<compile_context>
chip_gen: v7x
topology: tpu7x:2x2x1
jax: 0.10.0
libtpu: 0.0.40
codegen_flags: <defaults>
</compile_context>

<pallas_src>
import functools
from typing import NamedTuple, Tuple

import jax
import jax.numpy as jnp
from jax import lax
from jax.experimental import pallas as pl
from jax.experimental.pallas import tpu as pltpu


def _round_up(x, m):
    return ((x + m - 1) // m) * m


def _pick_tile(dim, candidates):
    for c in candidates:
        if dim % c == 0:
            return c
    return dim


# ----------------------------------------------------------------------------
# Pallas kernels
# ----------------------------------------------------------------------------
def _mm_kernel(a_ref, w_ref, b_ref, o_ref, acc_ref, *, act):
    """Tiled (tm,tk)x(tk,tn) matmul with f32 accumulator; bias+act at last K."""
    @pl.when(pl.program_id(2) == 0)
    def _init():
        acc_ref[...] = jnp.zeros_like(acc_ref)

    acc_ref[...] += jnp.dot(a_ref[...], w_ref[...],
                            preferred_element_type=jnp.float32)

    @pl.when(pl.program_id(2) == pl.num_programs(2) - 1)
    def _finalize():
        r = acc_ref[...] + b_ref[...]
        if act == "relu":
            r = jnp.maximum(r, 0.0)
        elif act == "sigmoid":
            r = jax.nn.sigmoid(r)
        o_ref[...] = r.astype(o_ref.dtype)


def matmul_bias_act(a, w_p, b_p, act="none"):
    """a:(M,K) -> bf16, w_p:(K,Np) bf16 (pre-padded, Np%128==0), b_p:(1,Np) f32."""
    M, K = a.shape
    K2, Np = w_p.shape
    assert K == K2 and Np % 128 == 0
    a = a.astype(jnp.bfloat16)

    tm = _pick_tile(M, (256, 128, 64, 32, 16, 8)) if M % 8 == 0 else M
    tn = _pick_tile(Np, (256, 128))
    tk = _pick_tile(K, (512, 256, 128)) if K % 8 == 0 else K

    grid = (M // tm, Np // tn, K // tk)
    cost = pl.CostEstimate(
        flops=2 * M * Np * K,
        bytes_accessed=M * K * 2 + K * Np * 2 + M * Np * 4,
        transcendentals=M * Np if act == "sigmoid" else 0,
    )
    return pl.pallas_call(
        functools.partial(_mm_kernel, act=act),
        out_shape=jax.ShapeDtypeStruct((M, Np), jnp.float32),
        grid=grid,
        in_specs=[
            pl.BlockSpec((tm, tk), lambda i, j, k: (i, k)),
            pl.BlockSpec((tk, tn), lambda i, j, k: (k, j)),
            pl.BlockSpec((1, tn), lambda i, j, k: (0, j)),
        ],
        out_specs=pl.BlockSpec((tm, tn), lambda i, j, k: (i, j)),
        scratch_shapes=[pltpu.VMEM((tm, tn), jnp.float32)],
        compiler_params=pltpu.CompilerParams(
            dimension_semantics=("parallel", "parallel", "arbitrary"),
            vmem_limit_bytes=32 * 1024 * 1024,
        ),
        cost_estimate=cost,
    )(a, w_p, b_p)


def _latent_kernel(flat_ref, w_ref, b_ref, eps_ref, mu_ref, lv_ref, z_ref, acc_ref):
    """flat @ [W_mu | W_logvar] (K-tiled) fused with the reparameterize step."""
    k = pl.program_id(0)

    @pl.when(k == 0)
    def _init():
        acc_ref[...] = jnp.zeros_like(acc_ref)

    acc_ref[...] += jnp.dot(flat_ref[...], w_ref[...],
                            preferred_element_type=jnp.float32)

    @pl.when(k == pl.num_programs(0) - 1)
    def _finalize():
        r = acc_ref[...] + b_ref[...]
        lp = mu_ref.shape[1]
        mu = r[:, :lp]
        lv = r[:, lp:]
        mu_ref[...] = mu
        lv_ref[...] = lv
        z_ref[...] = mu + eps_ref[...] * jnp.exp(0.5 * lv)


def latent_fused(flat, w_mulv, b_mulv, eps_p):
    """Returns padded (mu, logvar, z), each (B, Lp)."""
    B, K = flat.shape
    K2, N2 = w_mulv.shape          # N2 = 2 * Lp
    assert K == K2 and N2 % 256 == 0
    Lp = N2 // 2
    tk = _pick_tile(K, (512, 256, 128)) if K % 8 == 0 else K
    flat = flat.astype(jnp.bfloat16)

    return pl.pallas_call(
        _latent_kernel,
        out_shape=(jax.ShapeDtypeStruct((B, Lp), jnp.float32),
                   jax.ShapeDtypeStruct((B, Lp), jnp.float32),
                   jax.ShapeDtypeStruct((B, Lp), jnp.float32)),
        grid=(K // tk,),
        in_specs=[
            pl.BlockSpec((B, tk), lambda k: (0, k)),
            pl.BlockSpec((tk, N2), lambda k: (k, 0)),
            pl.BlockSpec((1, N2), lambda k: (0, 0)),
            pl.BlockSpec((B, Lp), lambda k: (0, 0)),
        ],
        out_specs=(pl.BlockSpec((B, Lp), lambda k: (0, 0)),
                   pl.BlockSpec((B, Lp), lambda k: (0, 0)),
                   pl.BlockSpec((B, Lp), lambda k: (0, 0))),
        scratch_shapes=[pltpu.VMEM((B, N2), jnp.float32)],
        compiler_params=pltpu.CompilerParams(
            dimension_semantics=("arbitrary",),
            vmem_limit_bytes=32 * 1024 * 1024,
        ),
    )(flat, w_mulv, b_mulv, eps_p)


# ----------------------------------------------------------------------------
# Conv lowering glue (pure JAX: slicing / padding / reshapes only)
# ----------------------------------------------------------------------------
def _im2col(x, k, stride, pad):
    N, H, W, C = x.shape
    xp = jnp.pad(x, ((0, 0), (pad, pad), (pad, pad), (0, 0)))
    Ho = (H + 2 * pad - k) // stride + 1
    Wo = (W + 2 * pad - k) // stride + 1
    cols = []
    for di in range(k):
        for dj in range(k):
            cols.append(xp[:, di:di + stride * Ho:stride,
                           dj:dj + stride * Wo:stride, :])
    patches = jnp.stack(cols, axis=3)                     # (N,Ho,Wo,k*k,C)
    return patches.reshape(N * Ho * Wo, k * k * C), Ho, Wo


def conv2d(x_nhwc, w_mat, b_row, cout, stride, pad, act):
    """nn.Conv2d with weights pre-flattened to ((kh,kw,Cin), Np) bf16."""
    N = x_nhwc.shape[0]
    patches, Ho, Wo = _im2col(x_nhwc, 4, stride, pad)
    out = matmul_bias_act(patches, w_mat, b_row, act)
    return out[:, :cout].reshape(N, Ho, Wo, cout)


def conv_transpose2d(x_nhwc, w_mat, zero_b, b_vec, cout, act):
    """nn.ConvTranspose2d (k=4, stride=2, pad=1) via one (Cin -> k*k*Cout)
    matmul + phase (col2im) combine — no zero-dilated input, no im2col."""
    N, H, W, C = x_nhwc.shape
    k = 4
    taps = matmul_bias_act(x_nhwc.reshape(N * H * W, C), w_mat, zero_b, act="none")
    T = taps[:, :k * k * cout].reshape(N, H, W, k, k, cout)

    zrow = jnp.zeros((N, 1, W, k, cout), T.dtype)
    # even output rows: taps (kh=1, same input row) + (kh=3, input row above)
    r0 = T[:, :, :, 1] + jnp.concatenate([zrow, T[:, :-1, :, 3]], axis=1)
    # odd output rows:  taps (kh=0, input row below) + (kh=2, same input row)
    r1 = jnp.concatenate([T[:, 1:, :, 0], zrow], axis=1) + T[:, :, :, 2]

    zcol = jnp.zeros((N, H, 1, cout), T.dtype)

    def _cols(R):
        c_even = R[:, :, :, 1] + jnp.concatenate([zcol, R[:, :, :-1, 3]], axis=2)
        c_odd = jnp.concatenate([R[:, :, 1:, 0], zcol], axis=2) + R[:, :, :, 2]
        return c_even, c_odd

    c00, c01 = _cols(r0)
    c10, c11 = _cols(r1)
    y = jnp.stack([jnp.stack([c00, c01], axis=3),
                   jnp.stack([c10, c11], axis=3)], axis=2)     # (N,H,2,W,2,Co)
    y = y.reshape(N, 2 * H, 2 * W, cout)
    y = y + b_vec.reshape(1, 1, 1, cout)
    if act == "relu":
        y = jax.nn.relu(y)
    elif act == "sigmoid":
        y = jax.nn.sigmoid(y)
    return y


# ----------------------------------------------------------------------------
# Parameters (PyTorch-layout synthetic init) and one-time kernel-layout prep
# ----------------------------------------------------------------------------
def init_params(key, latent_dim, img_size):
    fh = img_size // 16
    feat = 256 * fh * fh
    keys = jax.random.split(key, 24)
    ki = iter(range(24))
    p = {}
    for n, (ci, co) in enumerate([(3, 32), (32, 64), (64, 128), (128, 256)]):
        s = 1.0 / jnp.sqrt(ci * 16.0)
        p[f"enc{n}_w"] = s * jax.random.normal(keys[next(ki)], (co, ci, 4, 4), jnp.float32)
        p[f"enc{n}_b"] = s * jax.random.normal(keys[next(ki)], (co,), jnp.float32)
    s = 1.0 / jnp.sqrt(float(feat))
    p["fc_mu_w"] = s * jax.random.normal(keys[next(ki)], (latent_dim, feat), jnp.float32)
    p["fc_mu_b"] = s * jax.random.normal(keys[next(ki)], (latent_dim,), jnp.float32)
    p["fc_lv_w"] = s * jax.random.normal(keys[next(ki)], (latent_dim, feat), jnp.float32)
    p["fc_lv_b"] = s * jax.random.normal(keys[next(ki)], (latent_dim,), jnp.float32)
    s = 1.0 / jnp.sqrt(float(latent_dim))
    p["dec_fc_w"] = s * jax.random.normal(keys[next(ki)], (feat, latent_dim), jnp.float32)
    p["dec_fc_b"] = s * jax.random.normal(keys[next(ki)], (feat,), jnp.float32)
    for n, (ci, co) in enumerate([(256, 128), (128, 64), (64, 32), (32, 3)]):
        s = 1.0 / jnp.sqrt(ci * 16.0)
        p[f"dec{n}_w"] = s * jax.random.normal(keys[next(ki)], (ci, co, 4, 4), jnp.float32)
        p[f"dec{n}_b"] = s * jax.random.normal(keys[next(ki)], (co,), jnp.float32)
    return p


def prepare_params(tp, latent_dim, img_size):
    """One-time: transpose/permute/pad/cast weights into kernel layout."""
    fh = img_size // 16
    feat = 256 * fh * fh
    L = latent_dim
    Lp = _round_up(L, 128)
    k = 4
    p = {}

    # encoder convs: (O,I,kh,kw) -> ((kh,kw,I), Np) bf16, bias (1, Np) f32
    for n in range(4):
        w, b = tp[f"enc{n}_w"], tp[f"enc{n}_b"]
        O, I = w.shape[0], w.shape[1]
        Np = _round_up(O, 128)
        w_mat = jnp.transpose(w, (2, 3, 1, 0)).reshape(k * k * I, O)
        p[f"enc{n}_w"] = (jnp.zeros((k * k * I, Np), jnp.bfloat16)
                          .at[:, :O].set(w_mat.astype(jnp.bfloat16)))
        p[f"enc{n}_b"] = jnp.zeros((1, Np), jnp.float32).at[0, :O].set(b)

    # permutation: torch NCHW channel-major flatten index for each NHWC position
    hh, ww, cc = jnp.meshgrid(jnp.arange(fh), jnp.arange(fh), jnp.arange(256),
                              indexing="ij")
    perm = (cc * fh * fh + hh * fh + ww).reshape(-1)

    # fc_mu / fc_logvar fused: (feat, 2*Lp), rows permuted to NHWC flatten order
    w_mulv = jnp.zeros((feat, 2 * Lp), jnp.bfloat16)
    w_mulv = w_mulv.at[:, :L].set(tp["fc_mu_w"][:, perm].T.astype(jnp.bfloat16))
    w_mulv = w_mulv.at[:, Lp:Lp + L].set(tp["fc_lv_w"][:, perm].T.astype(jnp.bfloat16))
    b_mulv = (jnp.zeros((1, 2 * Lp), jnp.float32)
              .at[0, :L].set(tp["fc_mu_b"]).at[0, Lp:Lp + L].set(tp["fc_lv_b"]))
    p["fc_mulv_w"], p["fc_mulv_b"] = w_mulv, b_mulv

    # decoder fc: (Lp, feat) with columns permuted so output is NHWC-flattened
    wd, bd = tp["dec_fc_w"], tp["dec_fc_b"]           # (feat, L), (feat,)
    p["dec_fc_w"] = (jnp.zeros((Lp, feat), jnp.bfloat16)
                     .at[:L, :].set(wd[perm, :].T.astype(jnp.bfloat16)))
    p["dec_fc_b"] = bd[perm].reshape(1, feat).astype(jnp.float32)

    # decoder transposed convs: (I,O,kh,kw) -> (I, (kh,kw,O)) bf16 (padded N)
    for n in range(4):
        w, b = tp[f"dec{n}_w"], tp[f"dec{n}_b"]
        I, O = w.shape[0], w.shape[1]
        Np = _round_up(k * k * O, 128)
        w_mat = jnp.transpose(w, (0, 2, 3, 1)).reshape(I, k * k * O)
        p[f"dec{n}_w"] = (jnp.zeros((I, Np), jnp.bfloat16)
                          .at[:, :k * k * O].set(w_mat.astype(jnp.bfloat16)))
        p[f"dec{n}_zb"] = jnp.zeros((1, Np), jnp.float32)
        p[f"dec{n}_b"] = b.astype(jnp.float32)
    return p


class VAEConfig(NamedTuple):
    latent_dim: int
    latent_pad: int
    feat_hw: int
    enc_cout: Tuple[int, ...]
    dec_cout: Tuple[int, ...]


# ----------------------------------------------------------------------------
# Forward pass
# ----------------------------------------------------------------------------
def vae_forward(cfg, params, x_nchw, eps):
    B = x_nchw.shape[0]
    L, Lp, fh = cfg.latent_dim, cfg.latent_pad, cfg.feat_hw

    # encoder
    h = jnp.transpose(x_nchw, (0, 2, 3, 1)).astype(jnp.bfloat16)   # NCHW -> NHWC
    for n, co in enumerate(cfg.enc_cout):
        h = conv2d(h, params[f"enc{n}_w"], params[f"enc{n}_b"], co,
                   stride=2, pad=1, act="relu")
        h = h.astype(jnp.bfloat16)
    flat = h.reshape(B, -1)    # NHWC flatten; fc weights pre-permuted to match

    # fused fc_mu + fc_logvar + reparameterize
    eps_p = jnp.zeros((B, Lp), jnp.float32).at[:, :L].set(eps)
    mu_p, lv_p, z_p = latent_fused(flat, params["fc_mulv_w"],
                                   params["fc_mulv_b"], eps_p)
    mu, logvar = mu_p[:, :L], lv_p[:, :L]

    # decoder
    d = matmul_bias_act(z_p, params["dec_fc_w"], params["dec_fc_b"], act="relu")
    d = d.reshape(B, fh, fh, 256)          # already NHWC order (pre-permuted W)
    acts = ("relu", "relu", "relu", "sigmoid")
    for n, co in enumerate(cfg.dec_cout):
        d = conv_transpose2d(d.astype(jnp.bfloat16), params[f"dec{n}_w"],
                             params[f"dec{n}_zb"], params[f"dec{n}_b"], co, acts[n])
    recon = jnp.transpose(d, (0, 3, 1, 2))                          # NHWC -> NCHW
    return recon, mu, logvar


# ----------------------------------------------------------------------------
# Pure-JAX f32 reference of the PyTorch module (for a correctness cross-check)
# ----------------------------------------------------------------------------
def vae_reference(tp, latent_dim, img_size, x_nchw, eps):
    hp = lax.Precision.HIGHEST
    B = x_nchw.shape[0]
    fh = img_size // 16
    h = jnp.transpose(x_nchw, (0, 2, 3, 1))
    for n in range(4):
        w, b = tp[f"enc{n}_w"], tp[f"enc{n}_b"]
        dn = lax.conv_dimension_numbers(h.shape, w.shape, ("NHWC", "OIHW", "NHWC"))
        h = lax.conv_general_dilated(h, w, (2, 2), [(1, 1), (1, 1)],
                                     dimension_numbers=dn, precision=hp)
        h = jax.nn.relu(h + b.reshape(1, 1, 1, -1))
    flat = jnp.transpose(h, (0, 3, 1, 2)).reshape(B, -1)        # torch flatten
    mu = jnp.dot(flat, tp["fc_mu_w"].T, precision=hp) + tp["fc_mu_b"]
    logvar = jnp.dot(flat, tp["fc_lv_w"].T, precision=hp) + tp["fc_lv_b"]
    z = mu + eps * jnp.exp(0.5 * logvar)
    d = jax.nn.relu(jnp.dot(z, tp["dec_fc_w"].T, precision=hp) + tp["dec_fc_b"])
    d = jnp.transpose(d.reshape(B, 256, fh, fh), (0, 2, 3, 1))
    dec_acts = [jax.nn.relu] * 3 + [jax.nn.sigmoid]
    for n in range(4):
        w, b = tp[f"dec{n}_w"], tp[f"dec{n}_b"]                 # (I,O,kh,kw)
        w2 = jnp.transpose(w[:, :, ::-1, ::-1], (1, 0, 2, 3))   # -> (O,I,kh,kw)
        dn = lax.conv_dimension_numbers(d.shape, w2.shape, ("NHWC", "OIHW", "NHWC"))
        d = lax.conv_general_dilated(d, w2, (1, 1), [(2, 2), (2, 2)],
                                     lhs_dilation=(2, 2), dimension_numbers=dn,
                                     precision=hp)
        d = dec_acts[n](d + b.reshape(1, 1, 1, -1))
    return jnp.transpose(d, (0, 3, 1, 2)), mu, logvar


# ----------------------------------------------------------------------------
if __name__ == "__main__":
    B, C, S = 2, 3, 32          # four stride-2 convs -> spatial must be /16
    latent_dim = 16

    key = jax.random.PRNGKey(0)
    k_param, k_x, k_eps = jax.random.split(key, 3)

    torch_params = init_params(k_param, latent_dim, S)
    params = prepare_params(torch_params, latent_dim, S)
    cfg = VAEConfig(latent_dim, _round_up(latent_dim, 128), S // 16,
                    (32, 64, 128, 256), (128, 64, 32, 3))

    x = jax.random.normal(k_x, (B, C, S, S), jnp.float32)
    eps = jax.random.normal(k_eps, (B, latent_dim), jnp.float32)   # randn_like

    fwd = jax.jit(vae_forward, static_argnums=0)
    recon, mu, logvar = fwd(cfg, params, x, eps)
    jax.block_until_ready((recon, mu, logvar))

    assert recon.shape == (B, C, S, S)
    assert mu.shape == (B, latent_dim) and logvar.shape == (B, latent_dim)
    assert bool(jnp.all(jnp.isfinite(recon)))
    assert bool(jnp.all((recon >= 0.0) & (recon <= 1.0)))     # sigmoid range

    # cross-check vs a pure-JAX f32 reference (loose tol: bf16 MXU operands)
    r_ref, mu_ref, lv_ref = vae_reference(torch_params, latent_dim, S, x, eps)
    assert float(jnp.max(jnp.abs(mu - mu_ref))) < 5e-2
    assert float(jnp.max(jnp.abs(logvar - lv_ref))) < 5e-2
    assert float(jnp.max(jnp.abs(recon - r_ref))) < 5e-2

    print("KERNEL_OK")
</pallas_src>

<mosaic_0001>
module attributes {stable_mosaic.version = 11 : i64} {
  func.func @_mm_kernel(%arg0: i32, %arg1: i32, %arg2: i32, %arg3: memref<256x48xbf16, #tpu.memory_space<vmem>>, %arg4: memref<48x128xbf16, #tpu.memory_space<vmem>>, %arg5: memref<1x128xf32, #tpu.memory_space<vmem>>, %arg6: memref<256x128xf32, #tpu.memory_space<vmem>>, %arg7: memref<256x128xf32, #tpu.memory_space<vmem>>) attributes {dimension_semantics = [#tpu.dimension_semantics<parallel>, #tpu.dimension_semantics<parallel>, #tpu.dimension_semantics<arbitrary>], iteration_bounds = array<i64: 2, 1, 1>, scalar_prefetch = 0 : i64, scratch_operands = 1 : i64, tpu.core_type = #tpu.core_type<tc>, window_params = [{transform_indices = @transform_0, window_bounds = array<i64: 256, 48>}, {transform_indices = @transform_1, window_bounds = array<i64: 48, 128>}, {transform_indices = @transform_2, window_bounds = array<i64: 1, 128>}, {transform_indices = @transform_3, window_bounds = array<i64: 256, 128>}]} {
    %c0_i32 = arith.constant 0 : i32
    %0 = arith.cmpi eq, %arg2, %c0_i32 : i32
    %1 = arith.extui %0 : i1 to i32
    %c0_i32_0 = arith.constant 0 : i32
    %2 = arith.cmpi ne, %1, %c0_i32_0 : i32
    scf.if %2 {
      %cst_10 = arith.constant 0.000000e+00 : f32
      %12 = vector.broadcast %cst_10 : f32 to vector<256x128xf32>
      %c0_11 = arith.constant 0 : index
      %c0_12 = arith.constant 0 : index
      %13 = vector.load %arg7[%c0_11, %c0_12] : memref<256x128xf32, #tpu.memory_space<vmem>>, vector<256x128xf32>
      tpu.vector_store %arg7[%c0_11, %c0_12], %12 {strides = array<i32>} : memref<256x128xf32, #tpu.memory_space<vmem>>, vector<256x128xf32>,
    } else {
    }
    %c0 = arith.constant 0 : index
    %c0_1 = arith.constant 0 : index
    %3 = vector.load %arg7[%c0, %c0_1] : memref<256x128xf32, #tpu.memory_space<vmem>>, vector<256x128xf32>
    %c0_2 = arith.constant 0 : index
    %c0_3 = arith.constant 0 : index
    %4 = vector.load %arg3[%c0_2, %c0_3] : memref<256x48xbf16, #tpu.memory_space<vmem>>, vector<256x48xbf16>
    %c0_4 = arith.constant 0 : index
    %c0_5 = arith.constant 0 : index
    %5 = vector.load %arg4[%c0_4, %c0_5] : memref<48x128xbf16, #tpu.memory_space<vmem>>, vector<48x128xbf16>
    %cst = arith.constant dense<0.000000e+00> : vector<256x128xf32>
    %6 = tpu.matmul %4, %5, %cst {dimension_numbers = #tpu.dot_dimension_numbers<[1], [0], [0], [1], [0, 0, 1, 1], [], []>} : vector<256x48xbf16>, vector<48x128xbf16>, vector<256x128xf32> -> vector<256x128xf32>
    %7 = arith.addf %3, %6 : vector<256x128xf32>
    %c0_6 = arith.constant 0 : index
    %c0_7 = arith.constant 0 : index
    %8 = vector.load %arg7[%c0_6, %c0_7] : memref<256x128xf32, #tpu.memory_space<vmem>>, vector<256x128xf32>
    tpu.vector_store %arg7[%c0_6, %c0_7], %7 {strides = array<i32>} : memref<256x128xf32, #tpu.memory_space<vmem>>, vector<256x128xf32>,
    %c0_i32_8 = arith.constant 0 : i32
    %9 = arith.cmpi eq, %arg2, %c0_i32_8 : i32
    %10 = arith.extui %9 : i1 to i32
    %c0_i32_9 = arith.constant 0 : i32
    %11 = arith.cmpi ne, %10, %c0_i32_9 : i32
    scf.if %11 {
      %c0_10 = arith.constant 0 : index
      %c0_11 = arith.constant 0 : index
      %12 = vector.load %arg7[%c0_10, %c0_11] : memref<256x128xf32, #tpu.memory_space<vmem>>, vector<256x128xf32>
      %c0_12 = arith.constant 0 : index
      %c0_13 = arith.constant 0 : index
      %13 = vector.load %arg5[%c0_12, %c0_13] : memref<1x128xf32, #tpu.memory_space<vmem>>, vector<1x128xf32>
      %14 = vector.broadcast %13 : vector<1x128xf32> to vector<256x128xf32>
      %15 = arith.addf %12, %14 : vector<256x128xf32>
      %cst_14 = arith.constant 0.000000e+00 : f32
      %16 = vector.broadcast %cst_14 : f32 to vector<256x128xf32>
      %17 = arith.maximumf %15, %16 : vector<256x128xf32>
      %c0_15 = arith.constant 0 : index
      %c0_16 = arith.constant 0 : index
      %18 = vector.load %arg6[%c0_15, %c0_16] : memref<256x128xf32, #tpu.memory_space<vmem>>, vector<256x128xf32>
      tpu.vector_store %arg6[%c0_15, %c0_16], %17 {strides = array<i32>} : memref<256x128xf32, #tpu.memory_space<vmem>>, vector<256x128xf32>,
    } else {
    }
    return
  }
  func.func @transform_0(%arg0: i32, %arg1: i32, %arg2: i32) -> (i32, i32) {
    %c0_i32 = arith.constant 0 : i32
    return %arg0, %arg2 : i32, i32
  }
  func.func @transform_1(%arg0: i32, %arg1: i32, %arg2: i32) -> (i32, i32) {
    %c0_i32 = arith.constant 0 : i32
    return %arg2, %arg1 : i32, i32
  }
  func.func @transform_2(%arg0: i32, %arg1: i32, %arg2: i32) -> (i32, i32) {
    %c0_i32 = arith.constant 0 : i32
    %c0_i32_0 = arith.constant 0 : i32
    return %c0_i32, %arg1 : i32, i32
  }
  func.func @transform_3(%arg0: i32, %arg1: i32, %arg2: i32) -> (i32, i32) {
    %c0_i32 = arith.constant 0 : i32
    return %arg0, %arg1 : i32, i32
  }
}

module attributes {stable_mosaic.version = 11 : i64} {
  func.func @_mm_kernel(%arg0: i32, %arg1: i32, %arg2: i32, %arg3: memref<128x512xbf16, #tpu.memory_space<vmem>>, %arg4: memref<512x128xbf16, #tpu.memory_space<vmem>>, %arg5: memref<1x128xf32, #tpu.memory_space<vmem>>, %arg6: memref<128x128xf32, #tpu.memory_space<vmem>>, %arg7: memref<128x128xf32, #tpu.memory_space<vmem>>) attributes {dimension_semantics = [#tpu.dimension_semantics<parallel>, #tpu.dimension_semantics<parallel>, #tpu.dimension_semantics<arbitrary>], iteration_bounds = array<i64: 1, 1, 1>, scalar_prefetch = 0 : i64, scratch_operands = 1 : i64, tpu.core_type = #tpu.core_type<tc>, window_params = [{transform_indices = @transform_0, window_bounds = array<i64: 128, 512>}, {transform_indices = @transform_1, window_bounds = array<i64: 512, 128>}, {transform_indices = @transform_2, window_bounds = array<i64: 1, 128>}, {transform_indices = @transform_3, window_bounds = array<i64: 128, 128>}]} {
    %c0_i32 = arith.constant 0 : i32
    %0 = arith.cmpi eq, %arg2, %c0_i32 : i32
    %1 = arith.extui %0 : i1 to i32
    %c0_i32_0 = arith.constant 0 : i32
    %2 = arith.cmpi ne, %1, %c0_i32_0 : i32
    scf.if %2 {
      %cst_10 = arith.constant 0.000000e+00 : f32
      %12 = vector.broadcast %cst_10 : f32 to vector<128x128xf32>
      %c0_11 = arith.constant 0 : index
      %c0_12 = arith.constant 0 : index
      %13 = vector.load %arg7[%c0_11, %c0_12] : memref<128x128xf32, #tpu.memory_space<vmem>>, vector<128x128xf32>
      tpu.vector_store %arg7[%c0_11, %c0_12], %12 {strides = array<i32>} : memref<128x128xf32, #tpu.memory_space<vmem>>, vector<128x128xf32>,
    } else {
    }
    %c0 = arith.constant 0 : index
    %c0_1 = arith.constant 0 : index
    %3 = vector.load %arg7[%c0, %c0_1] : memref<128x128xf32, #tpu.memory_space<vmem>>, vector<128x128xf32>
    %c0_2 = arith.constant 0 : index
    %c0_3 = arith.constant 0 : index
    %4 = vector.load %arg3[%c0_2, %c0_3] : memref<128x512xbf16, #tpu.memory_space<vmem>>, vector<128x512xbf16>
    %c0_4 = arith.constant 0 : index
    %c0_5 = arith.constant 0 : index
    %5 = vector.load %arg4[%c0_4, %c0_5] : memref<512x128xbf16, #tpu.memory_space<vmem>>, vector<512x128xbf16>
    %cst = arith.constant dense<0.000000e+00> : vector<128x128xf32>
    %6 = tpu.matmul %4, %5, %cst {dimension_numbers = #tpu.dot_dimension_numbers<[1], [0], [0], [1], [0, 0, 1, 1], [], []>} : vector<128x512xbf16>, vector<512x128xbf16>, vector<128x128xf32> -> vector<128x128xf32>
    %7 = arith.addf %3, %6 : vector<128x128xf32>
    %c0_6 = arith.constant 0 : index
    %c0_7 = arith.constant 0 : index
    %8 = vector.load %arg7[%c0_6, %c0_7] : memref<128x128xf32, #tpu.memory_space<vmem>>, vector<128x128xf32>
    tpu.vector_store %arg7[%c0_6, %c0_7], %7 {strides = array<i32>} : memref<128x128xf32, #tpu.memory_space<vmem>>, vector<128x128xf32>,
    %c0_i32_8 = arith.constant 0 : i32
    %9 = arith.cmpi eq, %arg2, %c0_i32_8 : i32
    %10 = arith.extui %9 : i1 to i32
    %c0_i32_9 = arith.constant 0 : i32
    %11 = arith.cmpi ne, %10, %c0_i32_9 : i32
    scf.if %11 {
      %c0_10 = arith.constant 0 : index
      %c0_11 = arith.constant 0 : index
      %12 = vector.load %arg7[%c0_10, %c0_11] : memref<128x128xf32, #tpu.memory_space<vmem>>, vector<128x128xf32>
      %c0_12 = arith.constant 0 : index
      %c0_13 = arith.constant 0 : index
      %13 = vector.load %arg5[%c0_12, %c0_13] : memref<1x128xf32, #tpu.memory_space<vmem>>, vector<1x128xf32>
      %14 = vector.broadcast %13 : vector<1x128xf32> to vector<128x128xf32>
      %15 = arith.addf %12, %14 : vector<128x128xf32>
      %cst_14 = arith.constant 0.000000e+00 : f32
      %16 = vector.broadcast %cst_14 : f32 to vector<128x128xf32>
      %17 = arith.maximumf %15, %16 : vector<128x128xf32>
      %c0_15 = arith.constant 0 : index
      %c0_16 = arith.constant 0 : index
      %18 = vector.load %arg6[%c0_15, %c0_16] : memref<128x128xf32, #tpu.memory_space<vmem>>, vector<128x128xf32>
      tpu.vector_store %arg6[%c0_15, %c0_16], %17 {strides = array<i32>} : memref<128x128xf32, #tpu.memory_space<vmem>>, vector<128x128xf32>,
    } else {
    }
    return
  }
  func.func @transform_0(%arg0: i32, %arg1: i32, %arg2: i32) -> (i32, i32) {
    %c0_i32 = arith.constant 0 : i32
    return %arg0, %arg2 : i32, i32
  }
  func.func @transform_1(%arg0: i32, %arg1: i32, %arg2: i32) -> (i32, i32) {
    %c0_i32 = arith.constant 0 : i32
    return %arg2, %arg1 : i32, i32
  }
  func.func @transform_2(%arg0: i32, %arg1: i32, %arg2: i32) -> (i32, i32) {
    %c0_i32 = arith.constant 0 : i32
    %c0_i32_0 = arith.constant 0 : i32
    return %c0_i32, %arg1 : i32, i32
  }
  func.func @transform_3(%arg0: i32, %arg1: i32, %arg2: i32) -> (i32, i32) {
    %c0_i32 = arith.constant 0 : i32
    return %arg0, %arg1 : i32, i32
  }
}

module attributes {stable_mosaic.version = 11 : i64} {
  func.func @_mm_kernel(%arg0: i32, %arg1: i32, %arg2: i32, %arg3: memref<32x512xbf16, #tpu.memory_space<vmem>>, %arg4: memref<512x128xbf16, #tpu.memory_space<vmem>>, %arg5: memref<1x128xf32, #tpu.memory_space<vmem>>, %arg6: memref<32x128xf32, #tpu.memory_space<vmem>>, %arg7: memref<32x128xf32, #tpu.memory_space<vmem>>) attributes {dimension_semantics = [#tpu.dimension_semantics<parallel>, #tpu.dimension_semantics<parallel>, #tpu.dimension_semantics<arbitrary>], iteration_bounds = array<i64: 1, 1, 2>, scalar_prefetch = 0 : i64, scratch_operands = 1 : i64, tpu.core_type = #tpu.core_type<tc>, window_params = [{transform_indices = @transform_0, window_bounds = array<i64: 32, 512>}, {transform_indices = @transform_1, window_bounds = array<i64: 512, 128>}, {transform_indices = @transform_2, window_bounds = array<i64: 1, 128>}, {transform_indices = @transform_3, window_bounds = array<i64: 32, 128>}]} {
    %c0_i32 = arith.constant 0 : i32
    %0 = arith.cmpi eq, %arg2, %c0_i32 : i32
    %1 = arith.extui %0 : i1 to i32
    %c0_i32_0 = arith.constant 0 : i32
    %2 = arith.cmpi ne, %1, %c0_i32_0 : i32
    scf.if %2 {
      %cst_9 = arith.constant 0.000000e+00 : f32
      %12 = vector.broadcast %cst_9 : f32 to vector<32x128xf32>
      %c0_10 = arith.constant 0 : index
      %c0_11 = arith.constant 0 : index
      %13 = vector.load %arg7[%c0_10, %c0_11] : memref<32x128xf32, #tpu.memory_space<vmem>>, vector<32x128xf32>
      tpu.vector_store %arg7[%c0_10, %c0_11], %12 {strides = array<i32>} : memref<32x128xf32, #tpu.memory_space<vmem>>, vector<32x128xf32>,
    } else {
    }
    %c0 = arith.constant 0 : index
    %c0_1 = arith.constant 0 : index
    %3 = vector.load %arg7[%c0, %c0_1] : memref<32x128xf32, #tpu.memory_space<vmem>>, vector<32x128xf32>
    %c0_2 = arith.constant 0 : index
    %c0_3 = arith.constant 0 : index
    %4 = vector.load %arg3[%c0_2, %c0_3] : memref<32x512xbf16, #tpu.memory_space<vmem>>, vector<32x512xbf16>
    %c0_4 = arith.constant 0 : index
    %c0_5 = arith.constant 0 : index
    %5 = vector.load %arg4[%c0_4, %c0_5] : memref<512x128xbf16, #tpu.memory_space<vmem>>, vector<512x128xbf16>
    %cst = arith.constant dense<0.000000e+00> : vector<32x128xf32>
    %6 = tpu.matmul %4, %5, %cst {dimension_numbers = #tpu.dot_dimension_numbers<[1], [0], [0], [1], [0, 0, 1, 1], [], []>} : vector<32x512xbf16>, vector<512x128xbf16>, vector<32x128xf32> -> vector<32x128xf32>
    %7 = arith.addf %3, %6 : vector<32x128xf32>
    %c0_6 = arith.constant 0 : index
    %c0_7 = arith.constant 0 : index
    %8 = vector.load %arg7[%c0_6, %c0_7] : memref<32x128xf32, #tpu.memory_space<vmem>>, vector<32x128xf32>
    tpu.vector_store %arg7[%c0_6, %c0_7], %7 {strides = array<i32>} : memref<32x128xf32, #tpu.memory_space<vmem>>, vector<32x128xf32>,
    %c1_i32 = arith.constant 1 : i32
    %9 = arith.cmpi eq, %arg2, %c1_i32 : i32
    %10 = arith.extui %9 : i1 to i32
    %c0_i32_8 = arith.constant 0 : i32
    %11 = arith.cmpi ne, %10, %c0_i32_8 : i32
    scf.if %11 {
      %c0_9 = arith.constant 0 : index
      %c0_10 = arith.constant 0 : index
      %12 = vector.load %arg7[%c0_9, %c0_10] : memref<32x128xf32, #tpu.memory_space<vmem>>, vector<32x128xf32>
      %c0_11 = arith.constant 0 : index
      %c0_12 = arith.constant 0 : index
      %13 = vector.load %arg5[%c0_11, %c0_12] : memref<1x128xf32, #tpu.memory_space<vmem>>, vector<1x128xf32>
      %14 = vector.broadcast %13 : vector<1x128xf32> to vector<32x128xf32>
      %15 = arith.addf %12, %14 : vector<32x128xf32>
      %cst_13 = arith.constant 0.000000e+00 : f32
      %16 = vector.broadcast %cst_13 : f32 to vector<32x128xf32>
      %17 = arith.maximumf %15, %16 : vector<32x128xf32>
      %c0_14 = arith.constant 0 : index
      %c0_15 = arith.constant 0 : index
      %18 = vector.load %arg6[%c0_14, %c0_15] : memref<32x128xf32, #tpu.memory_space<vmem>>, vector<32x128xf32>
      tpu.vector_store %arg6[%c0_14, %c0_15], %17 {strides = array<i32>} : memref<32x128xf32, #tpu.memory_space<vmem>>, vector<32x128xf32>,
    } else {
    }
    return
  }
  func.func @transform_0(%arg0: i32, %arg1: i32, %arg2: i32) -> (i32, i32) {
    %c0_i32 = arith.constant 0 : i32
    return %arg0, %arg2 : i32, i32
  }
  func.func @transform_1(%arg0: i32, %arg1: i32, %arg2: i32) -> (i32, i32) {
    %c0_i32 = arith.constant 0 : i32
    return %arg2, %arg1 : i32, i32
  }
  func.func @transform_2(%arg0: i32, %arg1: i32, %arg2: i32) -> (i32, i32) {
    %c0_i32 = arith.constant 0 : i32
    %c0_i32_0 = arith.constant 0 : i32
    return %c0_i32, %arg1 : i32, i32
  }
  func.func @transform_3(%arg0: i32, %arg1: i32, %arg2: i32) -> (i32, i32) {
    %c0_i32 = arith.constant 0 : i32
    return %arg0, %arg1 : i32, i32
  }
}

module attributes {stable_mosaic.version = 11 : i64} {
  func.func @_mm_kernel(%arg0: i32, %arg1: i32, %arg2: i32, %arg3: memref<8x512xbf16, #tpu.memory_space<vmem>>, %arg4: memref<512x256xbf16, #tpu.memory_space<vmem>>, %arg5: memref<1x256xf32, #tpu.memory_space<vmem>>, %arg6: memref<8x256xf32, #tpu.memory_space<vmem>>, %arg7: memref<8x256xf32, #tpu.memory_space<vmem>>) attributes {dimension_semantics = [#tpu.dimension_semantics<parallel>, #tpu.dimension_semantics<parallel>, #tpu.dimension_semantics<arbitrary>], iteration_bounds = array<i64: 1, 1, 4>, scalar_prefetch = 0 : i64, scratch_operands = 1 : i64, tpu.core_type = #tpu.core_type<tc>, window_params = [{transform_indices = @transform_0, window_bounds = array<i64: 8, 512>}, {transform_indices = @transform_1, window_bounds = array<i64: 512, 256>}, {transform_indices = @transform_2, window_bounds = array<i64: 1, 256>}, {transform_indices = @transform_3, window_bounds = array<i64: 8, 256>}]} {
    %c0_i32 = arith.constant 0 : i32
    %0 = arith.cmpi eq, %arg2, %c0_i32 : i32
    %1 = arith.extui %0 : i1 to i32
    %c0_i32_0 = arith.constant 0 : i32
    %2 = arith.cmpi ne, %1, %c0_i32_0 : i32
    scf.if %2 {
      %cst_9 = arith.constant 0.000000e+00 : f32
      %12 = vector.broadcast %cst_9 : f32 to vector<8x256xf32>
      %c0_10 = arith.constant 0 : index
      %c0_11 = arith.constant 0 : index
      %13 = vector.load %arg7[%c0_10, %c0_11] : memref<8x256xf32, #tpu.memory_space<vmem>>, vector<8x256xf32>
      tpu.vector_store %arg7[%c0_10, %c0_11], %12 {strides = array<i32>} : memref<8x256xf32, #tpu.memory_space<vmem>>, vector<8x256xf32>,
    } else {
    }
    %c0 = arith.constant 0 : index
    %c0_1 = arith.constant 0 : index
    %3 = vector.load %arg7[%c0, %c0_1] : memref<8x256xf32, #tpu.memory_space<vmem>>, vector<8x256xf32>
    %c0_2 = arith.constant 0 : index
    %c0_3 = arith.constant 0 : index
    %4 = vector.load %arg3[%c0_2, %c0_3] : memref<8x512xbf16, #tpu.memory_space<vmem>>, vector<8x512xbf16>
    %c0_4 = arith.constant 0 : index
    %c0_5 = arith.constant 0 : index
    %5 = vector.load %arg4[%c0_4, %c0_5] : memref<512x256xbf16, #tpu.memory_space<vmem>>, vector<512x256xbf16>
    %cst = arith.constant dense<0.000000e+00> : vector<8x256xf32>
    %6 = tpu.matmul %4, %5, %cst {dimension_numbers = #tpu.dot_dimension_numbers<[1], [0], [0], [1], [0, 0, 1, 1], [], []>} : vector<8x512xbf16>, vector<512x256xbf16>, vector<8x256xf32> -> vector<8x256xf32>
    %7 = arith.addf %3, %6 : vector<8x256xf32>
    %c0_6 = arith.constant 0 : index
    %c0_7 = arith.constant 0 : index
    %8 = vector.load %arg7[%c0_6, %c0_7] : memref<8x256xf32, #tpu.memory_space<vmem>>, vector<8x256xf32>
    tpu.vector_store %arg7[%c0_6, %c0_7], %7 {strides = array<i32>} : memref<8x256xf32, #tpu.memory_space<vmem>>, vector<8x256xf32>,
    %c3_i32 = arith.constant 3 : i32
    %9 = arith.cmpi eq, %arg2, %c3_i32 : i32
    %10 = arith.extui %9 : i1 to i32
    %c0_i32_8 = arith.constant 0 : i32
    %11 = arith.cmpi ne, %10, %c0_i32_8 : i32
    scf.if %11 {
      %c0_9 = arith.constant 0 : index
      %c0_10 = arith.constant 0 : index
      %12 = vector.load %arg7[%c0_9, %c0_10] : memref<8x256xf32, #tpu.memory_space<vmem>>, vector<8x256xf32>
      %c0_11 = arith.constant 0 : index
      %c0_12 = arith.constant 0 : index
      %13 = vector.load %arg5[%c0_11, %c0_12] : memref<1x256xf32, #tpu.memory_space<vmem>>, vector<1x256xf32>
      %14 = vector.broadcast %13 : vector<1x256xf32> to vector<8x256xf32>
      %15 = arith.addf %12, %14 : vector<8x256xf32>
      %cst_13 = arith.constant 0.000000e+00 : f32
      %16 = vector.broadcast %cst_13 : f32 to vector<8x256xf32>
      %17 = arith.maximumf %15, %16 : vector<8x256xf32>
      %c0_14 = arith.constant 0 : index
      %c0_15 = arith.constant 0 : index
      %18 = vector.load %arg6[%c0_14, %c0_15] : memref<8x256xf32, #tpu.memory_space<vmem>>, vector<8x256xf32>
      tpu.vector_store %arg6[%c0_14, %c0_15], %17 {strides = array<i32>} : memref<8x256xf32, #tpu.memory_space<vmem>>, vector<8x256xf32>,
    } else {
    }
    return
  }
  func.func @transform_0(%arg0: i32, %arg1: i32, %arg2: i32) -> (i32, i32) {
    %c0_i32 = arith.constant 0 : i32
    return %arg0, %arg2 : i32, i32
  }
  func.func @transform_1(%arg0: i32, %arg1: i32, %arg2: i32) -> (i32, i32) {
    %c0_i32 = arith.constant 0 : i32
    return %arg2, %arg1 : i32, i32
  }
  func.func @transform_2(%arg0: i32, %arg1: i32, %arg2: i32) -> (i32, i32) {
    %c0_i32 = arith.constant 0 : i32
    %c0_i32_0 = arith.constant 0 : i32
    return %c0_i32, %arg1 : i32, i32
  }
  func.func @transform_3(%arg0: i32, %arg1: i32, %arg2: i32) -> (i32, i32) {
    %c0_i32 = arith.constant 0 : i32
    return %arg0, %arg1 : i32, i32
  }
}

module attributes {stable_mosaic.version = 11 : i64} {
  func.func @_latent_kernel(%arg0: i32, %arg1: memref<2x512xbf16, #tpu.memory_space<vmem>>, %arg2: memref<512x256xbf16, #tpu.memory_space<vmem>>, %arg3: memref<1x256xf32, #tpu.memory_space<vmem>>, %arg4: memref<2x128xf32, #tpu.memory_space<vmem>>, %arg5: memref<2x128xf32, #tpu.memory_space<vmem>>, %arg6: memref<2x128xf32, #tpu.memory_space<vmem>>, %arg7: memref<2x128xf32, #tpu.memory_space<vmem>>, %arg8: memref<2x256xf32, #tpu.memory_space<vmem>>) attributes {dimension_semantics = [#tpu.dimension_semantics<arbitrary>], iteration_bounds = array<i64: 2>, scalar_prefetch = 0 : i64, scratch_operands = 1 : i64, tpu.core_type = #tpu.core_type<tc>, window_params = [{transform_indices = @transform_0, window_bounds = array<i64: 2, 512>}, {transform_indices = @transform_1, window_bounds = array<i64: 512, 256>}, {pipeline_mode = #tpu.pipeline_mode<synchronous>, transform_indices = @transform_2, window_bounds = array<i64: 1, 256>}, {pipeline_mode = #tpu.pipeline_mode<synchronous>, transform_indices = @transform_3, window_bounds = array<i64: 2, 128>}, {pipeline_mode = #tpu.pipeline_mode<synchronous>, transform_indices = @transform_4, window_bounds = array<i64: 2, 128>}, {pipeline_mode = #tpu.pipeline_mode<synchronous>, transform_indices = @transform_5, window_bounds = array<i64: 2, 128>}, {pipeline_mode = #tpu.pipeline_mode<synchronous>, transform_indices = @transform_6, window_bounds = array<i64: 2, 128>}]} {
    %c0_i32 = arith.constant 0 : i32
    %0 = arith.cmpi eq, %arg0, %c0_i32 : i32
    %1 = arith.extui %0 : i1 to i32
    %c0_i32_0 = arith.constant 0 : i32
    %2 = arith.cmpi ne, %1, %c0_i32_0 : i32
    scf.if %2 {
      %cst_9 = arith.constant 0.000000e+00 : f32
      %12 = vector.broadcast %cst_9 : f32 to vector<2x256xf32>
      %c0_10 = arith.constant 0 : index
      %c0_11 = arith.constant 0 : index
      %13 = vector.load %arg8[%c0_10, %c0_11] : memref<2x256xf32, #tpu.memory_space<vmem>>, vector<2x256xf32>
      tpu.vector_store %arg8[%c0_10, %c0_11], %12 {strides = array<i32>} : memref<2x256xf32, #tpu.memory_space<vmem>>, vector<2x256xf32>,
    } else {
    }
    %c0 = arith.constant 0 : index
    %c0_1 = arith.constant 0 : index
    %3 = vector.load %arg8[%c0, %c0_1] : memref<2x256xf32, #tpu.memory_space<vmem>>, vector<2x256xf32>
    %c0_2 = arith.constant 0 : index
    %c0_3 = arith.constant 0 : index
    %4 = vector.load %arg1[%c0_2, %c0_3] : memref<2x512xbf16, #tpu.memory_space<vmem>>, vector<2x512xbf16>
    %c0_4 = arith.constant 0 : index
    %c0_5 = arith.constant 0 : index
    %5 = vector.load %arg2[%c0_4, %c0_5] : memref<512x256xbf16, #tpu.memory_space<vmem>>, vector<512x256xbf16>
    %cst = arith.constant dense<0.000000e+00> : vector<2x256xf32>
    %6 = tpu.matmul %4, %5, %cst {dimension_numbers = #tpu.dot_dimension_numbers<[1], [0], [0], [1], [0, 0, 1, 1], [], []>} : vector<2x512xbf16>, vector<512x256xbf16>, vector<2x256xf32> -> vector<2x256xf32>
    %7 = arith.addf %3, %6 : vector<2x256xf32>
    %c0_6 = arith.constant 0 : index
    %c0_7 = arith.constant 0 : index
    %8 = vector.load %arg8[%c0_6, %c0_7] : memref<2x256xf32, #tpu.memory_space<vmem>>, vector<2x256xf32>
    tpu.vector_store %arg8[%c0_6, %c0_7], %7 {strides = array<i32>} : memref<2x256xf32, #tpu.memory_space<vmem>>, vector<2x256xf32>,
    %c1_i32 = arith.constant 1 : i32
    %9 = arith.cmpi eq, %arg0, %c1_i32 : i32
    %10 = arith.extui %9 : i1 to i32
    %c0_i32_8 = arith.constant 0 : i32
    %11 = arith.cmpi ne, %10, %c0_i32_8 : i32
    scf.if %11 {
      %c0_9 = arith.constant 0 : index
      %c0_10 = arith.constant 0 : index
      %12 = vector.load %arg8[%c0_9, %c0_10] : memref<2x256xf32, #tpu.memory_space<vmem>>, vector<2x256xf32>
      %c0_11 = arith.constant 0 : index
      %c0_12 = arith.constant 0 : index
      %13 = vector.load %arg3[%c0_11, %c0_12] : memref<1x256xf32, #tpu.memory_space<vmem>>, vector<1x256xf32>
      %14 = vector.broadcast %13 : vector<1x256xf32> to vector<2x256xf32>
      %15 = arith.addf %12, %14 : vector<2x256xf32>
      %16 = vector.extract_strided_slice %15 {offsets = [0, 0], sizes = [2, 128], strides = [1, 1]} : vector<2x256xf32> to vector<2x128xf32>
      %17 = vector.extract_strided_slice %15 {offsets = [0, 128], sizes = [2, 128], strides = [1, 1]} : vector<2x256xf32> to vector<2x128xf32>
      %c0_13 = arith.constant 0 : index
      %c0_14 = arith.constant 0 : index
      %18 = vector.load %arg5[%c0_13, %c0_14] : memref<2x128xf32, #tpu.memory_space<vmem>>, vector<2x128xf32>
      tpu.vector_store %arg5[%c0_13, %c0_14], %16 {strides = array<i32>} : memref<2x128xf32, #tpu.memory_space<vmem>>, vector<2x128xf32>,
      %c0_15 = arith.constant 0 : index
      %c0_16 = arith.constant 0 : index
      %19 = vector.load %arg6[%c0_15, %c0_16] : memref<2x128xf32, #tpu.memory_space<vmem>>, vector<2x128xf32>
      tpu.vector_store %arg6[%c0_15, %c0_16], %17 {strides = array<i32>} : memref<2x128xf32, #tpu.memory_space<vmem>>, vector<2x128xf32>,
      %c0_17 = arith.constant 0 : index
      %c0_18 = arith.constant 0 : index
      %20 = vector.load %arg4[%c0_17, %c0_18] : memref<2x128xf32, #tpu.memory_space<vmem>>, vector<2x128xf32>
      %cst_19 = arith.constant 5.000000e-01 : f32
      %21 = vector.broadcast %cst_19 : f32 to vector<2x128xf32>
      %22 = arith.mulf %21, %17 : vector<2x128xf32>
      %23 = math.exp %22 : vector<2x128xf32>
      %24 = arith.mulf %20, %23 : vector<2x128xf32>
      %25 = arith.addf %16, %24 : vector<2x128xf32>
      %c0_20 = arith.constant 0 : index
      %c0_21 = arith.constant 0 : index
      %26 = vector.load %arg7[%c0_20, %c0_21] : memref<2x128xf32, #tpu.memory_space<vmem>>, vector<2x128xf32>
      tpu.vector_store %arg7[%c0_20, %c0_21], %25 {strides = array<i32>} : memref<2x128xf32, #tpu.memory_space<vmem>>, vector<2x128xf32>,
    } else {
    }
    return
  }
  func.func @transform_0(%arg0: i32) -> (i32, i32) {
    %c0_i32 = arith.constant 0 : i32
    %c0_i32_0 = arith.constant 0 : i32
    return %c0_i32, %arg0 : i32, i32
  }
  func.func @transform_1(%arg0: i32) -> (i32, i32) {
    %c0_i32 = arith.constant 0 : i32
    %c0_i32_0 = arith.constant 0 : i32
    return %arg0, %c0_i32 : i32, i32
  }
  func.func @transform_2(%arg0: i32) -> (i32, i32) {
    %c0_i32 = arith.constant 0 : i32
    %c0_i32_0 = arith.constant 0 : i32
    %c0_i32_1 = arith.constant 0 : i32
    return %c0_i32, %c0_i32_0 : i32, i32
  }
  func.func @transform_3(%arg0: i32) -> (i32, i32) {
    %c0_i32 = arith.constant 0 : i32
    %c0_i32_0 = arith.constant 0 : i32
    %c0_i32_1 = arith.constant 0 : i32
    return %c0_i32, %c0_i32_0 : i32, i32
  }
  func.func @transform_4(%arg0: i32) -> (i32, i32) {
    %c0_i32 = arith.constant 0 : i32
    %c0_i32_0 = arith.constant 0 : i32
    %c0_i32_1 = arith.constant 0 : i32
    return %c0_i32, %c0_i32_0 : i32, i32
  }
  func.func @transform_5(%arg0: i32) -> (i32, i32) {
    %c0_i32 = arith.constant 0 : i32
    %c0_i32_0 = arith.constant 0 : i32
    %c0_i32_1 = arith.constant 0 : i32
    return %c0_i32, %c0_i32_0 : i32, i32
  }
  func.func @transform_6(%arg0: i32) -> (i32, i32) {
    %c0_i32 = arith.constant 0 : i32
    %c0_i32_0 = arith.constant 0 : i32
    %c0_i32_1 = arith.constant 0 : i32
    return %c0_i32, %c0_i32_0 : i32, i32
  }
}

module attributes {stable_mosaic.version = 11 : i64} {
  func.func @_mm_kernel(%arg0: i32, %arg1: i32, %arg2: i32, %arg3: memref<8x256xbf16, #tpu.memory_space<vmem>>, %arg4: memref<256x256xbf16, #tpu.memory_space<vmem>>, %arg5: memref<1x256xf32, #tpu.memory_space<vmem>>, %arg6: memref<8x256xf32, #tpu.memory_space<vmem>>, %arg7: memref<8x256xf32, #tpu.memory_space<vmem>>) attributes {dimension_semantics = [#tpu.dimension_semantics<parallel>, #tpu.dimension_semantics<parallel>, #tpu.dimension_semantics<arbitrary>], iteration_bounds = array<i64: 1, 8, 1>, scalar_prefetch = 0 : i64, scratch_operands = 1 : i64, tpu.core_type = #tpu.core_type<tc>, window_params = [{transform_indices = @transform_0, window_bounds = array<i64: 8, 256>}, {transform_indices = @transform_1, window_bounds = array<i64: 256, 256>}, {transform_indices = @transform_2, window_bounds = array<i64: 1, 256>}, {transform_indices = @transform_3, window_bounds = array<i64: 8, 256>}]} {
    %c0_i32 = arith.constant 0 : i32
    %0 = arith.cmpi eq, %arg2, %c0_i32 : i32
    %1 = arith.extui %0 : i1 to i32
    %c0_i32_0 = arith.constant 0 : i32
    %2 = arith.cmpi ne, %1, %c0_i32_0 : i32
    scf.if %2 {
      %cst_10 = arith.constant 0.000000e+00 : f32
      %12 = vector.broadcast %cst_10 : f32 to vector<8x256xf32>
      %c0_11 = arith.constant 0 : index
      %c0_12 = arith.constant 0 : index
      %13 = vector.load %arg7[%c0_11, %c0_12] : memref<8x256xf32, #tpu.memory_space<vmem>>, vector<8x256xf32>
      tpu.vector_store %arg7[%c0_11, %c0_12], %12 {strides = array<i32>} : memref<8x256xf32, #tpu.memory_space<vmem>>, vector<8x256xf32>,
    } else {
    }
    %c0 = arith.constant 0 : index
    %c0_1 = arith.constant 0 : index
    %3 = vector.load %arg7[%c0, %c0_1] : memref<8x256xf32, #tpu.memory_space<vmem>>, vector<8x256xf32>
    %c0_2 = arith.constant 0 : index
    %c0_3 = arith.constant 0 : index
    %4 = vector.load %arg3[%c0_2, %c0_3] : memref<8x256xbf16, #tpu.memory_space<vmem>>, vector<8x256xbf16>
    %c0_4 = arith.constant 0 : index
    %c0_5 = arith.constant 0 : index
    %5 = vector.load %arg4[%c0_4, %c0_5] : memref<256x256xbf16, #tpu.memory_space<vmem>>, vector<256x256xbf16>
    %cst = arith.constant dense<0.000000e+00> : vector<8x256xf32>
    %6 = tpu.matmul %4, %5, %cst {dimension_numbers = #tpu.dot_dimension_numbers<[1], [0], [0], [1], [0, 0, 1, 1], [], []>} : vector<8x256xbf16>, vector<256x256xbf16>, vector<8x256xf32> -> vector<8x256xf32>
    %7 = arith.addf %3, %6 : vector<8x256xf32>
    %c0_6 = arith.constant 0 : index
    %c0_7 = arith.constant 0 : index
    %8 = vector.load %arg7[%c0_6, %c0_7] : memref<8x256xf32, #tpu.memory_space<vmem>>, vector<8x256xf32>
    tpu.vector_store %arg7[%c0_6, %c0_7], %7 {strides = array<i32>} : memref<8x256xf32, #tpu.memory_space<vmem>>, vector<8x256xf32>,
    %c0_i32_8 = arith.constant 0 : i32
    %9 = arith.cmpi eq, %arg2, %c0_i32_8 : i32
    %10 = arith.extui %9 : i1 to i32
    %c0_i32_9 = arith.constant 0 : i32
    %11 = arith.cmpi ne, %10, %c0_i32_9 : i32
    scf.if %11 {
      %c0_10 = arith.constant 0 : index
      %c0_11 = arith.constant 0 : index
      %12 = vector.load %arg7[%c0_10, %c0_11] : memref<8x256xf32, #tpu.memory_space<vmem>>, vector<8x256xf32>
      %c0_12 = arith.constant 0 : index
      %c0_13 = arith.constant 0 : index
      %13 = vector.load %arg5[%c0_12, %c0_13] : memref<1x256xf32, #tpu.memory_space<vmem>>, vector<1x256xf32>
      %14 = vector.broadcast %13 : vector<1x256xf32> to vector<8x256xf32>
      %15 = arith.addf %12, %14 : vector<8x256xf32>
      %c0_14 = arith.constant 0 : index
      %c0_15 = arith.constant 0 : index
      %16 = vector.load %arg6[%c0_14, %c0_15] : memref<8x256xf32, #tpu.memory_space<vmem>>, vector<8x256xf32>
      tpu.vector_store %arg6[%c0_14, %c0_15], %15 {strides = array<i32>} : memref<8x256xf32, #tpu.memory_space<vmem>>, vector<8x256xf32>,
    } else {
    }
    return
  }
  func.func @transform_0(%arg0: i32, %arg1: i32, %arg2: i32) -> (i32, i32) {
    %c0_i32 = arith.constant 0 : i32
    return %arg0, %arg2 : i32, i32
  }
  func.func @transform_1(%arg0: i32, %arg1: i32, %arg2: i32) -> (i32, i32) {
    %c0_i32 = arith.constant 0 : i32
    return %arg2, %arg1 : i32, i32
  }
  func.func @transform_2(%arg0: i32, %arg1: i32, %arg2: i32) -> (i32, i32) {
    %c0_i32 = arith.constant 0 : i32
    %c0_i32_0 = arith.constant 0 : i32
    return %c0_i32, %arg1 : i32, i32
  }
  func.func @transform_3(%arg0: i32, %arg1: i32, %arg2: i32) -> (i32, i32) {
    %c0_i32 = arith.constant 0 : i32
    return %arg0, %arg1 : i32, i32
  }
}

module attributes {stable_mosaic.version = 11 : i64} {
  func.func @_mm_kernel(%arg0: i32, %arg1: i32, %arg2: i32, %arg3: memref<2x128xbf16, #tpu.memory_space<vmem>>, %arg4: memref<128x256xbf16, #tpu.memory_space<vmem>>, %arg5: memref<1x256xf32, #tpu.memory_space<vmem>>, %arg6: memref<2x256xf32, #tpu.memory_space<vmem>>, %arg7: memref<2x256xf32, #tpu.memory_space<vmem>>) attributes {dimension_semantics = [#tpu.dimension_semantics<parallel>, #tpu.dimension_semantics<parallel>, #tpu.dimension_semantics<arbitrary>], iteration_bounds = array<i64: 1, 4, 1>, scalar_prefetch = 0 : i64, scratch_operands = 1 : i64, tpu.core_type = #tpu.core_type<tc>, window_params = [{transform_indices = @transform_0, window_bounds = array<i64: 2, 128>}, {transform_indices = @transform_1, window_bounds = array<i64: 128, 256>}, {transform_indices = @transform_2, window_bounds = array<i64: 1, 256>}, {transform_indices = @transform_3, window_bounds = array<i64: 2, 256>}]} {
    %c0_i32 = arith.constant 0 : i32
    %0 = arith.cmpi eq, %arg2, %c0_i32 : i32
    %1 = arith.extui %0 : i1 to i32
    %c0_i32_0 = arith.constant 0 : i32
    %2 = arith.cmpi ne, %1, %c0_i32_0 : i32
    scf.if %2 {
      %cst_10 = arith.constant 0.000000e+00 : f32
      %12 = vector.broadcast %cst_10 : f32 to vector<2x256xf32>
      %c0_11 = arith.constant 0 : index
      %c0_12 = arith.constant 0 : index
      %13 = vector.load %arg7[%c0_11, %c0_12] : memref<2x256xf32, #tpu.memory_space<vmem>>, vector<2x256xf32>
      tpu.vector_store %arg7[%c0_11, %c0_12], %12 {strides = array<i32>} : memref<2x256xf32, #tpu.memory_space<vmem>>, vector<2x256xf32>,
    } else {
    }
    %c0 = arith.constant 0 : index
    %c0_1 = arith.constant 0 : index
    %3 = vector.load %arg7[%c0, %c0_1] : memref<2x256xf32, #tpu.memory_space<vmem>>, vector<2x256xf32>
    %c0_2 = arith.constant 0 : index
    %c0_3 = arith.constant 0 : index
    %4 = vector.load %arg3[%c0_2, %c0_3] : memref<2x128xbf16, #tpu.memory_space<vmem>>, vector<2x128xbf16>
    %c0_4 = arith.constant 0 : index
    %c0_5 = arith.constant 0 : index
    %5 = vector.load %arg4[%c0_4, %c0_5] : memref<128x256xbf16, #tpu.memory_space<vmem>>, vector<128x256xbf16>
    %cst = arith.constant dense<0.000000e+00> : vector<2x256xf32>
    %6 = tpu.matmul %4, %5, %cst {dimension_numbers = #tpu.dot_dimension_numbers<[1], [0], [0], [1], [0, 0, 1, 1], [], []>} : vector<2x128xbf16>, vector<128x256xbf16>, vector<2x256xf32> -> vector<2x256xf32>
    %7 = arith.addf %3, %6 : vector<2x256xf32>
    %c0_6 = arith.constant 0 : index
    %c0_7 = arith.constant 0 : index
    %8 = vector.load %arg7[%c0_6, %c0_7] : memref<2x256xf32, #tpu.memory_space<vmem>>, vector<2x256xf32>
    tpu.vector_store %arg7[%c0_6, %c0_7], %7 {strides = array<i32>} : memref<2x256xf32, #tpu.memory_space<vmem>>, vector<2x256xf32>,
    %c0_i32_8 = arith.constant 0 : i32
    %9 = arith.cmpi eq, %arg2, %c0_i32_8 : i32
    %10 = arith.extui %9 : i1 to i32
    %c0_i32_9 = arith.constant 0 : i32
    %11 = arith.cmpi ne, %10, %c0_i32_9 : i32
    scf.if %11 {
      %c0_10 = arith.constant 0 : index
      %c0_11 = arith.constant 0 : index
      %12 = vector.load %arg7[%c0_10, %c0_11] : memref<2x256xf32, #tpu.memory_space<vmem>>, vector<2x256xf32>
      %c0_12 = arith.constant 0 : index
      %c0_13 = arith.constant 0 : index
      %13 = vector.load %arg5[%c0_12, %c0_13] : memref<1x256xf32, #tpu.memory_space<vmem>>, vector<1x256xf32>
      %14 = vector.broadcast %13 : vector<1x256xf32> to vector<2x256xf32>
      %15 = arith.addf %12, %14 : vector<2x256xf32>
      %cst_14 = arith.constant 0.000000e+00 : f32
      %16 = vector.broadcast %cst_14 : f32 to vector<2x256xf32>
      %17 = arith.maximumf %15, %16 : vector<2x256xf32>
      %c0_15 = arith.constant 0 : index
      %c0_16 = arith.constant 0 : index
      %18 = vector.load %arg6[%c0_15, %c0_16] : memref<2x256xf32, #tpu.memory_space<vmem>>, vector<2x256xf32>
      tpu.vector_store %arg6[%c0_15, %c0_16], %17 {strides = array<i32>} : memref<2x256xf32, #tpu.memory_space<vmem>>, vector<2x256xf32>,
    } else {
    }
    return
  }
  func.func @transform_0(%arg0: i32, %arg1: i32, %arg2: i32) -> (i32, i32) {
    %c0_i32 = arith.constant 0 : i32
    return %arg0, %arg2 : i32, i32
  }
  func.func @transform_1(%arg0: i32, %arg1: i32, %arg2: i32) -> (i32, i32) {
    %c0_i32 = arith.constant 0 : i32
    return %arg2, %arg1 : i32, i32
  }
  func.func @transform_2(%arg0: i32, %arg1: i32, %arg2: i32) -> (i32, i32) {
    %c0_i32 = arith.constant 0 : i32
    %c0_i32_0 = arith.constant 0 : i32
    return %c0_i32, %arg1 : i32, i32
  }
  func.func @transform_3(%arg0: i32, %arg1: i32, %arg2: i32) -> (i32, i32) {
    %c0_i32 = arith.constant 0 : i32
    return %arg0, %arg1 : i32, i32
  }
}

module attributes {stable_mosaic.version = 11 : i64} {
  func.func @_mm_kernel(%arg0: i32, %arg1: i32, %arg2: i32, %arg3: memref<32x128xbf16, #tpu.memory_space<vmem>>, %arg4: memref<128x256xbf16, #tpu.memory_space<vmem>>, %arg5: memref<1x256xf32, #tpu.memory_space<vmem>>, %arg6: memref<32x256xf32, #tpu.memory_space<vmem>>, %arg7: memref<32x256xf32, #tpu.memory_space<vmem>>) attributes {dimension_semantics = [#tpu.dimension_semantics<parallel>, #tpu.dimension_semantics<parallel>, #tpu.dimension_semantics<arbitrary>], iteration_bounds = array<i64: 1, 4, 1>, scalar_prefetch = 0 : i64, scratch_operands = 1 : i64, tpu.core_type = #tpu.core_type<tc>, window_params = [{transform_indices = @transform_0, window_bounds = array<i64: 32, 128>}, {transform_indices = @transform_1, window_bounds = array<i64: 128, 256>}, {transform_indices = @transform_2, window_bounds = array<i64: 1, 256>}, {transform_indices = @transform_3, window_bounds = array<i64: 32, 256>}]} {
    %c0_i32 = arith.constant 0 : i32
    %0 = arith.cmpi eq, %arg2, %c0_i32 : i32
    %1 = arith.extui %0 : i1 to i32
    %c0_i32_0 = arith.constant 0 : i32
    %2 = arith.cmpi ne, %1, %c0_i32_0 : i32
    scf.if %2 {
      %cst_10 = arith.constant 0.000000e+00 : f32
      %12 = vector.broadcast %cst_10 : f32 to vector<32x256xf32>
      %c0_11 = arith.constant 0 : index
      %c0_12 = arith.constant 0 : index
      %13 = vector.load %arg7[%c0_11, %c0_12] : memref<32x256xf32, #tpu.memory_space<vmem>>, vector<32x256xf32>
      tpu.vector_store %arg7[%c0_11, %c0_12], %12 {strides = array<i32>} : memref<32x256xf32, #tpu.memory_space<vmem>>, vector<32x256xf32>,
    } else {
    }
    %c0 = arith.constant 0 : index
    %c0_1 = arith.constant 0 : index
    %3 = vector.load %arg7[%c0, %c0_1] : memref<32x256xf32, #tpu.memory_space<vmem>>, vector<32x256xf32>
    %c0_2 = arith.constant 0 : index
    %c0_3 = arith.constant 0 : index
    %4 = vector.load %arg3[%c0_2, %c0_3] : memref<32x128xbf16, #tpu.memory_space<vmem>>, vector<32x128xbf16>
    %c0_4 = arith.constant 0 : index
    %c0_5 = arith.constant 0 : index
    %5 = vector.load %arg4[%c0_4, %c0_5] : memref<128x256xbf16, #tpu.memory_space<vmem>>, vector<128x256xbf16>
    %cst = arith.constant dense<0.000000e+00> : vector<32x256xf32>
    %6 = tpu.matmul %4, %5, %cst {dimension_numbers = #tpu.dot_dimension_numbers<[1], [0], [0], [1], [0, 0, 1, 1], [], []>} : vector<32x128xbf16>, vector<128x256xbf16>, vector<32x256xf32> -> vector<32x256xf32>
    %7 = arith.addf %3, %6 : vector<32x256xf32>
    %c0_6 = arith.constant 0 : index
    %c0_7 = arith.constant 0 : index
    %8 = vector.load %arg7[%c0_6, %c0_7] : memref<32x256xf32, #tpu.memory_space<vmem>>, vector<32x256xf32>
    tpu.vector_store %arg7[%c0_6, %c0_7], %7 {strides = array<i32>} : memref<32x256xf32, #tpu.memory_space<vmem>>, vector<32x256xf32>,
    %c0_i32_8 = arith.constant 0 : i32
    %9 = arith.cmpi eq, %arg2, %c0_i32_8 : i32
    %10 = arith.extui %9 : i1 to i32
    %c0_i32_9 = arith.constant 0 : i32
    %11 = arith.cmpi ne, %10, %c0_i32_9 : i32
    scf.if %11 {
      %c0_10 = arith.constant 0 : index
      %c0_11 = arith.constant 0 : index
      %12 = vector.load %arg7[%c0_10, %c0_11] : memref<32x256xf32, #tpu.memory_space<vmem>>, vector<32x256xf32>
      %c0_12 = arith.constant 0 : index
      %c0_13 = arith.constant 0 : index
      %13 = vector.load %arg5[%c0_12, %c0_13] : memref<1x256xf32, #tpu.memory_space<vmem>>, vector<1x256xf32>
      %14 = vector.broadcast %13 : vector<1x256xf32> to vector<32x256xf32>
      %15 = arith.addf %12, %14 : vector<32x256xf32>
      %c0_14 = arith.constant 0 : index
      %c0_15 = arith.constant 0 : index
      %16 = vector.load %arg6[%c0_14, %c0_15] : memref<32x256xf32, #tpu.memory_space<vmem>>, vector<32x256xf32>
      tpu.vector_store %arg6[%c0_14, %c0_15], %15 {strides = array<i32>} : memref<32x256xf32, #tpu.memory_space<vmem>>, vector<32x256xf32>,
    } else {
    }
    return
  }
  func.func @transform_0(%arg0: i32, %arg1: i32, %arg2: i32) -> (i32, i32) {
    %c0_i32 = arith.constant 0 : i32
    return %arg0, %arg2 : i32, i32
  }
  func.func @transform_1(%arg0: i32, %arg1: i32, %arg2: i32) -> (i32, i32) {
    %c0_i32 = arith.constant 0 : i32
    return %arg2, %arg1 : i32, i32
  }
  func.func @transform_2(%arg0: i32, %arg1: i32, %arg2: i32) -> (i32, i32) {
    %c0_i32 = arith.constant 0 : i32
    %c0_i32_0 = arith.constant 0 : i32
    return %c0_i32, %arg1 : i32, i32
  }
  func.func @transform_3(%arg0: i32, %arg1: i32, %arg2: i32) -> (i32, i32) {
    %c0_i32 = arith.constant 0 : i32
    return %arg0, %arg1 : i32, i32
  }
}

module attributes {stable_mosaic.version = 11 : i64} {
  func.func @_mm_kernel(%arg0: i32, %arg1: i32, %arg2: i32, %arg3: memref<128x64xbf16, #tpu.memory_space<vmem>>, %arg4: memref<64x256xbf16, #tpu.memory_space<vmem>>, %arg5: memref<1x256xf32, #tpu.memory_space<vmem>>, %arg6: memref<128x256xf32, #tpu.memory_space<vmem>>, %arg7: memref<128x256xf32, #tpu.memory_space<vmem>>) attributes {dimension_semantics = [#tpu.dimension_semantics<parallel>, #tpu.dimension_semantics<parallel>, #tpu.dimension_semantics<arbitrary>], iteration_bounds = array<i64: 1, 2, 1>, scalar_prefetch = 0 : i64, scratch_operands = 1 : i64, tpu.core_type = #tpu.core_type<tc>, window_params = [{transform_indices = @transform_0, window_bounds = array<i64: 128, 64>}, {transform_indices = @transform_1, window_bounds = array<i64: 64, 256>}, {transform_indices = @transform_2, window_bounds = array<i64: 1, 256>}, {transform_indices = @transform_3, window_bounds = array<i64: 128, 256>}]} {
    %c0_i32 = arith.constant 0 : i32
    %0 = arith.cmpi eq, %arg2, %c0_i32 : i32
    %1 = arith.extui %0 : i1 to i32
    %c0_i32_0 = arith.constant 0 : i32
    %2 = arith.cmpi ne, %1, %c0_i32_0 : i32
    scf.if %2 {
      %cst_10 = arith.constant 0.000000e+00 : f32
      %12 = vector.broadcast %cst_10 : f32 to vector<128x256xf32>
      %c0_11 = arith.constant 0 : index
      %c0_12 = arith.constant 0 : index
      %13 = vector.load %arg7[%c0_11, %c0_12] : memref<128x256xf32, #tpu.memory_space<vmem>>, vector<128x256xf32>
      tpu.vector_store %arg7[%c0_11, %c0_12], %12 {strides = array<i32>} : memref<128x256xf32, #tpu.memory_space<vmem>>, vector<128x256xf32>,
    } else {
    }
    %c0 = arith.constant 0 : index
    %c0_1 = arith.constant 0 : index
    %3 = vector.load %arg7[%c0, %c0_1] : memref<128x256xf32, #tpu.memory_space<vmem>>, vector<128x256xf32>
    %c0_2 = arith.constant 0 : index
    %c0_3 = arith.constant 0 : index
    %4 = vector.load %arg3[%c0_2, %c0_3] : memref<128x64xbf16, #tpu.memory_space<vmem>>, vector<128x64xbf16>
    %c0_4 = arith.constant 0 : index
    %c0_5 = arith.constant 0 : index
    %5 = vector.load %arg4[%c0_4, %c0_5] : memref<64x256xbf16, #tpu.memory_space<vmem>>, vector<64x256xbf16>
    %cst = arith.constant dense<0.000000e+00> : vector<128x256xf32>
    %6 = tpu.matmul %4, %5, %cst {dimension_numbers = #tpu.dot_dimension_numbers<[1], [0], [0], [1], [0, 0, 1, 1], [], []>} : vector<128x64xbf16>, vector<64x256xbf16>, vector<128x256xf32> -> vector<128x256xf32>
    %7 = arith.addf %3, %6 : vector<128x256xf32>
    %c0_6 = arith.constant 0 : index
    %c0_7 = arith.constant 0 : index
    %8 = vector.load %arg7[%c0_6, %c0_7] : memref<128x256xf32, #tpu.memory_space<vmem>>, vector<128x256xf32>
    tpu.vector_store %arg7[%c0_6, %c0_7], %7 {strides = array<i32>} : memref<128x256xf32, #tpu.memory_space<vmem>>, vector<128x256xf32>,
    %c0_i32_8 = arith.constant 0 : i32
    %9 = arith.cmpi eq, %arg2, %c0_i32_8 : i32
    %10 = arith.extui %9 : i1 to i32
    %c0_i32_9 = arith.constant 0 : i32
    %11 = arith.cmpi ne, %10, %c0_i32_9 : i32
    scf.if %11 {
      %c0_10 = arith.constant 0 : index
      %c0_11 = arith.constant 0 : index
      %12 = vector.load %arg7[%c0_10, %c0_11] : memref<128x256xf32, #tpu.memory_space<vmem>>, vector<128x256xf32>
      %c0_12 = arith.constant 0 : index
      %c0_13 = arith.constant 0 : index
      %13 = vector.load %arg5[%c0_12, %c0_13] : memref<1x256xf32, #tpu.memory_space<vmem>>, vector<1x256xf32>
      %14 = vector.broadcast %13 : vector<1x256xf32> to vector<128x256xf32>
      %15 = arith.addf %12, %14 : vector<128x256xf32>
      %c0_14 = arith.constant 0 : index
      %c0_15 = arith.constant 0 : index
      %16 = vector.load %arg6[%c0_14, %c0_15] : memref<128x256xf32, #tpu.memory_space<vmem>>, vector<128x256xf32>
      tpu.vector_store %arg6[%c0_14, %c0_15], %15 {strides = array<i32>} : memref<128x256xf32, #tpu.memory_space<vmem>>, vector<128x256xf32>,
    } else {
    }
    return
  }
  func.func @transform_0(%arg0: i32, %arg1: i32, %arg2: i32) -> (i32, i32) {
    %c0_i32 = arith.constant 0 : i32
    return %arg0, %arg2 : i32, i32
  }
  func.func @transform_1(%arg0: i32, %arg1: i32, %arg2: i32) -> (i32, i32) {
    %c0_i32 = arith.constant 0 : i32
    return %arg2, %arg1 : i32, i32
  }
  func.func @transform_2(%arg0: i32, %arg1: i32, %arg2: i32) -> (i32, i32) {
    %c0_i32 = arith.constant 0 : i32
    %c0_i32_0 = arith.constant 0 : i32
    return %c0_i32, %arg1 : i32, i32
  }
  func.func @transform_3(%arg0: i32, %arg1: i32, %arg2: i32) -> (i32, i32) {
    %c0_i32 = arith.constant 0 : i32
    return %arg0, %arg1 : i32, i32
  }
}

module attributes {stable_mosaic.version = 11 : i64} {
  func.func @_mm_kernel(%arg0: i32, %arg1: i32, %arg2: i32, %arg3: memref<256x32xbf16, #tpu.memory_space<vmem>>, %arg4: memref<32x128xbf16, #tpu.memory_space<vmem>>, %arg5: memref<1x128xf32, #tpu.memory_space<vmem>>, %arg6: memref<256x128xf32, #tpu.memory_space<vmem>>, %arg7: memref<256x128xf32, #tpu.memory_space<vmem>>) attributes {dimension_semantics = [#tpu.dimension_semantics<parallel>, #tpu.dimension_semantics<parallel>, #tpu.dimension_semantics<arbitrary>], iteration_bounds = array<i64: 2, 1, 1>, scalar_prefetch = 0 : i64, scratch_operands = 1 : i64, tpu.core_type = #tpu.core_type<tc>, window_params = [{transform_indices = @transform_0, window_bounds = array<i64: 256, 32>}, {transform_indices = @transform_1, window_bounds = array<i64: 32, 128>}, {transform_indices = @transform_2, window_bounds = array<i64: 1, 128>}, {transform_indices = @transform_3, window_bounds = array<i64: 256, 128>}]} {
    %c0_i32 = arith.constant 0 : i32
    %0 = arith.cmpi eq, %arg2, %c0_i32 : i32
    %1 = arith.extui %0 : i1 to i32
    %c0_i32_0 = arith.constant 0 : i32
    %2 = arith.cmpi ne, %1, %c0_i32_0 : i32
    scf.if %2 {
      %cst_10 = arith.constant 0.000000e+00 : f32
      %12 = vector.broadcast %cst_10 : f32 to vector<256x128xf32>
      %c0_11 = arith.constant 0 : index
      %c0_12 = arith.constant 0 : index
      %13 = vector.load %arg7[%c0_11, %c0_12] : memref<256x128xf32, #tpu.memory_space<vmem>>, vector<256x128xf32>
      tpu.vector_store %arg7[%c0_11, %c0_12], %12 {strides = array<i32>} : memref<256x128xf32, #tpu.memory_space<vmem>>, vector<256x128xf32>,
    } else {
    }
    %c0 = arith.constant 0 : index
    %c0_1 = arith.constant 0 : index
    %3 = vector.load %arg7[%c0, %c0_1] : memref<256x128xf32, #tpu.memory_space<vmem>>, vector<256x128xf32>
    %c0_2 = arith.constant 0 : index
    %c0_3 = arith.constant 0 : index
    %4 = vector.load %arg3[%c0_2, %c0_3] : memref<256x32xbf16, #tpu.memory_space<vmem>>, vector<256x32xbf16>
    %c0_4 = arith.constant 0 : index
    %c0_5 = arith.constant 0 : index
    %5 = vector.load %arg4[%c0_4, %c0_5] : memref<32x128xbf16, #tpu.memory_space<vmem>>, vector<32x128xbf16>
    %cst = arith.constant dense<0.000000e+00> : vector<256x128xf32>
    %6 = tpu.matmul %4, %5, %cst {dimension_numbers = #tpu.dot_dimension_numbers<[1], [0], [0], [1], [0, 0, 1, 1], [], []>} : vector<256x32xbf16>, vector<32x128xbf16>, vector<256x128xf32> -> vector<256x128xf32>
    %7 = arith.addf %3, %6 : vector<256x128xf32>
    %c0_6 = arith.constant 0 : index
    %c0_7 = arith.constant 0 : index
    %8 = vector.load %arg7[%c0_6, %c0_7] : memref<256x128xf32, #tpu.memory_space<vmem>>, vector<256x128xf32>
    tpu.vector_store %arg7[%c0_6, %c0_7], %7 {strides = array<i32>} : memref<256x128xf32, #tpu.memory_space<vmem>>, vector<256x128xf32>,
    %c0_i32_8 = arith.constant 0 : i32
    %9 = arith.cmpi eq, %arg2, %c0_i32_8 : i32
    %10 = arith.extui %9 : i1 to i32
    %c0_i32_9 = arith.constant 0 : i32
    %11 = arith.cmpi ne, %10, %c0_i32_9 : i32
    scf.if %11 {
      %c0_10 = arith.constant 0 : index
      %c0_11 = arith.constant 0 : index
      %12 = vector.load %arg7[%c0_10, %c0_11] : memref<256x128xf32, #tpu.memory_space<vmem>>, vector<256x128xf32>
      %c0_12 = arith.constant 0 : index
      %c0_13 = arith.constant 0 : index
      %13 = vector.load %arg5[%c0_12, %c0_13] : memref<1x128xf32, #tpu.memory_space<vmem>>, vector<1x128xf32>
      %14 = vector.broadcast %13 : vector<1x128xf32> to vector<256x128xf32>
      %15 = arith.addf %12, %14 : vector<256x128xf32>
      %c0_14 = arith.constant 0 : index
      %c0_15 = arith.constant 0 : index
      %16 = vector.load %arg6[%c0_14, %c0_15] : memref<256x128xf32, #tpu.memory_space<vmem>>, vector<256x128xf32>
      tpu.vector_store %arg6[%c0_14, %c0_15], %15 {strides = array<i32>} : memref<256x128xf32, #tpu.memory_space<vmem>>, vector<256x128xf32>,
    } else {
    }
    return
  }
  func.func @transform_0(%arg0: i32, %arg1: i32, %arg2: i32) -> (i32, i32) {
    %c0_i32 = arith.constant 0 : i32
    return %arg0, %arg2 : i32, i32
  }
  func.func @transform_1(%arg0: i32, %arg1: i32, %arg2: i32) -> (i32, i32) {
    %c0_i32 = arith.constant 0 : i32
    return %arg2, %arg1 : i32, i32
  }
  func.func @transform_2(%arg0: i32, %arg1: i32, %arg2: i32) -> (i32, i32) {
    %c0_i32 = arith.constant 0 : i32
    %c0_i32_0 = arith.constant 0 : i32
    return %c0_i32, %arg1 : i32, i32
  }
  func.func @transform_3(%arg0: i32, %arg1: i32, %arg2: i32) -> (i32, i32) {
    %c0_i32 = arith.constant 0 : i32
    return %arg0, %arg1 : i32, i32
  }
}

</mosaic_0001>

<llo_original>
// kernel: vae_forward.10
$region0: #{vae_forward.10}
  #allocation0 [shape = 'u32[]', space=smem, size = 0x4, offset = 0x4, fixed_abs, tag = 'smem constant byte address 0x4 - core index']
  #allocation1 [shape = 'u32[144,128]{1,0:T(1,128)}', space=vmem, size = 0x12000, scoped, tag = 'internal scratch']
  #allocation2 [shape = 'f32[256,128]{1,0:T(8,128)}', space=vmem, size = 0x20000, scoped, tag = 'scratch operand']
  %s0 = inlined_call_operand.vmem [shape: bf16[512,48], index: 0, kind: input, shape index: {}]
  %s1 = inlined_call_operand.vmem [shape: bf16[48,128], index: 1, kind: input, shape index: {}]
  %s2 = inlined_call_operand.vmem [shape: f32[1,128], index: 2, kind: input, shape index: {}]
  %s3 = inlined_call_operand.vmem [shape: f32[512,128], index: 3, kind: output, shape index: {}]
  %s4 = sld [smem:[#allocation0]]
  $region53: #{vae_forward.10} parent=0
    _
  %s6 = ssub.s32 1, %s4
  %s7 = scalar_select 0, %s6, %s4
  loop: start=0, step=1, limit=4
  $region2: #{vae_forward.10} parent=0 // loop_pre_header
    _
  $region3: #{vae_forward.10} parent=0 // loop_header
    %s9 = sphi 0, %s13
    %p10 = scmp.ge.s32.totalorder %s9, 4
    %s16 = sphi 0, %s35
    %s17 = sphi 0, %s31
    %s18 = sphi 0, %s27
    %s19 = sphi 0, %s16
    %s20 = sphi 0, %s17
    %s21 = sphi 0, %s18
    %s22 = sphi 0, %s19
    %s23 = sphi 0, %s20
    %s24 = sphi 0, %s21
    %s40 = sphi 0, %s42
    %s43 = sphi 0, %s40
    %s44 = sphi 0, %s43
    %s60 = sphi 0, %s44
    %s68 = sphi 0, %s70
    %s71 = sphi 0, %s68
    %s72 = sphi 0, %s71
    %s88 = sphi 0, %s72
    %s94 = sphi 0, %s96
    %s97 = sphi 0, %s94
    %s98 = sphi 0, %s97
    %s114 = sphi 0, %s98
    %s122 = sphi 0, %s124
    %s125 = sphi 0, %s122
    %s126 = sphi 0, %s125
    %s142 = sphi 0, %s126
  $region4: #{vae_forward.10} parent=0 // loop_header_branch
    %12 = sbr.rel (%p10) target = $region8
  $region5: #{vae_forward.10} parent=0 // loop_body
    %s14 = ssub.s32 %s9, 1
    %s15 = ssub.s32 %s9, 2
    %s25 = sadd.s32 1, %s18
    %p26 = scmp.ge.s32.totalorder %s25, 1
    %s27 = scalar_select %p26, 0, %s25
    %s28 = sadd.s32 1, %s17
    %s29 = scalar_select %p26, %s28, %s17
    %p30 = scmp.ge.s32.totalorder %s29, 1
    %s31 = scalar_select %p30, 0, %s29
    %s32 = sadd.s32 1, %s16
    %s33 = scalar_select %p30, %s32, %s16
    %p34 = scmp.ge.s32.totalorder %s33, 2
    %s35 = scalar_select %p34, 0, %s33
    %s36 = ssub.s32 %s16, %s35
    %s37 = ssub.s32 %s18, %s27
    %s38 = sor.u32 %s36, %s37
    %p39 = scmp.eq.s32.totalorder %s38, 0
    %s41 = sadd.s32 %s40, 1
    %s42 = scalar_select %p39, %s40, %s41
    %p45 = pneg %p39
    %p46 = scmp.eq.s32.totalorder %s9, 1
    %p47 = por %p45, %p46
    %p48 = scmp.ne.s32.totalorder %s40, %s43
    %p49 = scmp.eq.s32.totalorder %s9, 0
    %p50 = por %p48, %p49
    %p51 = scmp.ne.s32.totalorder %s40, %s43
    %p52 = scmp.eq.s32.totalorder %s14, 1
    %p53 = por %p51, %p52
    %p54 = scmp.ne.s32.totalorder %s43, %s44
    %p55 = scmp.eq.s32.totalorder %s14, 0
    %p56 = por %p54, %p55
    %p57 = scmp.ne.s32.totalorder %s43, %s44
    %p58 = scmp.eq.s32.totalorder %s15, 1
    %p59 = por %p57, %p58
    %p61 = scmp.ne.s32.totalorder %s44, %s60
    %p62 = scmp.eq.s32.totalorder %s15, 0
    %p63 = por %p61, %p62
    %s64 = ssub.s32 %s18, %s27
    %s65 = ssub.s32 %s17, %s31
    %s66 = sor.u32 %s64, %s65
    %p67 = scmp.eq.s32.totalorder %s66, 0
    %s69 = sadd.s32 %s68, 1
    %s70 = scalar_select %p67, %s68, %s69
    %p73 = pneg %p67
    %p74 = scmp.eq.s32.totalorder %s9, 1
    %p75 = por %p73, %p74
    %p76 = scmp.ne.s32.totalorder %s68, %s71
    %p77 = scmp.eq.s32.totalorder %s9, 0
    %p78 = por %p76, %p77
    %p79 = scmp.ne.s32.totalorder %s68, %s71
    %p80 = scmp.eq.s32.totalorder %s14, 1
    %p81 = por %p79, %p80
    %p82 = scmp.ne.s32.totalorder %s71, %s72
    %p83 = scmp.eq.s32.totalorder %s14, 0
    %p84 = por %p82, %p83
    %p85 = scmp.ne.s32.totalorder %s71, %s72
    %p86 = scmp.eq.s32.totalorder %s15, 1
    %p87 = por %p85, %p86
    %p89 = scmp.ne.s32.totalorder %s72, %s88
    %p90 = scmp.eq.s32.totalorder %s15, 0
    %p91 = por %p89, %p90
    %s92 = ssub.s32 %s17, %s31
    %p93 = scmp.eq.s32.totalorder %s92, 0
    %s95 = sadd.s32 %s94, 1
    %s96 = scalar_select %p93, %s94, %s95
    %p99 = pneg %p93
    %p100 = scmp.eq.s32.totalorder %s9, 1
    %p101 = por %p99, %p100
    %p102 = scmp.ne.s32.totalorder %s94, %s97
    %p103 = scmp.eq.s32.totalorder %s9, 0
    %p104 = por %p102, %p103
    %p105 = scmp.ne.s32.totalorder %s94, %s97
    %p106 = scmp.eq.s32.totalorder %s14, 1
    %p107 = por %p105, %p106
    %p108 = scmp.ne.s32.totalorder %s97, %s98
    %p109 = scmp.eq.s32.totalorder %s14, 0
    %p110 = por %p108, %p109
    %p111 = scmp.ne.s32.totalorder %s97, %s98
    %p112 = scmp.eq.s32.totalorder %s15, 1
    %p113 = por %p111, %p112
    %p115 = scmp.ne.s32.totalorder %s98, %s114
    %p116 = scmp.eq.s32.totalorder %s15, 0
    %p117 = por %p115, %p116
    %s118 = ssub.s32 %s16, %s35
    %s119 = ssub.s32 %s17, %s31
    %s120 = sor.u32 %s118, %s119
    %p121 = scmp.eq.s32.totalorder %s120, 0
    %s123 = sadd.s32 %s122, 1
    %s124 = scalar_select %p121, %s122, %s123
    %p127 = pneg %p121
    %p128 = scmp.eq.s32.totalorder %s9, 1
    %p129 = por %p127, %p128
    %p130 = scmp.ne.s32.totalorder %s122, %s125
    %p131 = scmp.eq.s32.totalorder %s9, 0
    %p132 = por %p130, %p131
    %p133 = scmp.ne.s32.totalorder %s122, %s125
    %p134 = scmp.eq.s32.totalorder %s14, 1
    %p135 = por %p133, %p134
    %p136 = scmp.ne.s32.totalorder %s125, %s126
    %p137 = scmp.eq.s32.totalorder %s14, 0
    %p138 = por %p136, %p137
    %p139 = scmp.ne.s32.totalorder %s125, %s126
    %p140 = scmp.eq.s32.totalorder %s15, 1
    %p141 = por %p139, %p140
    %p143 = scmp.ne.s32.totalorder %s126, %s142
    %p144 = scmp.eq.s32.totalorder %s15, 0
    %p145 = por %p143, %p144
    %p146 = scmp.le.s32.totalorder 1, %s9
    %p147 = scmp.lt.s32.totalorder %s9, 3
    %p148 = pnand %p146, %p147
    %p149 = pneg %p148
    // Predicated region
    $region9: #{vae_forward.10} parent=5 // pred_check
      _
    $region10: #{vae_forward.10} parent=5 // pred_check_branch
      %151 = sbr.rel (%p148) target = $region12
    $region11: #{vae_forward.10} parent=5 // pred_region
      %s152 = ssub.s32 %s9, 1
      // Predicated region
      $region13: #{vae_forward.10} parent=11 // pred_check
        %p153 = pneg %p84
      $region14: #{vae_forward.10} parent=11 // pred_check_branch
        %155 = sbr.rel (%p153) target = $region16
      $region15: #{vae_forward.10} parent=11 // pred_region
        %s156 = smul.u32 6, %s21
        %p157 = scmp.lt.s32.totalorder %s156, 5
        %s158 = scalar_select %p157, %s156, 5
        %p159 = scmp.lt.s32.totalorder %s20, 0
        %s160 = scalar_select %p159, %s20, 0
        %s161 = sadd.s32 %s160, %s158
        %s162 = smul.addr %s161, 4
        %s163 = scalar_lea.vmem %s1, %s162
        %s164 = smul.u32 6, %s21
      $region16: #{vae_forward.10} parent=11 // pred_fallthru
        _
      // Predicated region
      $region17: #{vae_forward.10} parent=11 // pred_check
        %p165 = pneg %p110
      $region18: #{vae_forward.10} parent=11 // pred_check_branch
        %167 = sbr.rel (%p165) target = $region20
      $region19: #{vae_forward.10} parent=11 // pred_region
        %p168 = scmp.lt.s32.totalorder %s20, 0
        %s169 = scalar_select %p168, %s20, 0
        %s170 = scalar_lea.vmem %s2, %s169
      $region20: #{vae_forward.10} parent=11 // pred_fallthru
        _
    $region12: #{vae_forward.10} parent=5 // pred_fallthru
      _
    %p171 = scmp.lt.s32.totalorder %s9, 2
    // Predicated region
    $region21: #{vae_forward.10} parent=5 // pred_check
      %p172 = pneg %p171
    $region22: #{vae_forward.10} parent=5 // pred_check_branch
      %174 = sbr.rel (%p172) target = $region24
    $region23: #{vae_forward.10} parent=5 // pred_region
      // Predicated region
      $region25: #{vae_forward.10} parent=23 // pred_check
        %p175 = pneg %p50
      $region26: #{vae_forward.10} parent=23 // pred_check_branch
        %177 = sbr.rel (%p175) target = $region28
      $region27: #{vae_forward.10} parent=23 // pred_region
        %s178 = smul.u32 32, %s16
        %p179 = scmp.lt.s32.totalorder %s178, 63
        %s180 = scalar_select %p179, %s178, 63
        %p181 = scmp.lt.s32.totalorder %s18, 0
        %s182 = scalar_select %p181, %s18, 0
        %s183 = sadd.s32 %s182, %s180
        %s184 = smul.addr %s183, 4
        %s185 = scalar_lea.vmem %s0, %s184
        %s186 = smul.u32 32, %s16
      $region28: #{vae_forward.10} parent=23 // pred_fallthru
        _
    $region24: #{vae_forward.10} parent=5 // pred_fallthru
      _
    %p187 = scmp.le.s32.totalorder 1, %s9
    %p188 = scmp.lt.s32.totalorder %s9, 3
    %p189 = pnand %p187, %p188
    %p190 = pneg %p189
    // Predicated region
    $region29: #{vae_forward.10} parent=5 // pred_check
      _
    $region30: #{vae_forward.10} parent=5 // pred_check_branch
      %192 = sbr.rel (%p189) target = $region32
    $region31: #{vae_forward.10} parent=5 // pred_region
      %s193 = ssub.s32 %s9, 1
      %s194 = smul.u32 32, %s19
      %p195 = scmp.lt.s32.totalorder %s194, 63
      %s196 = scalar_select %p195, %s194, 63
      %p197 = scmp.lt.s32.totalorder %s21, 0
      %s198 = scalar_select %p197, %s21, 0
      %s199 = sadd.s32 %s198, %s196
      %s200 = smul.addr %s199, 4
      %s201 = scalar_lea.vmem %s0, %s200
      %p202 = pneg %p56
      %p203 = pneg %p53
      %s204 = smul.u32 6, %s21
      %p205 = scmp.lt.s32.totalorder %s204, 5
      %s206 = scalar_select %p205, %s204, 5
      %p207 = scmp.lt.s32.totalorder %s20, 0
      %s208 = scalar_select %p207, %s20, 0
      %s209 = sadd.s32 %s208, %s206
      %s210 = smul.addr %s209, 4
      %s211 = scalar_lea.vmem %s1, %s210
      %p212 = pneg %p84
      %p213 = pneg %p81
      %p214 = scmp.lt.s32.totalorder %s20, 0
      %s215 = scalar_select %p214, %s20, 0
      %s216 = scalar_lea.vmem %s2, %s215
      %p217 = pneg %p110
      %p218 = pneg %p107
      %p219 = pneg %p138
      %p220 = pneg %p135
      %s221 = smul.u32 32, %s19
      %p222 = scmp.lt.s32.totalorder %s221, 63
      %s223 = scalar_select %p222, %s221, 63
      %p224 = scmp.lt.s32.totalorder %s20, 0
      %s225 = scalar_select %p224, %s20, 0
      %s226 = sadd.s32 %s225, %s223
      %s227 = smul.addr %s226, 8
      %s228 = scalar_lea.vmem %s3, %s227
      %s229 = smul.u32 32, %s19
      %p230 = scmp.lt.s32.totalorder %s229, 63
      %s231 = scalar_select %p230, %s229, 63
      %p232 = scmp.lt.s32.totalorder %s21, 0
      %s233 = scalar_select %p232, %s21, 0
      %s234 = sadd.s32 %s233, %s231
      %s235 = smul.addr %s234, 4
      %s236 = scalar_lea.vmem %s0, %s235
      %s237 = smul.u32 32, %s19
      %s238 = smul.u32 6, %s21
      %p239 = scmp.lt.s32.totalorder %s238, 5
      %s240 = scalar_select %p239, %s238, 5
      %p241 = scmp.lt.s32.totalorder %s20, 0
      %s242 = scalar_select %p241, %s20, 0
      %s243 = sadd.s32 %s242, %s240
      %s244 = smul.addr %s243, 4
      %s245 = scalar_lea.vmem %s1, %s244
      %s246 = smul.u32 6, %s21
      %p247 = scmp.lt.s32.totalorder %s20, 0
      %s248 = scalar_select %p247, %s20, 0
      %s249 = scalar_lea.vmem %s2, %s248
      %s250 = smul.u32 32, %s19
      %p251 = scmp.lt.s32.totalorder %s250, 63
      %s252 = scalar_select %p251, %s250, 63
      %p253 = scmp.lt.s32.totalorder %s20, 0
      %s254 = scalar_select %p253, %s20, 0
      %s255 = sadd.s32 %s254, %s252
      %s256 = smul.addr %s255, 8
      %s257 = scalar_lea.vmem %s3, %s256
      %s258 = smul.u32 32, %s19
      %p260 = scmp.eq.s32.totalorder %s21, 0
      // Predicated region
      $region33: #{vae_forward.10} parent=31 // pred_check
        %p261 = pneg %p260
      $region34: #{vae_forward.10} parent=31 // pred_check_branch
        %263 = sbr.rel (%p261) target = $region36
      $region35: #{vae_forward.10} parent=31 // pred_region
        %264 = vst [vmem:[#allocation2] sm:$0xff] 0.0
        %265 = vst [vmem:[#allocation2 + $0x8] sm:$0xff] 0.0
        %266 = vst [vmem:[#allocation2 + $0x10] sm:$0xff] 0.0
        %267 = vst [vmem:[#allocation2 + $0x18] sm:$0xff] 0.0
        %268 = vst [vmem:[#allocation2 + $0x20] sm:$0xff] 0.0
        %269 = vst [vmem:[#allocation2 + $0x28] sm:$0xff] 0.0
        %270 = vst [vmem:[#allocation2 + $0x30] sm:$0xff] 0.0
        %271 = vst [vmem:[#allocation2 + $0x38] sm:$0xff] 0.0
        %272 = vst [vmem:[#allocation2 + $0x40] sm:$0xff] 0.0
        %273 = vst [vmem:[#allocation2 + $0x48] sm:$0xff] 0.0
        %274 = vst [vmem:[#allocation2 + $0x50] sm:$0xff] 0.0
        %275 = vst [vmem:[#allocation2 + $0x58] sm:$0xff] 0.0
        %276 = vst [vmem:[#allocation2 + $0x60] sm:$0xff] 0.0
        %277 = vst [vmem:[#allocation2 + $0x68] sm:$0xff] 0.0
        %278 = vst [vmem:[#allocation2 + $0x70] sm:$0xff] 0.0
        %279 = vst [vmem:[#allocation2 + $0x78] sm:$0xff] 0.0
        %280 = vst [vmem:[#allocation2 + $0x80] sm:$0xff] 0.0
        %281 = vst [vmem:[#allocation2 + $0x88] sm:$0xff] 0.0
        %282 = vst [vmem:[#allocation2 + $0x90] sm:$0xff] 0.0
        %283 = vst [vmem:[#allocation2 + $0x98] sm:$0xff] 0.0
        %284 = vst [vmem:[#allocation2 + $0xa0] sm:$0xff] 0.0
        %285 = vst [vmem:[#allocation2 + $0xa8] sm:$0xff] 0.0
        %286 = vst [vmem:[#allocation2 + $0xb0] sm:$0xff] 0.0
        %287 = vst [vmem:[#allocation2 + $0xb8] sm:$0xff] 0.0
        %288 = vst [vmem:[#allocation2 + $0xc0] sm:$0xff] 0.0
        %289 = vst [vmem:[#allocation2 + $0xc8] sm:$0xff] 0.0
        %290 = vst [vmem:[#allocation2 + $0xd0] sm:$0xff] 0.0
        %291 = vst [vmem:[#allocation2 + $0xd8] sm:$0xff] 0.0
        %292 = vst [vmem:[#allocation2 + $0xe0] sm:$0xff] 0.0
        %293 = vst [vmem:[#allocation2 + $0xe8] sm:$0xff] 0.0
        %294 = vst [vmem:[#allocation2 + $0xf0] sm:$0xff] 0.0
        %295 = vst [vmem:[#allocation2 + $0xf8] sm:$0xff] 0.0
      $region36: #{vae_forward.10} parent=31 // pred_fallthru
        _
      %v296 = vld [vmem:[#allocation2] sm:$0xff]
      %v297 = vld [vmem:[#allocation2 + $0x8] sm:$0xff]
      %v298 = vld [vmem:[#allocation2 + $0x10] sm:$0xff]
      %v299 = vld [vmem:[#allocation2 + $0x18] sm:$0xff]
      %v300 = vld [vmem:[#allocation2 + $0x20] sm:$0xff]
      %v301 = vld [vmem:[#allocation2 + $0x28] sm:$0xff]
      %v302 = vld [vmem:[#allocation2 + $0x30] sm:$0xff]
      %v303 = vld [vmem:[#allocation2 + $0x38] sm:$0xff]
      %v304 = vld [vmem:[#allocation2 + $0x40] sm:$0xff]
      %v305 = vld [vmem:[#allocation2 + $0x48] sm:$0xff]
      %v306 = vld [vmem:[#allocation2 + $0x50] sm:$0xff]
      %v307 = vld [vmem:[#allocation2 + $0x58] sm:$0xff]
      %v308 = vld [vmem:[#allocation2 + $0x60] sm:$0xff]
      %v309 = vld [vmem:[#allocation2 + $0x68] sm:$0xff]
      %v310 = vld [vmem:[#allocation2 + $0x70] sm:$0xff]
      %v311 = vld [vmem:[#allocation2 + $0x78] sm:$0xff]
      %v312 = vld [vmem:[#allocation2 + $0x80] sm:$0xff]
      %v313 = vld [vmem:[#allocation2 + $0x88] sm:$0xff]
      %v314 = vld [vmem:[#allocation2 + $0x90] sm:$0xff]
      %v315 = vld [vmem:[#allocation2 + $0x98] sm:$0xff]
      %v316 = vld [vmem:[#allocation2 + $0xa0] sm:$0xff]
      %v317 = vld [vmem:[#allocation2 + $0xa8] sm:$0xff]
      %v318 = vld [vmem:[#allocation2 + $0xb0] sm:$0xff]
      %v319 = vld [vmem:[#allocation2 + $0xb8] sm:$0xff]
      %v320 = vld [vmem:[#allocation2 + $0xc0] sm:$0xff]
      %v321 = vld [vmem:[#allocation2 + $0xc8] sm:$0xff]
      %v322 = vld [vmem:[#allocation2 + $0xd0] sm:$0xff]
      %v323 = vld [vmem:[#allocation2 + $0xd8] sm:$0xff]
      %v324 = vld [vmem:[#allocation2 + $0xe0] sm:$0xff]
      %v325 = vld [vmem:[#allocation2 + $0xe8] sm:$0xff]
      %v326 = vld [vmem:[#allocation2 + $0xf0] sm:$0xff]
      %v327 = vld [vmem:[#allocation2 + $0xf8] sm:$0xff]
      %v328 = vld [vmem:[%s236] sm:$0xf]
      %v329 = vld [vmem:[%s236 + $0x4] sm:$0xf]
      %v330 = vld [vmem:[%s236 + $0x8] sm:$0xf]
      %v331 = vld [vmem:[%s236 + $0xc] sm:$0xf]
      %v332 = vld [vmem:[%s236 + $0x10] sm:$0xf]
      %v333 = vld [vmem:[%s236 + $0x14] sm:$0xf]
      %v334 = vld [vmem:[%s236 + $0x18] sm:$0xf]
      %v335 = vld [vmem:[%s236 + $0x1c] sm:$0xf]
      %v336 = vld [vmem:[%s236 + $0x20] sm:$0xf]
      %v337 = vld [vmem:[%s236 + $0x24] sm:$0xf]
      %v338 = vld [vmem:[%s236 + $0x28] sm:$0xf]
      %v339 = vld [vmem:[%s236 + $0x2c] sm:$0xf]
      %v340 = vld [vmem:[%s236 + $0x30] sm:$0xf]
      %v341 = vld [vmem:[%s236 + $0x34] sm:$0xf]
      %v342 = vld [vmem:[%s236 + $0x38] sm:$0xf]
      %v343 = vld [vmem:[%s236 + $0x3c] sm:$0xf]
      %v344 = vld [vmem:[%s236 + $0x40] sm:$0xf]
      %v345 = vld [vmem:[%s236 + $0x44] sm:$0xf]
      %v346 = vld [vmem:[%s236 + $0x48] sm:$0xf]
      %v347 = vld [vmem:[%s236 + $0x4c] sm:$0xf]
      %v348 = vld [vmem:[%s236 + $0x50] sm:$0xf]
      %v349 = vld [vmem:[%s236 + $0x54] sm:$0xf]
      %v350 = vld [vmem:[%s236 + $0x58] sm:$0xf]
      %v351 = vld [vmem:[%s236 + $0x5c] sm:$0xf]
      %v352 = vld [vmem:[%s236 + $0x60] sm:$0xf]
      %v353 = vld [vmem:[%s236 + $0x64] sm:$0xf]
      %v354 = vld [vmem:[%s236 + $0x68] sm:$0xf]
      %v355 = vld [vmem:[%s236 + $0x6c] sm:$0xf]
      %v356 = vld [vmem:[%s236 + $0x70] sm:$0xf]
      %v357 = vld [vmem:[%s236 + $0x74] sm:$0xf]
      %v358 = vld [vmem:[%s236 + $0x78] sm:$0xf]
      %v359 = vld [vmem:[%s236 + $0x7c] sm:$0xf]
      %v360 = vld [vmem:[%s245] sm:$0xf]
      %v361 = vld [vmem:[%s245 + $0x4] sm:$0xf]
      %v362 = vld [vmem:[%s245 + $0x8] sm:$0xf]
      %v363 = vld [vmem:[%s245 + $0xc] sm:$0xf]
      %v364 = vld [vmem:[%s245 + $0x10] sm:$0xf]
      %v365 = vld [vmem:[%s245 + $0x14] sm:$0xf]
      %v398 = vunpack.c.l.b16 %v328
      %v399 = vunpack.c.l.b16 %v329
      %v400 = vunpack.c.l.b16 %v330
      %v401 = vunpack.c.l.b16 %v331
      %v402 = vunpack.c.l.b16 %v332
      %v403 = vunpack.c.l.b16 %v333
      %v404 = vunpack.c.l.b16 %v334
      %v405 = vunpack.c.l.b16 %v335
      %v406 = vunpack.c.l.b16 %v336
      %v407 = vunpack.c.l.b16 %v337
      %v408 = vunpack.c.l.b16 %v338
      %v409 = vunpack.c.l.b16 %v339
      %v410 = vunpack.c.l.b16 %v340
      %v411 = vunpack.c.l.b16 %v341
      %v412 = vunpack.c.l.b16 %v342
      %v413 = vunpack.c.l.b16 %v343
      %v414 = vunpack.c.l.b16 %v344
      %v415 = vunpack.c.l.b16 %v345
      %v416 = vunpack.c.l.b16 %v346
      %v417 = vunpack.c.l.b16 %v347
      %v418 = vunpack.c.l.b16 %v348
      %v419 = vunpack.c.l.b16 %v349
      %v420 = vunpack.c.l.b16 %v350
      %v421 = vunpack.c.l.b16 %v351
      %v422 = vunpack.c.l.b16 %v352
      %v423 = vunpack.c.l.b16 %v353
      %v424 = vunpack.c.l.b16 %v354
      %v425 = vunpack.c.l.b16 %v355
      %v426 = vunpack.c.l.b16 %v356
      %v427 = vunpack.c.l.b16 %v357
      %v428 = vunpack.c.l.b16 %v358
      %v429 = vunpack.c.l.b16 %v359
      %v430 = vpack.c.b16 %v399, %v398
      %v431 = vpack.c.b16 %v401, %v400
      %v432 = vpack.c.b16 %v403, %v402
      %v433 = vpack.c.b16 %v405, %v404
      %v434 = vpack.c.b16 %v407, %v406
      %v435 = vpack.c.b16 %v409, %v408
      %v436 = vpack.c.b16 %v411, %v410
      %v437 = vpack.c.b16 %v413, %v412
      %v438 = vpack.c.b16 %v415, %v414
      %v439 = vpack.c.b16 %v417, %v416
      %v440 = vpack.c.b16 %v419, %v418
      %v441 = vpack.c.b16 %v421, %v420
      %v442 = vpack.c.b16 %v423, %v422
      %v443 = vpack.c.b16 %v425, %v424
      %v444 = vpack.c.b16 %v427, %v426
      %v445 = vpack.c.b16 %v429, %v428
      %v452 = vunpack.c.l.b16 %v360
      %v453 = vunpack.c.l.b16 %v361
      %v454 = vunpack.c.l.b16 %v362
      %v455 = vunpack.c.l.b16 %v363
      %v456 = vunpack.c.l.b16 %v364
      %v457 = vunpack.c.l.b16 %v365
      %v458 = vpack.c.b16 %v453, %v452
      %v459 = vpack.c.b16 %v455, %v454
      %v460 = vpack.c.b16 %v457, %v456
      %vm464 = vcmask 392192
      %v466 = vsel %vm464, %v430, 0
      %v469 = vsel %vm464, %v431, 0
      %v472 = vsel %vm464, %v432, 0
      %v475 = vsel %vm464, %v433, 0
      %v478 = vsel %vm464, %v434, 0
      %v481 = vsel %vm464, %v435, 0
      %v484 = vsel %vm464, %v436, 0
      %v487 = vsel %vm464, %v437, 0
      %v490 = vsel %vm464, %v438, 0
      %v493 = vsel %vm464, %v439, 0
      %v496 = vsel %vm464, %v440, 0
      %v499 = vsel %vm464, %v441, 0
      %v502 = vsel %vm464, %v442, 0
      %v505 = vsel %vm464, %v443, 0
      %v508 = vsel %vm464, %v444, 0
      %v511 = vsel %vm464, %v445, 0
      %513 = vmatprep.subr.bf16.mxu0 0
      %514 = vmatpush1.bf16.msra.mxu0 %v458
      %515 = vmatprep.subr.bf16.mxu0 0
      %516 = vmatpush1.bf16.msra.mxu0 %v459
      %517 = vmatprep.subr.bf16.mxu0 0
      %518 = vmatpush1.bf16.msra.mxu0 %v460
      %519 = vmatprep.subr.bf16.mxu0 0
      %520 = vmatpush1.bf16.msra.mxu0 0
      %521 = vmatprep.subr.bf16.mxu0 0
      %522 = vmatpush1.bf16.msra.mxu0 0
      %523 = vmatprep.subr.bf16.mxu0 0
      %524 = vmatpush1.bf16.msra.mxu0 0
      %525 = vmatprep.subr.bf16.mxu0 0
      %526 = vmatpush1.bf16.msra.mxu0 0
      %527 = vmatprep.subr.bf16.mxu0 0
      %528 = vmatpush1.bf16.msra.mxu0 0
      %529 = vmatprep.subr.bf16.mxu0 0
      %530 = vmatpush1.bf16.msra.mxu0 0
      %531 = vmatprep.subr.bf16.mxu0 0
      %532 = vmatpush1.bf16.msra.mxu0 0
      %533 = vmatprep.subr.bf16.mxu0 0
      %534 = vmatpush1.bf16.msra.mxu0 0
      %535 = vmatprep.subr.bf16.mxu0 0
      %536 = vmatpush1.bf16.msra.mxu0 0
      %537 = vmatprep.subr.bf16.mxu0 0
      %538 = vmatpush1.bf16.msra.mxu0 0
      %539 = vmatprep.subr.bf16.mxu0 0
      %540 = vmatpush1.bf16.msra.mxu0 0
      %541 = vmatprep.subr.bf16.mxu0 0
      %542 = vmatpush1.bf16.msra.mxu0 0
      %543 = vmatprep.subr.bf16.mxu0 0
      %544 = vmatpush1.bf16.msra.mxu0 0
      %545 = vmatprep.mubr.bf16.mxu0 0
      %546 = vmatmul.mubr.bf16.gmra.mrb[0].mxu0 %v466
      %v547 = vpop.f32.mrb[0].mxu0
      %v548 = vadd.f32 0.0, %v547
      %v549 = vpop.f32.mrb[0].mxu0
      %v550 = vpop.f32.mrb[0].mxu0
      %v551 = vadd.f32 0.0, %v550
      %v552 = vpop.f32.mrb[0].mxu0
      %553 = vmatprep.mubr.bf16.mxu0 0
      %554 = vmatmul.mubr.bf16.gmra.mrb[0].mxu0 %v469
      %v555 = vpop.f32.mrb[0].mxu0
      %v556 = vadd.f32 0.0, %v555
      %v557 = vpop.f32.mrb[0].mxu0
      %v558 = vpop.f32.mrb[0].mxu0
      %v559 = vadd.f32 0.0, %v558
      %v560 = vpop.f32.mrb[0].mxu0
      %561 = vmatprep.mubr.bf16.mxu0 0
      %562 = vmatmul.mubr.bf16.gmra.mrb[0].mxu0 %v472
      %v563 = vpop.f32.mrb[0].mxu0
      %v564 = vadd.f32 0.0, %v563
      %v565 = vpop.f32.mrb[0].mxu0
      %v566 = vpop.f32.mrb[0].mxu0
      %v567 = vadd.f32 0.0, %v566
      %v568 = vpop.f32.mrb[0].mxu0
      %569 = vmatprep.mubr.bf16.mxu0 0
      %570 = vmatmul.mubr.bf16.gmra.mrb[0].mxu0 %v475
      %v571 = vpop.f32.mrb[0].mxu0
      %v572 = vadd.f32 0.0, %v571
      %v573 = vpop.f32.mrb[0].mxu0
      %v574 = vpop.f32.mrb[0].mxu0
      %v575 = vadd.f32 0.0, %v574
      %v576 = vpop.f32.mrb[0].mxu0
      %577 = vmatprep.mubr.bf16.mxu0 0
      %578 = vmatmul.mubr.bf16.gmra.mrb[0].mxu0 %v478
      %v579 = vpop.f32.mrb[0].mxu0
      %v580 = vadd.f32 0.0, %v579
      %v581 = vpop.f32.mrb[0].mxu0
      %v582 = vpop.f32.mrb[0].mxu0
      %v583 = vadd.f32 0.0, %v582
      %v584 = vpop.f32.mrb[0].mxu0
      %585 = vmatprep.mubr.bf16.mxu0 0
      %586 = vmatmul.mubr.bf16.gmra.mrb[0].mxu0 %v481
      %v587 = vpop.f32.mrb[0].mxu0
      %v588 = vadd.f32 0.0, %v587
      %v589 = vpop.f32.mrb[0].mxu0
      %v590 = vpop.f32.mrb[0].mxu0
      %v591 = vadd.f32 0.0, %v590
      %v592 = vpop.f32.mrb[0].mxu0
      %593 = vmatprep.mubr.bf16.mxu0 0
      %594 = vmatmul.mubr.bf16.gmra.mrb[0].mxu0 %v484
      %v595 = vpop.f32.mrb[0].mxu0
      %v596 = vadd.f32 0.0, %v595
      %v597 = vpop.f32.mrb[0].mxu0
      %v598 = vpop.f32.mrb[0].mxu0
      %v599 = vadd.f32 0.0, %v598
      %v600 = vpop.f32.mrb[0].mxu0
      %601 = vmatprep.mubr.bf16.mxu0 0
      %602 = vmatmul.mubr.bf16.gmra.mrb[0].mxu0 %v487
      %v603 = vpop.f32.mrb[0].mxu0
      %v604 = vadd.f32 0.0, %v603
      %v605 = vpop.f32.mrb[0].mxu0
      %v606 = vpop.f32.mrb[0].mxu0
      %v607 = vadd.f32 0.0, %v606
      %v608 = vpop.f32.mrb[0].mxu0
      %609 = vmatprep.mubr.bf16.mxu0 0
      %610 = vmatmul.mubr.bf16.gmra.mrb[0].mxu0 %v490
      %v611 = vpop.f32.mrb[0].mxu0
      %v612 = vadd.f32 0.0, %v611
      %v613 = vpop.f32.mrb[0].mxu0
      %v614 = vpop.f32.mrb[0].mxu0
      %v615 = vadd.f32 0.0, %v614
      %v616 = vpop.f32.mrb[0].mxu0
      %617 = vmatprep.mubr.bf16.mxu0 0
      %618 = vmatmul.mubr.bf16.gmra.mrb[0].mxu0 %v493
      %v619 = vpop.f32.mrb[0].mxu0
      %v620 = vadd.f32 0.0, %v619
      %v621 = vpop.f32.mrb[0].mxu0
      %v622 = vpop.f32.mrb[0].mxu0
      %v623 = vadd.f32 0.0, %v622
      %v624 = vpop.f32.mrb[0].mxu0
      %625 = vmatprep.mubr.bf16.mxu0 0
      %626 = vmatmul.mubr.bf16.gmra.mrb[0].mxu0 %v496
      %v627 = vpop.f32.mrb[0].mxu0
      %v628 = vadd.f32 0.0, %v627
      %v629 = vpop.f32.mrb[0].mxu0
      %v630 = vpop.f32.mrb[0].mxu0
      %v631 = vadd.f32 0.0, %v630
      %v632 = vpop.f32.mrb[0].mxu0
      %633 = vmatprep.mubr.bf16.mxu0 0
      %634 = vmatmul.mubr.bf16.gmra.mrb[0].mxu0 %v499
      %v635 = vpop.f32.mrb[0].mxu0
      %v636 = vadd.f32 0.0, %v635
      %v637 = vpop.f32.mrb[0].mxu0
      %v638 = vpop.f32.mrb[0].mxu0
      %v639 = vadd.f32 0.0, %v638
      %v640 = vpop.f32.mrb[0].mxu0
      %641 = vmatprep.mubr.bf16.mxu0 0
      %642 = vmatmul.mubr.bf16.gmra.mrb[0].mxu0 %v502
      %v643 = vpop.f32.mrb[0].mxu0
      %v644 = vadd.f32 0.0, %v643
      %v645 = vpop.f32.mrb[0].mxu0
      %v646 = vpop.f32.mrb[0].mxu0
      %v647 = vadd.f32 0.0, %v646
      %v648 = vpop.f32.mrb[0].mxu0
      %649 = vmatprep.mubr.bf16.mxu0 0
      %650 = vmatmul.mubr.bf16.gmra.mrb[0].mxu0 %v505
      %v651 = vpop.f32.mrb[0].mxu0
      %v652 = vadd.f32 0.0, %v651
      %v653 = vpop.f32.mrb[0].mxu0
      %v654 = vpop.f32.mrb[0].mxu0
      %v655 = vadd.f32 0.0, %v654
      %v656 = vpop.f32.mrb[0].mxu0
      %657 = vmatprep.mubr.bf16.mxu0 0
      %658 = vmatmul.mubr.bf16.gmra.mrb[0].mxu0 %v508
      %v659 = vpop.f32.mrb[0].mxu0
      %v660 = vadd.f32 0.0, %v659
      %v661 = vpop.f32.mrb[0].mxu0
      %v662 = vpop.f32.mrb[0].mxu0
      %v663 = vadd.f32 0.0, %v662
      %v664 = vpop.f32.mrb[0].mxu0
      %665 = vmatprep.mubr.bf16.mxu0 0
      %666 = vmatmul.mubr.bf16.gmra.mrb[0].mxu0 %v511
      %v667 = vpop.f32.mrb[0].mxu0
      %v668 = vadd.f32 0.0, %v667
      %v669 = vpop.f32.mrb[0].mxu0
      %v670 = vpop.f32.mrb[0].mxu0
      %v671 = vadd.f32 0.0, %v670
      %v672 = vpop.f32.mrb[0].mxu0
      %673 = vdwg.mxu0
      %v674 = vadd.f32 %v296, %v548
      %v675 = vadd.f32 %v297, %v551
      %v676 = vadd.f32 %v298, %v556
      %v677 = vadd.f32 %v299, %v559
      %v678 = vadd.f32 %v300, %v564
      %v679 = vadd.f32 %v301, %v567
      %v680 = vadd.f32 %v302, %v572
      %v681 = vadd.f32 %v303, %v575
      %v682 = vadd.f32 %v304, %v580
      %v683 = vadd.f32 %v305, %v583
      %v684 = vadd.f32 %v306, %v588
      %v685 = vadd.f32 %v307, %v591
      %v686 = vadd.f32 %v308, %v596
      %v687 = vadd.f32 %v309, %v599
      %v688 = vadd.f32 %v310, %v604
      %v689 = vadd.f32 %v311, %v607
      %v690 = vadd.f32 %v312, %v612
      %v691 = vadd.f32 %v313, %v615
      %v692 = vadd.f32 %v314, %v620
      %v693 = vadd.f32 %v315, %v623
      %v694 = vadd.f32 %v316, %v628
      %v695 = vadd.f32 %v317, %v631
      %v696 = vadd.f32 %v318, %v636
      %v697 = vadd.f32 %v319, %v639
      %v698 = vadd.f32 %v320, %v644
      %v699 = vadd.f32 %v321, %v647
      %v700 = vadd.f32 %v322, %v652
      %v701 = vadd.f32 %v323, %v655
      %v702 = vadd.f32 %v324, %v660
      %v703 = vadd.f32 %v325, %v663
      %v704 = vadd.f32 %v326, %v668
      %v705 = vadd.f32 %v327, %v671
      %706 = vst [vmem:[#allocation2] sm:$0xff] %v674
      %707 = vst [vmem:[#allocation2 + $0x8] sm:$0xff] %v675
      %708 = vst [vmem:[#allocation2 + $0x10] sm:$0xff] %v676
      %709 = vst [vmem:[#allocation2 + $0x18] sm:$0xff] %v677
      %710 = vst [vmem:[#allocation2 + $0x20] sm:$0xff] %v678
      %711 = vst [vmem:[#allocation2 + $0x28] sm:$0xff] %v679
      %712 = vst [vmem:[#allocation2 + $0x30] sm:$0xff] %v680
      %713 = vst [vmem:[#allocation2 + $0x38] sm:$0xff] %v681
      %714 = vst [vmem:[#allocation2 + $0x40] sm:$0xff] %v682
      %715 = vst [vmem:[#allocation2 + $0x48] sm:$0xff] %v683
      %716 = vst [vmem:[#allocation2 + $0x50] sm:$0xff] %v684
      %717 = vst [vmem:[#allocation2 + $0x58] sm:$0xff] %v685
      %718 = vst [vmem:[#allocation2 + $0x60] sm:$0xff] %v686
      %719 = vst [vmem:[#allocation2 + $0x68] sm:$0xff] %v687
      %720 = vst [vmem:[#allocation2 + $0x70] sm:$0xff] %v688
      %721 = vst [vmem:[#allocation2 + $0x78] sm:$0xff] %v689
      %722 = vst [vmem:[#allocation2 + $0x80] sm:$0xff] %v690
      %723 = vst [vmem:[#allocation2 + $0x88] sm:$0xff] %v691
      %724 = vst [vmem:[#allocation2 + $0x90] sm:$0xff] %v692
      %725 = vst [vmem:[#allocation2 + $0x98] sm:$0xff] %v693
      %726 = vst [vmem:[#allocation2 + $0xa0] sm:$0xff] %v694
      %727 = vst [vmem:[#allocation2 + $0xa8] sm:$0xff] %v695
      %728 = vst [vmem:[#allocation2 + $0xb0] sm:$0xff] %v696
      %729 = vst [vmem:[#allocation2 + $0xb8] sm:$0xff] %v697
      %730 = vst [vmem:[#allocation2 + $0xc0] sm:$0xff] %v698
      %731 = vst [vmem:[#allocation2 + $0xc8] sm:$0xff] %v699
      %732 = vst [vmem:[#allocation2 + $0xd0] sm:$0xff] %v700
      %733 = vst [vmem:[#allocation2 + $0xd8] sm:$0xff] %v701
      %734 = vst [vmem:[#allocation2 + $0xe0] sm:$0xff] %v702
      %735 = vst [vmem:[#allocation2 + $0xe8] sm:$0xff] %v703
      %736 = vst [vmem:[#allocation2 + $0xf0] sm:$0xff] %v704
      %737 = vst [vmem:[#allocation2 + $0xf8] sm:$0xff] %v705
      // Predicated region
      $region37: #{vae_forward.10} parent=31 // pred_check
        %p738 = pneg %p260
      $region38: #{vae_forward.10} parent=31 // pred_check_branch
        %740 = sbr.rel (%p738) target = $region40
      $region39: #{vae_forward.10} parent=31 // pred_region
        %v741 = vld [vmem:[#allocation2] sm:$0xff]
        %v742 = vld [vmem:[#allocation2 + $0x8] sm:$0xff]
        %v743 = vld [vmem:[#allocation2 + $0x10] sm:$0xff]
        %v744 = vld [vmem:[#allocation2 + $0x18] sm:$0xff]
        %v745 = vld [vmem:[#allocation2 + $0x20] sm:$0xff]
        %v746 = vld [vmem:[#allocation2 + $0x28] sm:$0xff]
        %v747 = vld [vmem:[#allocation2 + $0x30] sm:$0xff]
        %v748 = vld [vmem:[#allocation2 + $0x38] sm:$0xff]
        %v749 = vld [vmem:[#allocation2 + $0x40] sm:$0xff]
        %v750 = vld [vmem:[#allocation2 + $0x48] sm:$0xff]
        %v751 = vld [vmem:[#allocation2 + $0x50] sm:$0xff]
        %v752 = vld [vmem:[#allocation2 + $0x58] sm:$0xff]
        %v753 = vld [vmem:[#allocation2 + $0x60] sm:$0xff]
        %v754 = vld [vmem:[#allocation2 + $0x68] sm:$0xff]
        %v755 = vld [vmem:[#allocation2 + $0x70] sm:$0xff]
        %v756 = vld [vmem:[#allocation2 + $0x78] sm:$0xff]
        %v757 = vld [vmem:[#allocation2 + $0x80] sm:$0xff]
        %v758 = vld [vmem:[#allocation2 + $0x88] sm:$0xff]
        %v759 = vld [vmem:[#allocation2 + $0x90] sm:$0xff]
        %v760 = vld [vmem:[#allocation2 + $0x98] sm:$0xff]
        %v761 = vld [vmem:[#allocation2 + $0xa0] sm:$0xff]
        %v762 = vld [vmem:[#allocation2 + $0xa8] sm:$0xff]
        %v763 = vld [vmem:[#allocation2 + $0xb0] sm:$0xff]
        %v764 = vld [vmem:[#allocation2 + $0xb8] sm:$0xff]
        %v765 = vld [vmem:[#allocation2 + $0xc0] sm:$0xff]
        %v766 = vld [vmem:[#allocation2 + $0xc8] sm:$0xff]
        %v767 = vld [vmem:[#allocation2 + $0xd0] sm:$0xff]
        %v768 = vld [vmem:[#allocation2 + $0xd8] sm:$0xff]
        %v769 = vld [vmem:[#allocation2 + $0xe0] sm:$0xff]
        %v770 = vld [vmem:[#allocation2 + $0xe8] sm:$0xff]
        %v771 = vld [vmem:[#allocation2 + $0xf0] sm:$0xff]
        %v772 = vld [vmem:[#allocation2 + $0xf8] sm:$0xff]
        %v773 = vld [vmem:[%s249] sm:$0x1]
        %v775 = vlaneseq
        %v776 = vshrl.u32 %v775, 7
        %v777 = vsub.s32 0, %v776
        %v778 = vrot.slane %v773, %v777
        %v780 = vadd.f32 %v741, %v778
        %v781 = vadd.f32 %v742, %v778
        %v782 = vadd.f32 %v743, %v778
        %v783 = vadd.f32 %v744, %v778
        %v784 = vadd.f32 %v745, %v778
        %v785 = vadd.f32 %v746, %v778
        %v786 = vadd.f32 %v747, %v778
        %v787 = vadd.f32 %v748, %v778
        %v788 = vadd.f32 %v749, %v778
        %v789 = vadd.f32 %v750, %v778
        %v790 = vadd.f32 %v751, %v778
        %v791 = vadd.f32 %v752, %v778
        %v792 = vadd.f32 %v753, %v778
        %v793 = vadd.f32 %v754, %v778
        %v794 = vadd.f32 %v755, %v778
        %v795 = vadd.f32 %v756, %v778
        %v796 = vadd.f32 %v757, %v778
        %v797 = vadd.f32 %v758, %v778
        %v798 = vadd.f32 %v759, %v778
        %v799 = vadd.f32 %v760, %v778
        %v800 = vadd.f32 %v761, %v778
        %v801 = vadd.f32 %v762, %v778
        %v802 = vadd.f32 %v763, %v778
        %v803 = vadd.f32 %v764, %v778
        %v804 = vadd.f32 %v765, %v778
        %v805 = vadd.f32 %v766, %v778
        %v806 = vadd.f32 %v767, %v778
        %v807 = vadd.f32 %v768, %v778
        %v808 = vadd.f32 %v769, %v778
        %v809 = vadd.f32 %v770, %v778
        %v810 = vadd.f32 %v771, %v778
        %v811 = vadd.f32 %v772, %v778
        %v812 = vmax.f32 %v780, 0.0
        %v813 = vmax.f32 %v781, 0.0
        %v814 = vmax.f32 %v782, 0.0
        %v815 = vmax.f32 %v783, 0.0
        %v816 = vmax.f32 %v784, 0.0
        %v817 = vmax.f32 %v785, 0.0
        %v818 = vmax.f32 %v786, 0.0
        %v819 = vmax.f32 %v787, 0.0
        %v820 = vmax.f32 %v788, 0.0
        %v821 = vmax.f32 %v789, 0.0
        %v822 = vmax.f32 %v790, 0.0
        %v823 = vmax.f32 %v791, 0.0
        %v824 = vmax.f32 %v792, 0.0
        %v825 = vmax.f32 %v793, 0.0
        %v826 = vmax.f32 %v794, 0.0
        %v827 = vmax.f32 %v795, 0.0
        %v828 = vmax.f32 %v796, 0.0
        %v829 = vmax.f32 %v797, 0.0
        %v830 = vmax.f32 %v798, 0.0
        %v831 = vmax.f32 %v799, 0.0
        %v832 = vmax.f32 %v800, 0.0
        %v833 = vmax.f32 %v801, 0.0
        %v834 = vmax.f32 %v802, 0.0
        %v835 = vmax.f32 %v803, 0.0
        %v836 = vmax.f32 %v804, 0.0
        %v837 = vmax.f32 %v805, 0.0
        %v838 = vmax.f32 %v806, 0.0
        %v839 = vmax.f32 %v807, 0.0
        %v840 = vmax.f32 %v808, 0.0
        %v841 = vmax.f32 %v809, 0.0
        %v842 = vmax.f32 %v810, 0.0
        %v843 = vmax.f32 %v811, 0.0
        %844 = vst [vmem:[%s257] sm:$0xff] %v812
        %845 = vst [vmem:[%s257 + $0x8] sm:$0xff] %v813
        %846 = vst [vmem:[%s257 + $0x10] sm:$0xff] %v814
        %847 = vst [vmem:[%s257 + $0x18] sm:$0xff] %v815
        %848 = vst [vmem:[%s257 + $0x20] sm:$0xff] %v816
        %849 = vst [vmem:[%s257 + $0x28] sm:$0xff] %v817
        %850 = vst [vmem:[%s257 + $0x30] sm:$0xff] %v818
        %851 = vst [vmem:[%s257 + $0x38] sm:$0xff] %v819
        %852 = vst [vmem:[%s257 + $0x40] sm:$0xff] %v820
        %853 = vst [vmem:[%s257 + $0x48] sm:$0xff] %v821
        %854 = vst [vmem:[%s257 + $0x50] sm:$0xff] %v822
        %855 = vst [vmem:[%s257 + $0x58] sm:$0xff] %v823
        %856 = vst [vmem:[%s257 + $0x60] sm:$0xff] %v824
        %857 = vst [vmem:[%s257 + $0x68] sm:$0xff] %v825
        %858 = vst [vmem:[%s257 + $0x70] sm:$0xff] %v826
        %859 = vst [vmem:[%s257 + $0x78] sm:$0xff] %v827
        %860 = vst [vmem:[%s257 + $0x80] sm:$0xff] %v828
        %861 = vst [vmem:[%s257 + $0x88] sm:$0xff] %v829
        %862 = vst [vmem:[%s257 + $0x90] sm:$0xff] %v830
        %863 = vst [vmem:[%s257 + $0x98] sm:$0xff] %v831
        %864 = vst [vmem:[%s257 + $0xa0] sm:$0xff] %v832
        %865 = vst [vmem:[%s257 + $0xa8] sm:$0xff] %v833
        %866 = vst [vmem:[%s257 + $0xb0] sm:$0xff] %v834
        %867 = vst [vmem:[%s257 + $0xb8] sm:$0xff] %v835
        %868 = vst [vmem:[%s257 + $0xc0] sm:$0xff] %v836
        %869 = vst [vmem:[%s257 + $0xc8] sm:$0xff] %v837
        %870 = vst [vmem:[%s257 + $0xd0] sm:$0xff] %v838
        %871 = vst [vmem:[%s257 + $0xd8] sm:$0xff] %v839
        %872 = vst [vmem:[%s257 + $0xe0] sm:$0xff] %v840
        %873 = vst [vmem:[%s257 + $0xe8] sm:$0xff] %v841
        %874 = vst [vmem:[%s257 + $0xf0] sm:$0xff] %v842
        %875 = vst [vmem:[%s257 + $0xf8] sm:$0xff] %v843
      $region40: #{vae_forward.10} parent=31 // pred_fallthru
        _
      %s876 = smul.u32 32, %s19
      %p877 = scmp.lt.s32.totalorder %s876, 63
      %s878 = scalar_select %p877, %s876, 63
      %p879 = scmp.lt.s32.totalorder %s20, 0
      %s880 = scalar_select %p879, %s20, 0
      %s881 = sadd.s32 %s880, %s878
      %s882 = smul.addr %s881, 8
      %s883 = scalar_lea.vmem %s3, %s882
      // Predicated region
      $region41: #{vae_forward.10} parent=31 // pred_check
        %p884 = pneg %p135
      $region42: #{vae_forward.10} parent=31 // pred_check_branch
        %886 = sbr.rel (%p884) target = $region44
      $region43: #{vae_forward.10} parent=31 // pred_region
        %s887 = smul.u32 32, %s19
      $region44: #{vae_forward.10} parent=31 // pred_fallthru
        _
    $region32: #{vae_forward.10} parent=5 // pred_fallthru
      _
    %p888 = scmp.le.s32.totalorder 2, %s9
    // Predicated region
    $region45: #{vae_forward.10} parent=5 // pred_check
      %p889 = pneg %p888
    $region46: #{vae_forward.10} parent=5 // pred_check_branch
      %891 = sbr.rel (%p889) target = $region48
    $region47: #{vae_forward.10} parent=5 // pred_region
      %s892 = ssub.s32 %s9, 2
      // Predicated region
      $region49: #{vae_forward.10} parent=47 // pred_check
        %p893 = pneg %p141
      $region50: #{vae_forward.10} parent=47 // pred_check_branch
        %895 = sbr.rel (%p893) target = $region52
      $region51: #{vae_forward.10} parent=47 // pred_region
        %s896 = smul.u32 32, %s22
        %p897 = scmp.lt.s32.totalorder %s896, 63
        %s898 = scalar_select %p897, %s896, 63
        %p899 = scmp.lt.s32.totalorder %s23, 0
        %s900 = scalar_select %p899, %s23, 0
        %s901 = sadd.s32 %s900, %s898
        %s902 = smul.addr %s901, 8
        %s903 = scalar_lea.vmem %s3, %s902
      $region52: #{vae_forward.10} parent=47 // pred_fallthru
        _
    $region48: #{vae_forward.10} parent=5 // pred_fallthru
      _
  $region6: #{vae_forward.10} parent=0 // loop_footer
    %s13 = sadd.s32 1, %s9
  $region7: #{vae_forward.10} parent=0 // loop_footer_branch
    %8 = sbr.rel target = $region3
  $region8: #{vae_forward.10} parent=0 // loop_exit
    _

// kernel: vae_forward.11
$region0: #{vae_forward.11}
  #allocation0 [shape = 'u32[]', space=smem, size = 0x4, offset = 0x4, fixed_abs, tag = 'smem constant byte address 0x4 - core index']
  #allocation1 [shape = 'u32[144,128]{1,0:T(1,128)}', space=vmem, size = 0x12000, scoped, tag = 'internal scratch']
  #allocation2 [shape = 'f32[128,128]{1,0:T(8,128)}', space=vmem, size = 0x10000, scoped, tag = 'scratch operand']
  %s0 = inlined_call_operand.vmem [shape: bf16[128,512], index: 0, kind: input, shape index: {}]
  %s1 = inlined_call_operand.vmem [shape: bf16[512,128], index: 1, kind: input, shape index: {}]
  %s2 = inlined_call_operand.vmem [shape: f32[1,128], index: 2, kind: input, shape index: {}]
  %s3 = inlined_call_operand.vmem [shape: f32[128,128], index: 3, kind: output, shape index: {}]
  %s4 = sld [smem:[#allocation0]]
  $region30: #{vae_forward.11} parent=0
    _
  %s6 = ssub.s32 1, %s4
  %s7 = scalar_select 0, %s6, %s4
  // Predicated region
  $region2: #{vae_forward.11} parent=0 // pred_check
    _
  $region3: #{vae_forward.11} parent=0 // pred_check_branch
    %9 = sbr.rel (0) target = $region5
  $region4: #{vae_forward.11} parent=0 // pred_region
    _
  $region5: #{vae_forward.11} parent=0 // pred_fallthru
    _
  // Predicated region
  $region6: #{vae_forward.11} parent=0 // pred_check
    _
  $region7: #{vae_forward.11} parent=0 // pred_check_branch
    %11 = sbr.rel (0) target = $region9
  $region8: #{vae_forward.11} parent=0 // pred_region
    _
  $region9: #{vae_forward.11} parent=0 // pred_fallthru
    _
  // Predicated region
  $region10: #{vae_forward.11} parent=0 // pred_check
    _
  $region11: #{vae_forward.11} parent=0 // pred_check_branch
    %13 = sbr.rel (0) target = $region13
  $region12: #{vae_forward.11} parent=0 // pred_region
    _
  $region13: #{vae_forward.11} parent=0 // pred_fallthru
    _
  %p15 = scmp.eq.s32.totalorder 0, 0
  // Predicated region
  $region14: #{vae_forward.11} parent=0 // pred_check
    %p16 = pneg %p15
  $region15: #{vae_forward.11} parent=0 // pred_check_branch
    %18 = sbr.rel (%p16) target = $region17
  $region16: #{vae_forward.11} parent=0 // pred_region
    %19 = vst [vmem:[#allocation2] sm:$0xff] 0.0
    %20 = vst [vmem:[#allocation2 + $0x8] sm:$0xff] 0.0
    %21 = vst [vmem:[#allocation2 + $0x10] sm:$0xff] 0.0
    %22 = vst [vmem:[#allocation2 + $0x18] sm:$0xff] 0.0
    %23 = vst [vmem:[#allocation2 + $0x20] sm:$0xff] 0.0
    %24 = vst [vmem:[#allocation2 + $0x28] sm:$0xff] 0.0
    %25 = vst [vmem:[#allocation2 + $0x30] sm:$0xff] 0.0
    %26 = vst [vmem:[#allocation2 + $0x38] sm:$0xff] 0.0
    %27 = vst [vmem:[#allocation2 + $0x40] sm:$0xff] 0.0
    %28 = vst [vmem:[#allocation2 + $0x48] sm:$0xff] 0.0
    %29 = vst [vmem:[#allocation2 + $0x50] sm:$0xff] 0.0
    %30 = vst [vmem:[#allocation2 + $0x58] sm:$0xff] 0.0
    %31 = vst [vmem:[#allocation2 + $0x60] sm:$0xff] 0.0
    %32 = vst [vmem:[#allocation2 + $0x68] sm:$0xff] 0.0
    %33 = vst [vmem:[#allocation2 + $0x70] sm:$0xff] 0.0
    %34 = vst [vmem:[#allocation2 + $0x78] sm:$0xff] 0.0
  $region17: #{vae_forward.11} parent=0 // pred_fallthru
    _
  %v35 = vld [vmem:[#allocation2] sm:$0xff]
  %v36 = vld [vmem:[#allocation2 + $0x8] sm:$0xff]
  %v37 = vld [vmem:[#allocation2 + $0x10] sm:$0xff]
  %v38 = vld [vmem:[#allocation2 + $0x18] sm:$0xff]
  %v39 = vld [vmem:[#allocation2 + $0x20] sm:$0xff]
  %v40 = vld [vmem:[#allocation2 + $0x28] sm:$0xff]
  %v41 = vld [vmem:[#allocation2 + $0x30] sm:$0xff]
  %v42 = vld [vmem:[#allocation2 + $0x38] sm:$0xff]
  %v43 = vld [vmem:[#allocation2 + $0x40] sm:$0xff]
  %v44 = vld [vmem:[#allocation2 + $0x48] sm:$0xff]
  %v45 = vld [vmem:[#allocation2 + $0x50] sm:$0xff]
  %v46 = vld [vmem:[#allocation2 + $0x58] sm:$0xff]
  %v47 = vld [vmem:[#allocation2 + $0x60] sm:$0xff]
  %v48 = vld [vmem:[#allocation2 + $0x68] sm:$0xff]
  %v49 = vld [vmem:[#allocation2 + $0x70] sm:$0xff]
  %v50 = vld [vmem:[#allocation2 + $0x78] sm:$0xff]
  %v51 = vld [vmem:[%s0] sm:$0xff]
  %v52 = vld [vmem:[%s0 + $0x8] sm:$0xff]
  %v53 = vld [vmem:[%s0 + $0x10] sm:$0xff]
  %v54 = vld [vmem:[%s0 + $0x18] sm:$0xff]
  %v55 = vld [vmem:[%s0 + $0x20] sm:$0xff]
  %v56 = vld [vmem:[%s0 + $0x28] sm:$0xff]
  %v57 = vld [vmem:[%s0 + $0x30] sm:$0xff]
  %v58 = vld [vmem:[%s0 + $0x38] sm:$0xff]
  %v59 = vld [vmem:[%s0 + $0x40] sm:$0xff]
  %v60 = vld [vmem:[%s0 + $0x48] sm:$0xff]
  %v61 = vld [vmem:[%s0 + $0x50] sm:$0xff]
  %v62 = vld [vmem:[%s0 + $0x58] sm:$0xff]
  %v63 = vld [vmem:[%s0 + $0x60] sm:$0xff]
  %v64 = vld [vmem:[%s0 + $0x68] sm:$0xff]
  %v65 = vld [vmem:[%s0 + $0x70] sm:$0xff]
  %v66 = vld [vmem:[%s0 + $0x78] sm:$0xff]
  %v67 = vld [vmem:[%s0 + $0x80] sm:$0xff]
  %v68 = vld [vmem:[%s0 + $0x88] sm:$0xff]
  %v69 = vld [vmem:[%s0 + $0x90] sm:$0xff]
  %v70 = vld [vmem:[%s0 + $0x98] sm:$0xff]
  %v71 = vld [vmem:[%s0 + $0xa0] sm:$0xff]
  %v72 = vld [vmem:[%s0 + $0xa8] sm:$0xff]
  %v73 = vld [vmem:[%s0 + $0xb0] sm:$0xff]
  %v74 = vld [vmem:[%s0 + $0xb8] sm:$0xff]
  %v75 = vld [vmem:[%s0 + $0xc0] sm:$0xff]
  %v76 = vld [vmem:[%s0 + $0xc8] sm:$0xff]
  %v77 = vld [vmem:[%s0 + $0xd0] sm:$0xff]
  %v78 = vld [vmem:[%s0 + $0xd8] sm:$0xff]
  %v79 = vld [vmem:[%s0 + $0xe0] sm:$0xff]
  %v80 = vld [vmem:[%s0 + $0xe8] sm:$0xff]
  %v81 = vld [vmem:[%s0 + $0xf0] sm:$0xff]
  %v82 = vld [vmem:[%s0 + $0xf8] sm:$0xff]
  %v83 = vld [vmem:[%s1] sm:$0xf]
  %v84 = vld [vmem:[%s1 + $0x4] sm:$0xf]
  %v85 = vld [vmem:[%s1 + $0x8] sm:$0xf]
  %v86 = vld [vmem:[%s1 + $0xc] sm:$0xf]
  %v87 = vld [vmem:[%s1 + $0x10] sm:$0xf]
  %v88 = vld [vmem:[%s1 + $0x14] sm:$0xf]
  %v89 = vld [vmem:[%s1 + $0x18] sm:$0xf]
  %v90 = vld [vmem:[%s1 + $0x1c] sm:$0xf]
  %v91 = vld [vmem:[%s1 + $0x20] sm:$0xf]
  %v92 = vld [vmem:[%s1 + $0x24] sm:$0xf]
  %v93 = vld [vmem:[%s1 + $0x28] sm:$0xf]
  %v94 = vld [vmem:[%s1 + $0x2c] sm:$0xf]
  %v95 = vld [vmem:[%s1 + $0x30] sm:$0xf]
  %v96 = vld [vmem:[%s1 + $0x34] sm:$0xf]
  %v97 = vld [vmem:[%s1 + $0x38] sm:$0xf]
  %v98 = vld [vmem:[%s1 + $0x3c] sm:$0xf]
  %v99 = vld [vmem:[%s1 + $0x40] sm:$0xf]
  %v100 = vld [vmem:[%s1 + $0x44] sm:$0xf]
  %v101 = vld [vmem:[%s1 + $0x48] sm:$0xf]
  %v102 = vld [vmem:[%s1 + $0x4c] sm:$0xf]
  %v103 = vld [vmem:[%s1 + $0x50] sm:$0xf]
  %v104 = vld [vmem:[%s1 + $0x54] sm:$0xf]
  %v105 = vld [vmem:[%s1 + $0x58] sm:$0xf]
  %v106 = vld [vmem:[%s1 + $0x5c] sm:$0xf]
  %v107 = vld [vmem:[%s1 + $0x60] sm:$0xf]
  %v108 = vld [vmem:[%s1 + $0x64] sm:$0xf]
  %v109 = vld [vmem:[%s1 + $0x68] sm:$0xf]
  %v110 = vld [vmem:[%s1 + $0x6c] sm:$0xf]
  %v111 = vld [vmem:[%s1 + $0x70] sm:$0xf]
  %v112 = vld [vmem:[%s1 + $0x74] sm:$0xf]
  %v113 = vld [vmem:[%s1 + $0x78] sm:$0xf]
  %v114 = vld [vmem:[%s1 + $0x7c] sm:$0xf]
  %v115 = vld [vmem:[%s1 + $0x80] sm:$0xf]
  %v116 = vld [vmem:[%s1 + $0x84] sm:$0xf]
  %v117 = vld [vmem:[%s1 + $0x88] sm:$0xf]
  %v118 = vld [vmem:[%s1 + $0x8c] sm:$0xf]
  %v119 = vld [vmem:[%s1 + $0x90] sm:$0xf]
  %v120 = vld [vmem:[%s1 + $0x94] sm:$0xf]
  %v121 = vld [vmem:[%s1 + $0x98] sm:$0xf]
  %v122 = vld [vmem:[%s1 + $0x9c] sm:$0xf]
  %v123 = vld [vmem:[%s1 + $0xa0] sm:$0xf]
  %v124 = vld [vmem:[%s1 + $0xa4] sm:$0xf]
  %v125 = vld [vmem:[%s1 + $0xa8] sm:$0xf]
  %v126 = vld [vmem:[%s1 + $0xac] sm:$0xf]
  %v127 = vld [vmem:[%s1 + $0xb0] sm:$0xf]
  %v128 = vld [vmem:[%s1 + $0xb4] sm:$0xf]
  %v129 = vld [vmem:[%s1 + $0xb8] sm:$0xf]
  %v130 = vld [vmem:[%s1 + $0xbc] sm:$0xf]
  %v131 = vld [vmem:[%s1 + $0xc0] sm:$0xf]
  %v132 = vld [vmem:[%s1 + $0xc4] sm:$0xf]
  %v133 = vld [vmem:[%s1 + $0xc8] sm:$0xf]
  %v134 = vld [vmem:[%s1 + $0xcc] sm:$0xf]
  %v135 = vld [vmem:[%s1 + $0xd0] sm:$0xf]
  %v136 = vld [vmem:[%s1 + $0xd4] sm:$0xf]
  %v137 = vld [vmem:[%s1 + $0xd8] sm:$0xf]
  %v138 = vld [vmem:[%s1 + $0xdc] sm:$0xf]
  %v139 = vld [vmem:[%s1 + $0xe0] sm:$0xf]
  %v140 = vld [vmem:[%s1 + $0xe4] sm:$0xf]
  %v141 = vld [vmem:[%s1 + $0xe8] sm:$0xf]
  %v142 = vld [vmem:[%s1 + $0xec] sm:$0xf]
  %v143 = vld [vmem:[%s1 + $0xf0] sm:$0xf]
  %v144 = vld [vmem:[%s1 + $0xf4] sm:$0xf]
  %v145 = vld [vmem:[%s1 + $0xf8] sm:$0xf]
  %v146 = vld [vmem:[%s1 + $0xfc] sm:$0xf]
  %v179 = vunpack.c.l.b16 %v51
  %v180 = vunpack.c.h.b16 %v51
  %v181 = vunpack.c.l.b16 %v52
  %v182 = vunpack.c.h.b16 %v52
  %v183 = vunpack.c.l.b16 %v53
  %v184 = vunpack.c.h.b16 %v53
  %v185 = vunpack.c.l.b16 %v54
  %v186 = vunpack.c.h.b16 %v54
  %v187 = vunpack.c.l.b16 %v55
  %v188 = vunpack.c.h.b16 %v55
  %v189 = vunpack.c.l.b16 %v56
  %v190 = vunpack.c.h.b16 %v56
  %v191 = vunpack.c.l.b16 %v57
  %v192 = vunpack.c.h.b16 %v57
  %v193 = vunpack.c.l.b16 %v58
  %v194 = vunpack.c.h.b16 %v58
  %v195 = vunpack.c.l.b16 %v59
  %v196 = vunpack.c.h.b16 %v59
  %v197 = vunpack.c.l.b16 %v60
  %v198 = vunpack.c.h.b16 %v60
  %v199 = vunpack.c.l.b16 %v61
  %v200 = vunpack.c.h.b16 %v61
  %v201 = vunpack.c.l.b16 %v62
  %v202 = vunpack.c.h.b16 %v62
  %v203 = vunpack.c.l.b16 %v63
  %v204 = vunpack.c.h.b16 %v63
  %v205 = vunpack.c.l.b16 %v64
  %v206 = vunpack.c.h.b16 %v64
  %v207 = vunpack.c.l.b16 %v65
  %v208 = vunpack.c.h.b16 %v65
  %v209 = vunpack.c.l.b16 %v66
  %v210 = vunpack.c.h.b16 %v66
  %v211 = vunpack.c.l.b16 %v67
  %v212 = vunpack.c.h.b16 %v67
  %v213 = vunpack.c.l.b16 %v68
  %v214 = vunpack.c.h.b16 %v68
  %v215 = vunpack.c.l.b16 %v69
  %v216 = vunpack.c.h.b16 %v69
  %v217 = vunpack.c.l.b16 %v70
  %v218 = vunpack.c.h.b16 %v70
  %v219 = vunpack.c.l.b16 %v71
  %v220 = vunpack.c.h.b16 %v71
  %v221 = vunpack.c.l.b16 %v72
  %v222 = vunpack.c.h.b16 %v72
  %v223 = vunpack.c.l.b16 %v73
  %v224 = vunpack.c.h.b16 %v73
  %v225 = vunpack.c.l.b16 %v74
  %v226 = vunpack.c.h.b16 %v74
  %v227 = vunpack.c.l.b16 %v75
  %v228 = vunpack.c.h.b16 %v75
  %v229 = vunpack.c.l.b16 %v76
  %v230 = vunpack.c.h.b16 %v76
  %v231 = vunpack.c.l.b16 %v77
  %v232 = vunpack.c.h.b16 %v77
  %v233 = vunpack.c.l.b16 %v78
  %v234 = vunpack.c.h.b16 %v78
  %v235 = vunpack.c.l.b16 %v79
  %v236 = vunpack.c.h.b16 %v79
  %v237 = vunpack.c.l.b16 %v80
  %v238 = vunpack.c.h.b16 %v80
  %v239 = vunpack.c.l.b16 %v81
  %v240 = vunpack.c.h.b16 %v81
  %v241 = vunpack.c.l.b16 %v82
  %v242 = vunpack.c.h.b16 %v82
  %v243 = vpack.c.b16 %v183, %v179
  %v244 = vpack.c.b16 %v184, %v180
  %v245 = vpack.c.b16 %v185, %v181
  %v246 = vpack.c.b16 %v186, %v182
  %v247 = vpack.c.b16 %v191, %v187
  %v248 = vpack.c.b16 %v192, %v188
  %v249 = vpack.c.b16 %v193, %v189
  %v250 = vpack.c.b16 %v194, %v190
  %v251 = vpack.c.b16 %v199, %v195
  %v252 = vpack.c.b16 %v200, %v196
  %v253 = vpack.c.b16 %v201, %v197
  %v254 = vpack.c.b16 %v202, %v198
  %v255 = vpack.c.b16 %v207, %v203
  %v256 = vpack.c.b16 %v208, %v204
  %v257 = vpack.c.b16 %v209, %v205
  %v258 = vpack.c.b16 %v210, %v206
  %v259 = vpack.c.b16 %v215, %v211
  %v260 = vpack.c.b16 %v216, %v212
  %v261 = vpack.c.b16 %v217, %v213
  %v262 = vpack.c.b16 %v218, %v214
  %v263 = vpack.c.b16 %v223, %v219
  %v264 = vpack.c.b16 %v224, %v220
  %v265 = vpack.c.b16 %v225, %v221
  %v266 = vpack.c.b16 %v226, %v222
  %v267 = vpack.c.b16 %v231, %v227
  %v268 = vpack.c.b16 %v232, %v228
  %v269 = vpack.c.b16 %v233, %v229
  %v270 = vpack.c.b16 %v234, %v230
  %v271 = vpack.c.b16 %v239, %v235
  %v272 = vpack.c.b16 %v240, %v236
  %v273 = vpack.c.b16 %v241, %v237
  %v274 = vpack.c.b16 %v242, %v238
  %v371 = vunpack.c.l.b16 %v83
  %v372 = vunpack.c.l.b16 %v84
  %v373 = vunpack.c.l.b16 %v85
  %v374 = vunpack.c.l.b16 %v86
  %v375 = vunpack.c.l.b16 %v87
  %v376 = vunpack.c.l.b16 %v88
  %v377 = vunpack.c.l.b16 %v89
  %v378 = vunpack.c.l.b16 %v90
  %v379 = vunpack.c.l.b16 %v91
  %v380 = vunpack.c.l.b16 %v92
  %v381 = vunpack.c.l.b16 %v93
  %v382 = vunpack.c.l.b16 %v94
  %v383 = vunpack.c.l.b16 %v95
  %v384 = vunpack.c.l.b16 %v96
  %v385 = vunpack.c.l.b16 %v97
  %v386 = vunpack.c.l.b16 %v98
  %v387 = vunpack.c.l.b16 %v99
  %v388 = vunpack.c.l.b16 %v100
  %v389 = vunpack.c.l.b16 %v101
  %v390 = vunpack.c.l.b16 %v102
  %v391 = vunpack.c.l.b16 %v103
  %v392 = vunpack.c.l.b16 %v104
  %v393 = vunpack.c.l.b16 %v105
  %v394 = vunpack.c.l.b16 %v106
  %v395 = vunpack.c.l.b16 %v107
  %v396 = vunpack.c.l.b16 %v108
  %v397 = vunpack.c.l.b16 %v109
  %v398 = vunpack.c.l.b16 %v110
  %v399 = vunpack.c.l.b16 %v111
  %v400 = vunpack.c.l.b16 %v112
  %v401 = vunpack.c.l.b16 %v113
  %v402 = vunpack.c.l.b16 %v114
  %v403 = vunpack.c.l.b16 %v115
  %v404 = vunpack.c.l.b16 %v116
  %v405 = vunpack.c.l.b16 %v117
  %v406 = vunpack.c.l.b16 %v118
  %v407 = vunpack.c.l.b16 %v119
  %v408 = vunpack.c.l.b16 %v120
  %v409 = vunpack.c.l.b16 %v121
  %v410 = vunpack.c.l.b16 %v122
  %v411 = vunpack.c.l.b16 %v123
  %v412 = vunpack.c.l.b16 %v124
  %v413 = vunpack.c.l.b16 %v125
  %v414 = vunpack.c.l.b16 %v126
  %v415 = vunpack.c.l.b16 %v127
  %v416 = vunpack.c.l.b16 %v128
  %v417 = vunpack.c.l.b16 %v129
  %v418 = vunpack.c.l.b16 %v130
  %v419 = vunpack.c.l.b16 %v131
  %v420 = vunpack.c.l.b16 %v132
  %v421 = vunpack.c.l.b16 %v133
  %v422 = vunpack.c.l.b16 %v134
  %v423 = vunpack.c.l.b16 %v135
  %v424 = vunpack.c.l.b16 %v136
  %v425 = vunpack.c.l.b16 %v137
  %v426 = vunpack.c.l.b16 %v138
  %v427 = vunpack.c.l.b16 %v139
  %v428 = vunpack.c.l.b16 %v140
  %v429 = vunpack.c.l.b16 %v141
  %v430 = vunpack.c.l.b16 %v142
  %v431 = vunpack.c.l.b16 %v143
  %v432 = vunpack.c.l.b16 %v144
  %v433 = vunpack.c.l.b16 %v145
  %v434 = vunpack.c.l.b16 %v146
  %v435 = vpack.c.b16 %v372, %v371
  %v436 = vpack.c.b16 %v374, %v373
  %v437 = vpack.c.b16 %v376, %v375
  %v438 = vpack.c.b16 %v378, %v377
  %v439 = vpack.c.b16 %v380, %v379
  %v440 = vpack.c.b16 %v382, %v381
  %v441 = vpack.c.b16 %v384, %v383
  %v442 = vpack.c.b16 %v386, %v385
  %v443 = vpack.c.b16 %v388, %v387
  %v444 = vpack.c.b16 %v390, %v389
  %v445 = vpack.c.b16 %v392, %v391
  %v446 = vpack.c.b16 %v394, %v393
  %v447 = vpack.c.b16 %v396, %v395
  %v448 = vpack.c.b16 %v398, %v397
  %v449 = vpack.c.b16 %v400, %v399
  %v450 = vpack.c.b16 %v402, %v401
  %v451 = vpack.c.b16 %v404, %v403
  %v452 = vpack.c.b16 %v406, %v405
  %v453 = vpack.c.b16 %v408, %v407
  %v454 = vpack.c.b16 %v410, %v409
  %v455 = vpack.c.b16 %v412, %v411
  %v456 = vpack.c.b16 %v414, %v413
  %v457 = vpack.c.b16 %v416, %v415
  %v458 = vpack.c.b16 %v418, %v417
  %v459 = vpack.c.b16 %v420, %v419
  %v460 = vpack.c.b16 %v422, %v421
  %v461 = vpack.c.b16 %v424, %v423
  %v462 = vpack.c.b16 %v426, %v425
  %v463 = vpack.c.b16 %v428, %v427
  %v464 = vpack.c.b16 %v430, %v429
  %v465 = vpack.c.b16 %v432, %v431
  %v466 = vpack.c.b16 %v434, %v433
  %499 = vmatprep.subr.bf16.mxu0 0
  %500 = vmatpush1.bf16.msra.mxu0 %v435
  %501 = vmatprep.subr.bf16.mxu0 0
  %502 = vmatpush1.bf16.msra.mxu0 %v436
  %503 = vmatprep.subr.bf16.mxu0 0
  %504 = vmatpush1.bf16.msra.mxu0 %v437
  %505 = vmatprep.subr.bf16.mxu0 0
  %506 = vmatpush1.bf16.msra.mxu0 %v438
  %507 = vmatprep.subr.bf16.mxu0 0
  %508 = vmatpush1.bf16.msra.mxu0 %v439
  %509 = vmatprep.subr.bf16.mxu0 0
  %510 = vmatpush1.bf16.msra.mxu0 %v440
  %511 = vmatprep.subr.bf16.mxu0 0
  %512 = vmatpush1.bf16.msra.mxu0 %v441
  %513 = vmatprep.subr.bf16.mxu0 0
  %514 = vmatpush1.bf16.msra.mxu0 %v442
  %515 = vmatprep.subr.bf16.mxu0 0
  %516 = vmatpush1.bf16.msra.mxu0 %v443
  %517 = vmatprep.subr.bf16.mxu0 0
  %518 = vmatpush1.bf16.msra.mxu0 %v444
  %519 = vmatprep.subr.bf16.mxu0 0
  %520 = vmatpush1.bf16.msra.mxu0 %v445
  %521 = vmatprep.subr.bf16.mxu0 0
  %522 = vmatpush1.bf16.msra.mxu0 %v446
  %523 = vmatprep.subr.bf16.mxu0 0
  %524 = vmatpush1.bf16.msra.mxu0 %v447
  %525 = vmatprep.subr.bf16.mxu0 0
  %526 = vmatpush1.bf16.msra.mxu0 %v448
  %527 = vmatprep.subr.bf16.mxu0 0
  %528 = vmatpush1.bf16.msra.mxu0 %v449
  %529 = vmatprep.subr.bf16.mxu0 0
  %530 = vmatpush1.bf16.msra.mxu0 %v450
  %531 = vmatprep.mubr.bf16.mxu0 %v244
  %532 = vmatmul.mubr.bf16.gmra.mrb[0].mxu0 %v243
  %v533 = vpop.f32.mrb[0].mxu0
  %v534 = vadd.f32 0.0, %v533
  %v535 = vpop.f32.mrb[0].mxu0
  %v536 = vpop.f32.mrb[0].mxu0
  %v537 = vadd.f32 0.0, %v536
  %v538 = vpop.f32.mrb[0].mxu0
  %539 = vmatprep.mubr.bf16.mxu0 %v248
  %540 = vmatmul.mubr.bf16.gmra.mrb[0].mxu0 %v247
  %v541 = vpop.f32.mrb[0].mxu0
  %v542 = vadd.f32 0.0, %v541
  %v543 = vpop.f32.mrb[0].mxu0
  %v544 = vpop.f32.mrb[0].mxu0
  %v545 = vadd.f32 0.0, %v544
  %v546 = vpop.f32.mrb[0].mxu0
  %547 = vmatprep.mubr.bf16.mxu0 %v252
  %548 = vmatmul.mubr.bf16.gmra.mrb[0].mxu0 %v251
  %v549 = vpop.f32.mrb[0].mxu0
  %v550 = vadd.f32 0.0, %v549
  %v551 = vpop.f32.mrb[0].mxu0
  %v552 = vpop.f32.mrb[0].mxu0
  %v553 = vadd.f32 0.0, %v552
  %v554 = vpop.f32.mrb[0].mxu0
  %555 = vmatprep.mubr.bf16.mxu0 %v256
  %556 = vmatmul.mubr.bf16.gmra.mrb[0].mxu0 %v255
  %v557 = vpop.f32.mrb[0].mxu0
  %v558 = vadd.f32 0.0, %v557
  %v559 = vpop.f32.mrb[0].mxu0
  %v560 = vpop.f32.mrb[0].mxu0
  %v561 = vadd.f32 0.0, %v560
  %v562 = vpop.f32.mrb[0].mxu0
  %563 = vmatprep.mubr.bf16.mxu0 %v260
  %564 = vmatmul.mubr.bf16.gmra.mrb[0].mxu0 %v259
  %v565 = vpop.f32.mrb[0].mxu0
  %v566 = vadd.f32 0.0, %v565
  %v567 = vpop.f32.mrb[0].mxu0
  %v568 = vpop.f32.mrb[0].mxu0
  %v569 = vadd.f32 0.0, %v568
  %v570 = vpop.f32.mrb[0].mxu0
  %571 = vmatprep.mubr.bf16.mxu0 %v264
  %572 = vmatmul.mubr.bf16.gmra.mrb[0].mxu0 %v263
  %v573 = vpop.f32.mrb[0].mxu0
  %v574 = vadd.f32 0.0, %v573
  %v575 = vpop.f32.mrb[0].mxu0
  %v576 = vpop.f32.mrb[0].mxu0
  %v577 = vadd.f32 0.0, %v576
  %v578 = vpop.f32.mrb[0].mxu0
  %579 = vmatprep.mubr.bf16.mxu0 %v268
  %580 = vmatmul.mubr.bf16.gmra.mrb[0].mxu0 %v267
  %v581 = vpop.f32.mrb[0].mxu0
  %v582 = vadd.f32 0.0, %v581
  %v583 = vpop.f32.mrb[0].mxu0
  %v584 = vpop.f32.mrb[0].mxu0
  %v585 = vadd.f32 0.0, %v584
  %v586 = vpop.f32.mrb[0].mxu0
  %587 = vmatprep.mubr.bf16.mxu0 %v272
  %588 = vmatmul.mubr.bf16.gmra.mrb[0].mxu0 %v271
  %v589 = vpop.f32.mrb[0].mxu0
  %v590 = vadd.f32 0.0, %v589
  %v591 = vpop.f32.mrb[0].mxu0
  %v592 = vpop.f32.mrb[0].mxu0
  %v593 = vadd.f32 0.0, %v592
  %v594 = vpop.f32.mrb[0].mxu0
  %595 = vdwg.mxu0
  %596 = vmatprep.subr.bf16.mxu0 0
  %597 = vmatpush1.bf16.msra.mxu0 %v451
  %598 = vmatprep.subr.bf16.mxu0 0
  %599 = vmatpush1.bf16.msra.mxu0 %v452
  %600 = vmatprep.subr.bf16.mxu0 0
  %601 = vmatpush1.bf16.msra.mxu0 %v453
  %602 = vmatprep.subr.bf16.mxu0 0
  %603 = vmatpush1.bf16.msra.mxu0 %v454
  %604 = vmatprep.subr.bf16.mxu0 0
  %605 = vmatpush1.bf16.msra.mxu0 %v455
  %606 = vmatprep.subr.bf16.mxu0 0
  %607 = vmatpush1.bf16.msra.mxu0 %v456
  %608 = vmatprep.subr.bf16.mxu0 0
  %609 = vmatpush1.bf16.msra.mxu0 %v457
  %610 = vmatprep.subr.bf16.mxu0 0
  %611 = vmatpush1.bf16.msra.mxu0 %v458
  %612 = vmatprep.subr.bf16.mxu0 0
  %613 = vmatpush1.bf16.msra.mxu0 %v459
  %614 = vmatprep.subr.bf16.mxu0 0
  %615 = vmatpush1.bf16.msra.mxu0 %v460
  %616 = vmatprep.subr.bf16.mxu0 0
  %617 = vmatpush1.bf16.msra.mxu0 %v461
  %618 = vmatprep.subr.bf16.mxu0 0
  %619 = vmatpush1.bf16.msra.mxu0 %v462
  %620 = vmatprep.subr.bf16.mxu0 0
  %621 = vmatpush1.bf16.msra.mxu0 %v463
  %622 = vmatprep.subr.bf16.mxu0 0
  %623 = vmatpush1.bf16.msra.mxu0 %v464
  %624 = vmatprep.subr.bf16.mxu0 0
  %625 = vmatpush1.bf16.msra.mxu0 %v465
  %626 = vmatprep.subr.bf16.mxu0 0
  %627 = vmatpush1.bf16.msra.mxu0 %v466
  %628 = vmatprep.mubr.bf16.mxu0 %v246
  %629 = vmatmul.mubr.bf16.gmra.mrb[0].mxu0 %v245
  %v630 = vpop.f32.mrb[0].mxu0
  %v631 = vadd.f32 %v534, %v630
  %v632 = vpop.f32.mrb[0].mxu0
  %v633 = vpop.f32.mrb[0].mxu0
  %v634 = vadd.f32 %v537, %v633
  %v635 = vpop.f32.mrb[0].mxu0
  %636 = vmatprep.mubr.bf16.mxu0 %v250
  %637 = vmatmul.mubr.bf16.gmra.mrb[0].mxu0 %v249
  %v638 = vpop.f32.mrb[0].mxu0
  %v639 = vadd.f32 %v542, %v638
  %v640 = vpop.f32.mrb[0].mxu0
  %v641 = vpop.f32.mrb[0].mxu0
  %v642 = vadd.f32 %v545, %v641
  %v643 = vpop.f32.mrb[0].mxu0
  %644 = vmatprep.mubr.bf16.mxu0 %v254
  %645 = vmatmul.mubr.bf16.gmra.mrb[0].mxu0 %v253
  %v646 = vpop.f32.mrb[0].mxu0
  %v647 = vadd.f32 %v550, %v646
  %v648 = vpop.f32.mrb[0].mxu0
  %v649 = vpop.f32.mrb[0].mxu0
  %v650 = vadd.f32 %v553, %v649
  %v651 = vpop.f32.mrb[0].mxu0
  %652 = vmatprep.mubr.bf16.mxu0 %v258
  %653 = vmatmul.mubr.bf16.gmra.mrb[0].mxu0 %v257
  %v654 = vpop.f32.mrb[0].mxu0
  %v655 = vadd.f32 %v558, %v654
  %v656 = vpop.f32.mrb[0].mxu0
  %v657 = vpop.f32.mrb[0].mxu0
  %v658 = vadd.f32 %v561, %v657
  %v659 = vpop.f32.mrb[0].mxu0
  %660 = vmatprep.mubr.bf16.mxu0 %v262
  %661 = vmatmul.mubr.bf16.gmra.mrb[0].mxu0 %v261
  %v662 = vpop.f32.mrb[0].mxu0
  %v663 = vadd.f32 %v566, %v662
  %v664 = vpop.f32.mrb[0].mxu0
  %v665 = vpop.f32.mrb[0].mxu0
  %v666 = vadd.f32 %v569, %v665
  %v667 = vpop.f32.mrb[0].mxu0
  %668 = vmatprep.mubr.bf16.mxu0 %v266
  %669 = vmatmul.mubr.bf16.gmra.mrb[0].mxu0 %v265
  %v670 = vpop.f32.mrb[0].mxu0
  %v671 = vadd.f32 %v574, %v670
  %v672 = vpop.f32.mrb[0].mxu0
  %v673 = vpop.f32.mrb[0].mxu0
  %v674 = vadd.f32 %v577, %v673
  %v675 = vpop.f32.mrb[0].mxu0
  %676 = vmatprep.mubr.bf16.mxu0 %v270
  %677 = vmatmul.mubr.bf16.gmra.mrb[0].mxu0 %v269
  %v678 = vpop.f32.mrb[0].mxu0
  %v679 = vadd.f32 %v582, %v678
  %v680 = vpop.f32.mrb[0].mxu0
  %v681 = vpop.f32.mrb[0].mxu0
  %v682 = vadd.f32 %v585, %v681
  %v683 = vpop.f32.mrb[0].mxu0
  %684 = vmatprep.mubr.bf16.mxu0 %v274
  %685 = vmatmul.mubr.bf16.gmra.mrb[0].mxu0 %v273
  %v686 = vpop.f32.mrb[0].mxu0
  %v687 = vadd.f32 %v590, %v686
  %v688 = vpop.f32.mrb[0].mxu0
  %v689 = vpop.f32.mrb[0].mxu0
  %v690 = vadd.f32 %v593, %v689
  %v691 = vpop.f32.mrb[0].mxu0
  %692 = vdwg.mxu0
  %v693 = vadd.f32 %v35, %v631
  %v694 = vadd.f32 %v36, %v634
  %v695 = vadd.f32 %v37, %v639
  %v696 = vadd.f32 %v38, %v642
  %v697 = vadd.f32 %v39, %v647
  %v698 = vadd.f32 %v40, %v650
  %v699 = vadd.f32 %v41, %v655
  %v700 = vadd.f32 %v42, %v658
  %v701 = vadd.f32 %v43, %v663
  %v702 = vadd.f32 %v44, %v666
  %v703 = vadd.f32 %v45, %v671
  %v704 = vadd.f32 %v46, %v674
  %v705 = vadd.f32 %v47, %v679
  %v706 = vadd.f32 %v48, %v682
  %v707 = vadd.f32 %v49, %v687
  %v708 = vadd.f32 %v50, %v690
  %709 = vst [vmem:[#allocation2] sm:$0xff] %v693
  %710 = vst [vmem:[#allocation2 + $0x8] sm:$0xff] %v694
  %711 = vst [vmem:[#allocation2 + $0x10] sm:$0xff] %v695
  %712 = vst [vmem:[#allocation2 + $0x18] sm:$0xff] %v696
  %713 = vst [vmem:[#allocation2 + $0x20] sm:$0xff] %v697
  %714 = vst [vmem:[#allocation2 + $0x28] sm:$0xff] %v698
  %715 = vst [vmem:[#allocation2 + $0x30] sm:$0xff] %v699
  %716 = vst [vmem:[#allocation2 + $0x38] sm:$0xff] %v700
  %717 = vst [vmem:[#allocation2 + $0x40] sm:$0xff] %v701
  %718 = vst [vmem:[#allocation2 + $0x48] sm:$0xff] %v702
  %719 = vst [vmem:[#allocation2 + $0x50] sm:$0xff] %v703
  %720 = vst [vmem:[#allocation2 + $0x58] sm:$0xff] %v704
  %721 = vst [vmem:[#allocation2 + $0x60] sm:$0xff] %v705
  %722 = vst [vmem:[#allocation2 + $0x68] sm:$0xff] %v706
  %723 = vst [vmem:[#allocation2 + $0x70] sm:$0xff] %v707
  %724 = vst [vmem:[#allocation2 + $0x78] sm:$0xff] %v708
  // Predicated region
  $region18: #{vae_forward.11} parent=0 // pred_check
    %p725 = pneg %p15
  $region19: #{vae_forward.11} parent=0 // pred_check_branch
    %727 = sbr.rel (%p725) target = $region21
  $region20: #{vae_forward.11} parent=0 // pred_region
    %v728 = vld [vmem:[#allocation2] sm:$0xff]
    %v729 = vld [vmem:[#allocation2 + $0x8] sm:$0xff]
    %v730 = vld [vmem:[#allocation2 + $0x10] sm:$0xff]
    %v731 = vld [vmem:[#allocation2 + $0x18] sm:$0xff]
    %v732 = vld [vmem:[#allocation2 + $0x20] sm:$0xff]
    %v733 = vld [vmem:[#allocation2 + $0x28] sm:$0xff]
    %v734 = vld [vmem:[#allocation2 + $0x30] sm:$0xff]
    %v735 = vld [vmem:[#allocation2 + $0x38] sm:$0xff]
    %v736 = vld [vmem:[#allocation2 + $0x40] sm:$0xff]
    %v737 = vld [vmem:[#allocation2 + $0x48] sm:$0xff]
    %v738 = vld [vmem:[#allocation2 + $0x50] sm:$0xff]
    %v739 = vld [vmem:[#allocation2 + $0x58] sm:$0xff]
    %v740 = vld [vmem:[#allocation2 + $0x60] sm:$0xff]
    %v741 = vld [vmem:[#allocation2 + $0x68] sm:$0xff]
    %v742 = vld [vmem:[#allocation2 + $0x70] sm:$0xff]
    %v743 = vld [vmem:[#allocation2 + $0x78] sm:$0xff]
    %v744 = vld [vmem:[%s2] sm:$0x1]
    %v746 = vlaneseq
    %v747 = vshrl.u32 %v746, 7
    %v748 = vsub.s32 0, %v747
    %v749 = vrot.slane %v744, %v748
    %v751 = vadd.f32 %v728, %v749
    %v752 = vadd.f32 %v729, %v749
    %v753 = vadd.f32 %v730, %v749
    %v754 = vadd.f32 %v731, %v749
    %v755 = vadd.f32 %v732, %v749
    %v756 = vadd.f32 %v733, %v749
    %v757 = vadd.f32 %v734, %v749
    %v758 = vadd.f32 %v735, %v749
    %v759 = vadd.f32 %v736, %v749
    %v760 = vadd.f32 %v737, %v749
    %v761 = vadd.f32 %v738, %v749
    %v762 = vadd.f32 %v739, %v749
    %v763 = vadd.f32 %v740, %v749
    %v764 = vadd.f32 %v741, %v749
    %v765 = vadd.f32 %v742, %v749
    %v766 = vadd.f32 %v743, %v749
    %v767 = vmax.f32 %v751, 0.0
    %v768 = vmax.f32 %v752, 0.0
    %v769 = vmax.f32 %v753, 0.0
    %v770 = vmax.f32 %v754, 0.0
    %v771 = vmax.f32 %v755, 0.0
    %v772 = vmax.f32 %v756, 0.0
    %v773 = vmax.f32 %v757, 0.0
    %v774 = vmax.f32 %v758, 0.0
    %v775 = vmax.f32 %v759, 0.0
    %v776 = vmax.f32 %v760, 0.0
    %v777 = vmax.f32 %v761, 0.0
    %v778 = vmax.f32 %v762, 0.0
    %v779 = vmax.f32 %v763, 0.0
    %v780 = vmax.f32 %v764, 0.0
    %v781 = vmax.f32 %v765, 0.0
    %v782 = vmax.f32 %v766, 0.0
    %783 = vst [vmem:[%s3] sm:$0xff] %v767
    %784 = vst [vmem:[%s3 + $0x8] sm:$0xff] %v768
    %785 = vst [vmem:[%s3 + $0x10] sm:$0xff] %v769
    %786 = vst [vmem:[%s3 + $0x18] sm:$0xff] %v770
    %787 = vst [vmem:[%s3 + $0x20] sm:$0xff] %v771
    %788 = vst [vmem:[%s3 + $0x28] sm:$0xff] %v772
    %789 = vst [vmem:[%s3 + $0x30] sm:$0xff] %v773
    %790 = vst [vmem:[%s3 + $0x38] sm:$0xff] %v774
    %791 = vst [vmem:[%s3 + $0x40] sm:$0xff] %v775
    %792 = vst [vmem:[%s3 + $0x48] sm:$0xff] %v776
    %793 = vst [vmem:[%s3 + $0x50] sm:$0xff] %v777
    %794 = vst [vmem:[%s3 + $0x58] sm:$0xff] %v778
    %795 = vst [vmem:[%s3 + $0x60] sm:$0xff] %v779
    %796 = vst [vmem:[%s3 + $0x68] sm:$0xff] %v780
    %797 = vst [vmem:[%s3 + $0x70] sm:$0xff] %v781
    %798 = vst [vmem:[%s3 + $0x78] sm:$0xff] %v782
  $region21: #{vae_forward.11} parent=0 // pred_fallthru
    _
  // Predicated region
  $region22: #{vae_forward.11} parent=0 // pred_check
    _
  $region23: #{vae_forward.11} parent=0 // pred_check_branch
    %800 = sbr.rel (0) target = $region25
  $region24: #{vae_forward.11} parent=0 // pred_region
    _
  $region25: #{vae_forward.11} parent=0 // pred_fallthru
    _
  // Predicated region
  $region26: #{vae_forward.11} parent=0 // pred_check
    _
  $region27: #{vae_forward.11} parent=0 // pred_check_branch
    %802 = sbr.rel (0) target = $region29
  $region28: #{vae_forward.11} parent=0 // pred_region
    _
  $region29: #{vae_forward.11} parent=0 // pred_fallthru
    _

// kernel: vae_forward.12
$region0: #{vae_forward.12}
  #allocation0 [shape = 'u32[]', space=smem, size = 0x4, offset = 0x4, fixed_abs, tag = 'smem constant byte address 0x4 - core index']
  #allocation1 [shape = 'u32[144,128]{1,0:T(1,128)}', space=vmem, size = 0x12000, scoped, tag = 'internal scratch']
  #allocation2 [shape = 'f32[32,128]{1,0:T(8,128)}', space=vmem, size = 0x4000, scoped, tag = 'scratch operand']
  %s0 = inlined_call_operand.vmem [shape: bf16[32,1024], index: 0, kind: input, shape index: {}]
  %s1 = inlined_call_operand.vmem [shape: bf16[1024,128], index: 1, kind: input, shape index: {}]
  %s2 = inlined_call_operand.vmem [shape: f32[1,128], index: 2, kind: input, shape index: {}]
  %s3 = inlined_call_operand.vmem [shape: f32[32,128], index: 3, kind: output, shape index: {}]
  %s4 = sld [smem:[#allocation0]]
  $region76: #{vae_forward.12} parent=0
    _
  %s6 = ssub.s32 1, %s4
  %s7 = scalar_select 0, %s6, %s4
  $region1: #{vae_forward.12} parent=0
    #allocation3 [shape = 'u8[65536]{0}', space=vmem, size = 0x10000, scoped, tag = 'input window, operand 0']
    loop: start=0, step=1, limit=4
    $region2: #{vae_forward.12} parent=1 // loop_pre_header
      _
    $region3: #{vae_forward.12} parent=1 // loop_header
      %s9 = sphi 0, %s13
      %p10 = scmp.ge.s32.totalorder %s9, 4
      %s16 = sphi 0, %s35
      %s17 = sphi 0, %s31
      %s18 = sphi 0, %s27
      %s19 = sphi 0, %s16
      %s20 = sphi 0, %s17
      %s21 = sphi 0, %s18
      %s22 = sphi 0, %s19
      %s23 = sphi 0, %s20
      %s24 = sphi 0, %s21
      %s40 = sphi 0, %s42
      %s43 = sphi 0, %s40
      %s44 = sphi 0, %s43
      %s60 = sphi 0, %s44
      %s68 = sphi 0, %s70
      %s71 = sphi 0, %s68
      %s72 = sphi 0, %s71
      %s88 = sphi 0, %s72
      %s94 = sphi 0, %s96
      %s97 = sphi 0, %s94
      %s98 = sphi 0, %s97
      %s114 = sphi 0, %s98
      %s122 = sphi 0, %s124
      %s125 = sphi 0, %s122
      %s126 = sphi 0, %s125
      %s142 = sphi 0, %s126
    $region4: #{vae_forward.12} parent=1 // loop_header_branch
      %12 = sbr.rel (%p10) target = $region8
    $region5: #{vae_forward.12} parent=1 // loop_body
      %s14 = ssub.s32 %s9, 1
      %s15 = ssub.s32 %s9, 2
      %s25 = sadd.s32 1, %s18
      %p26 = scmp.ge.s32.totalorder %s25, 2
      %s27 = scalar_select %p26, 0, %s25
      %s28 = sadd.s32 1, %s17
      %s29 = scalar_select %p26, %s28, %s17
      %p30 = scmp.ge.s32.totalorder %s29, 1
      %s31 = scalar_select %p30, 0, %s29
      %s32 = sadd.s32 1, %s16
      %s33 = scalar_select %p30, %s32, %s16
      %p34 = scmp.ge.s32.totalorder %s33, 1
      %s35 = scalar_select %p34, 0, %s33
      %s36 = ssub.s32 %s16, %s35
      %s37 = ssub.s32 %s18, %s27
      %s38 = sor.u32 %s36, %s37
      %p39 = scmp.eq.s32.totalorder %s38, 0
      %s41 = sadd.s32 %s40, 1
      %s42 = scalar_select %p39, %s40, %s41
      %p45 = pneg %p39
      %p46 = scmp.eq.s32.totalorder %s9, 1
      %p47 = por %p45, %p46
      %p48 = scmp.ne.s32.totalorder %s40, %s43
      %p49 = scmp.eq.s32.totalorder %s9, 0
      %p50 = por %p48, %p49
      %p51 = scmp.ne.s32.totalorder %s40, %s43
      %p52 = scmp.eq.s32.totalorder %s14, 1
      %p53 = por %p51, %p52
      %p54 = scmp.ne.s32.totalorder %s43, %s44
      %p55 = scmp.eq.s32.totalorder %s14, 0
      %p56 = por %p54, %p55
      %p57 = scmp.ne.s32.totalorder %s43, %s44
      %p58 = scmp.eq.s32.totalorder %s15, 1
      %p59 = por %p57, %p58
      %p61 = scmp.ne.s32.totalorder %s44, %s60
      %p62 = scmp.eq.s32.totalorder %s15, 0
      %p63 = por %p61, %p62
      %s64 = ssub.s32 %s18, %s27
      %s65 = ssub.s32 %s17, %s31
      %s66 = sor.u32 %s64, %s65
      %p67 = scmp.eq.s32.totalorder %s66, 0
      %s69 = sadd.s32 %s68, 1
      %s70 = scalar_select %p67, %s68, %s69
      %p73 = pneg %p67
      %p74 = scmp.eq.s32.totalorder %s9, 1
      %p75 = por %p73, %p74
      %p76 = scmp.ne.s32.totalorder %s68, %s71
      %p77 = scmp.eq.s32.totalorder %s9, 0
      %p78 = por %p76, %p77
      %p79 = scmp.ne.s32.totalorder %s68, %s71
      %p80 = scmp.eq.s32.totalorder %s14, 1
      %p81 = por %p79, %p80
      %p82 = scmp.ne.s32.totalorder %s71, %s72
      %p83 = scmp.eq.s32.totalorder %s14, 0
      %p84 = por %p82, %p83
      %p85 = scmp.ne.s32.totalorder %s71, %s72
      %p86 = scmp.eq.s32.totalorder %s15, 1
      %p87 = por %p85, %p86
      %p89 = scmp.ne.s32.totalorder %s72, %s88
      %p90 = scmp.eq.s32.totalorder %s15, 0
      %p91 = por %p89, %p90
      %s92 = ssub.s32 %s17, %s31
      %p93 = scmp.eq.s32.totalorder %s92, 0
      %s95 = sadd.s32 %s94, 1
      %s96 = scalar_select %p93, %s94, %s95
      %p99 = pneg %p93
      %p100 = scmp.eq.s32.totalorder %s9, 1
      %p101 = por %p99, %p100
      %p102 = scmp.ne.s32.totalorder %s94, %s97
      %p103 = scmp.eq.s32.totalorder %s9, 0
      %p104 = por %p102, %p103
      %p105 = scmp.ne.s32.totalorder %s94, %s97
      %p106 = scmp.eq.s32.totalorder %s14, 1
      %p107 = por %p105, %p106
      %p108 = scmp.ne.s32.totalorder %s97, %s98
      %p109 = scmp.eq.s32.totalorder %s14, 0
      %p110 = por %p108, %p109
      %p111 = scmp.ne.s32.totalorder %s97, %s98
      %p112 = scmp.eq.s32.totalorder %s15, 1
      %p113 = por %p111, %p112
      %p115 = scmp.ne.s32.totalorder %s98, %s114
      %p116 = scmp.eq.s32.totalorder %s15, 0
      %p117 = por %p115, %p116
      %s118 = ssub.s32 %s16, %s35
      %s119 = ssub.s32 %s17, %s31
      %s120 = sor.u32 %s118, %s119
      %p121 = scmp.eq.s32.totalorder %s120, 0
      %s123 = sadd.s32 %s122, 1
      %s124 = scalar_select %p121, %s122, %s123
      %p127 = pneg %p121
      %p128 = scmp.eq.s32.totalorder %s9, 1
      %p129 = por %p127, %p128
      %p130 = scmp.ne.s32.totalorder %s122, %s125
      %p131 = scmp.eq.s32.totalorder %s9, 0
      %p132 = por %p130, %p131
      %p133 = scmp.ne.s32.totalorder %s122, %s125
      %p134 = scmp.eq.s32.totalorder %s14, 1
      %p135 = por %p133, %p134
      %p136 = scmp.ne.s32.totalorder %s125, %s126
      %p137 = scmp.eq.s32.totalorder %s14, 0
      %p138 = por %p136, %p137
      %p139 = scmp.ne.s32.totalorder %s125, %s126
      %p140 = scmp.eq.s32.totalorder %s15, 1
      %p141 = por %p139, %p140
      %p143 = scmp.ne.s32.totalorder %s126, %s142
      %p144 = scmp.eq.s32.totalorder %s15, 0
      %p145 = por %p143, %p144
      %p146 = scmp.le.s32.totalorder 1, %s9
      %p147 = scmp.lt.s32.totalorder %s9, 3
      %p148 = pnand %p146, %p147
      %p149 = pneg %p148
      // Predicated region
      $region9: #{vae_forward.12} parent=5 // pred_check
        _
      $region10: #{vae_forward.12} parent=5 // pred_check_branch
        %151 = sbr.rel (%p148) target = $region12
      $region11: #{vae_forward.12} parent=5 // pred_region
        %s152 = ssub.s32 %s9, 1
        // Predicated region
        $region13: #{vae_forward.12} parent=11 // pred_check
          %p153 = pneg %p110
        $region14: #{vae_forward.12} parent=11 // pred_check_branch
          %155 = sbr.rel (%p153) target = $region16
        $region15: #{vae_forward.12} parent=11 // pred_region
          %p156 = scmp.lt.s32.totalorder %s20, 0
          %s157 = scalar_select %p156, %s20, 0
          %s158 = scalar_lea.vmem %s2, %s157
        $region16: #{vae_forward.12} parent=11 // pred_fallthru
          _
      $region12: #{vae_forward.12} parent=5 // pred_fallthru
        _
      %p159 = scmp.lt.s32.totalorder %s9, 2
      // Predicated region
      $region17: #{vae_forward.12} parent=5 // pred_check
        %p160 = pneg %p159
      $region18: #{vae_forward.12} parent=5 // pred_check_branch
        %162 = sbr.rel (%p160) target = $region20
      $region19: #{vae_forward.12} parent=5 // pred_region
        // Predicated region
        $region21: #{vae_forward.12} parent=19 // pred_check
          %p163 = pneg %p50
        $region22: #{vae_forward.12} parent=19 // pred_check_branch
          %165 = sbr.rel (%p163) target = $region24
        $region23: #{vae_forward.12} parent=19 // pred_region
          %s166 = sand.u32 %s40, 1
          %s167 = sand.u32 %s40, 1
          %s168 = smul.addr %s167, 64
          %s169 = scalar_lea.vmem [#allocation3], %s168
          %s170 = smul.u32 4, %s16
          %s171 = smul.u32 4, %s18
          %s172 = smul.addr %s170, 8
          %s173 = sadd.s32 %s171, %s172
          %s174 = smul.addr %s173, 4
          %s175 = scalar_lea.vmem %s0, %s174
          // Predicated region
          $region25: #{vae_forward.12} parent=23 // pred_check
            _
          $region26: #{vae_forward.12} parent=23 // pred_check_branch
            %177 = sbr.rel (0) target = $region28
          $region27: #{vae_forward.12} parent=23 // pred_region
            // Predicated region
            $region29: #{vae_forward.12} parent=27 // pred_check
              _
            $region30: #{vae_forward.12} parent=27 // pred_check_branch
              %179 = sbr.rel (0) target = $region32
            $region31: #{vae_forward.12} parent=27 // pred_region
              loop: start=0, step=1, limit=1
              $region33: #{vae_forward.12} parent=31 // loop_pre_header
                _
              $region34: #{vae_forward.12} parent=31 // loop_header
                %s181 = sphi 0, %s185
                %p182 = scmp.ge.s32.totalorder %s181, 1
                %s186 = sphi %s175, %s175
                %s187 = sphi %s169, %s169
              $region35: #{vae_forward.12} parent=31 // loop_header_branch
                %184 = sbr.rel (%p182) target = $region39
              $region36: #{vae_forward.12} parent=31 // loop_body
                %v188 = vld [vmem:[%s186] sm:$0xff]
                %189 = vst [vmem:[%s187] sm:$0xff] %v188
                %v190 = vld [vmem:[%s186 + $0x8] sm:$0xff]
                %191 = vst [vmem:[%s187 + $0x8] sm:$0xff] %v190
                %v192 = vld [vmem:[%s186 + $0x20] sm:$0xff]
                %193 = vst [vmem:[%s187 + $0x10] sm:$0xff] %v192
                %v194 = vld [vmem:[%s186 + $0x28] sm:$0xff]
                %195 = vst [vmem:[%s187 + $0x18] sm:$0xff] %v194
                %v196 = vld [vmem:[%s186 + $0x40] sm:$0xff]
                %197 = vst [vmem:[%s187 + $0x20] sm:$0xff] %v196
                %v198 = vld [vmem:[%s186 + $0x48] sm:$0xff]
                %199 = vst [vmem:[%s187 + $0x28] sm:$0xff] %v198
                %v200 = vld [vmem:[%s186 + $0x60] sm:$0xff]
                %201 = vst [vmem:[%s187 + $0x30] sm:$0xff] %v200
                %v202 = vld [vmem:[%s186 + $0x68] sm:$0xff]
                %203 = vst [vmem:[%s187 + $0x38] sm:$0xff] %v202
              $region37: #{vae_forward.12} parent=31 // loop_footer
                %s185 = sadd.s32 1, %s181
              $region38: #{vae_forward.12} parent=31 // loop_footer_branch
                %180 = sbr.rel target = $region34
              $region39: #{vae_forward.12} parent=31 // loop_exit
                _
            $region32: #{vae_forward.12} parent=27 // pred_fallthru
              _
            // Predicated region
            $region40: #{vae_forward.12} parent=27 // pred_check
              _
            $region41: #{vae_forward.12} parent=27 // pred_check_branch
              %205 = sbr.rel target = $region43
            $region42: #{vae_forward.12} parent=27 // pred_region
              _
            $region43: #{vae_forward.12} parent=27 // pred_fallthru
              _
          $region28: #{vae_forward.12} parent=23 // pred_fallthru
            _
          %206 = vnop
        $region24: #{vae_forward.12} parent=19 // pred_fallthru
          _
        // Predicated region
        $region44: #{vae_forward.12} parent=19 // pred_check
          %p207 = pneg %p78
        $region45: #{vae_forward.12} parent=19 // pred_check_branch
          %209 = sbr.rel (%p207) target = $region47
        $region46: #{vae_forward.12} parent=19 // pred_region
          %s210 = smul.u32 64, %s18
          %p211 = scmp.lt.s32.totalorder %s210, 127
          %s212 = scalar_select %p211, %s210, 127
          %p213 = scmp.lt.s32.totalorder %s17, 0
          %s214 = scalar_select %p213, %s17, 0
          %s215 = sadd.s32 %s214, %s212
          %s216 = smul.addr %s215, 4
          %s217 = scalar_lea.vmem %s1, %s216
          %s218 = smul.u32 64, %s18
        $region47: #{vae_forward.12} parent=19 // pred_fallthru
          _
      $region20: #{vae_forward.12} parent=5 // pred_fallthru
        _
      %p219 = scmp.le.s32.totalorder 1, %s9
      %p220 = scmp.lt.s32.totalorder %s9, 3
      %p221 = pnand %p219, %p220
      %p222 = pneg %p221
      // Predicated region
      $region48: #{vae_forward.12} parent=5 // pred_check
        _
      $region49: #{vae_forward.12} parent=5 // pred_check_branch
        %224 = sbr.rel (%p221) target = $region51
      $region50: #{vae_forward.12} parent=5 // pred_region
        %s225 = ssub.s32 %s9, 1
        %s226 = sand.u32 %s43, 1
        %s227 = sand.u32 %s43, 1
        %s228 = smul.addr %s227, 64
        %s229 = scalar_lea.vmem [#allocation3], %s228
        // Predicated region
        $region52: #{vae_forward.12} parent=50 // pred_check
          %p230 = pneg %p56
        $region53: #{vae_forward.12} parent=50 // pred_check_branch
          %232 = sbr.rel (%p230) target = $region55
        $region54: #{vae_forward.12} parent=50 // pred_region
          _
        $region55: #{vae_forward.12} parent=50 // pred_fallthru
          _
        %s233 = sand.u32 %s43, 1
        %s234 = sand.u32 %s43, 1
        %s235 = smul.addr %s234, 64
        %s236 = scalar_lea.vmem [#allocation3], %s235
        %p237 = pneg %p56
        %p238 = pneg %p53
        %s239 = smul.u32 64, %s21
        %p240 = scmp.lt.s32.totalorder %s239, 127
        %s241 = scalar_select %p240, %s239, 127
        %p242 = scmp.lt.s32.totalorder %s20, 0
        %s243 = scalar_select %p242, %s20, 0
        %s244 = sadd.s32 %s243, %s241
        %s245 = smul.addr %s244, 4
        %s246 = scalar_lea.vmem %s1, %s245
        %p247 = pneg %p84
        %p248 = pneg %p81
        %p249 = scmp.lt.s32.totalorder %s20, 0
        %s250 = scalar_select %p249, %s20, 0
        %s251 = scalar_lea.vmem %s2, %s250
        %p252 = pneg %p110
        %p253 = pneg %p107
        %p254 = pneg %p138
        %p255 = pneg %p135
        %s256 = smul.u32 4, %s19
        %p257 = scmp.lt.s32.totalorder %s256, 3
        %s258 = scalar_select %p257, %s256, 3
        %p259 = scmp.lt.s32.totalorder %s20, 0
        %s260 = scalar_select %p259, %s20, 0
        %s261 = sadd.s32 %s260, %s258
        %s262 = smul.addr %s261, 8
        %s263 = scalar_lea.vmem %s3, %s262
        %s264 = smul.u32 4, %s19
        %s265 = smul.u32 4, %s21
        %s266 = smul.u32 64, %s21
        %p267 = scmp.lt.s32.totalorder %s266, 127
        %s268 = scalar_select %p267, %s266, 127
        %p269 = scmp.lt.s32.totalorder %s20, 0
        %s270 = scalar_select %p269, %s20, 0
        %s271 = sadd.s32 %s270, %s268
        %s272 = smul.addr %s271, 4
        %s273 = scalar_lea.vmem %s1, %s272
        %s274 = smul.u32 64, %s21
        %p275 = scmp.lt.s32.totalorder %s20, 0
        %s276 = scalar_select %p275, %s20, 0
        %s277 = scalar_lea.vmem %s2, %s276
        %s278 = smul.u32 4, %s19
        %p279 = scmp.lt.s32.totalorder %s278, 3
        %s280 = scalar_select %p279, %s278, 3
        %p281 = scmp.lt.s32.totalorder %s20, 0
        %s282 = scalar_select %p281, %s20, 0
        %s283 = sadd.s32 %s282, %s280
        %s284 = smul.addr %s283, 8
        %s285 = scalar_lea.vmem %s3, %s284
        %s286 = smul.u32 4, %s19
        %p288 = scmp.eq.s32.totalorder %s21, 0
        // Predicated region
        $region56: #{vae_forward.12} parent=50 // pred_check
          %p289 = pneg %p288
        $region57: #{vae_forward.12} parent=50 // pred_check_branch
          %291 = sbr.rel (%p289) target = $region59
        $region58: #{vae_forward.12} parent=50 // pred_region
          %292 = vst [vmem:[#allocation2] sm:$0xff] 0.0
          %293 = vst [vmem:[#allocation2 + $0x8] sm:$0xff] 0.0
          %294 = vst [vmem:[#allocation2 + $0x10] sm:$0xff] 0.0
          %295 = vst [vmem:[#allocation2 + $0x18] sm:$0xff] 0.0
        $region59: #{vae_forward.12} parent=50 // pred_fallthru
          _
        %v296 = vld [vmem:[#allocation2] sm:$0xff]
        %v297 = vld [vmem:[#allocation2 + $0x8] sm:$0xff]
        %v298 = vld [vmem:[#allocation2 + $0x10] sm:$0xff]
        %v299 = vld [vmem:[#allocation2 + $0x18] sm:$0xff]
        %v300 = vld [vmem:[%s229] sm:$0xff]
        %v301 = vld [vmem:[%s229 + $0x8] sm:$0xff]
        %v302 = vld [vmem:[%s229 + $0x10] sm:$0xff]
        %v303 = vld [vmem:[%s229 + $0x18] sm:$0xff]
        %v304 = vld [vmem:[%s229 + $0x20] sm:$0xff]
        %v305 = vld [vmem:[%s229 + $0x28] sm:$0xff]
        %v306 = vld [vmem:[%s229 + $0x30] sm:$0xff]
        %v307 = vld [vmem:[%s229 + $0x38] sm:$0xff]
        %v308 = vld [vmem:[%s273] sm:$0xf]
        %v309 = vld [vmem:[%s273 + $0x4] sm:$0xf]
        %v310 = vld [vmem:[%s273 + $0x8] sm:$0xf]
        %v311 = vld [vmem:[%s273 + $0xc] sm:$0xf]
        %v312 = vld [vmem:[%s273 + $0x10] sm:$0xf]
        %v313 = vld [vmem:[%s273 + $0x14] sm:$0xf]
        %v314 = vld [vmem:[%s273 + $0x18] sm:$0xf]
        %v315 = vld [vmem:[%s273 + $0x1c] sm:$0xf]
        %v316 = vld [vmem:[%s273 + $0x20] sm:$0xf]
        %v317 = vld [vmem:[%s273 + $0x24] sm:$0xf]
        %v318 = vld [vmem:[%s273 + $0x28] sm:$0xf]
        %v319 = vld [vmem:[%s273 + $0x2c] sm:$0xf]
        %v320 = vld [vmem:[%s273 + $0x30] sm:$0xf]
        %v321 = vld [vmem:[%s273 + $0x34] sm:$0xf]
        %v322 = vld [vmem:[%s273 + $0x38] sm:$0xf]
        %v323 = vld [vmem:[%s273 + $0x3c] sm:$0xf]
        %v324 = vld [vmem:[%s273 + $0x40] sm:$0xf]
        %v325 = vld [vmem:[%s273 + $0x44] sm:$0xf]
        %v326 = vld [vmem:[%s273 + $0x48] sm:$0xf]
        %v327 = vld [vmem:[%s273 + $0x4c] sm:$0xf]
        %v328 = vld [vmem:[%s273 + $0x50] sm:$0xf]
        %v329 = vld [vmem:[%s273 + $0x54] sm:$0xf]
        %v330 = vld [vmem:[%s273 + $0x58] sm:$0xf]
        %v331 = vld [vmem:[%s273 + $0x5c] sm:$0xf]
        %v332 = vld [vmem:[%s273 + $0x60] sm:$0xf]
        %v333 = vld [vmem:[%s273 + $0x64] sm:$0xf]
        %v334 = vld [vmem:[%s273 + $0x68] sm:$0xf]
        %v335 = vld [vmem:[%s273 + $0x6c] sm:$0xf]
        %v336 = vld [vmem:[%s273 + $0x70] sm:$0xf]
        %v337 = vld [vmem:[%s273 + $0x74] sm:$0xf]
        %v338 = vld [vmem:[%s273 + $0x78] sm:$0xf]
        %v339 = vld [vmem:[%s273 + $0x7c] sm:$0xf]
        %v340 = vld [vmem:[%s273 + $0x80] sm:$0xf]
        %v341 = vld [vmem:[%s273 + $0x84] sm:$0xf]
        %v342 = vld [vmem:[%s273 + $0x88] sm:$0xf]
        %v343 = vld [vmem:[%s273 + $0x8c] sm:$0xf]
        %v344 = vld [vmem:[%s273 + $0x90] sm:$0xf]
        %v345 = vld [vmem:[%s273 + $0x94] sm:$0xf]
        %v346 = vld [vmem:[%s273 + $0x98] sm:$0xf]
        %v347 = vld [vmem:[%s273 + $0x9c] sm:$0xf]
        %v348 = vld [vmem:[%s273 + $0xa0] sm:$0xf]
        %v349 = vld [vmem:[%s273 + $0xa4] sm:$0xf]
        %v350 = vld [vmem:[%s273 + $0xa8] sm:$0xf]
        %v351 = vld [vmem:[%s273 + $0xac] sm:$0xf]
        %v352 = vld [vmem:[%s273 + $0xb0] sm:$0xf]
        %v353 = vld [vmem:[%s273 + $0xb4] sm:$0xf]
        %v354 = vld [vmem:[%s273 + $0xb8] sm:$0xf]
        %v355 = vld [vmem:[%s273 + $0xbc] sm:$0xf]
        %v356 = vld [vmem:[%s273 + $0xc0] sm:$0xf]
        %v357 = vld [vmem:[%s273 + $0xc4] sm:$0xf]
        %v358 = vld [vmem:[%s273 + $0xc8] sm:$0xf]
        %v359 = vld [vmem:[%s273 + $0xcc] sm:$0xf]
        %v360 = vld [vmem:[%s273 + $0xd0] sm:$0xf]
        %v361 = vld [vmem:[%s273 + $0xd4] sm:$0xf]
        %v362 = vld [vmem:[%s273 + $0xd8] sm:$0xf]
        %v363 = vld [vmem:[%s273 + $0xdc] sm:$0xf]
        %v364 = vld [vmem:[%s273 + $0xe0] sm:$0xf]
        %v365 = vld [vmem:[%s273 + $0xe4] sm:$0xf]
        %v366 = vld [vmem:[%s273 + $0xe8] sm:$0xf]
        %v367 = vld [vmem:[%s273 + $0xec] sm:$0xf]
        %v368 = vld [vmem:[%s273 + $0xf0] sm:$0xf]
        %v369 = vld [vmem:[%s273 + $0xf4] sm:$0xf]
        %v370 = vld [vmem:[%s273 + $0xf8] sm:$0xf]
        %v371 = vld [vmem:[%s273 + $0xfc] sm:$0xf]
        %v380 = vunpack.c.l.b16 %v300
        %v381 = vunpack.c.h.b16 %v300
        %v382 = vunpack.c.l.b16 %v301
        %v383 = vunpack.c.h.b16 %v301
        %v384 = vunpack.c.l.b16 %v302
        %v385 = vunpack.c.h.b16 %v302
        %v386 = vunpack.c.l.b16 %v303
        %v387 = vunpack.c.h.b16 %v303
        %v388 = vunpack.c.l.b16 %v304
        %v389 = vunpack.c.h.b16 %v304
        %v390 = vunpack.c.l.b16 %v305
        %v391 = vunpack.c.h.b16 %v305
        %v392 = vunpack.c.l.b16 %v306
        %v393 = vunpack.c.h.b16 %v306
        %v394 = vunpack.c.l.b16 %v307
        %v395 = vunpack.c.h.b16 %v307
        %v396 = vpack.c.b16 %v384, %v380
        %v397 = vpack.c.b16 %v385, %v381
        %v398 = vpack.c.b16 %v386, %v382
        %v399 = vpack.c.b16 %v387, %v383
        %v400 = vpack.c.b16 %v392, %v388
        %v401 = vpack.c.b16 %v393, %v389
        %v402 = vpack.c.b16 %v394, %v390
        %v403 = vpack.c.b16 %v395, %v391
        %v476 = vunpack.c.l.b16 %v308
        %v477 = vunpack.c.l.b16 %v309
        %v478 = vunpack.c.l.b16 %v310
        %v479 = vunpack.c.l.b16 %v311
        %v480 = vunpack.c.l.b16 %v312
        %v481 = vunpack.c.l.b16 %v313
        %v482 = vunpack.c.l.b16 %v314
        %v483 = vunpack.c.l.b16 %v315
        %v484 = vunpack.c.l.b16 %v316
        %v485 = vunpack.c.l.b16 %v317
        %v486 = vunpack.c.l.b16 %v318
        %v487 = vunpack.c.l.b16 %v319
        %v488 = vunpack.c.l.b16 %v320
        %v489 = vunpack.c.l.b16 %v321
        %v490 = vunpack.c.l.b16 %v322
        %v491 = vunpack.c.l.b16 %v323
        %v492 = vunpack.c.l.b16 %v324
        %v493 = vunpack.c.l.b16 %v325
        %v494 = vunpack.c.l.b16 %v326
        %v495 = vunpack.c.l.b16 %v327
        %v496 = vunpack.c.l.b16 %v328
        %v497 = vunpack.c.l.b16 %v329
        %v498 = vunpack.c.l.b16 %v330
        %v499 = vunpack.c.l.b16 %v331
        %v500 = vunpack.c.l.b16 %v332
        %v501 = vunpack.c.l.b16 %v333
        %v502 = vunpack.c.l.b16 %v334
        %v503 = vunpack.c.l.b16 %v335
        %v504 = vunpack.c.l.b16 %v336
        %v505 = vunpack.c.l.b16 %v337
        %v506 = vunpack.c.l.b16 %v338
        %v507 = vunpack.c.l.b16 %v339
        %v508 = vunpack.c.l.b16 %v340
        %v509 = vunpack.c.l.b16 %v341
        %v510 = vunpack.c.l.b16 %v342
        %v511 = vunpack.c.l.b16 %v343
        %v512 = vunpack.c.l.b16 %v344
        %v513 = vunpack.c.l.b16 %v345
        %v514 = vunpack.c.l.b16 %v346
        %v515 = vunpack.c.l.b16 %v347
        %v516 = vunpack.c.l.b16 %v348
        %v517 = vunpack.c.l.b16 %v349
        %v518 = vunpack.c.l.b16 %v350
        %v519 = vunpack.c.l.b16 %v351
        %v520 = vunpack.c.l.b16 %v352
        %v521 = vunpack.c.l.b16 %v353
        %v522 = vunpack.c.l.b16 %v354
        %v523 = vunpack.c.l.b16 %v355
        %v524 = vunpack.c.l.b16 %v356
        %v525 = vunpack.c.l.b16 %v357
        %v526 = vunpack.c.l.b16 %v358
        %v527 = vunpack.c.l.b16 %v359
        %v528 = vunpack.c.l.b16 %v360
        %v529 = vunpack.c.l.b16 %v361
        %v530 = vunpack.c.l.b16 %v362
        %v531 = vunpack.c.l.b16 %v363
        %v532 = vunpack.c.l.b16 %v364
        %v533 = vunpack.c.l.b16 %v365
        %v534 = vunpack.c.l.b16 %v366
        %v535 = vunpack.c.l.b16 %v367
        %v536 = vunpack.c.l.b16 %v368
        %v537 = vunpack.c.l.b16 %v369
        %v538 = vunpack.c.l.b16 %v370
        %v539 = vunpack.c.l.b16 %v371
        %v540 = vpack.c.b16 %v477, %v476
        %v541 = vpack.c.b16 %v479, %v478
        %v542 = vpack.c.b16 %v481, %v480
        %v543 = vpack.c.b16 %v483, %v482
        %v544 = vpack.c.b16 %v485, %v484
        %v545 = vpack.c.b16 %v487, %v486
        %v546 = vpack.c.b16 %v489, %v488
        %v547 = vpack.c.b16 %v491, %v490
        %v548 = vpack.c.b16 %v493, %v492
        %v549 = vpack.c.b16 %v495, %v494
        %v550 = vpack.c.b16 %v497, %v496
        %v551 = vpack.c.b16 %v499, %v498
        %v552 = vpack.c.b16 %v501, %v500
        %v553 = vpack.c.b16 %v503, %v502
        %v554 = vpack.c.b16 %v505, %v504
        %v555 = vpack.c.b16 %v507, %v506
        %v556 = vpack.c.b16 %v509, %v508
        %v557 = vpack.c.b16 %v511, %v510
        %v558 = vpack.c.b16 %v513, %v512
        %v559 = vpack.c.b16 %v515, %v514
        %v560 = vpack.c.b16 %v517, %v516
        %v561 = vpack.c.b16 %v519, %v518
        %v562 = vpack.c.b16 %v521, %v520
        %v563 = vpack.c.b16 %v523, %v522
        %v564 = vpack.c.b16 %v525, %v524
        %v565 = vpack.c.b16 %v527, %v526
        %v566 = vpack.c.b16 %v529, %v528
        %v567 = vpack.c.b16 %v531, %v530
        %v568 = vpack.c.b16 %v533, %v532
        %v569 = vpack.c.b16 %v535, %v534
        %v570 = vpack.c.b16 %v537, %v536
        %v571 = vpack.c.b16 %v539, %v538
        %604 = vmatprep.subr.bf16.mxu0 0
        %605 = vmatpush1.bf16.msra.mxu0 %v540
        %606 = vmatprep.subr.bf16.mxu0 0
        %607 = vmatpush1.bf16.msra.mxu0 %v541
        %608 = vmatprep.subr.bf16.mxu0 0
        %609 = vmatpush1.bf16.msra.mxu0 %v542
        %610 = vmatprep.subr.bf16.mxu0 0
        %611 = vmatpush1.bf16.msra.mxu0 %v543
        %612 = vmatprep.subr.bf16.mxu0 0
        %613 = vmatpush1.bf16.msra.mxu0 %v544
        %614 = vmatprep.subr.bf16.mxu0 0
        %615 = vmatpush1.bf16.msra.mxu0 %v545
        %616 = vmatprep.subr.bf16.mxu0 0
        %617 = vmatpush1.bf16.msra.mxu0 %v546
        %618 = vmatprep.subr.bf16.mxu0 0
        %619 = vmatpush1.bf16.msra.mxu0 %v547
        %620 = vmatprep.subr.bf16.mxu0 0
        %621 = vmatpush1.bf16.msra.mxu0 %v548
        %622 = vmatprep.subr.bf16.mxu0 0
        %623 = vmatpush1.bf16.msra.mxu0 %v549
        %624 = vmatprep.subr.bf16.mxu0 0
        %625 = vmatpush1.bf16.msra.mxu0 %v550
        %626 = vmatprep.subr.bf16.mxu0 0
        %627 = vmatpush1.bf16.msra.mxu0 %v551
        %628 = vmatprep.subr.bf16.mxu0 0
        %629 = vmatpush1.bf16.msra.mxu0 %v552
        %630 = vmatprep.subr.bf16.mxu0 0
        %631 = vmatpush1.bf16.msra.mxu0 %v553
        %632 = vmatprep.subr.bf16.mxu0 0
        %633 = vmatpush1.bf16.msra.mxu0 %v554
        %634 = vmatprep.subr.bf16.mxu0 0
        %635 = vmatpush1.bf16.msra.mxu0 %v555
        %636 = vmatprep.mubr.bf16.mxu0 %v397
        %637 = vmatmul.mubr.bf16.gmra.mrb[0].mxu0 %v396
        %v638 = vpop.f32.mrb[0].mxu0
        %v639 = vadd.f32 0.0, %v638
        %v640 = vpop.f32.mrb[0].mxu0
        %v641 = vpop.f32.mrb[0].mxu0
        %v642 = vadd.f32 0.0, %v641
        %v643 = vpop.f32.mrb[0].mxu0
        %644 = vmatprep.mubr.bf16.mxu0 %v401
        %645 = vmatmul.mubr.bf16.gmra.mrb[0].mxu0 %v400
        %v646 = vpop.f32.mrb[0].mxu0
        %v647 = vadd.f32 0.0, %v646
        %v648 = vpop.f32.mrb[0].mxu0
        %v649 = vpop.f32.mrb[0].mxu0
        %v650 = vadd.f32 0.0, %v649
        %v651 = vpop.f32.mrb[0].mxu0
        %652 = vdwg.mxu0
        %653 = vmatprep.subr.bf16.mxu0 0
        %654 = vmatpush1.bf16.msra.mxu0 %v556
        %655 = vmatprep.subr.bf16.mxu0 0
        %656 = vmatpush1.bf16.msra.mxu0 %v557
        %657 = vmatprep.subr.bf16.mxu0 0
        %658 = vmatpush1.bf16.msra.mxu0 %v558
        %659 = vmatprep.subr.bf16.mxu0 0
        %660 = vmatpush1.bf16.msra.mxu0 %v559
        %661 = vmatprep.subr.bf16.mxu0 0
        %662 = vmatpush1.bf16.msra.mxu0 %v560
        %663 = vmatprep.subr.bf16.mxu0 0
        %664 = vmatpush1.bf16.msra.mxu0 %v561
        %665 = vmatprep.subr.bf16.mxu0 0
        %666 = vmatpush1.bf16.msra.mxu0 %v562
        %667 = vmatprep.subr.bf16.mxu0 0
        %668 = vmatpush1.bf16.msra.mxu0 %v563
        %669 = vmatprep.subr.bf16.mxu0 0
        %670 = vmatpush1.bf16.msra.mxu0 %v564
        %671 = vmatprep.subr.bf16.mxu0 0
        %672 = vmatpush1.bf16.msra.mxu0 %v565
        %673 = vmatprep.subr.bf16.mxu0 0
        %674 = vmatpush1.bf16.msra.mxu0 %v566
        %675 = vmatprep.subr.bf16.mxu0 0
        %676 = vmatpush1.bf16.msra.mxu0 %v567
        %677 = vmatprep.subr.bf16.mxu0 0
        %678 = vmatpush1.bf16.msra.mxu0 %v568
        %679 = vmatprep.subr.bf16.mxu0 0
        %680 = vmatpush1.bf16.msra.mxu0 %v569
        %681 = vmatprep.subr.bf16.mxu0 0
        %682 = vmatpush1.bf16.msra.mxu0 %v570
        %683 = vmatprep.subr.bf16.mxu0 0
        %684 = vmatpush1.bf16.msra.mxu0 %v571
        %685 = vmatprep.mubr.bf16.mxu0 %v399
        %686 = vmatmul.mubr.bf16.gmra.mrb[0].mxu0 %v398
        %v687 = vpop.f32.mrb[0].mxu0
        %v688 = vadd.f32 %v639, %v687
        %v689 = vpop.f32.mrb[0].mxu0
        %v690 = vpop.f32.mrb[0].mxu0
        %v691 = vadd.f32 %v642, %v690
        %v692 = vpop.f32.mrb[0].mxu0
        %693 = vmatprep.mubr.bf16.mxu0 %v403
        %694 = vmatmul.mubr.bf16.gmra.mrb[0].mxu0 %v402
        %v695 = vpop.f32.mrb[0].mxu0
        %v696 = vadd.f32 %v647, %v695
        %v697 = vpop.f32.mrb[0].mxu0
        %v698 = vpop.f32.mrb[0].mxu0
        %v699 = vadd.f32 %v650, %v698
        %v700 = vpop.f32.mrb[0].mxu0
        %701 = vdwg.mxu0
        %v702 = vadd.f32 %v296, %v688
        %v703 = vadd.f32 %v297, %v691
        %v704 = vadd.f32 %v298, %v696
        %v705 = vadd.f32 %v299, %v699
        %706 = vst [vmem:[#allocation2] sm:$0xff] %v702
        %707 = vst [vmem:[#allocation2 + $0x8] sm:$0xff] %v703
        %708 = vst [vmem:[#allocation2 + $0x10] sm:$0xff] %v704
        %709 = vst [vmem:[#allocation2 + $0x18] sm:$0xff] %v705
        %p710 = scmp.eq.s32.totalorder %s21, 1
        // Predicated region
        $region60: #{vae_forward.12} parent=50 // pred_check
          %p711 = pneg %p710
        $region61: #{vae_forward.12} parent=50 // pred_check_branch
          %713 = sbr.rel (%p711) target = $region63
        $region62: #{vae_forward.12} parent=50 // pred_region
          %v714 = vld [vmem:[#allocation2] sm:$0xff]
          %v715 = vld [vmem:[#allocation2 + $0x8] sm:$0xff]
          %v716 = vld [vmem:[#allocation2 + $0x10] sm:$0xff]
          %v717 = vld [vmem:[#allocation2 + $0x18] sm:$0xff]
          %v718 = vld [vmem:[%s277] sm:$0x1]
          %v720 = vlaneseq
          %v721 = vshrl.u32 %v720, 7
          %v722 = vsub.s32 0, %v721
          %v723 = vrot.slane %v718, %v722
          %v725 = vadd.f32 %v714, %v723
          %v726 = vadd.f32 %v715, %v723
          %v727 = vadd.f32 %v716, %v723
          %v728 = vadd.f32 %v717, %v723
          %v729 = vmax.f32 %v725, 0.0
          %v730 = vmax.f32 %v726, 0.0
          %v731 = vmax.f32 %v727, 0.0
          %v732 = vmax.f32 %v728, 0.0
          %733 = vst [vmem:[%s285] sm:$0xff] %v729
          %734 = vst [vmem:[%s285 + $0x8] sm:$0xff] %v730
          %735 = vst [vmem:[%s285 + $0x10] sm:$0xff] %v731
          %736 = vst [vmem:[%s285 + $0x18] sm:$0xff] %v732
        $region63: #{vae_forward.12} parent=50 // pred_fallthru
          _
        %s737 = smul.u32 4, %s19
        %p738 = scmp.lt.s32.totalorder %s737, 3
        %s739 = scalar_select %p738, %s737, 3
        %p740 = scmp.lt.s32.totalorder %s20, 0
        %s741 = scalar_select %p740, %s20, 0
        %s742 = sadd.s32 %s741, %s739
        %s743 = smul.addr %s742, 8
        %s744 = scalar_lea.vmem %s3, %s743
        // Predicated region
        $region64: #{vae_forward.12} parent=50 // pred_check
          %p745 = pneg %p135
        $region65: #{vae_forward.12} parent=50 // pred_check_branch
          %747 = sbr.rel (%p745) target = $region67
        $region66: #{vae_forward.12} parent=50 // pred_region
          %s748 = smul.u32 4, %s19
        $region67: #{vae_forward.12} parent=50 // pred_fallthru
          _
        // Predicated region
        $region68: #{vae_forward.12} parent=50 // pred_check
          %p749 = pneg %p135
        $region69: #{vae_forward.12} parent=50 // pred_check_branch
          %751 = sbr.rel (%p749) target = $region71
        $region70: #{vae_forward.12} parent=50 // pred_region
          %s752 = smul.u32 4, %s19
          %p753 = scmp.lt.s32.totalorder %s752, 3
          %s754 = scalar_select %p753, %s752, 3
          %p755 = scmp.lt.s32.totalorder %s20, 0
          %s756 = scalar_select %p755, %s20, 0
          %s757 = sadd.s32 %s756, %s754
          %s758 = smul.addr %s757, 8
          %s759 = scalar_lea.vmem %s3, %s758
        $region71: #{vae_forward.12} parent=50 // pred_fallthru
          _
      $region51: #{vae_forward.12} parent=5 // pred_fallthru
        _
      %p760 = scmp.le.s32.totalorder 2, %s9
      // Predicated region
      $region72: #{vae_forward.12} parent=5 // pred_check
        %p761 = pneg %p760
      $region73: #{vae_forward.12} parent=5 // pred_check_branch
        %763 = sbr.rel (%p761) target = $region75
      $region74: #{vae_forward.12} parent=5 // pred_region
        %s764 = ssub.s32 %s9, 2
      $region75: #{vae_forward.12} parent=5 // pred_fallthru
        _
    $region6: #{vae_forward.12} parent=1 // loop_footer
      %s13 = sadd.s32 1, %s9
    $region7: #{vae_forward.12} parent=1 // loop_footer_branch
      %8 = sbr.rel target = $region3
    $region8: #{vae_forward.12} parent=1 // loop_exit
      _

// kernel: vae_forward.13
$region0: #{vae_forward.13}
  #allocation0 [shape = 'u32[]', space=smem, size = 0x4, offset = 0x4, fixed_abs, tag = 'smem constant byte address 0x4 - core index']
  #allocation1 [shape = 'u32[144,128]{1,0:T(1,128)}', space=vmem, size = 0x12000, scoped, tag = 'internal scratch']
  #allocation2 [shape = 'f32[8,256]{1,0:T(8,128)}', space=vmem, size = 0x2000, scoped, tag = 'scratch operand']
  %s0 = inlined_call_operand.vmem [shape: bf16[8,2048], index: 0, kind: input, shape index: {}]
  %s1 = inlined_call_operand.vmem [shape: bf16[2048,256], index: 1, kind: input, shape index: {}]
  %s2 = inlined_call_operand.vmem [shape: f32[1,256], index: 2, kind: input, shape index: {}]
  %s3 = inlined_call_operand.vmem [shape: f32[8,256], index: 3, kind: output, shape index: {}]
  %s4 = sld [smem:[#allocation0]]
  $region53: #{vae_forward.13} parent=0
    _
  %s6 = ssub.s32 1, %s4
  %s7 = scalar_select 0, %s6, %s4
  loop: start=0, step=1, limit=6
  $region2: #{vae_forward.13} parent=0 // loop_pre_header
    _
  $region3: #{vae_forward.13} parent=0 // loop_header
    %s9 = sphi 0, %s13
    %p10 = scmp.ge.s32.totalorder %s9, 6
    %s16 = sphi 0, %s35
    %s17 = sphi 0, %s31
    %s18 = sphi 0, %s27
    %s19 = sphi 0, %s16
    %s20 = sphi 0, %s17
    %s21 = sphi 0, %s18
    %s22 = sphi 0, %s19
    %s23 = sphi 0, %s20
    %s24 = sphi 0, %s21
    %s40 = sphi 0, %s42
    %s43 = sphi 0, %s40
    %s44 = sphi 0, %s43
    %s60 = sphi 0, %s44
    %s68 = sphi 0, %s70
    %s71 = sphi 0, %s68
    %s72 = sphi 0, %s71
    %s88 = sphi 0, %s72
    %s94 = sphi 0, %s96
    %s97 = sphi 0, %s94
    %s98 = sphi 0, %s97
    %s114 = sphi 0, %s98
    %s122 = sphi 0, %s124
    %s125 = sphi 0, %s122
    %s126 = sphi 0, %s125
    %s142 = sphi 0, %s126
  $region4: #{vae_forward.13} parent=0 // loop_header_branch
    %12 = sbr.rel (%p10) target = $region8
  $region5: #{vae_forward.13} parent=0 // loop_body
    %s14 = ssub.s32 %s9, 1
    %s15 = ssub.s32 %s9, 2
    %s25 = sadd.s32 1, %s18
    %p26 = scmp.ge.s32.totalorder %s25, 4
    %s27 = scalar_select %p26, 0, %s25
    %s28 = sadd.s32 1, %s17
    %s29 = scalar_select %p26, %s28, %s17
    %p30 = scmp.ge.s32.totalorder %s29, 1
    %s31 = scalar_select %p30, 0, %s29
    %s32 = sadd.s32 1, %s16
    %s33 = scalar_select %p30, %s32, %s16
    %p34 = scmp.ge.s32.totalorder %s33, 1
    %s35 = scalar_select %p34, 0, %s33
    %s36 = ssub.s32 %s16, %s35
    %s37 = ssub.s32 %s18, %s27
    %s38 = sor.u32 %s36, %s37
    %p39 = scmp.eq.s32.totalorder %s38, 0
    %s41 = sadd.s32 %s40, 1
    %s42 = scalar_select %p39, %s40, %s41
    %p45 = pneg %p39
    %p46 = scmp.eq.s32.totalorder %s9, 3
    %p47 = por %p45, %p46
    %p48 = scmp.ne.s32.totalorder %s40, %s43
    %p49 = scmp.eq.s32.totalorder %s9, 0
    %p50 = por %p48, %p49
    %p51 = scmp.ne.s32.totalorder %s40, %s43
    %p52 = scmp.eq.s32.totalorder %s14, 3
    %p53 = por %p51, %p52
    %p54 = scmp.ne.s32.totalorder %s43, %s44
    %p55 = scmp.eq.s32.totalorder %s14, 0
    %p56 = por %p54, %p55
    %p57 = scmp.ne.s32.totalorder %s43, %s44
    %p58 = scmp.eq.s32.totalorder %s15, 3
    %p59 = por %p57, %p58
    %p61 = scmp.ne.s32.totalorder %s44, %s60
    %p62 = scmp.eq.s32.totalorder %s15, 0
    %p63 = por %p61, %p62
    %s64 = ssub.s32 %s18, %s27
    %s65 = ssub.s32 %s17, %s31
    %s66 = sor.u32 %s64, %s65
    %p67 = scmp.eq.s32.totalorder %s66, 0
    %s69 = sadd.s32 %s68, 1
    %s70 = scalar_select %p67, %s68, %s69
    %p73 = pneg %p67
    %p74 = scmp.eq.s32.totalorder %s9, 3
    %p75 = por %p73, %p74
    %p76 = scmp.ne.s32.totalorder %s68, %s71
    %p77 = scmp.eq.s32.totalorder %s9, 0
    %p78 = por %p76, %p77
    %p79 = scmp.ne.s32.totalorder %s68, %s71
    %p80 = scmp.eq.s32.totalorder %s14, 3
    %p81 = por %p79, %p80
    %p82 = scmp.ne.s32.totalorder %s71, %s72
    %p83 = scmp.eq.s32.totalorder %s14, 0
    %p84 = por %p82, %p83
    %p85 = scmp.ne.s32.totalorder %s71, %s72
    %p86 = scmp.eq.s32.totalorder %s15, 3
    %p87 = por %p85, %p86
    %p89 = scmp.ne.s32.totalorder %s72, %s88
    %p90 = scmp.eq.s32.totalorder %s15, 0
    %p91 = por %p89, %p90
    %s92 = ssub.s32 %s17, %s31
    %p93 = scmp.eq.s32.totalorder %s92, 0
    %s95 = sadd.s32 %s94, 1
    %s96 = scalar_select %p93, %s94, %s95
    %p99 = pneg %p93
    %p100 = scmp.eq.s32.totalorder %s9, 3
    %p101 = por %p99, %p100
    %p102 = scmp.ne.s32.totalorder %s94, %s97
    %p103 = scmp.eq.s32.totalorder %s9, 0
    %p104 = por %p102, %p103
    %p105 = scmp.ne.s32.totalorder %s94, %s97
    %p106 = scmp.eq.s32.totalorder %s14, 3
    %p107 = por %p105, %p106
    %p108 = scmp.ne.s32.totalorder %s97, %s98
    %p109 = scmp.eq.s32.totalorder %s14, 0
    %p110 = por %p108, %p109
    %p111 = scmp.ne.s32.totalorder %s97, %s98
    %p112 = scmp.eq.s32.totalorder %s15, 3
    %p113 = por %p111, %p112
    %p115 = scmp.ne.s32.totalorder %s98, %s114
    %p116 = scmp.eq.s32.totalorder %s15, 0
    %p117 = por %p115, %p116
    %s118 = ssub.s32 %s16, %s35
    %s119 = ssub.s32 %s17, %s31
    %s120 = sor.u32 %s118, %s119
    %p121 = scmp.eq.s32.totalorder %s120, 0
    %s123 = sadd.s32 %s122, 1
    %s124 = scalar_select %p121, %s122, %s123
    %p127 = pneg %p121
    %p128 = scmp.eq.s32.totalorder %s9, 3
    %p129 = por %p127, %p128
    %p130 = scmp.ne.s32.totalorder %s122, %s125
    %p131 = scmp.eq.s32.totalorder %s9, 0
    %p132 = por %p130, %p131
    %p133 = scmp.ne.s32.totalorder %s122, %s125
    %p134 = scmp.eq.s32.totalorder %s14, 3
    %p135 = por %p133, %p134
    %p136 = scmp.ne.s32.totalorder %s125, %s126
    %p137 = scmp.eq.s32.totalorder %s14, 0
    %p138 = por %p136, %p137
    %p139 = scmp.ne.s32.totalorder %s125, %s126
    %p140 = scmp.eq.s32.totalorder %s15, 3
    %p141 = por %p139, %p140
    %p143 = scmp.ne.s32.totalorder %s126, %s142
    %p144 = scmp.eq.s32.totalorder %s15, 0
    %p145 = por %p143, %p144
    %p146 = scmp.le.s32.totalorder 1, %s9
    %p147 = scmp.lt.s32.totalorder %s9, 5
    %p148 = pnand %p146, %p147
    %p149 = pneg %p148
    // Predicated region
    $region9: #{vae_forward.13} parent=5 // pred_check
      _
    $region10: #{vae_forward.13} parent=5 // pred_check_branch
      %151 = sbr.rel (%p148) target = $region12
    $region11: #{vae_forward.13} parent=5 // pred_region
      %s152 = ssub.s32 %s9, 1
      // Predicated region
      $region13: #{vae_forward.13} parent=11 // pred_check
        %p153 = pneg %p110
      $region14: #{vae_forward.13} parent=11 // pred_check_branch
        %155 = sbr.rel (%p153) target = $region16
      $region15: #{vae_forward.13} parent=11 // pred_region
        %s156 = smul.u32 2, %s20
        %p157 = scmp.lt.s32.totalorder %s156, 1
        %s158 = scalar_select %p157, %s156, 1
        %s159 = scalar_lea.vmem %s2, %s158
        %s160 = smul.u32 2, %s20
      $region16: #{vae_forward.13} parent=11 // pred_fallthru
        _
    $region12: #{vae_forward.13} parent=5 // pred_fallthru
      _
    %p161 = scmp.lt.s32.totalorder %s9, 4
    // Predicated region
    $region17: #{vae_forward.13} parent=5 // pred_check
      %p162 = pneg %p161
    $region18: #{vae_forward.13} parent=5 // pred_check_branch
      %164 = sbr.rel (%p162) target = $region20
    $region19: #{vae_forward.13} parent=5 // pred_region
      // Predicated region
      $region21: #{vae_forward.13} parent=19 // pred_check
        %p165 = pneg %p50
      $region22: #{vae_forward.13} parent=19 // pred_check_branch
        %167 = sbr.rel (%p165) target = $region24
      $region23: #{vae_forward.13} parent=19 // pred_region
        %s168 = smul.u32 4, %s18
        %p169 = scmp.lt.s32.totalorder %s16, 0
        %s170 = scalar_select %p169, %s16, 0
        %p171 = scmp.lt.s32.totalorder %s168, 15
        %s172 = scalar_select %p171, %s168, 15
        %s173 = smul.addr %s170, 16
        %s174 = sadd.s32 %s172, %s173
        %s175 = smul.addr %s174, 4
        %s176 = scalar_lea.vmem %s0, %s175
        %s177 = smul.u32 4, %s18
      $region24: #{vae_forward.13} parent=19 // pred_fallthru
        _
      // Predicated region
      $region25: #{vae_forward.13} parent=19 // pred_check
        %p178 = pneg %p78
      $region26: #{vae_forward.13} parent=19 // pred_check_branch
        %180 = sbr.rel (%p178) target = $region28
      $region27: #{vae_forward.13} parent=19 // pred_region
        %s181 = smul.u32 64, %s18
        %s182 = smul.u32 2, %s17
        %p183 = scmp.lt.s32.totalorder %s181, 255
        %s184 = scalar_select %p183, %s181, 255
        %p185 = scmp.lt.s32.totalorder %s182, 1
        %s186 = scalar_select %p185, %s182, 1
        %s187 = smul.addr %s184, 2
        %s188 = sadd.s32 %s186, %s187
        %s189 = smul.addr %s188, 4
        %s190 = scalar_lea.vmem %s1, %s189
        %s191 = smul.u32 64, %s18
        %s192 = smul.u32 2, %s17
      $region28: #{vae_forward.13} parent=19 // pred_fallthru
        _
    $region20: #{vae_forward.13} parent=5 // pred_fallthru
      _
    %p193 = scmp.le.s32.totalorder 1, %s9
    %p194 = scmp.lt.s32.totalorder %s9, 5
    %p195 = pnand %p193, %p194
    %p196 = pneg %p195
    // Predicated region
    $region29: #{vae_forward.13} parent=5 // pred_check
      _
    $region30: #{vae_forward.13} parent=5 // pred_check_branch
      %198 = sbr.rel (%p195) target = $region32
    $region31: #{vae_forward.13} parent=5 // pred_region
      %s199 = ssub.s32 %s9, 1
      %s200 = smul.u32 4, %s21
      %p201 = scmp.lt.s32.totalorder %s19, 0
      %s202 = scalar_select %p201, %s19, 0
      %p203 = scmp.lt.s32.totalorder %s200, 15
      %s204 = scalar_select %p203, %s200, 15
      %s205 = smul.addr %s202, 16
      %s206 = sadd.s32 %s204, %s205
      %s207 = smul.addr %s206, 4
      %s208 = scalar_lea.vmem %s0, %s207
      %p209 = pneg %p56
      %p210 = pneg %p53
      %s211 = smul.u32 64, %s21
      %s212 = smul.u32 2, %s20
      %p213 = scmp.lt.s32.totalorder %s211, 255
      %s214 = scalar_select %p213, %s211, 255
      %p215 = scmp.lt.s32.totalorder %s212, 1
      %s216 = scalar_select %p215, %s212, 1
      %s217 = smul.addr %s214, 2
      %s218 = sadd.s32 %s216, %s217
      %s219 = smul.addr %s218, 4
      %s220 = scalar_lea.vmem %s1, %s219
      %p221 = pneg %p84
      %p222 = pneg %p81
      %s223 = smul.u32 2, %s20
      %p224 = scmp.lt.s32.totalorder %s223, 1
      %s225 = scalar_select %p224, %s223, 1
      %s226 = scalar_lea.vmem %s2, %s225
      %p227 = pneg %p110
      %p228 = pneg %p107
      %p229 = pneg %p138
      %p230 = pneg %p135
      %s231 = smul.u32 2, %s20
      %p232 = scmp.lt.s32.totalorder %s19, 0
      %s233 = scalar_select %p232, %s19, 0
      %p234 = scmp.lt.s32.totalorder %s231, 1
      %s235 = scalar_select %p234, %s231, 1
      %s236 = smul.addr %s233, 2
      %s237 = sadd.s32 %s235, %s236
      %s238 = smul.addr %s237, 8
      %s239 = scalar_lea.vmem %s3, %s238
      %s240 = smul.u32 4, %s21
      %p241 = scmp.lt.s32.totalorder %s19, 0
      %s242 = scalar_select %p241, %s19, 0
      %p243 = scmp.lt.s32.totalorder %s240, 15
      %s244 = scalar_select %p243, %s240, 15
      %s245 = smul.addr %s242, 16
      %s246 = sadd.s32 %s244, %s245
      %s247 = smul.addr %s246, 4
      %s248 = scalar_lea.vmem %s0, %s247
      %s249 = smul.u32 4, %s21
      %s250 = smul.u32 64, %s21
      %s251 = smul.u32 2, %s20
      %p252 = scmp.lt.s32.totalorder %s250, 255
      %s253 = scalar_select %p252, %s250, 255
      %p254 = scmp.lt.s32.totalorder %s251, 1
      %s255 = scalar_select %p254, %s251, 1
      %s256 = smul.addr %s253, 2
      %s257 = sadd.s32 %s255, %s256
      %s258 = smul.addr %s257, 4
      %s259 = scalar_lea.vmem %s1, %s258
      %s260 = smul.u32 64, %s21
      %s261 = smul.u32 2, %s20
      %s262 = smul.u32 2, %s20
      %p263 = scmp.lt.s32.totalorder %s262, 1
      %s264 = scalar_select %p263, %s262, 1
      %s265 = scalar_lea.vmem %s2, %s264
      %s266 = smul.u32 2, %s20
      %s267 = smul.u32 2, %s20
      %p268 = scmp.lt.s32.totalorder %s19, 0
      %s269 = scalar_select %p268, %s19, 0
      %p270 = scmp.lt.s32.totalorder %s267, 1
      %s271 = scalar_select %p270, %s267, 1
      %s272 = smul.addr %s269, 2
      %s273 = sadd.s32 %s271, %s272
      %s274 = smul.addr %s273, 8
      %s275 = scalar_lea.vmem %s3, %s274
      %s276 = smul.u32 2, %s20
      %p277 = scmp.eq.s32.totalorder %s21, 0
      // Predicated region
      $region33: #{vae_forward.13} parent=31 // pred_check
        %p278 = pneg %p277
      $region34: #{vae_forward.13} parent=31 // pred_check_branch
        %280 = sbr.rel (%p278) target = $region36
      $region35: #{vae_forward.13} parent=31 // pred_region
        %281 = vst [vmem:[#allocation2] sm:$0xff] 0.0
        %282 = vst [vmem:[#allocation2 + $0x8] sm:$0xff] 0.0
      $region36: #{vae_forward.13} parent=31 // pred_fallthru
        _
      %v283 = vld [vmem:[#allocation2] sm:$0xff]
      %v284 = vld [vmem:[#allocation2 + $0x8] sm:$0xff]
      %v285 = vld [vmem:[%s248] sm:$0xff]
      %v286 = vld [vmem:[%s248 + $0x8] sm:$0xff]
      %v287 = vld [vmem:[%s259] sm:$0xff]
      %v288 = vld [vmem:[%s259 + $0x8] sm:$0xff]
      %v289 = vld [vmem:[%s259 + $0x10] sm:$0xff]
      %v290 = vld [vmem:[%s259 + $0x18] sm:$0xff]
      %v291 = vld [vmem:[%s259 + $0x20] sm:$0xff]
      %v292 = vld [vmem:[%s259 + $0x28] sm:$0xff]
      %v293 = vld [vmem:[%s259 + $0x30] sm:$0xff]
      %v294 = vld [vmem:[%s259 + $0x38] sm:$0xff]
      %v295 = vld [vmem:[%s259 + $0x40] sm:$0xff]
      %v296 = vld [vmem:[%s259 + $0x48] sm:$0xff]
      %v297 = vld [vmem:[%s259 + $0x50] sm:$0xff]
      %v298 = vld [vmem:[%s259 + $0x58] sm:$0xff]
      %v299 = vld [vmem:[%s259 + $0x60] sm:$0xff]
      %v300 = vld [vmem:[%s259 + $0x68] sm:$0xff]
      %v301 = vld [vmem:[%s259 + $0x70] sm:$0xff]
      %v302 = vld [vmem:[%s259 + $0x78] sm:$0xff]
      %v303 = vld [vmem:[%s259 + $0x80] sm:$0xff]
      %v304 = vld [vmem:[%s259 + $0x88] sm:$0xff]
      %v305 = vld [vmem:[%s259 + $0x90] sm:$0xff]
      %v306 = vld [vmem:[%s259 + $0x98] sm:$0xff]
      %v307 = vld [vmem:[%s259 + $0xa0] sm:$0xff]
      %v308 = vld [vmem:[%s259 + $0xa8] sm:$0xff]
      %v309 = vld [vmem:[%s259 + $0xb0] sm:$0xff]
      %v310 = vld [vmem:[%s259 + $0xb8] sm:$0xff]
      %v311 = vld [vmem:[%s259 + $0xc0] sm:$0xff]
      %v312 = vld [vmem:[%s259 + $0xc8] sm:$0xff]
      %v313 = vld [vmem:[%s259 + $0xd0] sm:$0xff]
      %v314 = vld [vmem:[%s259 + $0xd8] sm:$0xff]
      %v315 = vld [vmem:[%s259 + $0xe0] sm:$0xff]
      %v316 = vld [vmem:[%s259 + $0xe8] sm:$0xff]
      %v317 = vld [vmem:[%s259 + $0xf0] sm:$0xff]
      %v318 = vld [vmem:[%s259 + $0xf8] sm:$0xff]
      %v319 = vld [vmem:[%s259 + $0x100] sm:$0xff]
      %v320 = vld [vmem:[%s259 + $0x108] sm:$0xff]
      %v321 = vld [vmem:[%s259 + $0x110] sm:$0xff]
      %v322 = vld [vmem:[%s259 + $0x118] sm:$0xff]
      %v323 = vld [vmem:[%s259 + $0x120] sm:$0xff]
      %v324 = vld [vmem:[%s259 + $0x128] sm:$0xff]
      %v325 = vld [vmem:[%s259 + $0x130] sm:$0xff]
      %v326 = vld [vmem:[%s259 + $0x138] sm:$0xff]
      %v327 = vld [vmem:[%s259 + $0x140] sm:$0xff]
      %v328 = vld [vmem:[%s259 + $0x148] sm:$0xff]
      %v329 = vld [vmem:[%s259 + $0x150] sm:$0xff]
      %v330 = vld [vmem:[%s259 + $0x158] sm:$0xff]
      %v331 = vld [vmem:[%s259 + $0x160] sm:$0xff]
      %v332 = vld [vmem:[%s259 + $0x168] sm:$0xff]
      %v333 = vld [vmem:[%s259 + $0x170] sm:$0xff]
      %v334 = vld [vmem:[%s259 + $0x178] sm:$0xff]
      %v335 = vld [vmem:[%s259 + $0x180] sm:$0xff]
      %v336 = vld [vmem:[%s259 + $0x188] sm:$0xff]
      %v337 = vld [vmem:[%s259 + $0x190] sm:$0xff]
      %v338 = vld [vmem:[%s259 + $0x198] sm:$0xff]
      %v339 = vld [vmem:[%s259 + $0x1a0] sm:$0xff]
      %v340 = vld [vmem:[%s259 + $0x1a8] sm:$0xff]
      %v341 = vld [vmem:[%s259 + $0x1b0] sm:$0xff]
      %v342 = vld [vmem:[%s259 + $0x1b8] sm:$0xff]
      %v343 = vld [vmem:[%s259 + $0x1c0] sm:$0xff]
      %v344 = vld [vmem:[%s259 + $0x1c8] sm:$0xff]
      %v345 = vld [vmem:[%s259 + $0x1d0] sm:$0xff]
      %v346 = vld [vmem:[%s259 + $0x1d8] sm:$0xff]
      %v347 = vld [vmem:[%s259 + $0x1e0] sm:$0xff]
      %v348 = vld [vmem:[%s259 + $0x1e8] sm:$0xff]
      %v349 = vld [vmem:[%s259 + $0x1f0] sm:$0xff]
      %v350 = vld [vmem:[%s259 + $0x1f8] sm:$0xff]
      %v353 = vunpack.c.l.b16 %v285
      %v354 = vunpack.c.h.b16 %v285
      %v355 = vunpack.c.l.b16 %v286
      %v356 = vunpack.c.h.b16 %v286
      %v357 = vpack.c.b16 %v353, %v353
      %v358 = vpack.c.b16 %v354, %v354
      %v359 = vpack.c.b16 %v355, %v355
      %v360 = vpack.c.b16 %v356, %v356
      %v429 = vunpack.c.l.b16 %v287
      %v430 = vunpack.c.h.b16 %v287
      %v431 = vunpack.c.l.b16 %v288
      %v432 = vunpack.c.h.b16 %v288
      %v433 = vunpack.c.l.b16 %v289
      %v434 = vunpack.c.h.b16 %v289
      %v435 = vunpack.c.l.b16 %v290
      %v436 = vunpack.c.h.b16 %v290
      %v437 = vunpack.c.l.b16 %v291
      %v438 = vunpack.c.h.b16 %v291
      %v439 = vunpack.c.l.b16 %v292
      %v440 = vunpack.c.h.b16 %v292
      %v441 = vunpack.c.l.b16 %v293
      %v442 = vunpack.c.h.b16 %v293
      %v443 = vunpack.c.l.b16 %v294
      %v444 = vunpack.c.h.b16 %v294
      %v445 = vunpack.c.l.b16 %v295
      %v446 = vunpack.c.h.b16 %v295
      %v447 = vunpack.c.l.b16 %v296
      %v448 = vunpack.c.h.b16 %v296
      %v449 = vunpack.c.l.b16 %v297
      %v450 = vunpack.c.h.b16 %v297
      %v451 = vunpack.c.l.b16 %v298
      %v452 = vunpack.c.h.b16 %v298
      %v453 = vunpack.c.l.b16 %v299
      %v454 = vunpack.c.h.b16 %v299
      %v455 = vunpack.c.l.b16 %v300
      %v456 = vunpack.c.h.b16 %v300
      %v457 = vunpack.c.l.b16 %v301
      %v458 = vunpack.c.h.b16 %v301
      %v459 = vunpack.c.l.b16 %v302
      %v460 = vunpack.c.h.b16 %v302
      %v461 = vunpack.c.l.b16 %v303
      %v462 = vunpack.c.h.b16 %v303
      %v463 = vunpack.c.l.b16 %v304
      %v464 = vunpack.c.h.b16 %v304
      %v465 = vunpack.c.l.b16 %v305
      %v466 = vunpack.c.h.b16 %v305
      %v467 = vunpack.c.l.b16 %v306
      %v468 = vunpack.c.h.b16 %v306
      %v469 = vunpack.c.l.b16 %v307
      %v470 = vunpack.c.h.b16 %v307
      %v471 = vunpack.c.l.b16 %v308
      %v472 = vunpack.c.h.b16 %v308
      %v473 = vunpack.c.l.b16 %v309
      %v474 = vunpack.c.h.b16 %v309
      %v475 = vunpack.c.l.b16 %v310
      %v476 = vunpack.c.h.b16 %v310
      %v477 = vunpack.c.l.b16 %v311
      %v478 = vunpack.c.h.b16 %v311
      %v479 = vunpack.c.l.b16 %v312
      %v480 = vunpack.c.h.b16 %v312
      %v481 = vunpack.c.l.b16 %v313
      %v482 = vunpack.c.h.b16 %v313
      %v483 = vunpack.c.l.b16 %v314
      %v484 = vunpack.c.h.b16 %v314
      %v485 = vunpack.c.l.b16 %v315
      %v486 = vunpack.c.h.b16 %v315
      %v487 = vunpack.c.l.b16 %v316
      %v488 = vunpack.c.h.b16 %v316
      %v489 = vunpack.c.l.b16 %v317
      %v490 = vunpack.c.h.b16 %v317
      %v491 = vunpack.c.l.b16 %v318
      %v492 = vunpack.c.h.b16 %v318
      %v493 = vunpack.c.l.b16 %v319
      %v494 = vunpack.c.h.b16 %v319
      %v495 = vunpack.c.l.b16 %v320
      %v496 = vunpack.c.h.b16 %v320
      %v497 = vunpack.c.l.b16 %v321
      %v498 = vunpack.c.h.b16 %v321
      %v499 = vunpack.c.l.b16 %v322
      %v500 = vunpack.c.h.b16 %v322
      %v501 = vunpack.c.l.b16 %v323
      %v502 = vunpack.c.h.b16 %v323
      %v503 = vunpack.c.l.b16 %v324
      %v504 = vunpack.c.h.b16 %v324
      %v505 = vunpack.c.l.b16 %v325
      %v506 = vunpack.c.h.b16 %v325
      %v507 = vunpack.c.l.b16 %v326
      %v508 = vunpack.c.h.b16 %v326
      %v509 = vunpack.c.l.b16 %v327
      %v510 = vunpack.c.h.b16 %v327
      %v511 = vunpack.c.l.b16 %v328
      %v512 = vunpack.c.h.b16 %v328
      %v513 = vunpack.c.l.b16 %v329
      %v514 = vunpack.c.h.b16 %v329
      %v515 = vunpack.c.l.b16 %v330
      %v516 = vunpack.c.h.b16 %v330
      %v517 = vunpack.c.l.b16 %v331
      %v518 = vunpack.c.h.b16 %v331
      %v519 = vunpack.c.l.b16 %v332
      %v520 = vunpack.c.h.b16 %v332
      %v521 = vunpack.c.l.b16 %v333
      %v522 = vunpack.c.h.b16 %v333
      %v523 = vunpack.c.l.b16 %v334
      %v524 = vunpack.c.h.b16 %v334
      %v525 = vunpack.c.l.b16 %v335
      %v526 = vunpack.c.h.b16 %v335
      %v527 = vunpack.c.l.b16 %v336
      %v528 = vunpack.c.h.b16 %v336
      %v529 = vunpack.c.l.b16 %v337
      %v530 = vunpack.c.h.b16 %v337
      %v531 = vunpack.c.l.b16 %v338
      %v532 = vunpack.c.h.b16 %v338
      %v533 = vunpack.c.l.b16 %v339
      %v534 = vunpack.c.h.b16 %v339
      %v535 = vunpack.c.l.b16 %v340
      %v536 = vunpack.c.h.b16 %v340
      %v537 = vunpack.c.l.b16 %v341
      %v538 = vunpack.c.h.b16 %v341
      %v539 = vunpack.c.l.b16 %v342
      %v540 = vunpack.c.h.b16 %v342
      %v541 = vunpack.c.l.b16 %v343
      %v542 = vunpack.c.h.b16 %v343
      %v543 = vunpack.c.l.b16 %v344
      %v544 = vunpack.c.h.b16 %v344
      %v545 = vunpack.c.l.b16 %v345
      %v546 = vunpack.c.h.b16 %v345
      %v547 = vunpack.c.l.b16 %v346
      %v548 = vunpack.c.h.b16 %v346
      %v549 = vunpack.c.l.b16 %v347
      %v550 = vunpack.c.h.b16 %v347
      %v551 = vunpack.c.l.b16 %v348
      %v552 = vunpack.c.h.b16 %v348
      %v553 = vunpack.c.l.b16 %v349
      %v554 = vunpack.c.h.b16 %v349
      %v555 = vunpack.c.l.b16 %v350
      %v556 = vunpack.c.h.b16 %v350
      %v557 = vpack.c.b16 %v431, %v429
      %v558 = vpack.c.b16 %v432, %v430
      %v559 = vpack.c.b16 %v435, %v433
      %v560 = vpack.c.b16 %v436, %v434
      %v561 = vpack.c.b16 %v439, %v437
      %v562 = vpack.c.b16 %v440, %v438
      %v563 = vpack.c.b16 %v443, %v441
      %v564 = vpack.c.b16 %v444, %v442
      %v565 = vpack.c.b16 %v447, %v445
      %v566 = vpack.c.b16 %v448, %v446
      %v567 = vpack.c.b16 %v451, %v449
      %v568 = vpack.c.b16 %v452, %v450
      %v569 = vpack.c.b16 %v455, %v453
      %v570 = vpack.c.b16 %v456, %v454
      %v571 = vpack.c.b16 %v459, %v457
      %v572 = vpack.c.b16 %v460, %v458
      %v573 = vpack.c.b16 %v463, %v461
      %v574 = vpack.c.b16 %v464, %v462
      %v575 = vpack.c.b16 %v467, %v465
      %v576 = vpack.c.b16 %v468, %v466
      %v577 = vpack.c.b16 %v471, %v469
      %v578 = vpack.c.b16 %v472, %v470
      %v579 = vpack.c.b16 %v475, %v473
      %v580 = vpack.c.b16 %v476, %v474
      %v581 = vpack.c.b16 %v479, %v477
      %v582 = vpack.c.b16 %v480, %v478
      %v583 = vpack.c.b16 %v483, %v481
      %v584 = vpack.c.b16 %v484, %v482
      %v585 = vpack.c.b16 %v487, %v485
      %v586 = vpack.c.b16 %v488, %v486
      %v587 = vpack.c.b16 %v491, %v489
      %v588 = vpack.c.b16 %v492, %v490
      %v589 = vpack.c.b16 %v495, %v493
      %v590 = vpack.c.b16 %v496, %v494
      %v591 = vpack.c.b16 %v499, %v497
      %v592 = vpack.c.b16 %v500, %v498
      %v593 = vpack.c.b16 %v503, %v501
      %v594 = vpack.c.b16 %v504, %v502
      %v595 = vpack.c.b16 %v507, %v505
      %v596 = vpack.c.b16 %v508, %v506
      %v597 = vpack.c.b16 %v511, %v509
      %v598 = vpack.c.b16 %v512, %v510
      %v599 = vpack.c.b16 %v515, %v513
      %v600 = vpack.c.b16 %v516, %v514
      %v601 = vpack.c.b16 %v519, %v517
      %v602 = vpack.c.b16 %v520, %v518
      %v603 = vpack.c.b16 %v523, %v521
      %v604 = vpack.c.b16 %v524, %v522
      %v605 = vpack.c.b16 %v527, %v525
      %v606 = vpack.c.b16 %v528, %v526
      %v607 = vpack.c.b16 %v531, %v529
      %v608 = vpack.c.b16 %v532, %v530
      %v609 = vpack.c.b16 %v535, %v533
      %v610 = vpack.c.b16 %v536, %v534
      %v611 = vpack.c.b16 %v539, %v537
      %v612 = vpack.c.b16 %v540, %v538
      %v613 = vpack.c.b16 %v543, %v541
      %v614 = vpack.c.b16 %v544, %v542
      %v615 = vpack.c.b16 %v547, %v545
      %v616 = vpack.c.b16 %v548, %v546
      %v617 = vpack.c.b16 %v551, %v549
      %v618 = vpack.c.b16 %v552, %v550
      %v619 = vpack.c.b16 %v555, %v553
      %v620 = vpack.c.b16 %v556, %v554
      %685 = vmatprep.subr.bf16.mxu0 %v558
      %686 = vmatpush1.bf16.msra.mxu0 %v557
      %687 = vmatprep.subr.bf16.mxu0 %v560
      %688 = vmatpush1.bf16.msra.mxu0 %v559
      %689 = vmatprep.subr.bf16.mxu0 %v562
      %690 = vmatpush1.bf16.msra.mxu0 %v561
      %691 = vmatprep.subr.bf16.mxu0 %v564
      %692 = vmatpush1.bf16.msra.mxu0 %v563
      %693 = vmatprep.subr.bf16.mxu0 %v566
      %694 = vmatpush1.bf16.msra.mxu0 %v565
      %695 = vmatprep.subr.bf16.mxu0 %v568
      %696 = vmatpush1.bf16.msra.mxu0 %v567
      %697 = vmatprep.subr.bf16.mxu0 %v570
      %698 = vmatpush1.bf16.msra.mxu0 %v569
      %699 = vmatprep.subr.bf16.mxu0 %v572
      %700 = vmatpush1.bf16.msra.mxu0 %v571
      %701 = vmatprep.subr.bf16.mxu0 %v574
      %702 = vmatpush1.bf16.msra.mxu0 %v573
      %703 = vmatprep.subr.bf16.mxu0 %v576
      %704 = vmatpush1.bf16.msra.mxu0 %v575
      %705 = vmatprep.subr.bf16.mxu0 %v578
      %706 = vmatpush1.bf16.msra.mxu0 %v577
      %707 = vmatprep.subr.bf16.mxu0 %v580
      %708 = vmatpush1.bf16.msra.mxu0 %v579
      %709 = vmatprep.subr.bf16.mxu0 %v582
      %710 = vmatpush1.bf16.msra.mxu0 %v581
      %711 = vmatprep.subr.bf16.mxu0 %v584
      %712 = vmatpush1.bf16.msra.mxu0 %v583
      %713 = vmatprep.subr.bf16.mxu0 %v586
      %714 = vmatpush1.bf16.msra.mxu0 %v585
      %715 = vmatprep.subr.bf16.mxu0 %v588
      %716 = vmatpush1.bf16.msra.mxu0 %v587
      %717 = vmatprep.mubr.bf16.mxu0 %v358
      %718 = vmatmul.mubr.bf16.gmra.mrb[0].mxu0 %v357
      %v719 = vpop.f32.mrb[0].mxu0
      %v720 = vadd.f32 0.0, %v719
      %v721 = vpop.f32.mrb[0].mxu0
      %v722 = vadd.f32 0.0, %v721
      %v723 = vpop.f32.mrb[0].mxu0
      %v724 = vpop.f32.mrb[0].mxu0
      %725 = vdwg.mxu0
      %726 = vmatprep.subr.bf16.mxu0 %v590
      %727 = vmatpush1.bf16.msra.mxu0 %v589
      %728 = vmatprep.subr.bf16.mxu0 %v592
      %729 = vmatpush1.bf16.msra.mxu0 %v591
      %730 = vmatprep.subr.bf16.mxu0 %v594
      %731 = vmatpush1.bf16.msra.mxu0 %v593
      %732 = vmatprep.subr.bf16.mxu0 %v596
      %733 = vmatpush1.bf16.msra.mxu0 %v595
      %734 = vmatprep.subr.bf16.mxu0 %v598
      %735 = vmatpush1.bf16.msra.mxu0 %v597
      %736 = vmatprep.subr.bf16.mxu0 %v600
      %737 = vmatpush1.bf16.msra.mxu0 %v599
      %738 = vmatprep.subr.bf16.mxu0 %v602
      %739 = vmatpush1.bf16.msra.mxu0 %v601
      %740 = vmatprep.subr.bf16.mxu0 %v604
      %741 = vmatpush1.bf16.msra.mxu0 %v603
      %742 = vmatprep.subr.bf16.mxu0 %v606
      %743 = vmatpush1.bf16.msra.mxu0 %v605
      %744 = vmatprep.subr.bf16.mxu0 %v608
      %745 = vmatpush1.bf16.msra.mxu0 %v607
      %746 = vmatprep.subr.bf16.mxu0 %v610
      %747 = vmatpush1.bf16.msra.mxu0 %v609
      %748 = vmatprep.subr.bf16.mxu0 %v612
      %749 = vmatpush1.bf16.msra.mxu0 %v611
      %750 = vmatprep.subr.bf16.mxu0 %v614
      %751 = vmatpush1.bf16.msra.mxu0 %v613
      %752 = vmatprep.subr.bf16.mxu0 %v616
      %753 = vmatpush1.bf16.msra.mxu0 %v615
      %754 = vmatprep.subr.bf16.mxu0 %v618
      %755 = vmatpush1.bf16.msra.mxu0 %v617
      %756 = vmatprep.subr.bf16.mxu0 %v620
      %757 = vmatpush1.bf16.msra.mxu0 %v619
      %758 = vmatprep.mubr.bf16.mxu0 %v360
      %759 = vmatmul.mubr.bf16.gmra.mrb[0].mxu0 %v359
      %v760 = vpop.f32.mrb[0].mxu0
      %v761 = vadd.f32 %v720, %v760
      %v762 = vpop.f32.mrb[0].mxu0
      %v763 = vadd.f32 %v722, %v762
      %v764 = vpop.f32.mrb[0].mxu0
      %v765 = vpop.f32.mrb[0].mxu0
      %766 = vdwg.mxu0
      %v767 = vadd.f32 %v283, %v761
      %v768 = vadd.f32 %v284, %v763
      %769 = vst [vmem:[#allocation2] sm:$0xff] %v767
      %770 = vst [vmem:[#allocation2 + $0x8] sm:$0xff] %v768
      %p771 = scmp.eq.s32.totalorder %s21, 3
      // Predicated region
      $region37: #{vae_forward.13} parent=31 // pred_check
        %p772 = pneg %p771
      $region38: #{vae_forward.13} parent=31 // pred_check_branch
        %774 = sbr.rel (%p772) target = $region40
      $region39: #{vae_forward.13} parent=31 // pred_region
        %v775 = vld [vmem:[#allocation2] sm:$0xff]
        %v776 = vld [vmem:[#allocation2 + $0x8] sm:$0xff]
        %v777 = vld [vmem:[%s265] sm:$0x3]
        %v779 = vlaneseq
        %v780 = vshrl.u32 %v779, 7
        %v781 = vsub.s32 0, %v780
        %v782 = vrot.slane %v777, %v781
        %v783 = vlaneseq
        %v784 = vshrl.u32 %v783, 7
        %v785 = vsub.s32 1, %v784
        %v786 = vrot.slane %v777, %v785
        %v789 = vadd.f32 %v775, %v782
        %v790 = vadd.f32 %v776, %v786
        %v791 = vmax.f32 %v789, 0.0
        %v792 = vmax.f32 %v790, 0.0
        %793 = vst [vmem:[%s275] sm:$0xff] %v791
        %794 = vst [vmem:[%s275 + $0x8] sm:$0xff] %v792
      $region40: #{vae_forward.13} parent=31 // pred_fallthru
        _
      %s795 = smul.u32 2, %s20
      %p796 = scmp.lt.s32.totalorder %s19, 0
      %s797 = scalar_select %p796, %s19, 0
      %p798 = scmp.lt.s32.totalorder %s795, 1
      %s799 = scalar_select %p798, %s795, 1
      %s800 = smul.addr %s797, 2
      %s801 = sadd.s32 %s799, %s800
      %s802 = smul.addr %s801, 8
      %s803 = scalar_lea.vmem %s3, %s802
      // Predicated region
      $region41: #{vae_forward.13} parent=31 // pred_check
        %p804 = pneg %p135
      $region42: #{vae_forward.13} parent=31 // pred_check_branch
        %806 = sbr.rel (%p804) target = $region44
      $region43: #{vae_forward.13} parent=31 // pred_region
        %s807 = smul.u32 2, %s20
      $region44: #{vae_forward.13} parent=31 // pred_fallthru
        _
      // Predicated region
      $region45: #{vae_forward.13} parent=31 // pred_check
        %p808 = pneg %p135
      $region46: #{vae_forward.13} parent=31 // pred_check_branch
        %810 = sbr.rel (%p808) target = $region48
      $region47: #{vae_forward.13} parent=31 // pred_region
        %s811 = smul.u32 2, %s20
        %p812 = scmp.lt.s32.totalorder %s19, 0
        %s813 = scalar_select %p812, %s19, 0
        %p814 = scmp.lt.s32.totalorder %s811, 1
        %s815 = scalar_select %p814, %s811, 1
        %s816 = smul.addr %s813, 2
        %s817 = sadd.s32 %s815, %s816
        %s818 = smul.addr %s817, 8
        %s819 = scalar_lea.vmem %s3, %s818
      $region48: #{vae_forward.13} parent=31 // pred_fallthru
        _
    $region32: #{vae_forward.13} parent=5 // pred_fallthru
      _
    %p820 = scmp.le.s32.totalorder 2, %s9
    // Predicated region
    $region49: #{vae_forward.13} parent=5 // pred_check
      %p821 = pneg %p820
    $region50: #{vae_forward.13} parent=5 // pred_check_branch
      %823 = sbr.rel (%p821) target = $region52
    $region51: #{vae_forward.13} parent=5 // pred_region
      %s824 = ssub.s32 %s9, 2
    $region52: #{vae_forward.13} parent=5 // pred_fallthru
      _
  $region6: #{vae_forward.13} parent=0 // loop_footer
    %s13 = sadd.s32 1, %s9
  $region7: #{vae_forward.13} parent=0 // loop_footer_branch
    %8 = sbr.rel target = $region3
  $region8: #{vae_forward.13} parent=0 // loop_exit
    _

// kernel: vae_forward.14
$region0: #{vae_forward.14}
  #allocation0 [shape = 'u32[]', space=smem, size = 0x4, offset = 0x4, fixed_abs, tag = 'smem constant byte address 0x4 - core index']
  #allocation1 [shape = 'u32[144,128]{1,0:T(1,128)}', space=vmem, size = 0x12000, scoped, tag = 'internal scratch']
  #allocation2 [shape = 'f32[2,256]{1,0:T(2,128)}', space=vmem, size = 0x800, scoped, tag = 'scratch operand']
  %s0 = inlined_call_operand.vmem [shape: bf16[2,1024], index: 0, kind: input, shape index: {}]
  %s1 = inlined_call_operand.vmem [shape: bf16[1024,256], index: 1, kind: input, shape index: {}]
  %s2 = inlined_call_operand.vmem [shape: f32[1,256], index: 2, kind: input, shape index: {}]
  %s3 = inlined_call_operand.vmem [shape: f32[2,128], index: 3, kind: input, shape index: {}]
  %s4 = inlined_call_operand.hbm [shape: f32[2,128], index: 4, kind: output, shape index: {0}]
  %s5 = inlined_call_operand.hbm [shape: f32[2,128], index: 5, kind: output, shape index: {1}]
  %s6 = inlined_call_operand.vmem [shape: f32[2,128], index: 6, kind: output, shape index: {2}]
  %7 = xla_tuple %s4, %s5, %s6
  %s8 = sld [smem:[#allocation0]]
  $region73: #{vae_forward.14} parent=0
    _
  %s10 = ssub.s32 1, %s8
  %s11 = scalar_select 0, %s10, %s8
  $region1: #{vae_forward.14} parent=0
    #allocation3 [shape = 'u8[1024]{0}', space=vmem, size = 0x400, scoped, tag = 'output window, operand 0, single buffered']
    #allocation4 [shape = 's32[2]{0}', space=sflag, size = 0x8, scoped, tag = 'scoped memory for vae_forward.14']
    #allocation5 [shape = 'u8[1024]{0}', space=vmem, size = 0x400, scoped, tag = 'output window, operand 1, single buffered']
    #allocation6 [shape = 's32[1]{0}', space=sflag, size = 0x4, scoped, tag = 'scoped memory for vae_forward.14']
    %12 = vsyncpa [#allocation4], 0
    %13 = vsyncpa [#allocation6], 0
    loop: start=0, step=1, limit=4
    $region2: #{vae_forward.14} parent=1 // loop_pre_header
      _
    $region3: #{vae_forward.14} parent=1 // loop_header
      %s15 = sphi 0, %s19
      %p16 = scmp.ge.s32.totalorder %s15, 4
      %s25 = sphi 0, %s27
      %s28 = sphi 0, %s25
      %s29 = sphi 0, %s28
      %s45 = sphi 0, %s29
      %s51 = sphi 0, %s53
      %s54 = sphi 0, %s51
      %s55 = sphi 0, %s54
      %s71 = sphi 0, %s55
      %s75 = sphi 0, %s75
      %s77 = sphi 0, %s75
      %s78 = sphi 0, %s77
      %s92 = sphi 0, %s78
      %s96 = sphi 0, %s96
      %s98 = sphi 0, %s96
      %s99 = sphi 0, %s98
      %s113 = sphi 0, %s99
      %s117 = sphi 0, %s117
      %s119 = sphi 0, %s117
      %s120 = sphi 0, %s119
      %s134 = sphi 0, %s120
      %s138 = sphi 0, %s138
      %s140 = sphi 0, %s138
      %s141 = sphi 0, %s140
      %s155 = sphi 0, %s141
      %s159 = sphi 0, %s159
      %s161 = sphi 0, %s159
      %s162 = sphi 0, %s161
      %s176 = sphi 0, %s162
    $region4: #{vae_forward.14} parent=1 // loop_header_branch
      %18 = sbr.rel (%p16) target = $region8
    $region5: #{vae_forward.14} parent=1 // loop_body
      %s20 = ssub.s32 %s15, 1
      %s21 = ssub.s32 %s15, 2
      %s22 = sadd.s32 %s15, 1
      %s23 = ssub.s32 %s15, %s22
      %p24 = scmp.eq.s32.totalorder %s23, 0
      %s26 = sadd.s32 %s25, 1
      %s27 = scalar_select %p24, %s25, %s26
      %p30 = pneg %p24
      %p31 = scmp.eq.s32.totalorder %s15, 1
      %p32 = por %p30, %p31
      %p33 = scmp.ne.s32.totalorder %s25, %s28
      %p34 = scmp.eq.s32.totalorder %s15, 0
      %p35 = por %p33, %p34
      %p36 = scmp.ne.s32.totalorder %s25, %s28
      %p37 = scmp.eq.s32.totalorder %s20, 1
      %p38 = por %p36, %p37
      %p39 = scmp.ne.s32.totalorder %s28, %s29
      %p40 = scmp.eq.s32.totalorder %s20, 0
      %p41 = por %p39, %p40
      %p42 = scmp.ne.s32.totalorder %s28, %s29
      %p43 = scmp.eq.s32.totalorder %s21, 1
      %p44 = por %p42, %p43
      %p46 = scmp.ne.s32.totalorder %s29, %s45
      %p47 = scmp.eq.s32.totalorder %s21, 0
      %p48 = por %p46, %p47
      %s49 = ssub.s32 %s15, %s22
      %p50 = scmp.eq.s32.totalorder %s49, 0
      %s52 = sadd.s32 %s51, 1
      %s53 = scalar_select %p50, %s51, %s52
      %p56 = pneg %p50
      %p57 = scmp.eq.s32.totalorder %s15, 1
      %p58 = por %p56, %p57
      %p59 = scmp.ne.s32.totalorder %s51, %s54
      %p60 = scmp.eq.s32.totalorder %s15, 0
      %p61 = por %p59, %p60
      %p62 = scmp.ne.s32.totalorder %s51, %s54
      %p63 = scmp.eq.s32.totalorder %s20, 1
      %p64 = por %p62, %p63
      %p65 = scmp.ne.s32.totalorder %s54, %s55
      %p66 = scmp.eq.s32.totalorder %s20, 0
      %p67 = por %p65, %p66
      %p68 = scmp.ne.s32.totalorder %s54, %s55
      %p69 = scmp.eq.s32.totalorder %s21, 1
      %p70 = por %p68, %p69
      %p72 = scmp.ne.s32.totalorder %s55, %s71
      %p73 = scmp.eq.s32.totalorder %s21, 0
      %p74 = por %p72, %p73
      %s76 = sadd.s32 %s75, 1
      %p79 = scmp.eq.s32.totalorder %s15, 1
      %p80 = scmp.ne.s32.totalorder %s75, %s77
      %p81 = scmp.eq.s32.totalorder %s15, 0
      %p82 = por %p80, %p81
      %p83 = scmp.ne.s32.totalorder %s75, %s77
      %p84 = scmp.eq.s32.totalorder %s20, 1
      %p85 = por %p83, %p84
      %p86 = scmp.ne.s32.totalorder %s77, %s78
      %p87 = scmp.eq.s32.totalorder %s20, 0
      %p88 = por %p86, %p87
      %p89 = scmp.ne.s32.totalorder %s77, %s78
      %p90 = scmp.eq.s32.totalorder %s21, 1
      %p91 = por %p89, %p90
      %p93 = scmp.ne.s32.totalorder %s78, %s92
      %p94 = scmp.eq.s32.totalorder %s21, 0
      %p95 = por %p93, %p94
      %s97 = sadd.s32 %s96, 1
      %p100 = scmp.eq.s32.totalorder %s15, 1
      %p101 = scmp.ne.s32.totalorder %s96, %s98
      %p102 = scmp.eq.s32.totalorder %s15, 0
      %p103 = por %p101, %p102
      %p104 = scmp.ne.s32.totalorder %s96, %s98
      %p105 = scmp.eq.s32.totalorder %s20, 1
      %p106 = por %p104, %p105
      %p107 = scmp.ne.s32.totalorder %s98, %s99
      %p108 = scmp.eq.s32.totalorder %s20, 0
      %p109 = por %p107, %p108
      %p110 = scmp.ne.s32.totalorder %s98, %s99
      %p111 = scmp.eq.s32.totalorder %s21, 1
      %p112 = por %p110, %p111
      %p114 = scmp.ne.s32.totalorder %s99, %s113
      %p115 = scmp.eq.s32.totalorder %s21, 0
      %p116 = por %p114, %p115
      %s118 = sadd.s32 %s117, 1
      %p121 = scmp.eq.s32.totalorder %s15, 1
      %p122 = scmp.ne.s32.totalorder %s117, %s119
      %p123 = scmp.eq.s32.totalorder %s15, 0
      %p124 = por %p122, %p123
      %p125 = scmp.ne.s32.totalorder %s117, %s119
      %p126 = scmp.eq.s32.totalorder %s20, 1
      %p127 = por %p125, %p126
      %p128 = scmp.ne.s32.totalorder %s119, %s120
      %p129 = scmp.eq.s32.totalorder %s20, 0
      %p130 = por %p128, %p129
      %p131 = scmp.ne.s32.totalorder %s119, %s120
      %p132 = scmp.eq.s32.totalorder %s21, 1
      %p133 = por %p131, %p132
      %p135 = scmp.ne.s32.totalorder %s120, %s134
      %p136 = scmp.eq.s32.totalorder %s21, 0
      %p137 = por %p135, %p136
      %s139 = sadd.s32 %s138, 1
      %p142 = scmp.eq.s32.totalorder %s15, 1
      %p143 = scmp.ne.s32.totalorder %s138, %s140
      %p144 = scmp.eq.s32.totalorder %s15, 0
      %p145 = por %p143, %p144
      %p146 = scmp.ne.s32.totalorder %s138, %s140
      %p147 = scmp.eq.s32.totalorder %s20, 1
      %p148 = por %p146, %p147
      %p149 = scmp.ne.s32.totalorder %s140, %s141
      %p150 = scmp.eq.s32.totalorder %s20, 0
      %p151 = por %p149, %p150
      %p152 = scmp.ne.s32.totalorder %s140, %s141
      %p153 = scmp.eq.s32.totalorder %s21, 1
      %p154 = por %p152, %p153
      %p156 = scmp.ne.s32.totalorder %s141, %s155
      %p157 = scmp.eq.s32.totalorder %s21, 0
      %p158 = por %p156, %p157
      %s160 = sadd.s32 %s159, 1
      %p163 = scmp.eq.s32.totalorder %s15, 1
      %p164 = scmp.ne.s32.totalorder %s159, %s161
      %p165 = scmp.eq.s32.totalorder %s15, 0
      %p166 = por %p164, %p165
      %p167 = scmp.ne.s32.totalorder %s159, %s161
      %p168 = scmp.eq.s32.totalorder %s20, 1
      %p169 = por %p167, %p168
      %p170 = scmp.ne.s32.totalorder %s161, %s162
      %p171 = scmp.eq.s32.totalorder %s20, 0
      %p172 = por %p170, %p171
      %p173 = scmp.ne.s32.totalorder %s161, %s162
      %p174 = scmp.eq.s32.totalorder %s21, 1
      %p175 = por %p173, %p174
      %p177 = scmp.ne.s32.totalorder %s162, %s176
      %p178 = scmp.eq.s32.totalorder %s21, 0
      %p179 = por %p177, %p178
      %p180 = scmp.le.s32.totalorder 1, %s15
      %p181 = scmp.lt.s32.totalorder %s15, 3
      %p182 = pnand %p180, %p181
      %p183 = pneg %p182
      // Predicated region
      $region9: #{vae_forward.14} parent=5 // pred_check
        _
      $region10: #{vae_forward.14} parent=5 // pred_check_branch
        %185 = sbr.rel (%p182) target = $region12
      $region11: #{vae_forward.14} parent=5 // pred_region
        %s186 = ssub.s32 %s15, 1
        // Predicated region
        $region13: #{vae_forward.14} parent=11 // pred_check
          %p187 = pneg %p88
        $region14: #{vae_forward.14} parent=11 // pred_check_branch
          %189 = sbr.rel (%p187) target = $region16
        $region15: #{vae_forward.14} parent=11 // pred_region
          _
        $region16: #{vae_forward.14} parent=11 // pred_fallthru
          _
        // Predicated region
        $region17: #{vae_forward.14} parent=11 // pred_check
          %p190 = pneg %p109
        $region18: #{vae_forward.14} parent=11 // pred_check_branch
          %192 = sbr.rel (%p190) target = $region20
        $region19: #{vae_forward.14} parent=11 // pred_region
          _
        $region20: #{vae_forward.14} parent=11 // pred_fallthru
          _
      $region12: #{vae_forward.14} parent=5 // pred_fallthru
        _
      %p193 = scmp.lt.s32.totalorder %s15, 2
      // Predicated region
      $region21: #{vae_forward.14} parent=5 // pred_check
        %p194 = pneg %p193
      $region22: #{vae_forward.14} parent=5 // pred_check_branch
        %196 = sbr.rel (%p194) target = $region24
      $region23: #{vae_forward.14} parent=5 // pred_region
        // Predicated region
        $region25: #{vae_forward.14} parent=23 // pred_check
          %p197 = pneg %p35
        $region26: #{vae_forward.14} parent=23 // pred_check_branch
          %199 = sbr.rel (%p197) target = $region28
        $region27: #{vae_forward.14} parent=23 // pred_region
          %s200 = smul.u32 4, %s15
          %p201 = scmp.lt.s32.totalorder %s200, 7
          %s202 = scalar_select %p201, %s200, 7
          %s203 = scalar_lea.vmem %s0, %s202
          %s204 = smul.u32 4, %s15
        $region28: #{vae_forward.14} parent=23 // pred_fallthru
          _
        // Predicated region
        $region29: #{vae_forward.14} parent=23 // pred_check
          %p205 = pneg %p61
        $region30: #{vae_forward.14} parent=23 // pred_check_branch
          %207 = sbr.rel (%p205) target = $region32
        $region31: #{vae_forward.14} parent=23 // pred_region
          %s208 = smul.u32 64, %s15
          %p209 = scmp.lt.s32.totalorder %s208, 127
          %s210 = scalar_select %p209, %s208, 127
          %s211 = smul.addr %s210, 2
          %s212 = smul.addr %s211, 4
          %s213 = scalar_lea.vmem %s1, %s212
          %s214 = smul.u32 64, %s15
        $region32: #{vae_forward.14} parent=23 // pred_fallthru
          _
      $region24: #{vae_forward.14} parent=5 // pred_fallthru
        _
      %p215 = scmp.le.s32.totalorder 1, %s15
      %p216 = scmp.lt.s32.totalorder %s15, 3
      %p217 = pnand %p215, %p216
      %p218 = pneg %p217
      // Predicated region
      $region33: #{vae_forward.14} parent=5 // pred_check
        _
      $region34: #{vae_forward.14} parent=5 // pred_check_branch
        %220 = sbr.rel (%p217) target = $region36
      $region35: #{vae_forward.14} parent=5 // pred_region
        %s221 = ssub.s32 %s15, 1
        %s222 = smul.u32 4, %s20
        %p223 = scmp.lt.s32.totalorder %s222, 7
        %s224 = scalar_select %p223, %s222, 7
        %s225 = scalar_lea.vmem %s0, %s224
        %p226 = pneg %p41
        %p227 = pneg %p38
        %s228 = smul.u32 64, %s20
        %p229 = scmp.lt.s32.totalorder %s228, 127
        %s230 = scalar_select %p229, %s228, 127
        %s231 = smul.addr %s230, 2
        %s232 = smul.addr %s231, 4
        %s233 = scalar_lea.vmem %s1, %s232
        %p234 = pneg %p67
        %p235 = pneg %p64
        %p236 = pneg %p88
        %p237 = pneg %p85
        %p238 = pneg %p109
        %p239 = pneg %p106
        %p240 = pneg %p130
        %p241 = pneg %p127
        %p242 = pneg %p151
        %p243 = pneg %p148
        %p244 = pneg %p172
        %p245 = pneg %p169
        %s246 = smul.u32 4, %s20
        %p247 = scmp.lt.s32.totalorder %s246, 7
        %s248 = scalar_select %p247, %s246, 7
        %s249 = scalar_lea.vmem %s0, %s248
        %s250 = smul.u32 4, %s20
        %s251 = smul.u32 64, %s20
        %p252 = scmp.lt.s32.totalorder %s251, 127
        %s253 = scalar_select %p252, %s251, 127
        %s254 = smul.addr %s253, 2
        %s255 = smul.addr %s254, 4
        %s256 = scalar_lea.vmem %s1, %s255
        %s257 = smul.u32 64, %s20
        %p258 = scmp.eq.s32.totalorder %s20, 0
        // Predicated region
        $region37: #{vae_forward.14} parent=35 // pred_check
          %p259 = pneg %p258
        $region38: #{vae_forward.14} parent=35 // pred_check_branch
          %261 = sbr.rel (%p259) target = $region40
        $region39: #{vae_forward.14} parent=35 // pred_region
          %262 = vst [vmem:[#allocation2] sm:$0xf] 0.0
        $region40: #{vae_forward.14} parent=35 // pred_fallthru
          _
        %v263 = vld [vmem:[#allocation2] sm:$0xf]
        %v264 = vld [vmem:[%s249] sm:$0xf]
        %v265 = vld [vmem:[%s256] sm:$0xff]
        %v266 = vld [vmem:[%s256 + $0x8] sm:$0xff]
        %v267 = vld [vmem:[%s256 + $0x10] sm:$0xff]
        %v268 = vld [vmem:[%s256 + $0x18] sm:$0xff]
        %v269 = vld [vmem:[%s256 + $0x20] sm:$0xff]
        %v270 = vld [vmem:[%s256 + $0x28] sm:$0xff]
        %v271 = vld [vmem:[%s256 + $0x30] sm:$0xff]
        %v272 = vld [vmem:[%s256 + $0x38] sm:$0xff]
        %v273 = vld [vmem:[%s256 + $0x40] sm:$0xff]
        %v274 = vld [vmem:[%s256 + $0x48] sm:$0xff]
        %v275 = vld [vmem:[%s256 + $0x50] sm:$0xff]
        %v276 = vld [vmem:[%s256 + $0x58] sm:$0xff]
        %v277 = vld [vmem:[%s256 + $0x60] sm:$0xff]
        %v278 = vld [vmem:[%s256 + $0x68] sm:$0xff]
        %v279 = vld [vmem:[%s256 + $0x70] sm:$0xff]
        %v280 = vld [vmem:[%s256 + $0x78] sm:$0xff]
        %v281 = vld [vmem:[%s256 + $0x80] sm:$0xff]
        %v282 = vld [vmem:[%s256 + $0x88] sm:$0xff]
        %v283 = vld [vmem:[%s256 + $0x90] sm:$0xff]
        %v284 = vld [vmem:[%s256 + $0x98] sm:$0xff]
        %v285 = vld [vmem:[%s256 + $0xa0] sm:$0xff]
        %v286 = vld [vmem:[%s256 + $0xa8] sm:$0xff]
        %v287 = vld [vmem:[%s256 + $0xb0] sm:$0xff]
        %v288 = vld [vmem:[%s256 + $0xb8] sm:$0xff]
        %v289 = vld [vmem:[%s256 + $0xc0] sm:$0xff]
        %v290 = vld [vmem:[%s256 + $0xc8] sm:$0xff]
        %v291 = vld [vmem:[%s256 + $0xd0] sm:$0xff]
        %v292 = vld [vmem:[%s256 + $0xd8] sm:$0xff]
        %v293 = vld [vmem:[%s256 + $0xe0] sm:$0xff]
        %v294 = vld [vmem:[%s256 + $0xe8] sm:$0xff]
        %v295 = vld [vmem:[%s256 + $0xf0] sm:$0xff]
        %v296 = vld [vmem:[%s256 + $0xf8] sm:$0xff]
        %v297 = vld [vmem:[%s256 + $0x100] sm:$0xff]
        %v298 = vld [vmem:[%s256 + $0x108] sm:$0xff]
        %v299 = vld [vmem:[%s256 + $0x110] sm:$0xff]
        %v300 = vld [vmem:[%s256 + $0x118] sm:$0xff]
        %v301 = vld [vmem:[%s256 + $0x120] sm:$0xff]
        %v302 = vld [vmem:[%s256 + $0x128] sm:$0xff]
        %v303 = vld [vmem:[%s256 + $0x130] sm:$0xff]
        %v304 = vld [vmem:[%s256 + $0x138] sm:$0xff]
        %v305 = vld [vmem:[%s256 + $0x140] sm:$0xff]
        %v306 = vld [vmem:[%s256 + $0x148] sm:$0xff]
        %v307 = vld [vmem:[%s256 + $0x150] sm:$0xff]
        %v308 = vld [vmem:[%s256 + $0x158] sm:$0xff]
        %v309 = vld [vmem:[%s256 + $0x160] sm:$0xff]
        %v310 = vld [vmem:[%s256 + $0x168] sm:$0xff]
        %v311 = vld [vmem:[%s256 + $0x170] sm:$0xff]
        %v312 = vld [vmem:[%s256 + $0x178] sm:$0xff]
        %v313 = vld [vmem:[%s256 + $0x180] sm:$0xff]
        %v314 = vld [vmem:[%s256 + $0x188] sm:$0xff]
        %v315 = vld [vmem:[%s256 + $0x190] sm:$0xff]
        %v316 = vld [vmem:[%s256 + $0x198] sm:$0xff]
        %v317 = vld [vmem:[%s256 + $0x1a0] sm:$0xff]
        %v318 = vld [vmem:[%s256 + $0x1a8] sm:$0xff]
        %v319 = vld [vmem:[%s256 + $0x1b0] sm:$0xff]
        %v320 = vld [vmem:[%s256 + $0x1b8] sm:$0xff]
        %v321 = vld [vmem:[%s256 + $0x1c0] sm:$0xff]
        %v322 = vld [vmem:[%s256 + $0x1c8] sm:$0xff]
        %v323 = vld [vmem:[%s256 + $0x1d0] sm:$0xff]
        %v324 = vld [vmem:[%s256 + $0x1d8] sm:$0xff]
        %v325 = vld [vmem:[%s256 + $0x1e0] sm:$0xff]
        %v326 = vld [vmem:[%s256 + $0x1e8] sm:$0xff]
        %v327 = vld [vmem:[%s256 + $0x1f0] sm:$0xff]
        %v328 = vld [vmem:[%s256 + $0x1f8] sm:$0xff]
        %v331 = vunpack.c.l.s4 1966171168
        %v332 = vunpack.c.0.s8 %v331
        %v333 = vlaneseq
        %v334 = vshrl.u32 %v333, 7
        %v335 = vsub.s32 %v332, %v334
        %v336 = vrot.slane %v264, %v335
        %v337 = vcombine.high %v336, %v336
        %v339 = vunpack.c.l.s4 1966171168
        %v340 = vunpack.c.0.s8 %v339
        %v341 = vlaneseq
        %v342 = vshrl.u32 %v341, 7
        %v343 = vsub.s32 %v340, %v342
        %v344 = vrot.slane %v336, %v343
        %v346 = vunpack.c.l.s4 1966171168
        %v347 = vunpack.c.0.s8 %v346
        %v348 = vlaneseq
        %v349 = vshrl.u32 %v348, 7
        %v350 = vsub.s32 %v347, %v349
        %v351 = vrot.slane %v337, %v350
        %v352 = vcombine.high %v344, %v344
        %v353 = vcombine.high %v351, %v351
        %v422 = vunpack.c.l.b16 %v265
        %v423 = vunpack.c.h.b16 %v265
        %v424 = vunpack.c.l.b16 %v266
        %v425 = vunpack.c.h.b16 %v266
        %v426 = vunpack.c.l.b16 %v267
        %v427 = vunpack.c.h.b16 %v267
        %v428 = vunpack.c.l.b16 %v268
        %v429 = vunpack.c.h.b16 %v268
        %v430 = vunpack.c.l.b16 %v269
        %v431 = vunpack.c.h.b16 %v269
        %v432 = vunpack.c.l.b16 %v270
        %v433 = vunpack.c.h.b16 %v270
        %v434 = vunpack.c.l.b16 %v271
        %v435 = vunpack.c.h.b16 %v271
        %v436 = vunpack.c.l.b16 %v272
        %v437 = vunpack.c.h.b16 %v272
        %v438 = vunpack.c.l.b16 %v273
        %v439 = vunpack.c.h.b16 %v273
        %v440 = vunpack.c.l.b16 %v274
        %v441 = vunpack.c.h.b16 %v274
        %v442 = vunpack.c.l.b16 %v275
        %v443 = vunpack.c.h.b16 %v275
        %v444 = vunpack.c.l.b16 %v276
        %v445 = vunpack.c.h.b16 %v276
        %v446 = vunpack.c.l.b16 %v277
        %v447 = vunpack.c.h.b16 %v277
        %v448 = vunpack.c.l.b16 %v278
        %v449 = vunpack.c.h.b16 %v278
        %v450 = vunpack.c.l.b16 %v279
        %v451 = vunpack.c.h.b16 %v279
        %v452 = vunpack.c.l.b16 %v280
        %v453 = vunpack.c.h.b16 %v280
        %v454 = vunpack.c.l.b16 %v281
        %v455 = vunpack.c.h.b16 %v281
        %v456 = vunpack.c.l.b16 %v282
        %v457 = vunpack.c.h.b16 %v282
        %v458 = vunpack.c.l.b16 %v283
        %v459 = vunpack.c.h.b16 %v283
        %v460 = vunpack.c.l.b16 %v284
        %v461 = vunpack.c.h.b16 %v284
        %v462 = vunpack.c.l.b16 %v285
        %v463 = vunpack.c.h.b16 %v285
        %v464 = vunpack.c.l.b16 %v286
        %v465 = vunpack.c.h.b16 %v286
        %v466 = vunpack.c.l.b16 %v287
        %v467 = vunpack.c.h.b16 %v287
        %v468 = vunpack.c.l.b16 %v288
        %v469 = vunpack.c.h.b16 %v288
        %v470 = vunpack.c.l.b16 %v289
        %v471 = vunpack.c.h.b16 %v289
        %v472 = vunpack.c.l.b16 %v290
        %v473 = vunpack.c.h.b16 %v290
        %v474 = vunpack.c.l.b16 %v291
        %v475 = vunpack.c.h.b16 %v291
        %v476 = vunpack.c.l.b16 %v292
        %v477 = vunpack.c.h.b16 %v292
        %v478 = vunpack.c.l.b16 %v293
        %v479 = vunpack.c.h.b16 %v293
        %v480 = vunpack.c.l.b16 %v294
        %v481 = vunpack.c.h.b16 %v294
        %v482 = vunpack.c.l.b16 %v295
        %v483 = vunpack.c.h.b16 %v295
        %v484 = vunpack.c.l.b16 %v296
        %v485 = vunpack.c.h.b16 %v296
        %v486 = vunpack.c.l.b16 %v297
        %v487 = vunpack.c.h.b16 %v297
        %v488 = vunpack.c.l.b16 %v298
        %v489 = vunpack.c.h.b16 %v298
        %v490 = vunpack.c.l.b16 %v299
        %v491 = vunpack.c.h.b16 %v299
        %v492 = vunpack.c.l.b16 %v300
        %v493 = vunpack.c.h.b16 %v300
        %v494 = vunpack.c.l.b16 %v301
        %v495 = vunpack.c.h.b16 %v301
        %v496 = vunpack.c.l.b16 %v302
        %v497 = vunpack.c.h.b16 %v302
        %v498 = vunpack.c.l.b16 %v303
        %v499 = vunpack.c.h.b16 %v303
        %v500 = vunpack.c.l.b16 %v304
        %v501 = vunpack.c.h.b16 %v304
        %v502 = vunpack.c.l.b16 %v305
        %v503 = vunpack.c.h.b16 %v305
        %v504 = vunpack.c.l.b16 %v306
        %v505 = vunpack.c.h.b16 %v306
        %v506 = vunpack.c.l.b16 %v307
        %v507 = vunpack.c.h.b16 %v307
        %v508 = vunpack.c.l.b16 %v308
        %v509 = vunpack.c.h.b16 %v308
        %v510 = vunpack.c.l.b16 %v309
        %v511 = vunpack.c.h.b16 %v309
        %v512 = vunpack.c.l.b16 %v310
        %v513 = vunpack.c.h.b16 %v310
        %v514 = vunpack.c.l.b16 %v311
        %v515 = vunpack.c.h.b16 %v311
        %v516 = vunpack.c.l.b16 %v312
        %v517 = vunpack.c.h.b16 %v312
        %v518 = vunpack.c.l.b16 %v313
        %v519 = vunpack.c.h.b16 %v313
        %v520 = vunpack.c.l.b16 %v314
        %v521 = vunpack.c.h.b16 %v314
        %v522 = vunpack.c.l.b16 %v315
        %v523 = vunpack.c.h.b16 %v315
        %v524 = vunpack.c.l.b16 %v316
        %v525 = vunpack.c.h.b16 %v316
        %v526 = vunpack.c.l.b16 %v317
        %v527 = vunpack.c.h.b16 %v317
        %v528 = vunpack.c.l.b16 %v318
        %v529 = vunpack.c.h.b16 %v318
        %v530 = vunpack.c.l.b16 %v319
        %v531 = vunpack.c.h.b16 %v319
        %v532 = vunpack.c.l.b16 %v320
        %v533 = vunpack.c.h.b16 %v320
        %v534 = vunpack.c.l.b16 %v321
        %v535 = vunpack.c.h.b16 %v321
        %v536 = vunpack.c.l.b16 %v322
        %v537 = vunpack.c.h.b16 %v322
        %v538 = vunpack.c.l.b16 %v323
        %v539 = vunpack.c.h.b16 %v323
        %v540 = vunpack.c.l.b16 %v324
        %v541 = vunpack.c.h.b16 %v324
        %v542 = vunpack.c.l.b16 %v325
        %v543 = vunpack.c.h.b16 %v325
        %v544 = vunpack.c.l.b16 %v326
        %v545 = vunpack.c.h.b16 %v326
        %v546 = vunpack.c.l.b16 %v327
        %v547 = vunpack.c.h.b16 %v327
        %v548 = vunpack.c.l.b16 %v328
        %v549 = vunpack.c.h.b16 %v328
        %v550 = vpack.c.b16 %v424, %v422
        %v551 = vpack.c.b16 %v425, %v423
        %v552 = vpack.c.b16 %v428, %v426
        %v553 = vpack.c.b16 %v429, %v427
        %v554 = vpack.c.b16 %v432, %v430
        %v555 = vpack.c.b16 %v433, %v431
        %v556 = vpack.c.b16 %v436, %v434
        %v557 = vpack.c.b16 %v437, %v435
        %v558 = vpack.c.b16 %v440, %v438
        %v559 = vpack.c.b16 %v441, %v439
        %v560 = vpack.c.b16 %v444, %v442
        %v561 = vpack.c.b16 %v445, %v443
        %v562 = vpack.c.b16 %v448, %v446
        %v563 = vpack.c.b16 %v449, %v447
        %v564 = vpack.c.b16 %v452, %v450
        %v565 = vpack.c.b16 %v453, %v451
        %v566 = vpack.c.b16 %v456, %v454
        %v567 = vpack.c.b16 %v457, %v455
        %v568 = vpack.c.b16 %v460, %v458
        %v569 = vpack.c.b16 %v461, %v459
        %v570 = vpack.c.b16 %v464, %v462
        %v571 = vpack.c.b16 %v465, %v463
        %v572 = vpack.c.b16 %v468, %v466
        %v573 = vpack.c.b16 %v469, %v467
        %v574 = vpack.c.b16 %v472, %v470
        %v575 = vpack.c.b16 %v473, %v471
        %v576 = vpack.c.b16 %v476, %v474
        %v577 = vpack.c.b16 %v477, %v475
        %v578 = vpack.c.b16 %v480, %v478
        %v579 = vpack.c.b16 %v481, %v479
        %v580 = vpack.c.b16 %v484, %v482
        %v581 = vpack.c.b16 %v485, %v483
        %v582 = vpack.c.b16 %v488, %v486
        %v583 = vpack.c.b16 %v489, %v487
        %v584 = vpack.c.b16 %v492, %v490
        %v585 = vpack.c.b16 %v493, %v491
        %v586 = vpack.c.b16 %v496, %v494
        %v587 = vpack.c.b16 %v497, %v495
        %v588 = vpack.c.b16 %v500, %v498
        %v589 = vpack.c.b16 %v501, %v499
        %v590 = vpack.c.b16 %v504, %v502
        %v591 = vpack.c.b16 %v505, %v503
        %v592 = vpack.c.b16 %v508, %v506
        %v593 = vpack.c.b16 %v509, %v507
        %v594 = vpack.c.b16 %v512, %v510
        %v595 = vpack.c.b16 %v513, %v511
        %v596 = vpack.c.b16 %v516, %v514
        %v597 = vpack.c.b16 %v517, %v515
        %v598 = vpack.c.b16 %v520, %v518
        %v599 = vpack.c.b16 %v521, %v519
        %v600 = vpack.c.b16 %v524, %v522
        %v601 = vpack.c.b16 %v525, %v523
        %v602 = vpack.c.b16 %v528, %v526
        %v603 = vpack.c.b16 %v529, %v527
        %v604 = vpack.c.b16 %v532, %v530
        %v605 = vpack.c.b16 %v533, %v531
        %v606 = vpack.c.b16 %v536, %v534
        %v607 = vpack.c.b16 %v537, %v535
        %v608 = vpack.c.b16 %v540, %v538
        %v609 = vpack.c.b16 %v541, %v539
        %v610 = vpack.c.b16 %v544, %v542
        %v611 = vpack.c.b16 %v545, %v543
        %v612 = vpack.c.b16 %v548, %v546
        %v613 = vpack.c.b16 %v549, %v547
        %678 = vmatprep.subr.bf16.mxu0 %v551
        %679 = vmatpush1.bf16.msra.mxu0 %v550
        %680 = vmatprep.subr.bf16.mxu0 %v553
        %681 = vmatpush1.bf16.msra.mxu0 %v552
        %682 = vmatprep.subr.bf16.mxu0 %v555
        %683 = vmatpush1.bf16.msra.mxu0 %v554
        %684 = vmatprep.subr.bf16.mxu0 %v557
        %685 = vmatpush1.bf16.msra.mxu0 %v556
        %686 = vmatprep.subr.bf16.mxu0 %v559
        %687 = vmatpush1.bf16.msra.mxu0 %v558
        %688 = vmatprep.subr.bf16.mxu0 %v561
        %689 = vmatpush1.bf16.msra.mxu0 %v560
        %690 = vmatprep.subr.bf16.mxu0 %v563
        %691 = vmatpush1.bf16.msra.mxu0 %v562
        %692 = vmatprep.subr.bf16.mxu0 %v565
        %693 = vmatpush1.bf16.msra.mxu0 %v564
        %694 = vmatprep.subr.bf16.mxu0 %v567
        %695 = vmatpush1.bf16.msra.mxu0 %v566
        %696 = vmatprep.subr.bf16.mxu0 %v569
        %697 = vmatpush1.bf16.msra.mxu0 %v568
        %698 = vmatprep.subr.bf16.mxu0 %v571
        %699 = vmatpush1.bf16.msra.mxu0 %v570
        %700 = vmatprep.subr.bf16.mxu0 %v573
        %701 = vmatpush1.bf16.msra.mxu0 %v572
        %702 = vmatprep.subr.bf16.mxu0 %v575
        %703 = vmatpush1.bf16.msra.mxu0 %v574
        %704 = vmatprep.subr.bf16.mxu0 %v577
        %705 = vmatpush1.bf16.msra.mxu0 %v576
        %706 = vmatprep.subr.bf16.mxu0 %v579
        %707 = vmatpush1.bf16.msra.mxu0 %v578
        %708 = vmatprep.subr.bf16.mxu0 %v581
        %709 = vmatpush1.bf16.msra.mxu0 %v580
        %710 = vmatprep.mubr.bf16.mxu0 %v351
        %711 = vmatmul.mubr.bf16.gmra.mrb[0].mxu0 %v344
        %v712 = vpop.f32.mrb[0].mxu0
        %v713 = vadd.f32 0.0, %v712
        %v714 = vpop.f32.mrb[0].mxu0
        %v715 = vadd.f32 0.0, %v714
        %v716 = vpop.f32.mrb[0].mxu0
        %v717 = vpop.f32.mrb[0].mxu0
        %718 = vdwg.mxu0
        %719 = vmatprep.subr.bf16.mxu0 %v583
        %720 = vmatpush1.bf16.msra.mxu0 %v582
        %721 = vmatprep.subr.bf16.mxu0 %v585
        %722 = vmatpush1.bf16.msra.mxu0 %v584
        %723 = vmatprep.subr.bf16.mxu0 %v587
        %724 = vmatpush1.bf16.msra.mxu0 %v586
        %725 = vmatprep.subr.bf16.mxu0 %v589
        %726 = vmatpush1.bf16.msra.mxu0 %v588
        %727 = vmatprep.subr.bf16.mxu0 %v591
        %728 = vmatpush1.bf16.msra.mxu0 %v590
        %729 = vmatprep.subr.bf16.mxu0 %v593
        %730 = vmatpush1.bf16.msra.mxu0 %v592
        %731 = vmatprep.subr.bf16.mxu0 %v595
        %732 = vmatpush1.bf16.msra.mxu0 %v594
        %733 = vmatprep.subr.bf16.mxu0 %v597
        %734 = vmatpush1.bf16.msra.mxu0 %v596
        %735 = vmatprep.subr.bf16.mxu0 %v599
        %736 = vmatpush1.bf16.msra.mxu0 %v598
        %737 = vmatprep.subr.bf16.mxu0 %v601
        %738 = vmatpush1.bf16.msra.mxu0 %v600
        %739 = vmatprep.subr.bf16.mxu0 %v603
        %740 = vmatpush1.bf16.msra.mxu0 %v602
        %741 = vmatprep.subr.bf16.mxu0 %v605
        %742 = vmatpush1.bf16.msra.mxu0 %v604
        %743 = vmatprep.subr.bf16.mxu0 %v607
        %744 = vmatpush1.bf16.msra.mxu0 %v606
        %745 = vmatprep.subr.bf16.mxu0 %v609
        %746 = vmatpush1.bf16.msra.mxu0 %v608
        %747 = vmatprep.subr.bf16.mxu0 %v611
        %748 = vmatpush1.bf16.msra.mxu0 %v610
        %749 = vmatprep.subr.bf16.mxu0 %v613
        %750 = vmatpush1.bf16.msra.mxu0 %v612
        %751 = vmatprep.mubr.bf16.mxu0 %v353
        %752 = vmatmul.mubr.bf16.gmra.mrb[0].mxu0 %v352
        %v753 = vpop.f32.mrb[0].mxu0
        %v754 = vadd.f32 %v713, %v753
        %v755 = vpop.f32.mrb[0].mxu0
        %v756 = vadd.f32 %v715, %v755
        %v757 = vpop.f32.mrb[0].mxu0
        %v758 = vpop.f32.mrb[0].mxu0
        %759 = vdwg.mxu0
        %v762 = vcombine.low %v754, %v756
        %v764 = vunpack.c.l.s4 1983009808
        %v765 = vunpack.c.0.s8 %v764
        %v766 = vlaneseq
        %v767 = vshrl.u32 %v766, 7
        %v768 = vsub.s32 %v765, %v767
        %v769 = vrot.slane %v762, %v768
        %v771 = vadd.f32 %v263, %v769
        %772 = vst [vmem:[#allocation2] sm:$0xf] %v771
        %p773 = scmp.eq.s32.totalorder %s20, 1
        // Predicated region
        $region41: #{vae_forward.14} parent=35 // pred_check
          %p774 = pneg %p773
        $region42: #{vae_forward.14} parent=35 // pred_check_branch
          %776 = sbr.rel (%p774) target = $region44
        $region43: #{vae_forward.14} parent=35 // pred_region
          %v777 = vld [vmem:[#allocation2] sm:$0xf]
          %v778 = vld [vmem:[%s2] sm:$0x3]
          %v780 = vlaneseq
          %v781 = vshrl.u32 %v780, 7
          %v782 = vsub.s32 0, %v781
          %v783 = vrot.slane %v778, %v782
          %v784 = vlaneseq
          %v785 = vshrl.u32 %v784, 7
          %v786 = vsub.s32 1, %v785
          %v787 = vrot.slane %v778, %v786
          %v788 = vcombine.low %v783, %v787
          %v790 = vunpack.c.l.s4 1983009808
          %v791 = vunpack.c.0.s8 %v790
          %v792 = vlaneseq
          %v793 = vshrl.u32 %v792, 7
          %v794 = vsub.s32 %v791, %v793
          %v795 = vrot.slane %v788, %v794
          %v797 = vadd.f32 %v777, %v795
          %798 = vst [vmem:[#allocation3] sm:$0x3] %v797
          %v801 = vunpack.c.l.s4 1983009808
          %v802 = vunpack.c.0.s8 %v801
          %v803 = vlaneseq
          %v804 = vshrl.u32 %v803, 7
          %v805 = vsub.s32 %v802, %v804
          %v806 = vrot.slane %v797, %v805
          %v807 = vcombine.high %v806, %v806
          %809 = vst [vmem:[#allocation5] sm:$0x3] %v807
          %v810 = vld [vmem:[%s3] sm:$0x3]
          %v811 = vrot.slane %v797, 2
          %v813 = vmul.f32 %v811, 0.5
          %v814 = vmul.f32 %v813, 1.442695
          %v815 = vpow.pop %v814
          %v816 = vmul.f32 %v810, %v815
          %v817 = vadd.f32 %v797, %v816
          %818 = vst [vmem:[%s6] sm:$0x3] %v817
        $region44: #{vae_forward.14} parent=35 // pred_fallthru
          _
        // Predicated region
        $region45: #{vae_forward.14} parent=35 // pred_check
          %p819 = pneg %p127
        $region46: #{vae_forward.14} parent=35 // pred_check_branch
          %821 = sbr.rel (%p819) target = $region48
        $region47: #{vae_forward.14} parent=35 // pred_region
          %s823 = ssub.s32 32, 32
          %824 = vsyncadd [#allocation4], %s823
          %s826 = sshll.u32 [#allocation3], 4
          %s827 = int_to_ptr.vmem [resolvable:$true] %s826
          %829 = dma.vmem_to_hbm [thread:$0]  %s827, 32, %s4, [#allocation4]
        $region48: #{vae_forward.14} parent=35 // pred_fallthru
          _
        // Predicated region
        $region49: #{vae_forward.14} parent=35 // pred_check
          %p830 = pneg %p148
        $region50: #{vae_forward.14} parent=35 // pred_check_branch
          %832 = sbr.rel (%p830) target = $region52
        $region51: #{vae_forward.14} parent=35 // pred_region
          %s834 = ssub.s32 32, 32
          %835 = vsyncadd [#allocation6], %s834
          %s837 = sshll.u32 [#allocation5], 4
          %s838 = int_to_ptr.vmem [resolvable:$true] %s837
          %840 = dma.vmem_to_hbm [thread:$0]  %s838, 32, %s5, [#allocation6]
        $region52: #{vae_forward.14} parent=35 // pred_fallthru
          _
        // Predicated region
        $region53: #{vae_forward.14} parent=35 // pred_check
          %p841 = pneg %p169
        $region54: #{vae_forward.14} parent=35 // pred_check_branch
          %843 = sbr.rel (%p841) target = $region56
        $region55: #{vae_forward.14} parent=35 // pred_region
          _
        $region56: #{vae_forward.14} parent=35 // pred_fallthru
          _
        // Predicated region
        $region57: #{vae_forward.14} parent=35 // pred_check
          %p844 = pneg %p127
        $region58: #{vae_forward.14} parent=35 // pred_check_branch
          %846 = sbr.rel (%p844) target = $region60
        $region59: #{vae_forward.14} parent=35 // pred_region
          %847 = dma.done [#allocation4], 32
        $region60: #{vae_forward.14} parent=35 // pred_fallthru
          _
        // Predicated region
        $region61: #{vae_forward.14} parent=35 // pred_check
          %p848 = pneg %p148
        $region62: #{vae_forward.14} parent=35 // pred_check_branch
          %850 = sbr.rel (%p848) target = $region64
        $region63: #{vae_forward.14} parent=35 // pred_region
          %851 = dma.done [#allocation6], 32
        $region64: #{vae_forward.14} parent=35 // pred_fallthru
          _
        // Predicated region
        $region65: #{vae_forward.14} parent=35 // pred_check
          %p852 = pneg %p169
        $region66: #{vae_forward.14} parent=35 // pred_check_branch
          %854 = sbr.rel (%p852) target = $region68
        $region67: #{vae_forward.14} parent=35 // pred_region
          _
        $region68: #{vae_forward.14} parent=35 // pred_fallthru
          _
      $region36: #{vae_forward.14} parent=5 // pred_fallthru
        _
      %p855 = scmp.le.s32.totalorder 2, %s15
      // Predicated region
      $region69: #{vae_forward.14} parent=5 // pred_check
        %p856 = pneg %p855
      $region70: #{vae_forward.14} parent=5 // pred_check_branch
        %858 = sbr.rel (%p856) target = $region72
      $region71: #{vae_forward.14} parent=5 // pred_region
        %s859 = ssub.s32 %s15, 2
      $region72: #{vae_forward.14} parent=5 // pred_fallthru
        _
    $region6: #{vae_forward.14} parent=1 // loop_footer
      %s19 = sadd.s32 1, %s15
    $region7: #{vae_forward.14} parent=1 // loop_footer_branch
      %14 = sbr.rel target = $region3
    $region8: #{vae_forward.14} parent=1 // loop_exit
      _
    %860 = vsyncpa [#allocation4], 1
    %s861 = scalar_lea.sflag [#allocation4], 1
    %862 = vsyncpa %s861, 1
    %863 = vsyncpa [#allocation6], 1

// kernel: vae_forward.16
$region0: #{vae_forward.16}
  #allocation0 [shape = 'u32[]', space=smem, size = 0x4, offset = 0x4, fixed_abs, tag = 'smem constant byte address 0x4 - core index']
  #allocation1 [shape = 'u32[144,128]{1,0:T(1,128)}', space=vmem, size = 0x12000, scoped, tag = 'internal scratch']
  #allocation2 [shape = 'f32[8,256]{1,0:T(8,128)}', space=vmem, size = 0x2000, scoped, tag = 'scratch operand']
  %s0 = inlined_call_operand.vmem [shape: bf16[8,256], index: 0, kind: input, shape index: {}]
  %s1 = inlined_call_operand.vmem [shape: bf16[256,2048], index: 1, kind: input, shape index: {}]
  %s2 = inlined_call_operand.vmem [shape: f32[1,2048], index: 2, kind: input, shape index: {}]
  %s3 = inlined_call_operand.vmem [shape: f32[8,2048], index: 3, kind: output, shape index: {}]
  %s4 = sld [smem:[#allocation0]]
  $region91: #{vae_forward.16} parent=0
    _
  %s6 = ssub.s32 1, %s4
  %s7 = scalar_select 0, %s6, %s4
  $region1: #{vae_forward.16} parent=0
    #allocation3 [shape = 'u8[262144]{0}', space=vmem, size = 0x40000, scoped, tag = 'input window, operand 1']
    loop: start=0, step=1, limit=10
    $region2: #{vae_forward.16} parent=1 // loop_pre_header
      _
    $region3: #{vae_forward.16} parent=1 // loop_header
      %s9 = sphi 0, %s13
      %p10 = scmp.ge.s32.totalorder %s9, 10
      %s16 = sphi 0, %s35
      %s17 = sphi 0, %s31
      %s18 = sphi 0, %s27
      %s19 = sphi 0, %s16
      %s20 = sphi 0, %s17
      %s21 = sphi 0, %s18
      %s22 = sphi 0, %s19
      %s23 = sphi 0, %s20
      %s24 = sphi 0, %s21
      %s40 = sphi 0, %s42
      %s43 = sphi 0, %s40
      %s44 = sphi 0, %s43
      %s60 = sphi 0, %s44
      %s68 = sphi 0, %s70
      %s71 = sphi 0, %s68
      %s72 = sphi 0, %s71
      %s88 = sphi 0, %s72
      %s94 = sphi 0, %s96
      %s97 = sphi 0, %s94
      %s98 = sphi 0, %s97
      %s114 = sphi 0, %s98
      %s122 = sphi 0, %s124
      %s125 = sphi 0, %s122
      %s126 = sphi 0, %s125
      %s142 = sphi 0, %s126
    $region4: #{vae_forward.16} parent=1 // loop_header_branch
      %12 = sbr.rel (%p10) target = $region8
    $region5: #{vae_forward.16} parent=1 // loop_body
      %s14 = ssub.s32 %s9, 1
      %s15 = ssub.s32 %s9, 2
      %s25 = sadd.s32 1, %s18
      %p26 = scmp.ge.s32.totalorder %s25, 1
      %s27 = scalar_select %p26, 0, %s25
      %s28 = sadd.s32 1, %s17
      %s29 = scalar_select %p26, %s28, %s17
      %p30 = scmp.ge.s32.totalorder %s29, 8
      %s31 = scalar_select %p30, 0, %s29
      %s32 = sadd.s32 1, %s16
      %s33 = scalar_select %p30, %s32, %s16
      %p34 = scmp.ge.s32.totalorder %s33, 1
      %s35 = scalar_select %p34, 0, %s33
      %s36 = ssub.s32 %s16, %s35
      %s37 = ssub.s32 %s18, %s27
      %s38 = sor.u32 %s36, %s37
      %p39 = scmp.eq.s32.totalorder %s38, 0
      %s41 = sadd.s32 %s40, 1
      %s42 = scalar_select %p39, %s40, %s41
      %p45 = pneg %p39
      %p46 = scmp.eq.s32.totalorder %s9, 7
      %p47 = por %p45, %p46
      %p48 = scmp.ne.s32.totalorder %s40, %s43
      %p49 = scmp.eq.s32.totalorder %s9, 0
      %p50 = por %p48, %p49
      %p51 = scmp.ne.s32.totalorder %s40, %s43
      %p52 = scmp.eq.s32.totalorder %s14, 7
      %p53 = por %p51, %p52
      %p54 = scmp.ne.s32.totalorder %s43, %s44
      %p55 = scmp.eq.s32.totalorder %s14, 0
      %p56 = por %p54, %p55
      %p57 = scmp.ne.s32.totalorder %s43, %s44
      %p58 = scmp.eq.s32.totalorder %s15, 7
      %p59 = por %p57, %p58
      %p61 = scmp.ne.s32.totalorder %s44, %s60
      %p62 = scmp.eq.s32.totalorder %s15, 0
      %p63 = por %p61, %p62
      %s64 = ssub.s32 %s18, %s27
      %s65 = ssub.s32 %s17, %s31
      %s66 = sor.u32 %s64, %s65
      %p67 = scmp.eq.s32.totalorder %s66, 0
      %s69 = sadd.s32 %s68, 1
      %s70 = scalar_select %p67, %s68, %s69
      %p73 = pneg %p67
      %p74 = scmp.eq.s32.totalorder %s9, 7
      %p75 = por %p73, %p74
      %p76 = scmp.ne.s32.totalorder %s68, %s71
      %p77 = scmp.eq.s32.totalorder %s9, 0
      %p78 = por %p76, %p77
      %p79 = scmp.ne.s32.totalorder %s68, %s71
      %p80 = scmp.eq.s32.totalorder %s14, 7
      %p81 = por %p79, %p80
      %p82 = scmp.ne.s32.totalorder %s71, %s72
      %p83 = scmp.eq.s32.totalorder %s14, 0
      %p84 = por %p82, %p83
      %p85 = scmp.ne.s32.totalorder %s71, %s72
      %p86 = scmp.eq.s32.totalorder %s15, 7
      %p87 = por %p85, %p86
      %p89 = scmp.ne.s32.totalorder %s72, %s88
      %p90 = scmp.eq.s32.totalorder %s15, 0
      %p91 = por %p89, %p90
      %s92 = ssub.s32 %s17, %s31
      %p93 = scmp.eq.s32.totalorder %s92, 0
      %s95 = sadd.s32 %s94, 1
      %s96 = scalar_select %p93, %s94, %s95
      %p99 = pneg %p93
      %p100 = scmp.eq.s32.totalorder %s9, 7
      %p101 = por %p99, %p100
      %p102 = scmp.ne.s32.totalorder %s94, %s97
      %p103 = scmp.eq.s32.totalorder %s9, 0
      %p104 = por %p102, %p103
      %p105 = scmp.ne.s32.totalorder %s94, %s97
      %p106 = scmp.eq.s32.totalorder %s14, 7
      %p107 = por %p105, %p106
      %p108 = scmp.ne.s32.totalorder %s97, %s98
      %p109 = scmp.eq.s32.totalorder %s14, 0
      %p110 = por %p108, %p109
      %p111 = scmp.ne.s32.totalorder %s97, %s98
      %p112 = scmp.eq.s32.totalorder %s15, 7
      %p113 = por %p111, %p112
      %p115 = scmp.ne.s32.totalorder %s98, %s114
      %p116 = scmp.eq.s32.totalorder %s15, 0
      %p117 = por %p115, %p116
      %s118 = ssub.s32 %s16, %s35
      %s119 = ssub.s32 %s17, %s31
      %s120 = sor.u32 %s118, %s119
      %p121 = scmp.eq.s32.totalorder %s120, 0
      %s123 = sadd.s32 %s122, 1
      %s124 = scalar_select %p121, %s122, %s123
      %p127 = pneg %p121
      %p128 = scmp.eq.s32.totalorder %s9, 7
      %p129 = por %p127, %p128
      %p130 = scmp.ne.s32.totalorder %s122, %s125
      %p131 = scmp.eq.s32.totalorder %s9, 0
      %p132 = por %p130, %p131
      %p133 = scmp.ne.s32.totalorder %s122, %s125
      %p134 = scmp.eq.s32.totalorder %s14, 7
      %p135 = por %p133, %p134
      %p136 = scmp.ne.s32.totalorder %s125, %s126
      %p137 = scmp.eq.s32.totalorder %s14, 0
      %p138 = por %p136, %p137
      %p139 = scmp.ne.s32.totalorder %s125, %s126
      %p140 = scmp.eq.s32.totalorder %s15, 7
      %p141 = por %p139, %p140
      %p143 = scmp.ne.s32.totalorder %s126, %s142
      %p144 = scmp.eq.s32.totalorder %s15, 0
      %p145 = por %p143, %p144
      %p146 = scmp.le.s32.totalorder 1, %s9
      %p147 = scmp.lt.s32.totalorder %s9, 9
      %p148 = pnand %p146, %p147
      %p149 = pneg %p148
      // Predicated region
      $region9: #{vae_forward.16} parent=5 // pred_check
        _
      $region10: #{vae_forward.16} parent=5 // pred_check_branch
        %151 = sbr.rel (%p148) target = $region12
      $region11: #{vae_forward.16} parent=5 // pred_region
        %s152 = ssub.s32 %s9, 1
        // Predicated region
        $region13: #{vae_forward.16} parent=11 // pred_check
          %p153 = pneg %p56
        $region14: #{vae_forward.16} parent=11 // pred_check_branch
          %155 = sbr.rel (%p153) target = $region16
        $region15: #{vae_forward.16} parent=11 // pred_region
          %s156 = smul.u32 2, %s21
          %p157 = scmp.lt.s32.totalorder %s19, 0
          %s158 = scalar_select %p157, %s19, 0
          %p159 = scmp.lt.s32.totalorder %s156, 1
          %s160 = scalar_select %p159, %s156, 1
          %s161 = smul.addr %s158, 2
          %s162 = sadd.s32 %s160, %s161
          %s163 = smul.addr %s162, 4
          %s164 = scalar_lea.vmem %s0, %s163
          %s165 = smul.u32 2, %s21
        $region16: #{vae_forward.16} parent=11 // pred_fallthru
          _
      $region12: #{vae_forward.16} parent=5 // pred_fallthru
        _
      %p166 = scmp.lt.s32.totalorder %s9, 8
      // Predicated region
      $region17: #{vae_forward.16} parent=5 // pred_check
        %p167 = pneg %p166
      $region18: #{vae_forward.16} parent=5 // pred_check_branch
        %169 = sbr.rel (%p167) target = $region20
      $region19: #{vae_forward.16} parent=5 // pred_region
        // Predicated region
        $region21: #{vae_forward.16} parent=19 // pred_check
          %p170 = pneg %p78
        $region22: #{vae_forward.16} parent=19 // pred_check_branch
          %172 = sbr.rel (%p170) target = $region24
        $region23: #{vae_forward.16} parent=19 // pred_region
          %s173 = sand.u32 %s68, 1
          %s174 = sand.u32 %s68, 1
          %s175 = smul.addr %s174, 256
          %s176 = scalar_lea.vmem [#allocation3], %s175
          %s177 = smul.u32 32, %s18
          %s178 = smul.u32 2, %s17
          %s179 = smul.addr %s177, 16
          %s180 = sadd.s32 %s178, %s179
          %s181 = smul.addr %s180, 4
          %s182 = scalar_lea.vmem %s1, %s181
          // Predicated region
          $region25: #{vae_forward.16} parent=23 // pred_check
            _
          $region26: #{vae_forward.16} parent=23 // pred_check_branch
            %184 = sbr.rel (0) target = $region28
          $region27: #{vae_forward.16} parent=23 // pred_region
            // Predicated region
            $region29: #{vae_forward.16} parent=27 // pred_check
              _
            $region30: #{vae_forward.16} parent=27 // pred_check_branch
              %186 = sbr.rel (0) target = $region32
            $region31: #{vae_forward.16} parent=27 // pred_region
              // Predicated region
              $region44: #{vae_forward.16} parent=31 // pred_check
                _
              $region45: #{vae_forward.16} parent=31 // pred_check_branch
                %263 = sbr.rel (0) target = $region47
              $region46: #{vae_forward.16} parent=31 // pred_region
                loop: start=0, step=1, limit=1
                $region48: #{vae_forward.16} parent=46 // loop_pre_header
                  _
                $region49: #{vae_forward.16} parent=46 // loop_header
                  %s265 = sphi 0, %s269
                  %p266 = scmp.ge.s32.totalorder %s265, 1
                  %s270 = sphi %s182, %s182
                  %s271 = sphi %s176, %s176
                $region50: #{vae_forward.16} parent=46 // loop_header_branch
                  %268 = sbr.rel (%p266) target = $region54
                $region51: #{vae_forward.16} parent=46 // loop_body
                  %v272 = vld [vmem:[%s270] sm:$0xff]
                  %273 = vst [vmem:[%s271] sm:$0xff] %v272
                  %v274 = vld [vmem:[%s270 + $0x40] sm:$0xff]
                  %275 = vst [vmem:[%s271 + $0x8] sm:$0xff] %v274
                  %v276 = vld [vmem:[%s270 + $0x80] sm:$0xff]
                  %277 = vst [vmem:[%s271 + $0x10] sm:$0xff] %v276
                  %v278 = vld [vmem:[%s270 + $0xc0] sm:$0xff]
                  %279 = vst [vmem:[%s271 + $0x18] sm:$0xff] %v278
                  %v280 = vld [vmem:[%s270 + $0x100] sm:$0xff]
                  %281 = vst [vmem:[%s271 + $0x20] sm:$0xff] %v280
                  %v282 = vld [vmem:[%s270 + $0x140] sm:$0xff]
                  %283 = vst [vmem:[%s271 + $0x28] sm:$0xff] %v282
                  %v284 = vld [vmem:[%s270 + $0x180] sm:$0xff]
                  %285 = vst [vmem:[%s271 + $0x30] sm:$0xff] %v284
                  %v286 = vld [vmem:[%s270 + $0x1c0] sm:$0xff]
                  %287 = vst [vmem:[%s271 + $0x38] sm:$0xff] %v286
                  %v288 = vld [vmem:[%s270 + $0x200] sm:$0xff]
                  %289 = vst [vmem:[%s271 + $0x40] sm:$0xff] %v288
                  %v290 = vld [vmem:[%s270 + $0x240] sm:$0xff]
                  %291 = vst [vmem:[%s271 + $0x48] sm:$0xff] %v290
                  %v292 = vld [vmem:[%s270 + $0x280] sm:$0xff]
                  %293 = vst [vmem:[%s271 + $0x50] sm:$0xff] %v292
                  %v294 = vld [vmem:[%s270 + $0x2c0] sm:$0xff]
                  %295 = vst [vmem:[%s271 + $0x58] sm:$0xff] %v294
                  %v296 = vld [vmem:[%s270 + $0x300] sm:$0xff]
                  %297 = vst [vmem:[%s271 + $0x60] sm:$0xff] %v296
                  %v298 = vld [vmem:[%s270 + $0x340] sm:$0xff]
                  %299 = vst [vmem:[%s271 + $0x68] sm:$0xff] %v298
                  %v300 = vld [vmem:[%s270 + $0x380] sm:$0xff]
                  %301 = vst [vmem:[%s271 + $0x70] sm:$0xff] %v300
                  %v302 = vld [vmem:[%s270 + $0x3c0] sm:$0xff]
                  %303 = vst [vmem:[%s271 + $0x78] sm:$0xff] %v302
                  %v304 = vld [vmem:[%s270 + $0x400] sm:$0xff]
                  %305 = vst [vmem:[%s271 + $0x80] sm:$0xff] %v304
                  %v306 = vld [vmem:[%s270 + $0x440] sm:$0xff]
                  %307 = vst [vmem:[%s271 + $0x88] sm:$0xff] %v306
                  %v308 = vld [vmem:[%s270 + $0x480] sm:$0xff]
                  %309 = vst [vmem:[%s271 + $0x90] sm:$0xff] %v308
                  %v310 = vld [vmem:[%s270 + $0x4c0] sm:$0xff]
                  %311 = vst [vmem:[%s271 + $0x98] sm:$0xff] %v310
                  %v312 = vld [vmem:[%s270 + $0x500] sm:$0xff]
                  %313 = vst [vmem:[%s271 + $0xa0] sm:$0xff] %v312
                  %v314 = vld [vmem:[%s270 + $0x540] sm:$0xff]
                  %315 = vst [vmem:[%s271 + $0xa8] sm:$0xff] %v314
                  %v316 = vld [vmem:[%s270 + $0x580] sm:$0xff]
                  %317 = vst [vmem:[%s271 + $0xb0] sm:$0xff] %v316
                  %v318 = vld [vmem:[%s270 + $0x5c0] sm:$0xff]
                  %319 = vst [vmem:[%s271 + $0xb8] sm:$0xff] %v318
                  %v320 = vld [vmem:[%s270 + $0x600] sm:$0xff]
                  %321 = vst [vmem:[%s271 + $0xc0] sm:$0xff] %v320
                  %v322 = vld [vmem:[%s270 + $0x640] sm:$0xff]
                  %323 = vst [vmem:[%s271 + $0xc8] sm:$0xff] %v322
                  %v324 = vld [vmem:[%s270 + $0x680] sm:$0xff]
                  %325 = vst [vmem:[%s271 + $0xd0] sm:$0xff] %v324
                  %v326 = vld [vmem:[%s270 + $0x6c0] sm:$0xff]
                  %327 = vst [vmem:[%s271 + $0xd8] sm:$0xff] %v326
                  %v328 = vld [vmem:[%s270 + $0x700] sm:$0xff]
                  %329 = vst [vmem:[%s271 + $0xe0] sm:$0xff] %v328
                  %v330 = vld [vmem:[%s270 + $0x740] sm:$0xff]
                  %331 = vst [vmem:[%s271 + $0xe8] sm:$0xff] %v330
                  %v332 = vld [vmem:[%s270 + $0x780] sm:$0xff]
                  %333 = vst [vmem:[%s271 + $0xf0] sm:$0xff] %v332
                  %v334 = vld [vmem:[%s270 + $0x7c0] sm:$0xff]
                  %335 = vst [vmem:[%s271 + $0xf8] sm:$0xff] %v334
                $region52: #{vae_forward.16} parent=46 // loop_footer
                  %s269 = sadd.s32 1, %s265
                $region53: #{vae_forward.16} parent=46 // loop_footer_branch
                  %264 = sbr.rel target = $region49
                $region54: #{vae_forward.16} parent=46 // loop_exit
                  _
              $region47: #{vae_forward.16} parent=31 // pred_fallthru
                _
              // Predicated region
              $region55: #{vae_forward.16} parent=31 // pred_check
                _
              $region56: #{vae_forward.16} parent=31 // pred_check_branch
                %337 = sbr.rel target = $region58
              $region57: #{vae_forward.16} parent=31 // pred_region
                _
              $region58: #{vae_forward.16} parent=31 // pred_fallthru
                _
            $region32: #{vae_forward.16} parent=27 // pred_fallthru
              _
            // Predicated region
            $region33: #{vae_forward.16} parent=27 // pred_check
              _
            $region34: #{vae_forward.16} parent=27 // pred_check_branch
              %188 = sbr.rel target = $region36
            $region35: #{vae_forward.16} parent=27 // pred_region
              loop: start=0, step=1, limit=1
              $region37: #{vae_forward.16} parent=35 // loop_pre_header
                _
              $region38: #{vae_forward.16} parent=35 // loop_header
                %s191 = sphi 0, %s195
                %p192 = scmp.ge.s32.totalorder %s191, 1
                %s196 = sphi %s182, %s182
                %s197 = sphi %s176, %s176
              $region39: #{vae_forward.16} parent=35 // loop_header_branch
                %194 = sbr.rel (%p192) target = $region43
              $region40: #{vae_forward.16} parent=35 // loop_body
                %v198 = vld [vmem:[%s196] sm:$0xff]
                %199 = vst [vmem:[%s197] sm:$0xff] %v198
                %v200 = vld [vmem:[%s196 + $0x40] sm:$0xff]
                %201 = vst [vmem:[%s197 + $0x8] sm:$0xff] %v200
                %v202 = vld [vmem:[%s196 + $0x80] sm:$0xff]
                %203 = vst [vmem:[%s197 + $0x10] sm:$0xff] %v202
                %v204 = vld [vmem:[%s196 + $0xc0] sm:$0xff]
                %205 = vst [vmem:[%s197 + $0x18] sm:$0xff] %v204
                %v206 = vld [vmem:[%s196 + $0x100] sm:$0xff]
                %207 = vst [vmem:[%s197 + $0x20] sm:$0xff] %v206
                %v208 = vld [vmem:[%s196 + $0x140] sm:$0xff]
                %209 = vst [vmem:[%s197 + $0x28] sm:$0xff] %v208
                %v210 = vld [vmem:[%s196 + $0x180] sm:$0xff]
                %211 = vst [vmem:[%s197 + $0x30] sm:$0xff] %v210
                %v212 = vld [vmem:[%s196 + $0x1c0] sm:$0xff]
                %213 = vst [vmem:[%s197 + $0x38] sm:$0xff] %v212
                %v214 = vld [vmem:[%s196 + $0x200] sm:$0xff]
                %215 = vst [vmem:[%s197 + $0x40] sm:$0xff] %v214
                %v216 = vld [vmem:[%s196 + $0x240] sm:$0xff]
                %217 = vst [vmem:[%s197 + $0x48] sm:$0xff] %v216
                %v218 = vld [vmem:[%s196 + $0x280] sm:$0xff]
                %219 = vst [vmem:[%s197 + $0x50] sm:$0xff] %v218
                %v220 = vld [vmem:[%s196 + $0x2c0] sm:$0xff]
                %221 = vst [vmem:[%s197 + $0x58] sm:$0xff] %v220
                %v222 = vld [vmem:[%s196 + $0x300] sm:$0xff]
                %223 = vst [vmem:[%s197 + $0x60] sm:$0xff] %v222
                %v224 = vld [vmem:[%s196 + $0x340] sm:$0xff]
                %225 = vst [vmem:[%s197 + $0x68] sm:$0xff] %v224
                %v226 = vld [vmem:[%s196 + $0x380] sm:$0xff]
                %227 = vst [vmem:[%s197 + $0x70] sm:$0xff] %v226
                %v228 = vld [vmem:[%s196 + $0x3c0] sm:$0xff]
                %229 = vst [vmem:[%s197 + $0x78] sm:$0xff] %v228
                %v230 = vld [vmem:[%s196 + $0x400] sm:$0xff]
                %231 = vst [vmem:[%s197 + $0x80] sm:$0xff] %v230
                %v232 = vld [vmem:[%s196 + $0x440] sm:$0xff]
                %233 = vst [vmem:[%s197 + $0x88] sm:$0xff] %v232
                %v234 = vld [vmem:[%s196 + $0x480] sm:$0xff]
                %235 = vst [vmem:[%s197 + $0x90] sm:$0xff] %v234
                %v236 = vld [vmem:[%s196 + $0x4c0] sm:$0xff]
                %237 = vst [vmem:[%s197 + $0x98] sm:$0xff] %v236
                %v238 = vld [vmem:[%s196 + $0x500] sm:$0xff]
                %239 = vst [vmem:[%s197 + $0xa0] sm:$0xff] %v238
                %v240 = vld [vmem:[%s196 + $0x540] sm:$0xff]
                %241 = vst [vmem:[%s197 + $0xa8] sm:$0xff] %v240
                %v242 = vld [vmem:[%s196 + $0x580] sm:$0xff]
                %243 = vst [vmem:[%s197 + $0xb0] sm:$0xff] %v242
                %v244 = vld [vmem:[%s196 + $0x5c0] sm:$0xff]
                %245 = vst [vmem:[%s197 + $0xb8] sm:$0xff] %v244
                %v246 = vld [vmem:[%s196 + $0x600] sm:$0xff]
                %247 = vst [vmem:[%s197 + $0xc0] sm:$0xff] %v246
                %v248 = vld [vmem:[%s196 + $0x640] sm:$0xff]
                %249 = vst [vmem:[%s197 + $0xc8] sm:$0xff] %v248
                %v250 = vld [vmem:[%s196 + $0x680] sm:$0xff]
                %251 = vst [vmem:[%s197 + $0xd0] sm:$0xff] %v250
                %v252 = vld [vmem:[%s196 + $0x6c0] sm:$0xff]
                %253 = vst [vmem:[%s197 + $0xd8] sm:$0xff] %v252
                %v254 = vld [vmem:[%s196 + $0x700] sm:$0xff]
                %255 = vst [vmem:[%s197 + $0xe0] sm:$0xff] %v254
                %v256 = vld [vmem:[%s196 + $0x740] sm:$0xff]
                %257 = vst [vmem:[%s197 + $0xe8] sm:$0xff] %v256
                %v258 = vld [vmem:[%s196 + $0x780] sm:$0xff]
                %259 = vst [vmem:[%s197 + $0xf0] sm:$0xff] %v258
                %v260 = vld [vmem:[%s196 + $0x7c0] sm:$0xff]
                %261 = vst [vmem:[%s197 + $0xf8] sm:$0xff] %v260
              $region41: #{vae_forward.16} parent=35 // loop_footer
                %s195 = sadd.s32 1, %s191
              $region42: #{vae_forward.16} parent=35 // loop_footer_branch
                %190 = sbr.rel target = $region38
              $region43: #{vae_forward.16} parent=35 // loop_exit
                _
            $region36: #{vae_forward.16} parent=27 // pred_fallthru
              _
          $region28: #{vae_forward.16} parent=23 // pred_fallthru
            _
          %338 = vnop
        $region24: #{vae_forward.16} parent=19 // pred_fallthru
          _
        // Predicated region
        $region59: #{vae_forward.16} parent=19 // pred_check
          %p339 = pneg %p104
        $region60: #{vae_forward.16} parent=19 // pred_check_branch
          %341 = sbr.rel (%p339) target = $region62
        $region61: #{vae_forward.16} parent=19 // pred_region
          %s342 = smul.u32 2, %s17
          %p343 = scmp.lt.s32.totalorder %s342, 15
          %s344 = scalar_select %p343, %s342, 15
          %s345 = scalar_lea.vmem %s2, %s344
          %s346 = smul.u32 2, %s17
        $region62: #{vae_forward.16} parent=19 // pred_fallthru
          _
      $region20: #{vae_forward.16} parent=5 // pred_fallthru
        _
      %p347 = scmp.le.s32.totalorder 1, %s9
      %p348 = scmp.lt.s32.totalorder %s9, 9
      %p349 = pnand %p347, %p348
      %p350 = pneg %p349
      // Predicated region
      $region63: #{vae_forward.16} parent=5 // pred_check
        _
      $region64: #{vae_forward.16} parent=5 // pred_check_branch
        %352 = sbr.rel (%p349) target = $region66
      $region65: #{vae_forward.16} parent=5 // pred_region
        %s353 = ssub.s32 %s9, 1
        %s354 = sand.u32 %s71, 1
        %s355 = sand.u32 %s71, 1
        %s356 = smul.addr %s355, 256
        %s357 = scalar_lea.vmem [#allocation3], %s356
        // Predicated region
        $region67: #{vae_forward.16} parent=65 // pred_check
          %p358 = pneg %p84
        $region68: #{vae_forward.16} parent=65 // pred_check_branch
          %360 = sbr.rel (%p358) target = $region70
        $region69: #{vae_forward.16} parent=65 // pred_region
          _
        $region70: #{vae_forward.16} parent=65 // pred_fallthru
          _
        %s361 = smul.u32 2, %s21
        %p362 = scmp.lt.s32.totalorder %s19, 0
        %s363 = scalar_select %p362, %s19, 0
        %p364 = scmp.lt.s32.totalorder %s361, 1
        %s365 = scalar_select %p364, %s361, 1
        %s366 = smul.addr %s363, 2
        %s367 = sadd.s32 %s365, %s366
        %s368 = smul.addr %s367, 4
        %s369 = scalar_lea.vmem %s0, %s368
        %p370 = pneg %p56
        %p371 = pneg %p53
        %s372 = sand.u32 %s71, 1
        %s373 = sand.u32 %s71, 1
        %s374 = smul.addr %s373, 256
        %s375 = scalar_lea.vmem [#allocation3], %s374
        %p376 = pneg %p84
        %p377 = pneg %p81
        %s378 = smul.u32 2, %s20
        %p379 = scmp.lt.s32.totalorder %s378, 15
        %s380 = scalar_select %p379, %s378, 15
        %s381 = scalar_lea.vmem %s2, %s380
        %p382 = pneg %p110
        %p383 = pneg %p107
        %p384 = pneg %p138
        %p385 = pneg %p135
        %s386 = smul.u32 2, %s20
        %p387 = scmp.lt.s32.totalorder %s19, 0
        %s388 = scalar_select %p387, %s19, 0
        %p389 = scmp.lt.s32.totalorder %s386, 15
        %s390 = scalar_select %p389, %s386, 15
        %s391 = smul.addr %s388, 16
        %s392 = sadd.s32 %s390, %s391
        %s393 = smul.addr %s392, 8
        %s394 = scalar_lea.vmem %s3, %s393
        %s395 = smul.u32 2, %s21
        %p396 = scmp.lt.s32.totalorder %s19, 0
        %s397 = scalar_select %p396, %s19, 0
        %p398 = scmp.lt.s32.totalorder %s395, 1
        %s399 = scalar_select %p398, %s395, 1
        %s400 = smul.addr %s397, 2
        %s401 = sadd.s32 %s399, %s400
        %s402 = smul.addr %s401, 4
        %s403 = scalar_lea.vmem %s0, %s402
        %s404 = smul.u32 2, %s21
        %s405 = smul.u32 32, %s21
        %s406 = smul.u32 2, %s20
        %s407 = smul.u32 2, %s20
        %p408 = scmp.lt.s32.totalorder %s407, 15
        %s409 = scalar_select %p408, %s407, 15
        %s410 = scalar_lea.vmem %s2, %s409
        %s411 = smul.u32 2, %s20
        %s412 = smul.u32 2, %s20
        %p413 = scmp.lt.s32.totalorder %s19, 0
        %s414 = scalar_select %p413, %s19, 0
        %p415 = scmp.lt.s32.totalorder %s412, 15
        %s416 = scalar_select %p415, %s412, 15
        %s417 = smul.addr %s414, 16
        %s418 = sadd.s32 %s416, %s417
        %s419 = smul.addr %s418, 8
        %s420 = scalar_lea.vmem %s3, %s419
        %s421 = smul.u32 2, %s20
        %p422 = scmp.eq.s32.totalorder %s21, 0
        // Predicated region
        $region71: #{vae_forward.16} parent=65 // pred_check
          %p423 = pneg %p422
        $region72: #{vae_forward.16} parent=65 // pred_check_branch
          %425 = sbr.rel (%p423) target = $region74
        $region73: #{vae_forward.16} parent=65 // pred_region
          %426 = vst [vmem:[#allocation2] sm:$0xff] 0.0
          %427 = vst [vmem:[#allocation2 + $0x8] sm:$0xff] 0.0
        $region74: #{vae_forward.16} parent=65 // pred_fallthru
          _
        %v428 = vld [vmem:[#allocation2] sm:$0xff]
        %v429 = vld [vmem:[#allocation2 + $0x8] sm:$0xff]
        %v430 = vld [vmem:[%s403] sm:$0xff]
        %v431 = vld [vmem:[%s357] sm:$0xff]
        %v432 = vld [vmem:[%s357 + $0x8] sm:$0xff]
        %v433 = vld [vmem:[%s357 + $0x10] sm:$0xff]
        %v434 = vld [vmem:[%s357 + $0x18] sm:$0xff]
        %v435 = vld [vmem:[%s357 + $0x20] sm:$0xff]
        %v436 = vld [vmem:[%s357 + $0x28] sm:$0xff]
        %v437 = vld [vmem:[%s357 + $0x30] sm:$0xff]
        %v438 = vld [vmem:[%s357 + $0x38] sm:$0xff]
        %v439 = vld [vmem:[%s357 + $0x40] sm:$0xff]
        %v440 = vld [vmem:[%s357 + $0x48] sm:$0xff]
        %v441 = vld [vmem:[%s357 + $0x50] sm:$0xff]
        %v442 = vld [vmem:[%s357 + $0x58] sm:$0xff]
        %v443 = vld [vmem:[%s357 + $0x60] sm:$0xff]
        %v444 = vld [vmem:[%s357 + $0x68] sm:$0xff]
        %v445 = vld [vmem:[%s357 + $0x70] sm:$0xff]
        %v446 = vld [vmem:[%s357 + $0x78] sm:$0xff]
        %v447 = vld [vmem:[%s357 + $0x80] sm:$0xff]
        %v448 = vld [vmem:[%s357 + $0x88] sm:$0xff]
        %v449 = vld [vmem:[%s357 + $0x90] sm:$0xff]
        %v450 = vld [vmem:[%s357 + $0x98] sm:$0xff]
        %v451 = vld [vmem:[%s357 + $0xa0] sm:$0xff]
        %v452 = vld [vmem:[%s357 + $0xa8] sm:$0xff]
        %v453 = vld [vmem:[%s357 + $0xb0] sm:$0xff]
        %v454 = vld [vmem:[%s357 + $0xb8] sm:$0xff]
        %v455 = vld [vmem:[%s357 + $0xc0] sm:$0xff]
        %v456 = vld [vmem:[%s357 + $0xc8] sm:$0xff]
        %v457 = vld [vmem:[%s357 + $0xd0] sm:$0xff]
        %v458 = vld [vmem:[%s357 + $0xd8] sm:$0xff]
        %v459 = vld [vmem:[%s357 + $0xe0] sm:$0xff]
        %v460 = vld [vmem:[%s357 + $0xe8] sm:$0xff]
        %v461 = vld [vmem:[%s357 + $0xf0] sm:$0xff]
        %v462 = vld [vmem:[%s357 + $0xf8] sm:$0xff]
        %v464 = vunpack.c.l.b16 %v430
        %v465 = vunpack.c.h.b16 %v430
        %v466 = vpack.c.b16 %v464, %v464
        %v467 = vpack.c.b16 %v465, %v465
        %v502 = vunpack.c.l.b16 %v431
        %v503 = vunpack.c.h.b16 %v431
        %v504 = vunpack.c.l.b16 %v432
        %v505 = vunpack.c.h.b16 %v432
        %v506 = vunpack.c.l.b16 %v433
        %v507 = vunpack.c.h.b16 %v433
        %v508 = vunpack.c.l.b16 %v434
        %v509 = vunpack.c.h.b16 %v434
        %v510 = vunpack.c.l.b16 %v435
        %v511 = vunpack.c.h.b16 %v435
        %v512 = vunpack.c.l.b16 %v436
        %v513 = vunpack.c.h.b16 %v436
        %v514 = vunpack.c.l.b16 %v437
        %v515 = vunpack.c.h.b16 %v437
        %v516 = vunpack.c.l.b16 %v438
        %v517 = vunpack.c.h.b16 %v438
        %v518 = vunpack.c.l.b16 %v439
        %v519 = vunpack.c.h.b16 %v439
        %v520 = vunpack.c.l.b16 %v440
        %v521 = vunpack.c.h.b16 %v440
        %v522 = vunpack.c.l.b16 %v441
        %v523 = vunpack.c.h.b16 %v441
        %v524 = vunpack.c.l.b16 %v442
        %v525 = vunpack.c.h.b16 %v442
        %v526 = vunpack.c.l.b16 %v443
        %v527 = vunpack.c.h.b16 %v443
        %v528 = vunpack.c.l.b16 %v444
        %v529 = vunpack.c.h.b16 %v444
        %v530 = vunpack.c.l.b16 %v445
        %v531 = vunpack.c.h.b16 %v445
        %v532 = vunpack.c.l.b16 %v446
        %v533 = vunpack.c.h.b16 %v446
        %v534 = vunpack.c.l.b16 %v447
        %v535 = vunpack.c.h.b16 %v447
        %v536 = vunpack.c.l.b16 %v448
        %v537 = vunpack.c.h.b16 %v448
        %v538 = vunpack.c.l.b16 %v449
        %v539 = vunpack.c.h.b16 %v449
        %v540 = vunpack.c.l.b16 %v450
        %v541 = vunpack.c.h.b16 %v450
        %v542 = vunpack.c.l.b16 %v451
        %v543 = vunpack.c.h.b16 %v451
        %v544 = vunpack.c.l.b16 %v452
        %v545 = vunpack.c.h.b16 %v452
        %v546 = vunpack.c.l.b16 %v453
        %v547 = vunpack.c.h.b16 %v453
        %v548 = vunpack.c.l.b16 %v454
        %v549 = vunpack.c.h.b16 %v454
        %v550 = vunpack.c.l.b16 %v455
        %v551 = vunpack.c.h.b16 %v455
        %v552 = vunpack.c.l.b16 %v456
        %v553 = vunpack.c.h.b16 %v456
        %v554 = vunpack.c.l.b16 %v457
        %v555 = vunpack.c.h.b16 %v457
        %v556 = vunpack.c.l.b16 %v458
        %v557 = vunpack.c.h.b16 %v458
        %v558 = vunpack.c.l.b16 %v459
        %v559 = vunpack.c.h.b16 %v459
        %v560 = vunpack.c.l.b16 %v460
        %v561 = vunpack.c.h.b16 %v460
        %v562 = vunpack.c.l.b16 %v461
        %v563 = vunpack.c.h.b16 %v461
        %v564 = vunpack.c.l.b16 %v462
        %v565 = vunpack.c.h.b16 %v462
        %v566 = vpack.c.b16 %v504, %v502
        %v567 = vpack.c.b16 %v505, %v503
        %v568 = vpack.c.b16 %v508, %v506
        %v569 = vpack.c.b16 %v509, %v507
        %v570 = vpack.c.b16 %v512, %v510
        %v571 = vpack.c.b16 %v513, %v511
        %v572 = vpack.c.b16 %v516, %v514
        %v573 = vpack.c.b16 %v517, %v515
        %v574 = vpack.c.b16 %v520, %v518
        %v575 = vpack.c.b16 %v521, %v519
        %v576 = vpack.c.b16 %v524, %v522
        %v577 = vpack.c.b16 %v525, %v523
        %v578 = vpack.c.b16 %v528, %v526
        %v579 = vpack.c.b16 %v529, %v527
        %v580 = vpack.c.b16 %v532, %v530
        %v581 = vpack.c.b16 %v533, %v531
        %v582 = vpack.c.b16 %v536, %v534
        %v583 = vpack.c.b16 %v537, %v535
        %v584 = vpack.c.b16 %v540, %v538
        %v585 = vpack.c.b16 %v541, %v539
        %v586 = vpack.c.b16 %v544, %v542
        %v587 = vpack.c.b16 %v545, %v543
        %v588 = vpack.c.b16 %v548, %v546
        %v589 = vpack.c.b16 %v549, %v547
        %v590 = vpack.c.b16 %v552, %v550
        %v591 = vpack.c.b16 %v553, %v551
        %v592 = vpack.c.b16 %v556, %v554
        %v593 = vpack.c.b16 %v557, %v555
        %v594 = vpack.c.b16 %v560, %v558
        %v595 = vpack.c.b16 %v561, %v559
        %v596 = vpack.c.b16 %v564, %v562
        %v597 = vpack.c.b16 %v565, %v563
        %630 = vmatprep.subr.bf16.mxu0 %v567
        %631 = vmatpush1.bf16.msra.mxu0 %v566
        %632 = vmatprep.subr.bf16.mxu0 %v569
        %633 = vmatpush1.bf16.msra.mxu0 %v568
        %634 = vmatprep.subr.bf16.mxu0 %v571
        %635 = vmatpush1.bf16.msra.mxu0 %v570
        %636 = vmatprep.subr.bf16.mxu0 %v573
        %637 = vmatpush1.bf16.msra.mxu0 %v572
        %638 = vmatprep.subr.bf16.mxu0 %v575
        %639 = vmatpush1.bf16.msra.mxu0 %v574
        %640 = vmatprep.subr.bf16.mxu0 %v577
        %641 = vmatpush1.bf16.msra.mxu0 %v576
        %642 = vmatprep.subr.bf16.mxu0 %v579
        %643 = vmatpush1.bf16.msra.mxu0 %v578
        %644 = vmatprep.subr.bf16.mxu0 %v581
        %645 = vmatpush1.bf16.msra.mxu0 %v580
        %646 = vmatprep.subr.bf16.mxu0 %v583
        %647 = vmatpush1.bf16.msra.mxu0 %v582
        %648 = vmatprep.subr.bf16.mxu0 %v585
        %649 = vmatpush1.bf16.msra.mxu0 %v584
        %650 = vmatprep.subr.bf16.mxu0 %v587
        %651 = vmatpush1.bf16.msra.mxu0 %v586
        %652 = vmatprep.subr.bf16.mxu0 %v589
        %653 = vmatpush1.bf16.msra.mxu0 %v588
        %654 = vmatprep.subr.bf16.mxu0 %v591
        %655 = vmatpush1.bf16.msra.mxu0 %v590
        %656 = vmatprep.subr.bf16.mxu0 %v593
        %657 = vmatpush1.bf16.msra.mxu0 %v592
        %658 = vmatprep.subr.bf16.mxu0 %v595
        %659 = vmatpush1.bf16.msra.mxu0 %v594
        %660 = vmatprep.subr.bf16.mxu0 %v597
        %661 = vmatpush1.bf16.msra.mxu0 %v596
        %662 = vmatprep.mubr.bf16.mxu0 %v467
        %663 = vmatmul.mubr.bf16.gmra.mrb[0].mxu0 %v466
        %v664 = vpop.f32.mrb[0].mxu0
        %v665 = vadd.f32 0.0, %v664
        %v666 = vpop.f32.mrb[0].mxu0
        %v667 = vadd.f32 0.0, %v666
        %v668 = vpop.f32.mrb[0].mxu0
        %v669 = vpop.f32.mrb[0].mxu0
        %670 = vdwg.mxu0
        %v671 = vadd.f32 %v428, %v665
        %v672 = vadd.f32 %v429, %v667
        %673 = vst [vmem:[#allocation2] sm:$0xff] %v671
        %674 = vst [vmem:[#allocation2 + $0x8] sm:$0xff] %v672
        // Predicated region
        $region75: #{vae_forward.16} parent=65 // pred_check
          %p675 = pneg %p422
        $region76: #{vae_forward.16} parent=65 // pred_check_branch
          %677 = sbr.rel (%p675) target = $region78
        $region77: #{vae_forward.16} parent=65 // pred_region
          %v678 = vld [vmem:[#allocation2] sm:$0xff]
          %v679 = vld [vmem:[#allocation2 + $0x8] sm:$0xff]
          %v680 = vld [vmem:[%s410] sm:$0x3]
          %v682 = vlaneseq
          %v683 = vshrl.u32 %v682, 7
          %v684 = vsub.s32 0, %v683
          %v685 = vrot.slane %v680, %v684
          %v686 = vlaneseq
          %v687 = vshrl.u32 %v686, 7
          %v688 = vsub.s32 1, %v687
          %v689 = vrot.slane %v680, %v688
          %v692 = vadd.f32 %v678, %v685
          %v693 = vadd.f32 %v679, %v689
          %694 = vst [vmem:[%s420] sm:$0xff] %v692
          %695 = vst [vmem:[%s420 + $0x8] sm:$0xff] %v693
        $region78: #{vae_forward.16} parent=65 // pred_fallthru
          _
        %s696 = smul.u32 2, %s20
        %p697 = scmp.lt.s32.totalorder %s19, 0
        %s698 = scalar_select %p697, %s19, 0
        %p699 = scmp.lt.s32.totalorder %s696, 15
        %s700 = scalar_select %p699, %s696, 15
        %s701 = smul.addr %s698, 16
        %s702 = sadd.s32 %s700, %s701
        %s703 = smul.addr %s702, 8
        %s704 = scalar_lea.vmem %s3, %s703
        // Predicated region
        $region79: #{vae_forward.16} parent=65 // pred_check
          %p705 = pneg %p135
        $region80: #{vae_forward.16} parent=65 // pred_check_branch
          %707 = sbr.rel (%p705) target = $region82
        $region81: #{vae_forward.16} parent=65 // pred_region
          %s708 = smul.u32 2, %s20
        $region82: #{vae_forward.16} parent=65 // pred_fallthru
          _
      $region66: #{vae_forward.16} parent=5 // pred_fallthru
        _
      %p709 = scmp.le.s32.totalorder 2, %s9
      // Predicated region
      $region83: #{vae_forward.16} parent=5 // pred_check
        %p710 = pneg %p709
      $region84: #{vae_forward.16} parent=5 // pred_check_branch
        %712 = sbr.rel (%p710) target = $region86
      $region85: #{vae_forward.16} parent=5 // pred_region
        %s713 = ssub.s32 %s9, 2
        // Predicated region
        $region87: #{vae_forward.16} parent=85 // pred_check
          %p714 = pneg %p141
        $region88: #{vae_forward.16} parent=85 // pred_check_branch
          %716 = sbr.rel (%p714) target = $region90
        $region89: #{vae_forward.16} parent=85 // pred_region
          %s717 = smul.u32 2, %s23
          %p718 = scmp.lt.s32.totalorder %s22, 0
          %s719 = scalar_select %p718, %s22, 0
          %p720 = scmp.lt.s32.totalorder %s717, 15
          %s721 = scalar_select %p720, %s717, 15
          %s722 = smul.addr %s719, 16
          %s723 = sadd.s32 %s721, %s722
          %s724 = smul.addr %s723, 8
          %s725 = scalar_lea.vmem %s3, %s724
        $region90: #{vae_forward.16} parent=85 // pred_fallthru
          _
      $region86: #{vae_forward.16} parent=5 // pred_fallthru
        _
    $region6: #{vae_forward.16} parent=1 // loop_footer
      %s13 = sadd.s32 1, %s9
    $region7: #{vae_forward.16} parent=1 // loop_footer_branch
      %8 = sbr.rel target = $region3
    $region8: #{vae_forward.16} parent=1 // loop_exit
      _

// kernel: vae_forward.15
$region0: #{vae_forward.15}
  #allocation0 [shape = 'u32[]', space=smem, size = 0x4, offset = 0x4, fixed_abs, tag = 'smem constant byte address 0x4 - core index']
  #allocation1 [shape = 'u32[144,128]{1,0:T(1,128)}', space=vmem, size = 0x12000, scoped, tag = 'internal scratch']
  #allocation2 [shape = 'f32[2,256]{1,0:T(2,128)}', space=vmem, size = 0x800, scoped, tag = 'scratch operand']
  %s0 = inlined_call_operand.vmem [shape: bf16[2,128], index: 0, kind: input, shape index: {}]
  %s1 = inlined_call_operand.vmem [shape: bf16[128,1024], index: 1, kind: input, shape index: {}]
  %s2 = inlined_call_operand.vmem [shape: f32[1,1024], index: 2, kind: input, shape index: {}]
  %s3 = inlined_call_operand.vmem [shape: f32[2,1024], index: 3, kind: output, shape index: {}]
  %s4 = sld [smem:[#allocation0]]
  $region91: #{vae_forward.15} parent=0
    _
  %s6 = ssub.s32 1, %s4
  %s7 = scalar_select 0, %s6, %s4
  $region1: #{vae_forward.15} parent=0
    #allocation3 [shape = 'u8[131072]{0}', space=vmem, size = 0x20000, scoped, tag = 'input window, operand 1']
    loop: start=0, step=1, limit=6
    $region2: #{vae_forward.15} parent=1 // loop_pre_header
      _
    $region3: #{vae_forward.15} parent=1 // loop_header
      %s9 = sphi 0, %s13
      %p10 = scmp.ge.s32.totalorder %s9, 6
      %s16 = sphi 0, %s35
      %s17 = sphi 0, %s31
      %s18 = sphi 0, %s27
      %s19 = sphi 0, %s16
      %s20 = sphi 0, %s17
      %s21 = sphi 0, %s18
      %s22 = sphi 0, %s19
      %s23 = sphi 0, %s20
      %s24 = sphi 0, %s21
      %s40 = sphi 0, %s42
      %s43 = sphi 0, %s40
      %s44 = sphi 0, %s43
      %s60 = sphi 0, %s44
      %s68 = sphi 0, %s70
      %s71 = sphi 0, %s68
      %s72 = sphi 0, %s71
      %s88 = sphi 0, %s72
      %s94 = sphi 0, %s96
      %s97 = sphi 0, %s94
      %s98 = sphi 0, %s97
      %s114 = sphi 0, %s98
      %s122 = sphi 0, %s124
      %s125 = sphi 0, %s122
      %s126 = sphi 0, %s125
      %s142 = sphi 0, %s126
    $region4: #{vae_forward.15} parent=1 // loop_header_branch
      %12 = sbr.rel (%p10) target = $region8
    $region5: #{vae_forward.15} parent=1 // loop_body
      %s14 = ssub.s32 %s9, 1
      %s15 = ssub.s32 %s9, 2
      %s25 = sadd.s32 1, %s18
      %p26 = scmp.ge.s32.totalorder %s25, 1
      %s27 = scalar_select %p26, 0, %s25
      %s28 = sadd.s32 1, %s17
      %s29 = scalar_select %p26, %s28, %s17
      %p30 = scmp.ge.s32.totalorder %s29, 4
      %s31 = scalar_select %p30, 0, %s29
      %s32 = sadd.s32 1, %s16
      %s33 = scalar_select %p30, %s32, %s16
      %p34 = scmp.ge.s32.totalorder %s33, 1
      %s35 = scalar_select %p34, 0, %s33
      %s36 = ssub.s32 %s16, %s35
      %s37 = ssub.s32 %s18, %s27
      %s38 = sor.u32 %s36, %s37
      %p39 = scmp.eq.s32.totalorder %s38, 0
      %s41 = sadd.s32 %s40, 1
      %s42 = scalar_select %p39, %s40, %s41
      %p45 = pneg %p39
      %p46 = scmp.eq.s32.totalorder %s9, 3
      %p47 = por %p45, %p46
      %p48 = scmp.ne.s32.totalorder %s40, %s43
      %p49 = scmp.eq.s32.totalorder %s9, 0
      %p50 = por %p48, %p49
      %p51 = scmp.ne.s32.totalorder %s40, %s43
      %p52 = scmp.eq.s32.totalorder %s14, 3
      %p53 = por %p51, %p52
      %p54 = scmp.ne.s32.totalorder %s43, %s44
      %p55 = scmp.eq.s32.totalorder %s14, 0
      %p56 = por %p54, %p55
      %p57 = scmp.ne.s32.totalorder %s43, %s44
      %p58 = scmp.eq.s32.totalorder %s15, 3
      %p59 = por %p57, %p58
      %p61 = scmp.ne.s32.totalorder %s44, %s60
      %p62 = scmp.eq.s32.totalorder %s15, 0
      %p63 = por %p61, %p62
      %s64 = ssub.s32 %s18, %s27
      %s65 = ssub.s32 %s17, %s31
      %s66 = sor.u32 %s64, %s65
      %p67 = scmp.eq.s32.totalorder %s66, 0
      %s69 = sadd.s32 %s68, 1
      %s70 = scalar_select %p67, %s68, %s69
      %p73 = pneg %p67
      %p74 = scmp.eq.s32.totalorder %s9, 3
      %p75 = por %p73, %p74
      %p76 = scmp.ne.s32.totalorder %s68, %s71
      %p77 = scmp.eq.s32.totalorder %s9, 0
      %p78 = por %p76, %p77
      %p79 = scmp.ne.s32.totalorder %s68, %s71
      %p80 = scmp.eq.s32.totalorder %s14, 3
      %p81 = por %p79, %p80
      %p82 = scmp.ne.s32.totalorder %s71, %s72
      %p83 = scmp.eq.s32.totalorder %s14, 0
      %p84 = por %p82, %p83
      %p85 = scmp.ne.s32.totalorder %s71, %s72
      %p86 = scmp.eq.s32.totalorder %s15, 3
      %p87 = por %p85, %p86
      %p89 = scmp.ne.s32.totalorder %s72, %s88
      %p90 = scmp.eq.s32.totalorder %s15, 0
      %p91 = por %p89, %p90
      %s92 = ssub.s32 %s17, %s31
      %p93 = scmp.eq.s32.totalorder %s92, 0
      %s95 = sadd.s32 %s94, 1
      %s96 = scalar_select %p93, %s94, %s95
      %p99 = pneg %p93
      %p100 = scmp.eq.s32.totalorder %s9, 3
      %p101 = por %p99, %p100
      %p102 = scmp.ne.s32.totalorder %s94, %s97
      %p103 = scmp.eq.s32.totalorder %s9, 0
      %p104 = por %p102, %p103
      %p105 = scmp.ne.s32.totalorder %s94, %s97
      %p106 = scmp.eq.s32.totalorder %s14, 3
      %p107 = por %p105, %p106
      %p108 = scmp.ne.s32.totalorder %s97, %s98
      %p109 = scmp.eq.s32.totalorder %s14, 0
      %p110 = por %p108, %p109
      %p111 = scmp.ne.s32.totalorder %s97, %s98
      %p112 = scmp.eq.s32.totalorder %s15, 3
      %p113 = por %p111, %p112
      %p115 = scmp.ne.s32.totalorder %s98, %s114
      %p116 = scmp.eq.s32.totalorder %s15, 0
      %p117 = por %p115, %p116
      %s118 = ssub.s32 %s16, %s35
      %s119 = ssub.s32 %s17, %s31
      %s120 = sor.u32 %s118, %s119
      %p121 = scmp.eq.s32.totalorder %s120, 0
      %s123 = sadd.s32 %s122, 1
      %s124 = scalar_select %p121, %s122, %s123
      %p127 = pneg %p121
      %p128 = scmp.eq.s32.totalorder %s9, 3
      %p129 = por %p127, %p128
      %p130 = scmp.ne.s32.totalorder %s122, %s125
      %p131 = scmp.eq.s32.totalorder %s9, 0
      %p132 = por %p130, %p131
      %p133 = scmp.ne.s32.totalorder %s122, %s125
      %p134 = scmp.eq.s32.totalorder %s14, 3
      %p135 = por %p133, %p134
      %p136 = scmp.ne.s32.totalorder %s125, %s126
      %p137 = scmp.eq.s32.totalorder %s14, 0
      %p138 = por %p136, %p137
      %p139 = scmp.ne.s32.totalorder %s125, %s126
      %p140 = scmp.eq.s32.totalorder %s15, 3
      %p141 = por %p139, %p140
      %p143 = scmp.ne.s32.totalorder %s126, %s142
      %p144 = scmp.eq.s32.totalorder %s15, 0
      %p145 = por %p143, %p144
      %p146 = scmp.le.s32.totalorder 1, %s9
      %p147 = scmp.lt.s32.totalorder %s9, 5
      %p148 = pnand %p146, %p147
      %p149 = pneg %p148
      // Predicated region
      $region9: #{vae_forward.15} parent=5 // pred_check
        _
      $region10: #{vae_forward.15} parent=5 // pred_check_branch
        %151 = sbr.rel (%p148) target = $region12
      $region11: #{vae_forward.15} parent=5 // pred_region
        %s152 = ssub.s32 %s9, 1
        // Predicated region
        $region13: #{vae_forward.15} parent=11 // pred_check
          %p153 = pneg %p56
        $region14: #{vae_forward.15} parent=11 // pred_check_branch
          %155 = sbr.rel (%p153) target = $region16
        $region15: #{vae_forward.15} parent=11 // pred_region
          %p156 = scmp.lt.s32.totalorder %s19, 0
          %s157 = scalar_select %p156, %s19, 0
          %p158 = scmp.lt.s32.totalorder %s21, 0
          %s159 = scalar_select %p158, %s21, 0
          %s160 = sadd.s32 %s159, %s157
          %s161 = scalar_lea.vmem %s0, %s160
        $region16: #{vae_forward.15} parent=11 // pred_fallthru
          _
      $region12: #{vae_forward.15} parent=5 // pred_fallthru
        _
      %p162 = scmp.lt.s32.totalorder %s9, 4
      // Predicated region
      $region17: #{vae_forward.15} parent=5 // pred_check
        %p163 = pneg %p162
      $region18: #{vae_forward.15} parent=5 // pred_check_branch
        %165 = sbr.rel (%p163) target = $region20
      $region19: #{vae_forward.15} parent=5 // pred_region
        // Predicated region
        $region21: #{vae_forward.15} parent=19 // pred_check
          %p166 = pneg %p78
        $region22: #{vae_forward.15} parent=19 // pred_check_branch
          %168 = sbr.rel (%p166) target = $region24
        $region23: #{vae_forward.15} parent=19 // pred_region
          %s169 = sand.u32 %s68, 1
          %s170 = sand.u32 %s68, 1
          %s171 = smul.addr %s170, 128
          %s172 = scalar_lea.vmem [#allocation3], %s171
          %s173 = smul.u32 16, %s18
          %s174 = smul.u32 2, %s17
          %s175 = smul.addr %s173, 8
          %s176 = sadd.s32 %s174, %s175
          %s177 = smul.addr %s176, 4
          %s178 = scalar_lea.vmem %s1, %s177
          // Predicated region
          $region25: #{vae_forward.15} parent=23 // pred_check
            _
          $region26: #{vae_forward.15} parent=23 // pred_check_branch
            %180 = sbr.rel (0) target = $region28
          $region27: #{vae_forward.15} parent=23 // pred_region
            // Predicated region
            $region29: #{vae_forward.15} parent=27 // pred_check
              _
            $region30: #{vae_forward.15} parent=27 // pred_check_branch
              %182 = sbr.rel (0) target = $region32
            $region31: #{vae_forward.15} parent=27 // pred_region
              // Predicated region
              $region44: #{vae_forward.15} parent=31 // pred_check
                _
              $region45: #{vae_forward.15} parent=31 // pred_check_branch
                %227 = sbr.rel (0) target = $region47
              $region46: #{vae_forward.15} parent=31 // pred_region
                loop: start=0, step=1, limit=1
                $region48: #{vae_forward.15} parent=46 // loop_pre_header
                  _
                $region49: #{vae_forward.15} parent=46 // loop_header
                  %s229 = sphi 0, %s233
                  %p230 = scmp.ge.s32.totalorder %s229, 1
                  %s234 = sphi %s178, %s178
                  %s235 = sphi %s172, %s172
                $region50: #{vae_forward.15} parent=46 // loop_header_branch
                  %232 = sbr.rel (%p230) target = $region54
                $region51: #{vae_forward.15} parent=46 // loop_body
                  %v236 = vld [vmem:[%s234] sm:$0xff]
                  %237 = vst [vmem:[%s235] sm:$0xff] %v236
                  %v238 = vld [vmem:[%s234 + $0x20] sm:$0xff]
                  %239 = vst [vmem:[%s235 + $0x8] sm:$0xff] %v238
                  %v240 = vld [vmem:[%s234 + $0x40] sm:$0xff]
                  %241 = vst [vmem:[%s235 + $0x10] sm:$0xff] %v240
                  %v242 = vld [vmem:[%s234 + $0x60] sm:$0xff]
                  %243 = vst [vmem:[%s235 + $0x18] sm:$0xff] %v242
                  %v244 = vld [vmem:[%s234 + $0x80] sm:$0xff]
                  %245 = vst [vmem:[%s235 + $0x20] sm:$0xff] %v244
                  %v246 = vld [vmem:[%s234 + $0xa0] sm:$0xff]
                  %247 = vst [vmem:[%s235 + $0x28] sm:$0xff] %v246
                  %v248 = vld [vmem:[%s234 + $0xc0] sm:$0xff]
                  %249 = vst [vmem:[%s235 + $0x30] sm:$0xff] %v248
                  %v250 = vld [vmem:[%s234 + $0xe0] sm:$0xff]
                  %251 = vst [vmem:[%s235 + $0x38] sm:$0xff] %v250
                  %v252 = vld [vmem:[%s234 + $0x100] sm:$0xff]
                  %253 = vst [vmem:[%s235 + $0x40] sm:$0xff] %v252
                  %v254 = vld [vmem:[%s234 + $0x120] sm:$0xff]
                  %255 = vst [vmem:[%s235 + $0x48] sm:$0xff] %v254
                  %v256 = vld [vmem:[%s234 + $0x140] sm:$0xff]
                  %257 = vst [vmem:[%s235 + $0x50] sm:$0xff] %v256
                  %v258 = vld [vmem:[%s234 + $0x160] sm:$0xff]
                  %259 = vst [vmem:[%s235 + $0x58] sm:$0xff] %v258
                  %v260 = vld [vmem:[%s234 + $0x180] sm:$0xff]
                  %261 = vst [vmem:[%s235 + $0x60] sm:$0xff] %v260
                  %v262 = vld [vmem:[%s234 + $0x1a0] sm:$0xff]
                  %263 = vst [vmem:[%s235 + $0x68] sm:$0xff] %v262
                  %v264 = vld [vmem:[%s234 + $0x1c0] sm:$0xff]
                  %265 = vst [vmem:[%s235 + $0x70] sm:$0xff] %v264
                  %v266 = vld [vmem:[%s234 + $0x1e0] sm:$0xff]
                  %267 = vst [vmem:[%s235 + $0x78] sm:$0xff] %v266
                $region52: #{vae_forward.15} parent=46 // loop_footer
                  %s233 = sadd.s32 1, %s229
                $region53: #{vae_forward.15} parent=46 // loop_footer_branch
                  %228 = sbr.rel target = $region49
                $region54: #{vae_forward.15} parent=46 // loop_exit
                  _
              $region47: #{vae_forward.15} parent=31 // pred_fallthru
                _
              // Predicated region
              $region55: #{vae_forward.15} parent=31 // pred_check
                _
              $region56: #{vae_forward.15} parent=31 // pred_check_branch
                %269 = sbr.rel target = $region58
              $region57: #{vae_forward.15} parent=31 // pred_region
                _
              $region58: #{vae_forward.15} parent=31 // pred_fallthru
                _
            $region32: #{vae_forward.15} parent=27 // pred_fallthru
              _
            // Predicated region
            $region33: #{vae_forward.15} parent=27 // pred_check
              _
            $region34: #{vae_forward.15} parent=27 // pred_check_branch
              %184 = sbr.rel target = $region36
            $region35: #{vae_forward.15} parent=27 // pred_region
              loop: start=0, step=1, limit=1
              $region37: #{vae_forward.15} parent=35 // loop_pre_header
                _
              $region38: #{vae_forward.15} parent=35 // loop_header
                %s187 = sphi 0, %s191
                %p188 = scmp.ge.s32.totalorder %s187, 1
                %s192 = sphi %s178, %s178
                %s193 = sphi %s172, %s172
              $region39: #{vae_forward.15} parent=35 // loop_header_branch
                %190 = sbr.rel (%p188) target = $region43
              $region40: #{vae_forward.15} parent=35 // loop_body
                %v194 = vld [vmem:[%s192] sm:$0xff]
                %195 = vst [vmem:[%s193] sm:$0xff] %v194
                %v196 = vld [vmem:[%s192 + $0x20] sm:$0xff]
                %197 = vst [vmem:[%s193 + $0x8] sm:$0xff] %v196
                %v198 = vld [vmem:[%s192 + $0x40] sm:$0xff]
                %199 = vst [vmem:[%s193 + $0x10] sm:$0xff] %v198
                %v200 = vld [vmem:[%s192 + $0x60] sm:$0xff]
                %201 = vst [vmem:[%s193 + $0x18] sm:$0xff] %v200
                %v202 = vld [vmem:[%s192 + $0x80] sm:$0xff]
                %203 = vst [vmem:[%s193 + $0x20] sm:$0xff] %v202
                %v204 = vld [vmem:[%s192 + $0xa0] sm:$0xff]
                %205 = vst [vmem:[%s193 + $0x28] sm:$0xff] %v204
                %v206 = vld [vmem:[%s192 + $0xc0] sm:$0xff]
                %207 = vst [vmem:[%s193 + $0x30] sm:$0xff] %v206
                %v208 = vld [vmem:[%s192 + $0xe0] sm:$0xff]
                %209 = vst [vmem:[%s193 + $0x38] sm:$0xff] %v208
                %v210 = vld [vmem:[%s192 + $0x100] sm:$0xff]
                %211 = vst [vmem:[%s193 + $0x40] sm:$0xff] %v210
                %v212 = vld [vmem:[%s192 + $0x120] sm:$0xff]
                %213 = vst [vmem:[%s193 + $0x48] sm:$0xff] %v212
                %v214 = vld [vmem:[%s192 + $0x140] sm:$0xff]
                %215 = vst [vmem:[%s193 + $0x50] sm:$0xff] %v214
                %v216 = vld [vmem:[%s192 + $0x160] sm:$0xff]
                %217 = vst [vmem:[%s193 + $0x58] sm:$0xff] %v216
                %v218 = vld [vmem:[%s192 + $0x180] sm:$0xff]
                %219 = vst [vmem:[%s193 + $0x60] sm:$0xff] %v218
                %v220 = vld [vmem:[%s192 + $0x1a0] sm:$0xff]
                %221 = vst [vmem:[%s193 + $0x68] sm:$0xff] %v220
                %v222 = vld [vmem:[%s192 + $0x1c0] sm:$0xff]
                %223 = vst [vmem:[%s193 + $0x70] sm:$0xff] %v222
                %v224 = vld [vmem:[%s192 + $0x1e0] sm:$0xff]
                %225 = vst [vmem:[%s193 + $0x78] sm:$0xff] %v224
              $region41: #{vae_forward.15} parent=35 // loop_footer
                %s191 = sadd.s32 1, %s187
              $region42: #{vae_forward.15} parent=35 // loop_footer_branch
                %186 = sbr.rel target = $region38
              $region43: #{vae_forward.15} parent=35 // loop_exit
                _
            $region36: #{vae_forward.15} parent=27 // pred_fallthru
              _
          $region28: #{vae_forward.15} parent=23 // pred_fallthru
            _
          %270 = vnop
        $region24: #{vae_forward.15} parent=19 // pred_fallthru
          _
        // Predicated region
        $region59: #{vae_forward.15} parent=19 // pred_check
          %p271 = pneg %p104
        $region60: #{vae_forward.15} parent=19 // pred_check_branch
          %273 = sbr.rel (%p271) target = $region62
        $region61: #{vae_forward.15} parent=19 // pred_region
          %s274 = smul.u32 2, %s17
          %p275 = scmp.lt.s32.totalorder %s274, 7
          %s276 = scalar_select %p275, %s274, 7
          %s277 = scalar_lea.vmem %s2, %s276
          %s278 = smul.u32 2, %s17
        $region62: #{vae_forward.15} parent=19 // pred_fallthru
          _
      $region20: #{vae_forward.15} parent=5 // pred_fallthru
        _
      %p279 = scmp.le.s32.totalorder 1, %s9
      %p280 = scmp.lt.s32.totalorder %s9, 5
      %p281 = pnand %p279, %p280
      %p282 = pneg %p281
      // Predicated region
      $region63: #{vae_forward.15} parent=5 // pred_check
        _
      $region64: #{vae_forward.15} parent=5 // pred_check_branch
        %284 = sbr.rel (%p281) target = $region66
      $region65: #{vae_forward.15} parent=5 // pred_region
        %s285 = ssub.s32 %s9, 1
        %s286 = sand.u32 %s71, 1
        %s287 = sand.u32 %s71, 1
        %s288 = smul.addr %s287, 128
        %s289 = scalar_lea.vmem [#allocation3], %s288
        // Predicated region
        $region67: #{vae_forward.15} parent=65 // pred_check
          %p290 = pneg %p84
        $region68: #{vae_forward.15} parent=65 // pred_check_branch
          %292 = sbr.rel (%p290) target = $region70
        $region69: #{vae_forward.15} parent=65 // pred_region
          _
        $region70: #{vae_forward.15} parent=65 // pred_fallthru
          _
        %p293 = scmp.lt.s32.totalorder %s19, 0
        %s294 = scalar_select %p293, %s19, 0
        %p295 = scmp.lt.s32.totalorder %s21, 0
        %s296 = scalar_select %p295, %s21, 0
        %s297 = sadd.s32 %s296, %s294
        %s298 = scalar_lea.vmem %s0, %s297
        %p299 = pneg %p56
        %p300 = pneg %p53
        %s301 = sand.u32 %s71, 1
        %s302 = sand.u32 %s71, 1
        %s303 = smul.addr %s302, 128
        %s304 = scalar_lea.vmem [#allocation3], %s303
        %p305 = pneg %p84
        %p306 = pneg %p81
        %s307 = smul.u32 2, %s20
        %p308 = scmp.lt.s32.totalorder %s307, 7
        %s309 = scalar_select %p308, %s307, 7
        %s310 = scalar_lea.vmem %s2, %s309
        %p311 = pneg %p110
        %p312 = pneg %p107
        %p313 = pneg %p138
        %p314 = pneg %p135
        %s315 = smul.u32 2, %s20
        %p316 = scmp.lt.s32.totalorder %s19, 0
        %s317 = scalar_select %p316, %s19, 0
        %p318 = scmp.lt.s32.totalorder %s315, 7
        %s319 = scalar_select %p318, %s315, 7
        %s320 = smul.addr %s317, 8
        %s321 = sadd.s32 %s319, %s320
        %s322 = smul.addr %s321, 2
        %s323 = scalar_lea.vmem %s3, %s322
        %p324 = scmp.lt.s32.totalorder %s19, 0
        %s325 = scalar_select %p324, %s19, 0
        %p326 = scmp.lt.s32.totalorder %s21, 0
        %s327 = scalar_select %p326, %s21, 0
        %s328 = sadd.s32 %s327, %s325
        %s329 = scalar_lea.vmem %s0, %s328
        %s330 = smul.u32 16, %s21
        %s331 = smul.u32 2, %s20
        %s332 = smul.u32 2, %s20
        %p333 = scmp.lt.s32.totalorder %s332, 7
        %s334 = scalar_select %p333, %s332, 7
        %s335 = scalar_lea.vmem %s2, %s334
        %s336 = smul.u32 2, %s20
        %s337 = smul.u32 2, %s20
        %p338 = scmp.lt.s32.totalorder %s19, 0
        %s339 = scalar_select %p338, %s19, 0
        %p340 = scmp.lt.s32.totalorder %s337, 7
        %s341 = scalar_select %p340, %s337, 7
        %s342 = smul.addr %s339, 8
        %s343 = sadd.s32 %s341, %s342
        %s344 = smul.addr %s343, 2
        %s345 = scalar_lea.vmem %s3, %s344
        %s346 = smul.u32 2, %s20
        %p348 = scmp.eq.s32.totalorder %s21, 0
        // Predicated region
        $region71: #{vae_forward.15} parent=65 // pred_check
          %p349 = pneg %p348
        $region72: #{vae_forward.15} parent=65 // pred_check_branch
          %351 = sbr.rel (%p349) target = $region74
        $region73: #{vae_forward.15} parent=65 // pred_region
          %352 = vst [vmem:[#allocation2] sm:$0xf] 0.0
        $region74: #{vae_forward.15} parent=65 // pred_fallthru
          _
        %v353 = vld [vmem:[#allocation2] sm:$0xf]
        %v354 = vld [vmem:[%s329] sm:$0x1]
        %v355 = vld [vmem:[%s289] sm:$0xff]
        %v356 = vld [vmem:[%s289 + $0x8] sm:$0xff]
        %v357 = vld [vmem:[%s289 + $0x10] sm:$0xff]
        %v358 = vld [vmem:[%s289 + $0x18] sm:$0xff]
        %v359 = vld [vmem:[%s289 + $0x20] sm:$0xff]
        %v360 = vld [vmem:[%s289 + $0x28] sm:$0xff]
        %v361 = vld [vmem:[%s289 + $0x30] sm:$0xff]
        %v362 = vld [vmem:[%s289 + $0x38] sm:$0xff]
        %v363 = vld [vmem:[%s289 + $0x40] sm:$0xff]
        %v364 = vld [vmem:[%s289 + $0x48] sm:$0xff]
        %v365 = vld [vmem:[%s289 + $0x50] sm:$0xff]
        %v366 = vld [vmem:[%s289 + $0x58] sm:$0xff]
        %v367 = vld [vmem:[%s289 + $0x60] sm:$0xff]
        %v368 = vld [vmem:[%s289 + $0x68] sm:$0xff]
        %v369 = vld [vmem:[%s289 + $0x70] sm:$0xff]
        %v370 = vld [vmem:[%s289 + $0x78] sm:$0xff]
        %v387 = vunpack.c.l.b16 %v355
        %v388 = vunpack.c.h.b16 %v355
        %v389 = vunpack.c.l.b16 %v356
        %v390 = vunpack.c.h.b16 %v356
        %v391 = vunpack.c.l.b16 %v357
        %v392 = vunpack.c.h.b16 %v357
        %v393 = vunpack.c.l.b16 %v358
        %v394 = vunpack.c.h.b16 %v358
        %v395 = vunpack.c.l.b16 %v359
        %v396 = vunpack.c.h.b16 %v359
        %v397 = vunpack.c.l.b16 %v360
        %v398 = vunpack.c.h.b16 %v360
        %v399 = vunpack.c.l.b16 %v361
        %v400 = vunpack.c.h.b16 %v361
        %v401 = vunpack.c.l.b16 %v362
        %v402 = vunpack.c.h.b16 %v362
        %v403 = vunpack.c.l.b16 %v363
        %v404 = vunpack.c.h.b16 %v363
        %v405 = vunpack.c.l.b16 %v364
        %v406 = vunpack.c.h.b16 %v364
        %v407 = vunpack.c.l.b16 %v365
        %v408 = vunpack.c.h.b16 %v365
        %v409 = vunpack.c.l.b16 %v366
        %v410 = vunpack.c.h.b16 %v366
        %v411 = vunpack.c.l.b16 %v367
        %v412 = vunpack.c.h.b16 %v367
        %v413 = vunpack.c.l.b16 %v368
        %v414 = vunpack.c.h.b16 %v368
        %v415 = vunpack.c.l.b16 %v369
        %v416 = vunpack.c.h.b16 %v369
        %v417 = vunpack.c.l.b16 %v370
        %v418 = vunpack.c.h.b16 %v370
        %v419 = vpack.c.b16 %v389, %v387
        %v420 = vpack.c.b16 %v390, %v388
        %v421 = vpack.c.b16 %v393, %v391
        %v422 = vpack.c.b16 %v394, %v392
        %v423 = vpack.c.b16 %v397, %v395
        %v424 = vpack.c.b16 %v398, %v396
        %v425 = vpack.c.b16 %v401, %v399
        %v426 = vpack.c.b16 %v402, %v400
        %v427 = vpack.c.b16 %v405, %v403
        %v428 = vpack.c.b16 %v406, %v404
        %v429 = vpack.c.b16 %v409, %v407
        %v430 = vpack.c.b16 %v410, %v408
        %v431 = vpack.c.b16 %v413, %v411
        %v432 = vpack.c.b16 %v414, %v412
        %v433 = vpack.c.b16 %v417, %v415
        %v434 = vpack.c.b16 %v418, %v416
        %451 = vmatprep.subr.bf16.mxu0 %v420
        %452 = vmatpush1.bf16.msra.mxu0 %v419
        %453 = vmatprep.subr.bf16.mxu0 %v422
        %454 = vmatpush1.bf16.msra.mxu0 %v421
        %455 = vmatprep.subr.bf16.mxu0 %v424
        %456 = vmatpush1.bf16.msra.mxu0 %v423
        %457 = vmatprep.subr.bf16.mxu0 %v426
        %458 = vmatpush1.bf16.msra.mxu0 %v425
        %459 = vmatprep.subr.bf16.mxu0 %v428
        %460 = vmatpush1.bf16.msra.mxu0 %v427
        %461 = vmatprep.subr.bf16.mxu0 %v430
        %462 = vmatpush1.bf16.msra.mxu0 %v429
        %463 = vmatprep.subr.bf16.mxu0 %v432
        %464 = vmatpush1.bf16.msra.mxu0 %v431
        %465 = vmatprep.subr.bf16.mxu0 %v434
        %466 = vmatpush1.bf16.msra.mxu0 %v433
        %467 = vmatprep.subr.bf16.mxu0 0
        %468 = vmatpush1.bf16.msra.mxu0 0
        %469 = vmatprep.subr.bf16.mxu0 0
        %470 = vmatpush1.bf16.msra.mxu0 0
        %471 = vmatprep.subr.bf16.mxu0 0
        %472 = vmatpush1.bf16.msra.mxu0 0
        %473 = vmatprep.subr.bf16.mxu0 0
        %474 = vmatpush1.bf16.msra.mxu0 0
        %475 = vmatprep.subr.bf16.mxu0 0
        %476 = vmatpush1.bf16.msra.mxu0 0
        %477 = vmatprep.subr.bf16.mxu0 0
        %478 = vmatpush1.bf16.msra.mxu0 0
        %479 = vmatprep.subr.bf16.mxu0 0
        %480 = vmatpush1.bf16.msra.mxu0 0
        %481 = vmatprep.subr.bf16.mxu0 0
        %482 = vmatpush1.bf16.msra.mxu0 0
        %483 = vmatprep.mubr.bf16.mxu0 0
        %484 = vmatmul.mubr.bf16.gmra.mrb[0].mxu0 %v354
        %v485 = vpop.f32.mrb[0].mxu0
        %v486 = vadd.f32 0.0, %v485
        %v487 = vpop.f32.mrb[0].mxu0
        %v488 = vadd.f32 0.0, %v487
        %v489 = vpop.f32.mrb[0].mxu0
        %v490 = vpop.f32.mrb[0].mxu0
        %491 = vdwg.mxu0
        %v494 = vcombine.low %v486, %v488
        %v496 = vunpack.c.l.s4 1983009808
        %v497 = vunpack.c.0.s8 %v496
        %v498 = vlaneseq
        %v499 = vshrl.u32 %v498, 7
        %v500 = vsub.s32 %v497, %v499
        %v501 = vrot.slane %v494, %v500
        %v503 = vadd.f32 %v353, %v501
        %504 = vst [vmem:[#allocation2] sm:$0xf] %v503
        // Predicated region
        $region75: #{vae_forward.15} parent=65 // pred_check
          %p505 = pneg %p348
        $region76: #{vae_forward.15} parent=65 // pred_check_branch
          %507 = sbr.rel (%p505) target = $region78
        $region77: #{vae_forward.15} parent=65 // pred_region
          %v508 = vld [vmem:[#allocation2] sm:$0xf]
          %v509 = vld [vmem:[%s335] sm:$0x3]
          %v511 = vlaneseq
          %v512 = vshrl.u32 %v511, 7
          %v513 = vsub.s32 0, %v512
          %v514 = vrot.slane %v509, %v513
          %v515 = vlaneseq
          %v516 = vshrl.u32 %v515, 7
          %v517 = vsub.s32 1, %v516
          %v518 = vrot.slane %v509, %v517
          %v519 = vcombine.low %v514, %v518
          %v521 = vunpack.c.l.s4 1983009808
          %v522 = vunpack.c.0.s8 %v521
          %v523 = vlaneseq
          %v524 = vshrl.u32 %v523, 7
          %v525 = vsub.s32 %v522, %v524
          %v526 = vrot.slane %v519, %v525
          %v528 = vadd.f32 %v508, %v526
          %v529 = vmax.f32 %v528, 0.0
          %530 = vst [vmem:[%s345] sm:$0xf] %v529
        $region78: #{vae_forward.15} parent=65 // pred_fallthru
          _
        %s531 = smul.u32 2, %s20
        %p532 = scmp.lt.s32.totalorder %s19, 0
        %s533 = scalar_select %p532, %s19, 0
        %p534 = scmp.lt.s32.totalorder %s531, 7
        %s535 = scalar_select %p534, %s531, 7
        %s536 = smul.addr %s533, 8
        %s537 = sadd.s32 %s535, %s536
        %s538 = smul.addr %s537, 2
        %s539 = scalar_lea.vmem %s3, %s538
        // Predicated region
        $region79: #{vae_forward.15} parent=65 // pred_check
          %p540 = pneg %p135
        $region80: #{vae_forward.15} parent=65 // pred_check_branch
          %542 = sbr.rel (%p540) target = $region82
        $region81: #{vae_forward.15} parent=65 // pred_region
          %s543 = smul.u32 2, %s20
        $region82: #{vae_forward.15} parent=65 // pred_fallthru
          _
      $region66: #{vae_forward.15} parent=5 // pred_fallthru
        _
      %p544 = scmp.le.s32.totalorder 2, %s9
      // Predicated region
      $region83: #{vae_forward.15} parent=5 // pred_check
        %p545 = pneg %p544
      $region84: #{vae_forward.15} parent=5 // pred_check_branch
        %547 = sbr.rel (%p545) target = $region86
      $region85: #{vae_forward.15} parent=5 // pred_region
        %s548 = ssub.s32 %s9, 2
        // Predicated region
        $region87: #{vae_forward.15} parent=85 // pred_check
          %p549 = pneg %p141
        $region88: #{vae_forward.15} parent=85 // pred_check_branch
          %551 = sbr.rel (%p549) target = $region90
        $region89: #{vae_forward.15} parent=85 // pred_region
          %s552 = smul.u32 2, %s23
          %p553 = scmp.lt.s32.totalorder %s22, 0
          %s554 = scalar_select %p553, %s22, 0
          %p555 = scmp.lt.s32.totalorder %s552, 7
          %s556 = scalar_select %p555, %s552, 7
          %s557 = smul.addr %s554, 8
          %s558 = sadd.s32 %s556, %s557
          %s559 = smul.addr %s558, 2
          %s560 = scalar_lea.vmem %s3, %s559
        $region90: #{vae_forward.15} parent=85 // pred_fallthru
          _
      $region86: #{vae_forward.15} parent=5 // pred_fallthru
        _
    $region6: #{vae_forward.15} parent=1 // loop_footer
      %s13 = sadd.s32 1, %s9
    $region7: #{vae_forward.15} parent=1 // loop_footer_branch
      %8 = sbr.rel target = $region3
    $region8: #{vae_forward.15} parent=1 // loop_exit
      _

// kernel: vae_forward.17
$region0: #{vae_forward.17}
  #allocation0 [shape = 'u32[]', space=smem, size = 0x4, offset = 0x4, fixed_abs, tag = 'smem constant byte address 0x4 - core index']
  #allocation1 [shape = 'u32[144,128]{1,0:T(1,128)}', space=vmem, size = 0x12000, scoped, tag = 'internal scratch']
  #allocation2 [shape = 'f32[32,256]{1,0:T(8,128)}', space=vmem, size = 0x8000, scoped, tag = 'scratch operand']
  %s0 = inlined_call_operand.vmem [shape: bf16[32,128], index: 0, kind: input, shape index: {}]
  %s1 = inlined_call_operand.vmem [shape: bf16[128,1024], index: 1, kind: input, shape index: {}]
  %s2 = inlined_call_operand.vmem [shape: f32[1,1024], index: 2, kind: input, shape index: {}]
  %s3 = inlined_call_operand.vmem [shape: f32[32,1024], index: 3, kind: output, shape index: {}]
  %s4 = sld [smem:[#allocation0]]
  $region110: #{vae_forward.17} parent=0
    _
  %s6 = ssub.s32 1, %s4
  %s7 = scalar_select 0, %s6, %s4
  $region1: #{vae_forward.17} parent=0
    #allocation3 [shape = 'u8[131072]{0}', space=vmem, size = 0x20000, scoped, tag = 'input window, operand 1']
    #allocation4 [shape = 'u8[65536]{0}', space=vmem, size = 0x10000, scoped, tag = 'output window, operand 0']
    loop: start=0, step=1, limit=6
    $region2: #{vae_forward.17} parent=1 // loop_pre_header
      _
    $region3: #{vae_forward.17} parent=1 // loop_header
      %s9 = sphi 0, %s13
      %p10 = scmp.ge.s32.totalorder %s9, 6
      %s16 = sphi 0, %s35
      %s17 = sphi 0, %s31
      %s18 = sphi 0, %s27
      %s19 = sphi 0, %s16
      %s20 = sphi 0, %s17
      %s21 = sphi 0, %s18
      %s22 = sphi 0, %s19
      %s23 = sphi 0, %s20
      %s24 = sphi 0, %s21
      %s40 = sphi 0, %s42
      %s43 = sphi 0, %s40
      %s44 = sphi 0, %s43
      %s60 = sphi 0, %s44
      %s68 = sphi 0, %s70
      %s71 = sphi 0, %s68
      %s72 = sphi 0, %s71
      %s88 = sphi 0, %s72
      %s94 = sphi 0, %s96
      %s97 = sphi 0, %s94
      %s98 = sphi 0, %s97
      %s114 = sphi 0, %s98
      %s122 = sphi 0, %s124
      %s125 = sphi 0, %s122
      %s126 = sphi 0, %s125
      %s142 = sphi 0, %s126
    $region4: #{vae_forward.17} parent=1 // loop_header_branch
      %12 = sbr.rel (%p10) target = $region8
    $region5: #{vae_forward.17} parent=1 // loop_body
      %s14 = ssub.s32 %s9, 1
      %s15 = ssub.s32 %s9, 2
      %s25 = sadd.s32 1, %s18
      %p26 = scmp.ge.s32.totalorder %s25, 1
      %s27 = scalar_select %p26, 0, %s25
      %s28 = sadd.s32 1, %s17
      %s29 = scalar_select %p26, %s28, %s17
      %p30 = scmp.ge.s32.totalorder %s29, 4
      %s31 = scalar_select %p30, 0, %s29
      %s32 = sadd.s32 1, %s16
      %s33 = scalar_select %p30, %s32, %s16
      %p34 = scmp.ge.s32.totalorder %s33, 1
      %s35 = scalar_select %p34, 0, %s33
      %s36 = ssub.s32 %s16, %s35
      %s37 = ssub.s32 %s18, %s27
      %s38 = sor.u32 %s36, %s37
      %p39 = scmp.eq.s32.totalorder %s38, 0
      %s41 = sadd.s32 %s40, 1
      %s42 = scalar_select %p39, %s40, %s41
      %p45 = pneg %p39
      %p46 = scmp.eq.s32.totalorder %s9, 3
      %p47 = por %p45, %p46
      %p48 = scmp.ne.s32.totalorder %s40, %s43
      %p49 = scmp.eq.s32.totalorder %s9, 0
      %p50 = por %p48, %p49
      %p51 = scmp.ne.s32.totalorder %s40, %s43
      %p52 = scmp.eq.s32.totalorder %s14, 3
      %p53 = por %p51, %p52
      %p54 = scmp.ne.s32.totalorder %s43, %s44
      %p55 = scmp.eq.s32.totalorder %s14, 0
      %p56 = por %p54, %p55
      %p57 = scmp.ne.s32.totalorder %s43, %s44
      %p58 = scmp.eq.s32.totalorder %s15, 3
      %p59 = por %p57, %p58
      %p61 = scmp.ne.s32.totalorder %s44, %s60
      %p62 = scmp.eq.s32.totalorder %s15, 0
      %p63 = por %p61, %p62
      %s64 = ssub.s32 %s18, %s27
      %s65 = ssub.s32 %s17, %s31
      %s66 = sor.u32 %s64, %s65
      %p67 = scmp.eq.s32.totalorder %s66, 0
      %s69 = sadd.s32 %s68, 1
      %s70 = scalar_select %p67, %s68, %s69
      %p73 = pneg %p67
      %p74 = scmp.eq.s32.totalorder %s9, 3
      %p75 = por %p73, %p74
      %p76 = scmp.ne.s32.totalorder %s68, %s71
      %p77 = scmp.eq.s32.totalorder %s9, 0
      %p78 = por %p76, %p77
      %p79 = scmp.ne.s32.totalorder %s68, %s71
      %p80 = scmp.eq.s32.totalorder %s14, 3
      %p81 = por %p79, %p80
      %p82 = scmp.ne.s32.totalorder %s71, %s72
      %p83 = scmp.eq.s32.totalorder %s14, 0
      %p84 = por %p82, %p83
      %p85 = scmp.ne.s32.totalorder %s71, %s72
      %p86 = scmp.eq.s32.totalorder %s15, 3
      %p87 = por %p85, %p86
      %p89 = scmp.ne.s32.totalorder %s72, %s88
      %p90 = scmp.eq.s32.totalorder %s15, 0
      %p91 = por %p89, %p90
      %s92 = ssub.s32 %s17, %s31
      %p93 = scmp.eq.s32.totalorder %s92, 0
      %s95 = sadd.s32 %s94, 1
      %s96 = scalar_select %p93, %s94, %s95
      %p99 = pneg %p93
      %p100 = scmp.eq.s32.totalorder %s9, 3
      %p101 = por %p99, %p100
      %p102 = scmp.ne.s32.totalorder %s94, %s97
      %p103 = scmp.eq.s32.totalorder %s9, 0
      %p104 = por %p102, %p103
      %p105 = scmp.ne.s32.totalorder %s94, %s97
      %p106 = scmp.eq.s32.totalorder %s14, 3
      %p107 = por %p105, %p106
      %p108 = scmp.ne.s32.totalorder %s97, %s98
      %p109 = scmp.eq.s32.totalorder %s14, 0
      %p110 = por %p108, %p109
      %p111 = scmp.ne.s32.totalorder %s97, %s98
      %p112 = scmp.eq.s32.totalorder %s15, 3
      %p113 = por %p111, %p112
      %p115 = scmp.ne.s32.totalorder %s98, %s114
      %p116 = scmp.eq.s32.totalorder %s15, 0
      %p117 = por %p115, %p116
      %s118 = ssub.s32 %s16, %s35
      %s119 = ssub.s32 %s17, %s31
      %s120 = sor.u32 %s118, %s119
      %p121 = scmp.eq.s32.totalorder %s120, 0
      %s123 = sadd.s32 %s122, 1
      %s124 = scalar_select %p121, %s122, %s123
      %p127 = pneg %p121
      %p128 = scmp.eq.s32.totalorder %s9, 3
      %p129 = por %p127, %p128
      %p130 = scmp.ne.s32.totalorder %s122, %s125
      %p131 = scmp.eq.s32.totalorder %s9, 0
      %p132 = por %p130, %p131
      %p133 = scmp.ne.s32.totalorder %s122, %s125
      %p134 = scmp.eq.s32.totalorder %s14, 3
      %p135 = por %p133, %p134
      %p136 = scmp.ne.s32.totalorder %s125, %s126
      %p137 = scmp.eq.s32.totalorder %s14, 0
      %p138 = por %p136, %p137
      %p139 = scmp.ne.s32.totalorder %s125, %s126
      %p140 = scmp.eq.s32.totalorder %s15, 3
      %p141 = por %p139, %p140
      %p143 = scmp.ne.s32.totalorder %s126, %s142
      %p144 = scmp.eq.s32.totalorder %s15, 0
      %p145 = por %p143, %p144
      %p146 = scmp.le.s32.totalorder 1, %s9
      %p147 = scmp.lt.s32.totalorder %s9, 5
      %p148 = pnand %p146, %p147
      %p149 = pneg %p148
      // Predicated region
      $region9: #{vae_forward.17} parent=5 // pred_check
        _
      $region10: #{vae_forward.17} parent=5 // pred_check_branch
        %151 = sbr.rel (%p148) target = $region12
      $region11: #{vae_forward.17} parent=5 // pred_region
        %s152 = ssub.s32 %s9, 1
        // Predicated region
        $region13: #{vae_forward.17} parent=11 // pred_check
          %p153 = pneg %p56
        $region14: #{vae_forward.17} parent=11 // pred_check_branch
          %155 = sbr.rel (%p153) target = $region16
        $region15: #{vae_forward.17} parent=11 // pred_region
          %s156 = smul.u32 4, %s19
          %p157 = scmp.lt.s32.totalorder %s156, 3
          %s158 = scalar_select %p157, %s156, 3
          %p159 = scmp.lt.s32.totalorder %s21, 0
          %s160 = scalar_select %p159, %s21, 0
          %s161 = sadd.s32 %s160, %s158
          %s162 = smul.addr %s161, 4
          %s163 = scalar_lea.vmem %s0, %s162
          %s164 = smul.u32 4, %s19
        $region16: #{vae_forward.17} parent=11 // pred_fallthru
          _
      $region12: #{vae_forward.17} parent=5 // pred_fallthru
        _
      %p165 = scmp.lt.s32.totalorder %s9, 4
      // Predicated region
      $region17: #{vae_forward.17} parent=5 // pred_check
        %p166 = pneg %p165
      $region18: #{vae_forward.17} parent=5 // pred_check_branch
        %168 = sbr.rel (%p166) target = $region20
      $region19: #{vae_forward.17} parent=5 // pred_region
        // Predicated region
        $region21: #{vae_forward.17} parent=19 // pred_check
          %p169 = pneg %p78
        $region22: #{vae_forward.17} parent=19 // pred_check_branch
          %171 = sbr.rel (%p169) target = $region24
        $region23: #{vae_forward.17} parent=19 // pred_region
          %s172 = sand.u32 %s68, 1
          %s173 = sand.u32 %s68, 1
          %s174 = smul.addr %s173, 128
          %s175 = scalar_lea.vmem [#allocation3], %s174
          %s176 = smul.u32 16, %s18
          %s177 = smul.u32 2, %s17
          %s178 = smul.addr %s176, 8
          %s179 = sadd.s32 %s177, %s178
          %s180 = smul.addr %s179, 4
          %s181 = scalar_lea.vmem %s1, %s180
          // Predicated region
          $region25: #{vae_forward.17} parent=23 // pred_check
            _
          $region26: #{vae_forward.17} parent=23 // pred_check_branch
            %183 = sbr.rel (0) target = $region28
          $region27: #{vae_forward.17} parent=23 // pred_region
            // Predicated region
            $region29: #{vae_forward.17} parent=27 // pred_check
              _
            $region30: #{vae_forward.17} parent=27 // pred_check_branch
              %185 = sbr.rel (0) target = $region32
            $region31: #{vae_forward.17} parent=27 // pred_region
              // Predicated region
              $region44: #{vae_forward.17} parent=31 // pred_check
                _
              $region45: #{vae_forward.17} parent=31 // pred_check_branch
                %230 = sbr.rel (0) target = $region47
              $region46: #{vae_forward.17} parent=31 // pred_region
                loop: start=0, step=1, limit=1
                $region48: #{vae_forward.17} parent=46 // loop_pre_header
                  _
                $region49: #{vae_forward.17} parent=46 // loop_header
                  %s232 = sphi 0, %s236
                  %p233 = scmp.ge.s32.totalorder %s232, 1
                  %s237 = sphi %s181, %s181
                  %s238 = sphi %s175, %s175
                $region50: #{vae_forward.17} parent=46 // loop_header_branch
                  %235 = sbr.rel (%p233) target = $region54
                $region51: #{vae_forward.17} parent=46 // loop_body
                  %v239 = vld [vmem:[%s237] sm:$0xff]
                  %240 = vst [vmem:[%s238] sm:$0xff] %v239
                  %v241 = vld [vmem:[%s237 + $0x20] sm:$0xff]
                  %242 = vst [vmem:[%s238 + $0x8] sm:$0xff] %v241
                  %v243 = vld [vmem:[%s237 + $0x40] sm:$0xff]
                  %244 = vst [vmem:[%s238 + $0x10] sm:$0xff] %v243
                  %v245 = vld [vmem:[%s237 + $0x60] sm:$0xff]
                  %246 = vst [vmem:[%s238 + $0x18] sm:$0xff] %v245
                  %v247 = vld [vmem:[%s237 + $0x80] sm:$0xff]
                  %248 = vst [vmem:[%s238 + $0x20] sm:$0xff] %v247
                  %v249 = vld [vmem:[%s237 + $0xa0] sm:$0xff]
                  %250 = vst [vmem:[%s238 + $0x28] sm:$0xff] %v249
                  %v251 = vld [vmem:[%s237 + $0xc0] sm:$0xff]
                  %252 = vst [vmem:[%s238 + $0x30] sm:$0xff] %v251
                  %v253 = vld [vmem:[%s237 + $0xe0] sm:$0xff]
                  %254 = vst [vmem:[%s238 + $0x38] sm:$0xff] %v253
                  %v255 = vld [vmem:[%s237 + $0x100] sm:$0xff]
                  %256 = vst [vmem:[%s238 + $0x40] sm:$0xff] %v255
                  %v257 = vld [vmem:[%s237 + $0x120] sm:$0xff]
                  %258 = vst [vmem:[%s238 + $0x48] sm:$0xff] %v257
                  %v259 = vld [vmem:[%s237 + $0x140] sm:$0xff]
                  %260 = vst [vmem:[%s238 + $0x50] sm:$0xff] %v259
                  %v261 = vld [vmem:[%s237 + $0x160] sm:$0xff]
                  %262 = vst [vmem:[%s238 + $0x58] sm:$0xff] %v261
                  %v263 = vld [vmem:[%s237 + $0x180] sm:$0xff]
                  %264 = vst [vmem:[%s238 + $0x60] sm:$0xff] %v263
                  %v265 = vld [vmem:[%s237 + $0x1a0] sm:$0xff]
                  %266 = vst [vmem:[%s238 + $0x68] sm:$0xff] %v265
                  %v267 = vld [vmem:[%s237 + $0x1c0] sm:$0xff]
                  %268 = vst [vmem:[%s238 + $0x70] sm:$0xff] %v267
                  %v269 = vld [vmem:[%s237 + $0x1e0] sm:$0xff]
                  %270 = vst [vmem:[%s238 + $0x78] sm:$0xff] %v269
                $region52: #{vae_forward.17} parent=46 // loop_footer
                  %s236 = sadd.s32 1, %s232
                $region53: #{vae_forward.17} parent=46 // loop_footer_branch
                  %231 = sbr.rel target = $region49
                $region54: #{vae_forward.17} parent=46 // loop_exit
                  _
              $region47: #{vae_forward.17} parent=31 // pred_fallthru
                _
              // Predicated region
              $region55: #{vae_forward.17} parent=31 // pred_check
                _
              $region56: #{vae_forward.17} parent=31 // pred_check_branch
                %272 = sbr.rel target = $region58
              $region57: #{vae_forward.17} parent=31 // pred_region
                _
              $region58: #{vae_forward.17} parent=31 // pred_fallthru
                _
            $region32: #{vae_forward.17} parent=27 // pred_fallthru
              _
            // Predicated region
            $region33: #{vae_forward.17} parent=27 // pred_check
              _
            $region34: #{vae_forward.17} parent=27 // pred_check_branch
              %187 = sbr.rel target = $region36
            $region35: #{vae_forward.17} parent=27 // pred_region
              loop: start=0, step=1, limit=1
              $region37: #{vae_forward.17} parent=35 // loop_pre_header
                _
              $region38: #{vae_forward.17} parent=35 // loop_header
                %s190 = sphi 0, %s194
                %p191 = scmp.ge.s32.totalorder %s190, 1
                %s195 = sphi %s181, %s181
                %s196 = sphi %s175, %s175
              $region39: #{vae_forward.17} parent=35 // loop_header_branch
                %193 = sbr.rel (%p191) target = $region43
              $region40: #{vae_forward.17} parent=35 // loop_body
                %v197 = vld [vmem:[%s195] sm:$0xff]
                %198 = vst [vmem:[%s196] sm:$0xff] %v197
                %v199 = vld [vmem:[%s195 + $0x20] sm:$0xff]
                %200 = vst [vmem:[%s196 + $0x8] sm:$0xff] %v199
                %v201 = vld [vmem:[%s195 + $0x40] sm:$0xff]
                %202 = vst [vmem:[%s196 + $0x10] sm:$0xff] %v201
                %v203 = vld [vmem:[%s195 + $0x60] sm:$0xff]
                %204 = vst [vmem:[%s196 + $0x18] sm:$0xff] %v203
                %v205 = vld [vmem:[%s195 + $0x80] sm:$0xff]
                %206 = vst [vmem:[%s196 + $0x20] sm:$0xff] %v205
                %v207 = vld [vmem:[%s195 + $0xa0] sm:$0xff]
                %208 = vst [vmem:[%s196 + $0x28] sm:$0xff] %v207
                %v209 = vld [vmem:[%s195 + $0xc0] sm:$0xff]
                %210 = vst [vmem:[%s196 + $0x30] sm:$0xff] %v209
                %v211 = vld [vmem:[%s195 + $0xe0] sm:$0xff]
                %212 = vst [vmem:[%s196 + $0x38] sm:$0xff] %v211
                %v213 = vld [vmem:[%s195 + $0x100] sm:$0xff]
                %214 = vst [vmem:[%s196 + $0x40] sm:$0xff] %v213
                %v215 = vld [vmem:[%s195 + $0x120] sm:$0xff]
                %216 = vst [vmem:[%s196 + $0x48] sm:$0xff] %v215
                %v217 = vld [vmem:[%s195 + $0x140] sm:$0xff]
                %218 = vst [vmem:[%s196 + $0x50] sm:$0xff] %v217
                %v219 = vld [vmem:[%s195 + $0x160] sm:$0xff]
                %220 = vst [vmem:[%s196 + $0x58] sm:$0xff] %v219
                %v221 = vld [vmem:[%s195 + $0x180] sm:$0xff]
                %222 = vst [vmem:[%s196 + $0x60] sm:$0xff] %v221
                %v223 = vld [vmem:[%s195 + $0x1a0] sm:$0xff]
                %224 = vst [vmem:[%s196 + $0x68] sm:$0xff] %v223
                %v225 = vld [vmem:[%s195 + $0x1c0] sm:$0xff]
                %226 = vst [vmem:[%s196 + $0x70] sm:$0xff] %v225
                %v227 = vld [vmem:[%s195 + $0x1e0] sm:$0xff]
                %228 = vst [vmem:[%s196 + $0x78] sm:$0xff] %v227
              $region41: #{vae_forward.17} parent=35 // loop_footer
                %s194 = sadd.s32 1, %s190
              $region42: #{vae_forward.17} parent=35 // loop_footer_branch
                %189 = sbr.rel target = $region38
              $region43: #{vae_forward.17} parent=35 // loop_exit
                _
            $region36: #{vae_forward.17} parent=27 // pred_fallthru
              _
          $region28: #{vae_forward.17} parent=23 // pred_fallthru
            _
          %273 = vnop
        $region24: #{vae_forward.17} parent=19 // pred_fallthru
          _
        // Predicated region
        $region59: #{vae_forward.17} parent=19 // pred_check
          %p274 = pneg %p104
        $region60: #{vae_forward.17} parent=19 // pred_check_branch
          %276 = sbr.rel (%p274) target = $region62
        $region61: #{vae_forward.17} parent=19 // pred_region
          %s277 = smul.u32 2, %s17
          %p278 = scmp.lt.s32.totalorder %s277, 7
          %s279 = scalar_select %p278, %s277, 7
          %s280 = scalar_lea.vmem %s2, %s279
          %s281 = smul.u32 2, %s17
        $region62: #{vae_forward.17} parent=19 // pred_fallthru
          _
      $region20: #{vae_forward.17} parent=5 // pred_fallthru
        _
      %p282 = scmp.le.s32.totalorder 1, %s9
      %p283 = scmp.lt.s32.totalorder %s9, 5
      %p284 = pnand %p282, %p283
      %p285 = pneg %p284
      // Predicated region
      $region63: #{vae_forward.17} parent=5 // pred_check
        _
      $region64: #{vae_forward.17} parent=5 // pred_check_branch
        %287 = sbr.rel (%p284) target = $region66
      $region65: #{vae_forward.17} parent=5 // pred_region
        %s288 = ssub.s32 %s9, 1
        %s289 = sand.u32 %s71, 1
        %s290 = sand.u32 %s71, 1
        %s291 = smul.addr %s290, 128
        %s292 = scalar_lea.vmem [#allocation3], %s291
        // Predicated region
        $region67: #{vae_forward.17} parent=65 // pred_check
          %p293 = pneg %p84
        $region68: #{vae_forward.17} parent=65 // pred_check_branch
          %295 = sbr.rel (%p293) target = $region70
        $region69: #{vae_forward.17} parent=65 // pred_region
          _
        $region70: #{vae_forward.17} parent=65 // pred_fallthru
          _
        %s296 = smul.u32 4, %s19
        %p297 = scmp.lt.s32.totalorder %s296, 3
        %s298 = scalar_select %p297, %s296, 3
        %p299 = scmp.lt.s32.totalorder %s21, 0
        %s300 = scalar_select %p299, %s21, 0
        %s301 = sadd.s32 %s300, %s298
        %s302 = smul.addr %s301, 4
        %s303 = scalar_lea.vmem %s0, %s302
        %p304 = pneg %p56
        %p305 = pneg %p53
        %s306 = sand.u32 %s71, 1
        %s307 = sand.u32 %s71, 1
        %s308 = smul.addr %s307, 128
        %s309 = scalar_lea.vmem [#allocation3], %s308
        %p310 = pneg %p84
        %p311 = pneg %p81
        %s312 = smul.u32 2, %s20
        %p313 = scmp.lt.s32.totalorder %s312, 7
        %s314 = scalar_select %p313, %s312, 7
        %s315 = scalar_lea.vmem %s2, %s314
        %p316 = pneg %p110
        %p317 = pneg %p107
        %p318 = pneg %p138
        %p319 = pneg %p135
        %s320 = sand.u32 %s125, 1
        %s321 = sand.u32 %s125, 1
        %s322 = smul.addr %s321, 64
        %s323 = scalar_lea.vmem [#allocation4], %s322
        %s324 = smul.u32 4, %s19
        %p325 = scmp.lt.s32.totalorder %s324, 3
        %s326 = scalar_select %p325, %s324, 3
        %p327 = scmp.lt.s32.totalorder %s21, 0
        %s328 = scalar_select %p327, %s21, 0
        %s329 = sadd.s32 %s328, %s326
        %s330 = smul.addr %s329, 4
        %s331 = scalar_lea.vmem %s0, %s330
        %s332 = smul.u32 4, %s19
        %s333 = smul.u32 16, %s21
        %s334 = smul.u32 2, %s20
        %s335 = smul.u32 2, %s20
        %p336 = scmp.lt.s32.totalorder %s335, 7
        %s337 = scalar_select %p336, %s335, 7
        %s338 = scalar_lea.vmem %s2, %s337
        %s339 = smul.u32 2, %s20
        %s340 = smul.u32 4, %s19
        %s341 = smul.u32 2, %s20
        %p343 = scmp.eq.s32.totalorder %s21, 0
        // Predicated region
        $region71: #{vae_forward.17} parent=65 // pred_check
          %p344 = pneg %p343
        $region72: #{vae_forward.17} parent=65 // pred_check_branch
          %346 = sbr.rel (%p344) target = $region74
        $region73: #{vae_forward.17} parent=65 // pred_region
          %347 = vst [vmem:[#allocation2] sm:$0xff] 0.0
          %348 = vst [vmem:[#allocation2 + $0x8] sm:$0xff] 0.0
          %349 = vst [vmem:[#allocation2 + $0x10] sm:$0xff] 0.0
          %350 = vst [vmem:[#allocation2 + $0x18] sm:$0xff] 0.0
          %351 = vst [vmem:[#allocation2 + $0x20] sm:$0xff] 0.0
          %352 = vst [vmem:[#allocation2 + $0x28] sm:$0xff] 0.0
          %353 = vst [vmem:[#allocation2 + $0x30] sm:$0xff] 0.0
          %354 = vst [vmem:[#allocation2 + $0x38] sm:$0xff] 0.0
        $region74: #{vae_forward.17} parent=65 // pred_fallthru
          _
        %v355 = vld [vmem:[#allocation2] sm:$0xff]
        %v356 = vld [vmem:[#allocation2 + $0x8] sm:$0xff]
        %v357 = vld [vmem:[#allocation2 + $0x10] sm:$0xff]
        %v358 = vld [vmem:[#allocation2 + $0x18] sm:$0xff]
        %v359 = vld [vmem:[#allocation2 + $0x20] sm:$0xff]
        %v360 = vld [vmem:[#allocation2 + $0x28] sm:$0xff]
        %v361 = vld [vmem:[#allocation2 + $0x30] sm:$0xff]
        %v362 = vld [vmem:[#allocation2 + $0x38] sm:$0xff]
        %v363 = vld [vmem:[%s331] sm:$0xf]
        %v364 = vld [vmem:[%s331 + $0x4] sm:$0xf]
        %v365 = vld [vmem:[%s331 + $0x8] sm:$0xf]
        %v366 = vld [vmem:[%s331 + $0xc] sm:$0xf]
        %v367 = vld [vmem:[%s292] sm:$0xff]
        %v368 = vld [vmem:[%s292 + $0x8] sm:$0xff]
        %v369 = vld [vmem:[%s292 + $0x10] sm:$0xff]
        %v370 = vld [vmem:[%s292 + $0x18] sm:$0xff]
        %v371 = vld [vmem:[%s292 + $0x20] sm:$0xff]
        %v372 = vld [vmem:[%s292 + $0x28] sm:$0xff]
        %v373 = vld [vmem:[%s292 + $0x30] sm:$0xff]
        %v374 = vld [vmem:[%s292 + $0x38] sm:$0xff]
        %v375 = vld [vmem:[%s292 + $0x40] sm:$0xff]
        %v376 = vld [vmem:[%s292 + $0x48] sm:$0xff]
        %v377 = vld [vmem:[%s292 + $0x50] sm:$0xff]
        %v378 = vld [vmem:[%s292 + $0x58] sm:$0xff]
        %v379 = vld [vmem:[%s292 + $0x60] sm:$0xff]
        %v380 = vld [vmem:[%s292 + $0x68] sm:$0xff]
        %v381 = vld [vmem:[%s292 + $0x70] sm:$0xff]
        %v382 = vld [vmem:[%s292 + $0x78] sm:$0xff]
        %v387 = vunpack.c.l.b16 %v363
        %v388 = vunpack.c.l.b16 %v364
        %v389 = vunpack.c.l.b16 %v365
        %v390 = vunpack.c.l.b16 %v366
        %v391 = vpack.c.b16 %v388, %v387
        %v392 = vpack.c.b16 %v390, %v389
        %v411 = vunpack.c.l.b16 %v367
        %v412 = vunpack.c.h.b16 %v367
        %v413 = vunpack.c.l.b16 %v368
        %v414 = vunpack.c.h.b16 %v368
        %v415 = vunpack.c.l.b16 %v369
        %v416 = vunpack.c.h.b16 %v369
        %v417 = vunpack.c.l.b16 %v370
        %v418 = vunpack.c.h.b16 %v370
        %v419 = vunpack.c.l.b16 %v371
        %v420 = vunpack.c.h.b16 %v371
        %v421 = vunpack.c.l.b16 %v372
        %v422 = vunpack.c.h.b16 %v372
        %v423 = vunpack.c.l.b16 %v373
        %v424 = vunpack.c.h.b16 %v373
        %v425 = vunpack.c.l.b16 %v374
        %v426 = vunpack.c.h.b16 %v374
        %v427 = vunpack.c.l.b16 %v375
        %v428 = vunpack.c.h.b16 %v375
        %v429 = vunpack.c.l.b16 %v376
        %v430 = vunpack.c.h.b16 %v376
        %v431 = vunpack.c.l.b16 %v377
        %v432 = vunpack.c.h.b16 %v377
        %v433 = vunpack.c.l.b16 %v378
        %v434 = vunpack.c.h.b16 %v378
        %v435 = vunpack.c.l.b16 %v379
        %v436 = vunpack.c.h.b16 %v379
        %v437 = vunpack.c.l.b16 %v380
        %v438 = vunpack.c.h.b16 %v380
        %v439 = vunpack.c.l.b16 %v381
        %v440 = vunpack.c.h.b16 %v381
        %v441 = vunpack.c.l.b16 %v382
        %v442 = vunpack.c.h.b16 %v382
        %v443 = vpack.c.b16 %v413, %v411
        %v444 = vpack.c.b16 %v414, %v412
        %v445 = vpack.c.b16 %v417, %v415
        %v446 = vpack.c.b16 %v418, %v416
        %v447 = vpack.c.b16 %v421, %v419
        %v448 = vpack.c.b16 %v422, %v420
        %v449 = vpack.c.b16 %v425, %v423
        %v450 = vpack.c.b16 %v426, %v424
        %v451 = vpack.c.b16 %v429, %v427
        %v452 = vpack.c.b16 %v430, %v428
        %v453 = vpack.c.b16 %v433, %v431
        %v454 = vpack.c.b16 %v434, %v432
        %v455 = vpack.c.b16 %v437, %v435
        %v456 = vpack.c.b16 %v438, %v436
        %v457 = vpack.c.b16 %v441, %v439
        %v458 = vpack.c.b16 %v442, %v440
        %475 = vmatprep.subr.bf16.mxu0 %v444
        %476 = vmatpush1.bf16.msra.mxu0 %v443
        %477 = vmatprep.subr.bf16.mxu0 %v446
        %478 = vmatpush1.bf16.msra.mxu0 %v445
        %479 = vmatprep.subr.bf16.mxu0 %v448
        %480 = vmatpush1.bf16.msra.mxu0 %v447
        %481 = vmatprep.subr.bf16.mxu0 %v450
        %482 = vmatpush1.bf16.msra.mxu0 %v449
        %483 = vmatprep.subr.bf16.mxu0 %v452
        %484 = vmatpush1.bf16.msra.mxu0 %v451
        %485 = vmatprep.subr.bf16.mxu0 %v454
        %486 = vmatpush1.bf16.msra.mxu0 %v453
        %487 = vmatprep.subr.bf16.mxu0 %v456
        %488 = vmatpush1.bf16.msra.mxu0 %v455
        %489 = vmatprep.subr.bf16.mxu0 %v458
        %490 = vmatpush1.bf16.msra.mxu0 %v457
        %491 = vmatprep.subr.bf16.mxu0 0
        %492 = vmatpush1.bf16.msra.mxu0 0
        %493 = vmatprep.subr.bf16.mxu0 0
        %494 = vmatpush1.bf16.msra.mxu0 0
        %495 = vmatprep.subr.bf16.mxu0 0
        %496 = vmatpush1.bf16.msra.mxu0 0
        %497 = vmatprep.subr.bf16.mxu0 0
        %498 = vmatpush1.bf16.msra.mxu0 0
        %499 = vmatprep.subr.bf16.mxu0 0
        %500 = vmatpush1.bf16.msra.mxu0 0
        %501 = vmatprep.subr.bf16.mxu0 0
        %502 = vmatpush1.bf16.msra.mxu0 0
        %503 = vmatprep.subr.bf16.mxu0 0
        %504 = vmatpush1.bf16.msra.mxu0 0
        %505 = vmatprep.subr.bf16.mxu0 0
        %506 = vmatpush1.bf16.msra.mxu0 0
        %507 = vmatprep.mubr.bf16.mxu0 0
        %508 = vmatmul.mubr.bf16.gmra.mrb[0].mxu0 %v391
        %v509 = vpop.f32.mrb[0].mxu0
        %v510 = vadd.f32 0.0, %v509
        %v511 = vpop.f32.mrb[0].mxu0
        %v512 = vadd.f32 0.0, %v511
        %v513 = vpop.f32.mrb[0].mxu0
        %v514 = vadd.f32 0.0, %v513
        %v515 = vpop.f32.mrb[0].mxu0
        %v516 = vadd.f32 0.0, %v515
        %517 = vmatprep.mubr.bf16.mxu0 0
        %518 = vmatmul.mubr.bf16.gmra.mrb[0].mxu0 %v392
        %v519 = vpop.f32.mrb[0].mxu0
        %v520 = vadd.f32 0.0, %v519
        %v521 = vpop.f32.mrb[0].mxu0
        %v522 = vadd.f32 0.0, %v521
        %v523 = vpop.f32.mrb[0].mxu0
        %v524 = vadd.f32 0.0, %v523
        %v525 = vpop.f32.mrb[0].mxu0
        %v526 = vadd.f32 0.0, %v525
        %527 = vdwg.mxu0
        %v528 = vadd.f32 %v355, %v510
        %v529 = vadd.f32 %v356, %v512
        %v530 = vadd.f32 %v357, %v514
        %v531 = vadd.f32 %v358, %v516
        %v532 = vadd.f32 %v359, %v520
        %v533 = vadd.f32 %v360, %v522
        %v534 = vadd.f32 %v361, %v524
        %v535 = vadd.f32 %v362, %v526
        %536 = vst [vmem:[#allocation2] sm:$0xff] %v528
        %537 = vst [vmem:[#allocation2 + $0x8] sm:$0xff] %v529
        %538 = vst [vmem:[#allocation2 + $0x10] sm:$0xff] %v530
        %539 = vst [vmem:[#allocation2 + $0x18] sm:$0xff] %v531
        %540 = vst [vmem:[#allocation2 + $0x20] sm:$0xff] %v532
        %541 = vst [vmem:[#allocation2 + $0x28] sm:$0xff] %v533
        %542 = vst [vmem:[#allocation2 + $0x30] sm:$0xff] %v534
        %543 = vst [vmem:[#allocation2 + $0x38] sm:$0xff] %v535
        // Predicated region
        $region75: #{vae_forward.17} parent=65 // pred_check
          %p544 = pneg %p343
        $region76: #{vae_forward.17} parent=65 // pred_check_branch
          %546 = sbr.rel (%p544) target = $region78
        $region77: #{vae_forward.17} parent=65 // pred_region
          %v547 = vld [vmem:[#allocation2] sm:$0xff]
          %v548 = vld [vmem:[#allocation2 + $0x8] sm:$0xff]
          %v549 = vld [vmem:[#allocation2 + $0x10] sm:$0xff]
          %v550 = vld [vmem:[#allocation2 + $0x18] sm:$0xff]
          %v551 = vld [vmem:[#allocation2 + $0x20] sm:$0xff]
          %v552 = vld [vmem:[#allocation2 + $0x28] sm:$0xff]
          %v553 = vld [vmem:[#allocation2 + $0x30] sm:$0xff]
          %v554 = vld [vmem:[#allocation2 + $0x38] sm:$0xff]
          %v555 = vld [vmem:[%s338] sm:$0x3]
          %v557 = vlaneseq
          %v558 = vshrl.u32 %v557, 7
          %v559 = vsub.s32 0, %v558
          %v560 = vrot.slane %v555, %v559
          %v561 = vlaneseq
          %v562 = vshrl.u32 %v561, 7
          %v563 = vsub.s32 1, %v562
          %v564 = vrot.slane %v555, %v563
          %v567 = vadd.f32 %v547, %v560
          %v568 = vadd.f32 %v548, %v564
          %v569 = vadd.f32 %v549, %v560
          %v570 = vadd.f32 %v550, %v564
          %v571 = vadd.f32 %v551, %v560
          %v572 = vadd.f32 %v552, %v564
          %v573 = vadd.f32 %v553, %v560
          %v574 = vadd.f32 %v554, %v564
          %575 = vst [vmem:[%s323] sm:$0xff] %v567
          %576 = vst [vmem:[%s323 + $0x8] sm:$0xff] %v568
          %577 = vst [vmem:[%s323 + $0x10] sm:$0xff] %v569
          %578 = vst [vmem:[%s323 + $0x18] sm:$0xff] %v570
          %579 = vst [vmem:[%s323 + $0x20] sm:$0xff] %v571
          %580 = vst [vmem:[%s323 + $0x28] sm:$0xff] %v572
          %581 = vst [vmem:[%s323 + $0x30] sm:$0xff] %v573
          %582 = vst [vmem:[%s323 + $0x38] sm:$0xff] %v574
        $region78: #{vae_forward.17} parent=65 // pred_fallthru
          _
        %s583 = sand.u32 %s125, 1
        %s584 = sand.u32 %s125, 1
        %s585 = smul.addr %s584, 64
        %s586 = scalar_lea.vmem [#allocation4], %s585
        // Predicated region
        $region79: #{vae_forward.17} parent=65 // pred_check
          %p587 = pneg %p135
        $region80: #{vae_forward.17} parent=65 // pred_check_branch
          %589 = sbr.rel (%p587) target = $region82
        $region81: #{vae_forward.17} parent=65 // pred_region
          %s590 = smul.u32 4, %s19
          %s591 = smul.u32 2, %s20
          %s592 = smul.addr %s590, 8
          %s593 = sadd.s32 %s591, %s592
          %s594 = smul.addr %s593, 8
          %s595 = scalar_lea.vmem %s3, %s594
          // Predicated region
          $region83: #{vae_forward.17} parent=81 // pred_check
            _
          $region84: #{vae_forward.17} parent=81 // pred_check_branch
            %597 = sbr.rel (0) target = $region86
          $region85: #{vae_forward.17} parent=81 // pred_region
            // Predicated region
            $region87: #{vae_forward.17} parent=85 // pred_check
              _
            $region88: #{vae_forward.17} parent=85 // pred_check_branch
              %599 = sbr.rel (0) target = $region90
            $region89: #{vae_forward.17} parent=85 // pred_region
              loop: start=0, step=1, limit=1
              $region91: #{vae_forward.17} parent=89 // loop_pre_header
                _
              $region92: #{vae_forward.17} parent=89 // loop_header
                %s601 = sphi 0, %s605
                %p602 = scmp.ge.s32.totalorder %s601, 1
                %s606 = sphi %s586, %s586
                %s607 = sphi %s595, %s595
              $region93: #{vae_forward.17} parent=89 // loop_header_branch
                %604 = sbr.rel (%p602) target = $region97
              $region94: #{vae_forward.17} parent=89 // loop_body
                %v608 = vld [vmem:[%s606] sm:$0xff]
                %609 = vst [vmem:[%s607] sm:$0xff] %v608
                %v610 = vld [vmem:[%s606 + $0x8] sm:$0xff]
                %611 = vst [vmem:[%s607 + $0x8] sm:$0xff] %v610
                %v612 = vld [vmem:[%s606 + $0x10] sm:$0xff]
                %613 = vst [vmem:[%s607 + $0x40] sm:$0xff] %v612
                %v614 = vld [vmem:[%s606 + $0x18] sm:$0xff]
                %615 = vst [vmem:[%s607 + $0x48] sm:$0xff] %v614
                %v616 = vld [vmem:[%s606 + $0x20] sm:$0xff]
                %617 = vst [vmem:[%s607 + $0x80] sm:$0xff] %v616
                %v618 = vld [vmem:[%s606 + $0x28] sm:$0xff]
                %619 = vst [vmem:[%s607 + $0x88] sm:$0xff] %v618
                %v620 = vld [vmem:[%s606 + $0x30] sm:$0xff]
                %621 = vst [vmem:[%s607 + $0xc0] sm:$0xff] %v620
                %v622 = vld [vmem:[%s606 + $0x38] sm:$0xff]
                %623 = vst [vmem:[%s607 + $0xc8] sm:$0xff] %v622
              $region95: #{vae_forward.17} parent=89 // loop_footer
                %s605 = sadd.s32 1, %s601
              $region96: #{vae_forward.17} parent=89 // loop_footer_branch
                %600 = sbr.rel target = $region92
              $region97: #{vae_forward.17} parent=89 // loop_exit
                _
            $region90: #{vae_forward.17} parent=85 // pred_fallthru
              _
            // Predicated region
            $region98: #{vae_forward.17} parent=85 // pred_check
              _
            $region99: #{vae_forward.17} parent=85 // pred_check_branch
              %625 = sbr.rel target = $region101
            $region100: #{vae_forward.17} parent=85 // pred_region
              _
            $region101: #{vae_forward.17} parent=85 // pred_fallthru
              _
          $region86: #{vae_forward.17} parent=81 // pred_fallthru
            _
          %626 = vnop
        $region82: #{vae_forward.17} parent=65 // pred_fallthru
          _
      $region66: #{vae_forward.17} parent=5 // pred_fallthru
        _
      %p627 = scmp.le.s32.totalorder 2, %s9
      // Predicated region
      $region102: #{vae_forward.17} parent=5 // pred_check
        %p628 = pneg %p627
      $region103: #{vae_forward.17} parent=5 // pred_check_branch
        %630 = sbr.rel (%p628) target = $region105
      $region104: #{vae_forward.17} parent=5 // pred_region
        %s631 = ssub.s32 %s9, 2
        // Predicated region
        $region106: #{vae_forward.17} parent=104 // pred_check
          %p632 = pneg %p141
        $region107: #{vae_forward.17} parent=104 // pred_check_branch
          %634 = sbr.rel (%p632) target = $region109
        $region108: #{vae_forward.17} parent=104 // pred_region
          %s635 = sand.u32 %s126, 1
          %s636 = sand.u32 %s126, 1
          %s637 = smul.addr %s636, 64
          %s638 = scalar_lea.vmem [#allocation4], %s637
        $region109: #{vae_forward.17} parent=104 // pred_fallthru
          _
      $region105: #{vae_forward.17} parent=5 // pred_fallthru
        _
    $region6: #{vae_forward.17} parent=1 // loop_footer
      %s13 = sadd.s32 1, %s9
    $region7: #{vae_forward.17} parent=1 // loop_footer_branch
      %8 = sbr.rel target = $region3
    $region8: #{vae_forward.17} parent=1 // loop_exit
      _

// kernel: vae_forward.18
$region0: #{vae_forward.18}
  #allocation0 [shape = 'u32[]', space=smem, size = 0x4, offset = 0x4, fixed_abs, tag = 'smem constant byte address 0x4 - core index']
  #allocation1 [shape = 'u32[144,128]{1,0:T(1,128)}', space=vmem, size = 0x12000, scoped, tag = 'internal scratch']
  #allocation2 [shape = 'f32[128,256]{1,0:T(8,128)}', space=vmem, size = 0x20000, scoped, tag = 'scratch operand']
  %s0 = inlined_call_operand.vmem [shape: bf16[128,64], index: 0, kind: input, shape index: {}]
  %s1 = inlined_call_operand.vmem [shape: bf16[64,512], index: 1, kind: input, shape index: {}]
  %s2 = inlined_call_operand.vmem [shape: f32[1,512], index: 2, kind: input, shape index: {}]
  %s3 = inlined_call_operand.vmem [shape: f32[128,512], index: 3, kind: output, shape index: {}]
  %s4 = sld [smem:[#allocation0]]
  $region110: #{vae_forward.18} parent=0
    _
  %s6 = ssub.s32 1, %s4
  %s7 = scalar_select 0, %s6, %s4
  $region1: #{vae_forward.18} parent=0
    #allocation3 [shape = 'u8[65536]{0}', space=vmem, size = 0x10000, scoped, tag = 'input window, operand 1']
    #allocation4 [shape = 'u8[262144]{0}', space=vmem, size = 0x40000, scoped, tag = 'output window, operand 0']
    loop: start=0, step=1, limit=4
    $region2: #{vae_forward.18} parent=1 // loop_pre_header
      _
    $region3: #{vae_forward.18} parent=1 // loop_header
      %s9 = sphi 0, %s13
      %p10 = scmp.ge.s32.totalorder %s9, 4
      %s16 = sphi 0, %s35
      %s17 = sphi 0, %s31
      %s18 = sphi 0, %s27
      %s19 = sphi 0, %s16
      %s20 = sphi 0, %s17
      %s21 = sphi 0, %s18
      %s22 = sphi 0, %s19
      %s23 = sphi 0, %s20
      %s24 = sphi 0, %s21
      %s40 = sphi 0, %s42
      %s43 = sphi 0, %s40
      %s44 = sphi 0, %s43
      %s60 = sphi 0, %s44
      %s68 = sphi 0, %s70
      %s71 = sphi 0, %s68
      %s72 = sphi 0, %s71
      %s88 = sphi 0, %s72
      %s94 = sphi 0, %s96
      %s97 = sphi 0, %s94
      %s98 = sphi 0, %s97
      %s114 = sphi 0, %s98
      %s122 = sphi 0, %s124
      %s125 = sphi 0, %s122
      %s126 = sphi 0, %s125
      %s142 = sphi 0, %s126
    $region4: #{vae_forward.18} parent=1 // loop_header_branch
      %12 = sbr.rel (%p10) target = $region8
    $region5: #{vae_forward.18} parent=1 // loop_body
      %s14 = ssub.s32 %s9, 1
      %s15 = ssub.s32 %s9, 2
      %s25 = sadd.s32 1, %s18
      %p26 = scmp.ge.s32.totalorder %s25, 1
      %s27 = scalar_select %p26, 0, %s25
      %s28 = sadd.s32 1, %s17
      %s29 = scalar_select %p26, %s28, %s17
      %p30 = scmp.ge.s32.totalorder %s29, 2
      %s31 = scalar_select %p30, 0, %s29
      %s32 = sadd.s32 1, %s16
      %s33 = scalar_select %p30, %s32, %s16
      %p34 = scmp.ge.s32.totalorder %s33, 1
      %s35 = scalar_select %p34, 0, %s33
      %s36 = ssub.s32 %s16, %s35
      %s37 = ssub.s32 %s18, %s27
      %s38 = sor.u32 %s36, %s37
      %p39 = scmp.eq.s32.totalorder %s38, 0
      %s41 = sadd.s32 %s40, 1
      %s42 = scalar_select %p39, %s40, %s41
      %p45 = pneg %p39
      %p46 = scmp.eq.s32.totalorder %s9, 1
      %p47 = por %p45, %p46
      %p48 = scmp.ne.s32.totalorder %s40, %s43
      %p49 = scmp.eq.s32.totalorder %s9, 0
      %p50 = por %p48, %p49
      %p51 = scmp.ne.s32.totalorder %s40, %s43
      %p52 = scmp.eq.s32.totalorder %s14, 1
      %p53 = por %p51, %p52
      %p54 = scmp.ne.s32.totalorder %s43, %s44
      %p55 = scmp.eq.s32.totalorder %s14, 0
      %p56 = por %p54, %p55
      %p57 = scmp.ne.s32.totalorder %s43, %s44
      %p58 = scmp.eq.s32.totalorder %s15, 1
      %p59 = por %p57, %p58
      %p61 = scmp.ne.s32.totalorder %s44, %s60
      %p62 = scmp.eq.s32.totalorder %s15, 0
      %p63 = por %p61, %p62
      %s64 = ssub.s32 %s18, %s27
      %s65 = ssub.s32 %s17, %s31
      %s66 = sor.u32 %s64, %s65
      %p67 = scmp.eq.s32.totalorder %s66, 0
      %s69 = sadd.s32 %s68, 1
      %s70 = scalar_select %p67, %s68, %s69
      %p73 = pneg %p67
      %p74 = scmp.eq.s32.totalorder %s9, 1
      %p75 = por %p73, %p74
      %p76 = scmp.ne.s32.totalorder %s68, %s71
      %p77 = scmp.eq.s32.totalorder %s9, 0
      %p78 = por %p76, %p77
      %p79 = scmp.ne.s32.totalorder %s68, %s71
      %p80 = scmp.eq.s32.totalorder %s14, 1
      %p81 = por %p79, %p80
      %p82 = scmp.ne.s32.totalorder %s71, %s72
      %p83 = scmp.eq.s32.totalorder %s14, 0
      %p84 = por %p82, %p83
      %p85 = scmp.ne.s32.totalorder %s71, %s72
      %p86 = scmp.eq.s32.totalorder %s15, 1
      %p87 = por %p85, %p86
      %p89 = scmp.ne.s32.totalorder %s72, %s88
      %p90 = scmp.eq.s32.totalorder %s15, 0
      %p91 = por %p89, %p90
      %s92 = ssub.s32 %s17, %s31
      %p93 = scmp.eq.s32.totalorder %s92, 0
      %s95 = sadd.s32 %s94, 1
      %s96 = scalar_select %p93, %s94, %s95
      %p99 = pneg %p93
      %p100 = scmp.eq.s32.totalorder %s9, 1
      %p101 = por %p99, %p100
      %p102 = scmp.ne.s32.totalorder %s94, %s97
      %p103 = scmp.eq.s32.totalorder %s9, 0
      %p104 = por %p102, %p103
      %p105 = scmp.ne.s32.totalorder %s94, %s97
      %p106 = scmp.eq.s32.totalorder %s14, 1
      %p107 = por %p105, %p106
      %p108 = scmp.ne.s32.totalorder %s97, %s98
      %p109 = scmp.eq.s32.totalorder %s14, 0
      %p110 = por %p108, %p109
      %p111 = scmp.ne.s32.totalorder %s97, %s98
      %p112 = scmp.eq.s32.totalorder %s15, 1
      %p113 = por %p111, %p112
      %p115 = scmp.ne.s32.totalorder %s98, %s114
      %p116 = scmp.eq.s32.totalorder %s15, 0
      %p117 = por %p115, %p116
      %s118 = ssub.s32 %s16, %s35
      %s119 = ssub.s32 %s17, %s31
      %s120 = sor.u32 %s118, %s119
      %p121 = scmp.eq.s32.totalorder %s120, 0
      %s123 = sadd.s32 %s122, 1
      %s124 = scalar_select %p121, %s122, %s123
      %p127 = pneg %p121
      %p128 = scmp.eq.s32.totalorder %s9, 1
      %p129 = por %p127, %p128
      %p130 = scmp.ne.s32.totalorder %s122, %s125
      %p131 = scmp.eq.s32.totalorder %s9, 0
      %p132 = por %p130, %p131
      %p133 = scmp.ne.s32.totalorder %s122, %s125
      %p134 = scmp.eq.s32.totalorder %s14, 1
      %p135 = por %p133, %p134
      %p136 = scmp.ne.s32.totalorder %s125, %s126
      %p137 = scmp.eq.s32.totalorder %s14, 0
      %p138 = por %p136, %p137
      %p139 = scmp.ne.s32.totalorder %s125, %s126
      %p140 = scmp.eq.s32.totalorder %s15, 1
      %p141 = por %p139, %p140
      %p143 = scmp.ne.s32.totalorder %s126, %s142
      %p144 = scmp.eq.s32.totalorder %s15, 0
      %p145 = por %p143, %p144
      %p146 = scmp.le.s32.totalorder 1, %s9
      %p147 = scmp.lt.s32.totalorder %s9, 3
      %p148 = pnand %p146, %p147
      %p149 = pneg %p148
      // Predicated region
      $region9: #{vae_forward.18} parent=5 // pred_check
        _
      $region10: #{vae_forward.18} parent=5 // pred_check_branch
        %151 = sbr.rel (%p148) target = $region12
      $region11: #{vae_forward.18} parent=5 // pred_region
        %s152 = ssub.s32 %s9, 1
        // Predicated region
        $region13: #{vae_forward.18} parent=11 // pred_check
          %p153 = pneg %p56
        $region14: #{vae_forward.18} parent=11 // pred_check_branch
          %155 = sbr.rel (%p153) target = $region16
        $region15: #{vae_forward.18} parent=11 // pred_region
          %s156 = smul.u32 16, %s19
          %p157 = scmp.lt.s32.totalorder %s156, 15
          %s158 = scalar_select %p157, %s156, 15
          %p159 = scmp.lt.s32.totalorder %s21, 0
          %s160 = scalar_select %p159, %s21, 0
          %s161 = sadd.s32 %s160, %s158
          %s162 = smul.addr %s161, 4
          %s163 = scalar_lea.vmem %s0, %s162
          %s164 = smul.u32 16, %s19
        $region16: #{vae_forward.18} parent=11 // pred_fallthru
          _
      $region12: #{vae_forward.18} parent=5 // pred_fallthru
        _
      %p165 = scmp.lt.s32.totalorder %s9, 2
      // Predicated region
      $region17: #{vae_forward.18} parent=5 // pred_check
        %p166 = pneg %p165
      $region18: #{vae_forward.18} parent=5 // pred_check_branch
        %168 = sbr.rel (%p166) target = $region20
      $region19: #{vae_forward.18} parent=5 // pred_region
        // Predicated region
        $region21: #{vae_forward.18} parent=19 // pred_check
          %p169 = pneg %p78
        $region22: #{vae_forward.18} parent=19 // pred_check_branch
          %171 = sbr.rel (%p169) target = $region24
        $region23: #{vae_forward.18} parent=19 // pred_region
          %s172 = sand.u32 %s68, 1
          %s173 = sand.u32 %s68, 1
          %s174 = smul.addr %s173, 64
          %s175 = scalar_lea.vmem [#allocation3], %s174
          %s176 = smul.u32 8, %s18
          %s177 = smul.u32 2, %s17
          %s178 = smul.addr %s176, 4
          %s179 = sadd.s32 %s177, %s178
          %s180 = smul.addr %s179, 4
          %s181 = scalar_lea.vmem %s1, %s180
          // Predicated region
          $region25: #{vae_forward.18} parent=23 // pred_check
            _
          $region26: #{vae_forward.18} parent=23 // pred_check_branch
            %183 = sbr.rel (0) target = $region28
          $region27: #{vae_forward.18} parent=23 // pred_region
            // Predicated region
            $region29: #{vae_forward.18} parent=27 // pred_check
              _
            $region30: #{vae_forward.18} parent=27 // pred_check_branch
              %185 = sbr.rel (0) target = $region32
            $region31: #{vae_forward.18} parent=27 // pred_region
              // Predicated region
              $region44: #{vae_forward.18} parent=31 // pred_check
                _
              $region45: #{vae_forward.18} parent=31 // pred_check_branch
                %214 = sbr.rel (0) target = $region47
              $region46: #{vae_forward.18} parent=31 // pred_region
                loop: start=0, step=1, limit=1
                $region48: #{vae_forward.18} parent=46 // loop_pre_header
                  _
                $region49: #{vae_forward.18} parent=46 // loop_header
                  %s216 = sphi 0, %s220
                  %p217 = scmp.ge.s32.totalorder %s216, 1
                  %s221 = sphi %s181, %s181
                  %s222 = sphi %s175, %s175
                $region50: #{vae_forward.18} parent=46 // loop_header_branch
                  %219 = sbr.rel (%p217) target = $region54
                $region51: #{vae_forward.18} parent=46 // loop_body
                  %v223 = vld [vmem:[%s221] sm:$0xff]
                  %224 = vst [vmem:[%s222] sm:$0xff] %v223
                  %v225 = vld [vmem:[%s221 + $0x10] sm:$0xff]
                  %226 = vst [vmem:[%s222 + $0x8] sm:$0xff] %v225
                  %v227 = vld [vmem:[%s221 + $0x20] sm:$0xff]
                  %228 = vst [vmem:[%s222 + $0x10] sm:$0xff] %v227
                  %v229 = vld [vmem:[%s221 + $0x30] sm:$0xff]
                  %230 = vst [vmem:[%s222 + $0x18] sm:$0xff] %v229
                  %v231 = vld [vmem:[%s221 + $0x40] sm:$0xff]
                  %232 = vst [vmem:[%s222 + $0x20] sm:$0xff] %v231
                  %v233 = vld [vmem:[%s221 + $0x50] sm:$0xff]
                  %234 = vst [vmem:[%s222 + $0x28] sm:$0xff] %v233
                  %v235 = vld [vmem:[%s221 + $0x60] sm:$0xff]
                  %236 = vst [vmem:[%s222 + $0x30] sm:$0xff] %v235
                  %v237 = vld [vmem:[%s221 + $0x70] sm:$0xff]
                  %238 = vst [vmem:[%s222 + $0x38] sm:$0xff] %v237
                $region52: #{vae_forward.18} parent=46 // loop_footer
                  %s220 = sadd.s32 1, %s216
                $region53: #{vae_forward.18} parent=46 // loop_footer_branch
                  %215 = sbr.rel target = $region49
                $region54: #{vae_forward.18} parent=46 // loop_exit
                  _
              $region47: #{vae_forward.18} parent=31 // pred_fallthru
                _
              // Predicated region
              $region55: #{vae_forward.18} parent=31 // pred_check
                _
              $region56: #{vae_forward.18} parent=31 // pred_check_branch
                %240 = sbr.rel target = $region58
              $region57: #{vae_forward.18} parent=31 // pred_region
                _
              $region58: #{vae_forward.18} parent=31 // pred_fallthru
                _
            $region32: #{vae_forward.18} parent=27 // pred_fallthru
              _
            // Predicated region
            $region33: #{vae_forward.18} parent=27 // pred_check
              _
            $region34: #{vae_forward.18} parent=27 // pred_check_branch
              %187 = sbr.rel target = $region36
            $region35: #{vae_forward.18} parent=27 // pred_region
              loop: start=0, step=1, limit=1
              $region37: #{vae_forward.18} parent=35 // loop_pre_header
                _
              $region38: #{vae_forward.18} parent=35 // loop_header
                %s190 = sphi 0, %s194
                %p191 = scmp.ge.s32.totalorder %s190, 1
                %s195 = sphi %s181, %s181
                %s196 = sphi %s175, %s175
              $region39: #{vae_forward.18} parent=35 // loop_header_branch
                %193 = sbr.rel (%p191) target = $region43
              $region40: #{vae_forward.18} parent=35 // loop_body
                %v197 = vld [vmem:[%s195] sm:$0xff]
                %198 = vst [vmem:[%s196] sm:$0xff] %v197
                %v199 = vld [vmem:[%s195 + $0x10] sm:$0xff]
                %200 = vst [vmem:[%s196 + $0x8] sm:$0xff] %v199
                %v201 = vld [vmem:[%s195 + $0x20] sm:$0xff]
                %202 = vst [vmem:[%s196 + $0x10] sm:$0xff] %v201
                %v203 = vld [vmem:[%s195 + $0x30] sm:$0xff]
                %204 = vst [vmem:[%s196 + $0x18] sm:$0xff] %v203
                %v205 = vld [vmem:[%s195 + $0x40] sm:$0xff]
                %206 = vst [vmem:[%s196 + $0x20] sm:$0xff] %v205
                %v207 = vld [vmem:[%s195 + $0x50] sm:$0xff]
                %208 = vst [vmem:[%s196 + $0x28] sm:$0xff] %v207
                %v209 = vld [vmem:[%s195 + $0x60] sm:$0xff]
                %210 = vst [vmem:[%s196 + $0x30] sm:$0xff] %v209
                %v211 = vld [vmem:[%s195 + $0x70] sm:$0xff]
                %212 = vst [vmem:[%s196 + $0x38] sm:$0xff] %v211
              $region41: #{vae_forward.18} parent=35 // loop_footer
                %s194 = sadd.s32 1, %s190
              $region42: #{vae_forward.18} parent=35 // loop_footer_branch
                %189 = sbr.rel target = $region38
              $region43: #{vae_forward.18} parent=35 // loop_exit
                _
            $region36: #{vae_forward.18} parent=27 // pred_fallthru
              _
          $region28: #{vae_forward.18} parent=23 // pred_fallthru
            _
          %241 = vnop
        $region24: #{vae_forward.18} parent=19 // pred_fallthru
          _
        // Predicated region
        $region59: #{vae_forward.18} parent=19 // pred_check
          %p242 = pneg %p104
        $region60: #{vae_forward.18} parent=19 // pred_check_branch
          %244 = sbr.rel (%p242) target = $region62
        $region61: #{vae_forward.18} parent=19 // pred_region
          %s245 = smul.u32 2, %s17
          %p246 = scmp.lt.s32.totalorder %s245, 3
          %s247 = scalar_select %p246, %s245, 3
          %s248 = scalar_lea.vmem %s2, %s247
          %s249 = smul.u32 2, %s17
        $region62: #{vae_forward.18} parent=19 // pred_fallthru
          _
      $region20: #{vae_forward.18} parent=5 // pred_fallthru
        _
      %p250 = scmp.le.s32.totalorder 1, %s9
      %p251 = scmp.lt.s32.totalorder %s9, 3
      %p252 = pnand %p250, %p251
      %p253 = pneg %p252
      // Predicated region
      $region63: #{vae_forward.18} parent=5 // pred_check
        _
      $region64: #{vae_forward.18} parent=5 // pred_check_branch
        %255 = sbr.rel (%p252) target = $region66
      $region65: #{vae_forward.18} parent=5 // pred_region
        %s256 = ssub.s32 %s9, 1
        %s257 = sand.u32 %s71, 1
        %s258 = sand.u32 %s71, 1
        %s259 = smul.addr %s258, 64
        %s260 = scalar_lea.vmem [#allocation3], %s259
        // Predicated region
        $region67: #{vae_forward.18} parent=65 // pred_check
          %p261 = pneg %p84
        $region68: #{vae_forward.18} parent=65 // pred_check_branch
          %263 = sbr.rel (%p261) target = $region70
        $region69: #{vae_forward.18} parent=65 // pred_region
          _
        $region70: #{vae_forward.18} parent=65 // pred_fallthru
          _
        %s264 = smul.u32 16, %s19
        %p265 = scmp.lt.s32.totalorder %s264, 15
        %s266 = scalar_select %p265, %s264, 15
        %p267 = scmp.lt.s32.totalorder %s21, 0
        %s268 = scalar_select %p267, %s21, 0
        %s269 = sadd.s32 %s268, %s266
        %s270 = smul.addr %s269, 4
        %s271 = scalar_lea.vmem %s0, %s270
        %p272 = pneg %p56
        %p273 = pneg %p53
        %s274 = sand.u32 %s71, 1
        %s275 = sand.u32 %s71, 1
        %s276 = smul.addr %s275, 64
        %s277 = scalar_lea.vmem [#allocation3], %s276
        %p278 = pneg %p84
        %p279 = pneg %p81
        %s280 = smul.u32 2, %s20
        %p281 = scmp.lt.s32.totalorder %s280, 3
        %s282 = scalar_select %p281, %s280, 3
        %s283 = scalar_lea.vmem %s2, %s282
        %p284 = pneg %p110
        %p285 = pneg %p107
        %p286 = pneg %p138
        %p287 = pneg %p135
        %s288 = sand.u32 %s125, 1
        %s289 = sand.u32 %s125, 1
        %s290 = smul.addr %s289, 256
        %s291 = scalar_lea.vmem [#allocation4], %s290
        %s292 = smul.u32 16, %s19
        %p293 = scmp.lt.s32.totalorder %s292, 15
        %s294 = scalar_select %p293, %s292, 15
        %p295 = scmp.lt.s32.totalorder %s21, 0
        %s296 = scalar_select %p295, %s21, 0
        %s297 = sadd.s32 %s296, %s294
        %s298 = smul.addr %s297, 4
        %s299 = scalar_lea.vmem %s0, %s298
        %s300 = smul.u32 16, %s19
        %s301 = smul.u32 8, %s21
        %s302 = smul.u32 2, %s20
        %s303 = smul.u32 2, %s20
        %p304 = scmp.lt.s32.totalorder %s303, 3
        %s305 = scalar_select %p304, %s303, 3
        %s306 = scalar_lea.vmem %s2, %s305
        %s307 = smul.u32 2, %s20
        %s308 = smul.u32 16, %s19
        %s309 = smul.u32 2, %s20
        %p311 = scmp.eq.s32.totalorder %s21, 0
        // Predicated region
        $region71: #{vae_forward.18} parent=65 // pred_check
          %p312 = pneg %p311
        $region72: #{vae_forward.18} parent=65 // pred_check_branch
          %314 = sbr.rel (%p312) target = $region74
        $region73: #{vae_forward.18} parent=65 // pred_region
          %315 = vst [vmem:[#allocation2] sm:$0xff] 0.0
          %316 = vst [vmem:[#allocation2 + $0x8] sm:$0xff] 0.0
          %317 = vst [vmem:[#allocation2 + $0x10] sm:$0xff] 0.0
          %318 = vst [vmem:[#allocation2 + $0x18] sm:$0xff] 0.0
          %319 = vst [vmem:[#allocation2 + $0x20] sm:$0xff] 0.0
          %320 = vst [vmem:[#allocation2 + $0x28] sm:$0xff] 0.0
          %321 = vst [vmem:[#allocation2 + $0x30] sm:$0xff] 0.0
          %322 = vst [vmem:[#allocation2 + $0x38] sm:$0xff] 0.0
          %323 = vst [vmem:[#allocation2 + $0x40] sm:$0xff] 0.0
          %324 = vst [vmem:[#allocation2 + $0x48] sm:$0xff] 0.0
          %325 = vst [vmem:[#allocation2 + $0x50] sm:$0xff] 0.0
          %326 = vst [vmem:[#allocation2 + $0x58] sm:$0xff] 0.0
          %327 = vst [vmem:[#allocation2 + $0x60] sm:$0xff] 0.0
          %328 = vst [vmem:[#allocation2 + $0x68] sm:$0xff] 0.0
          %329 = vst [vmem:[#allocation2 + $0x70] sm:$0xff] 0.0
          %330 = vst [vmem:[#allocation2 + $0x78] sm:$0xff] 0.0
          %331 = vst [vmem:[#allocation2 + $0x80] sm:$0xff] 0.0
          %332 = vst [vmem:[#allocation2 + $0x88] sm:$0xff] 0.0
          %333 = vst [vmem:[#allocation2 + $0x90] sm:$0xff] 0.0
          %334 = vst [vmem:[#allocation2 + $0x98] sm:$0xff] 0.0
          %335 = vst [vmem:[#allocation2 + $0xa0] sm:$0xff] 0.0
          %336 = vst [vmem:[#allocation2 + $0xa8] sm:$0xff] 0.0
          %337 = vst [vmem:[#allocation2 + $0xb0] sm:$0xff] 0.0
          %338 = vst [vmem:[#allocation2 + $0xb8] sm:$0xff] 0.0
          %339 = vst [vmem:[#allocation2 + $0xc0] sm:$0xff] 0.0
          %340 = vst [vmem:[#allocation2 + $0xc8] sm:$0xff] 0.0
          %341 = vst [vmem:[#allocation2 + $0xd0] sm:$0xff] 0.0
          %342 = vst [vmem:[#allocation2 + $0xd8] sm:$0xff] 0.0
          %343 = vst [vmem:[#allocation2 + $0xe0] sm:$0xff] 0.0
          %344 = vst [vmem:[#allocation2 + $0xe8] sm:$0xff] 0.0
          %345 = vst [vmem:[#allocation2 + $0xf0] sm:$0xff] 0.0
          %346 = vst [vmem:[#allocation2 + $0xf8] sm:$0xff] 0.0
        $region74: #{vae_forward.18} parent=65 // pred_fallthru
          _
        %v347 = vld [vmem:[#allocation2] sm:$0xff]
        %v348 = vld [vmem:[#allocation2 + $0x8] sm:$0xff]
        %v349 = vld [vmem:[#allocation2 + $0x10] sm:$0xff]
        %v350 = vld [vmem:[#allocation2 + $0x18] sm:$0xff]
        %v351 = vld [vmem:[#allocation2 + $0x20] sm:$0xff]
        %v352 = vld [vmem:[#allocation2 + $0x28] sm:$0xff]
        %v353 = vld [vmem:[#allocation2 + $0x30] sm:$0xff]
        %v354 = vld [vmem:[#allocation2 + $0x38] sm:$0xff]
        %v355 = vld [vmem:[#allocation2 + $0x40] sm:$0xff]
        %v356 = vld [vmem:[#allocation2 + $0x48] sm:$0xff]
        %v357 = vld [vmem:[#allocation2 + $0x50] sm:$0xff]
        %v358 = vld [vmem:[#allocation2 + $0x58] sm:$0xff]
        %v359 = vld [vmem:[#allocation2 + $0x60] sm:$0xff]
        %v360 = vld [vmem:[#allocation2 + $0x68] sm:$0xff]
        %v361 = vld [vmem:[#allocation2 + $0x70] sm:$0xff]
        %v362 = vld [vmem:[#allocation2 + $0x78] sm:$0xff]
        %v363 = vld [vmem:[#allocation2 + $0x80] sm:$0xff]
        %v364 = vld [vmem:[#allocation2 + $0x88] sm:$0xff]
        %v365 = vld [vmem:[#allocation2 + $0x90] sm:$0xff]
        %v366 = vld [vmem:[#allocation2 + $0x98] sm:$0xff]
        %v367 = vld [vmem:[#allocation2 + $0xa0] sm:$0xff]
        %v368 = vld [vmem:[#allocation2 + $0xa8] sm:$0xff]
        %v369 = vld [vmem:[#allocation2 + $0xb0] sm:$0xff]
        %v370 = vld [vmem:[#allocation2 + $0xb8] sm:$0xff]
        %v371 = vld [vmem:[#allocation2 + $0xc0] sm:$0xff]
        %v372 = vld [vmem:[#allocation2 + $0xc8] sm:$0xff]
        %v373 = vld [vmem:[#allocation2 + $0xd0] sm:$0xff]
        %v374 = vld [vmem:[#allocation2 + $0xd8] sm:$0xff]
        %v375 = vld [vmem:[#allocation2 + $0xe0] sm:$0xff]
        %v376 = vld [vmem:[#allocation2 + $0xe8] sm:$0xff]
        %v377 = vld [vmem:[#allocation2 + $0xf0] sm:$0xff]
        %v378 = vld [vmem:[#allocation2 + $0xf8] sm:$0xff]
        %v379 = vld [vmem:[%s299] sm:$0xf]
        %v380 = vld [vmem:[%s299 + $0x4] sm:$0xf]
        %v381 = vld [vmem:[%s299 + $0x8] sm:$0xf]
        %v382 = vld [vmem:[%s299 + $0xc] sm:$0xf]
        %v383 = vld [vmem:[%s299 + $0x10] sm:$0xf]
        %v384 = vld [vmem:[%s299 + $0x14] sm:$0xf]
        %v385 = vld [vmem:[%s299 + $0x18] sm:$0xf]
        %v386 = vld [vmem:[%s299 + $0x1c] sm:$0xf]
        %v387 = vld [vmem:[%s299 + $0x20] sm:$0xf]
        %v388 = vld [vmem:[%s299 + $0x24] sm:$0xf]
        %v389 = vld [vmem:[%s299 + $0x28] sm:$0xf]
        %v390 = vld [vmem:[%s299 + $0x2c] sm:$0xf]
        %v391 = vld [vmem:[%s299 + $0x30] sm:$0xf]
        %v392 = vld [vmem:[%s299 + $0x34] sm:$0xf]
        %v393 = vld [vmem:[%s299 + $0x38] sm:$0xf]
        %v394 = vld [vmem:[%s299 + $0x3c] sm:$0xf]
        %v395 = vld [vmem:[%s260] sm:$0xff]
        %v396 = vld [vmem:[%s260 + $0x8] sm:$0xff]
        %v397 = vld [vmem:[%s260 + $0x10] sm:$0xff]
        %v398 = vld [vmem:[%s260 + $0x18] sm:$0xff]
        %v399 = vld [vmem:[%s260 + $0x20] sm:$0xff]
        %v400 = vld [vmem:[%s260 + $0x28] sm:$0xff]
        %v401 = vld [vmem:[%s260 + $0x30] sm:$0xff]
        %v402 = vld [vmem:[%s260 + $0x38] sm:$0xff]
        %v419 = vunpack.c.l.b16 %v379
        %v420 = vunpack.c.l.b16 %v380
        %v421 = vunpack.c.l.b16 %v381
        %v422 = vunpack.c.l.b16 %v382
        %v423 = vunpack.c.l.b16 %v383
        %v424 = vunpack.c.l.b16 %v384
        %v425 = vunpack.c.l.b16 %v385
        %v426 = vunpack.c.l.b16 %v386
        %v427 = vunpack.c.l.b16 %v387
        %v428 = vunpack.c.l.b16 %v388
        %v429 = vunpack.c.l.b16 %v389
        %v430 = vunpack.c.l.b16 %v390
        %v431 = vunpack.c.l.b16 %v391
        %v432 = vunpack.c.l.b16 %v392
        %v433 = vunpack.c.l.b16 %v393
        %v434 = vunpack.c.l.b16 %v394
        %v435 = vpack.c.b16 %v420, %v419
        %v436 = vpack.c.b16 %v422, %v421
        %v437 = vpack.c.b16 %v424, %v423
        %v438 = vpack.c.b16 %v426, %v425
        %v439 = vpack.c.b16 %v428, %v427
        %v440 = vpack.c.b16 %v430, %v429
        %v441 = vpack.c.b16 %v432, %v431
        %v442 = vpack.c.b16 %v434, %v433
        %v451 = vunpack.c.l.b16 %v395
        %v452 = vunpack.c.h.b16 %v395
        %v453 = vunpack.c.l.b16 %v396
        %v454 = vunpack.c.h.b16 %v396
        %v455 = vunpack.c.l.b16 %v397
        %v456 = vunpack.c.h.b16 %v397
        %v457 = vunpack.c.l.b16 %v398
        %v458 = vunpack.c.h.b16 %v398
        %v459 = vunpack.c.l.b16 %v399
        %v460 = vunpack.c.h.b16 %v399
        %v461 = vunpack.c.l.b16 %v400
        %v462 = vunpack.c.h.b16 %v400
        %v463 = vunpack.c.l.b16 %v401
        %v464 = vunpack.c.h.b16 %v401
        %v465 = vunpack.c.l.b16 %v402
        %v466 = vunpack.c.h.b16 %v402
        %v467 = vpack.c.b16 %v453, %v451
        %v468 = vpack.c.b16 %v454, %v452
        %v469 = vpack.c.b16 %v457, %v455
        %v470 = vpack.c.b16 %v458, %v456
        %v471 = vpack.c.b16 %v461, %v459
        %v472 = vpack.c.b16 %v462, %v460
        %v473 = vpack.c.b16 %v465, %v463
        %v474 = vpack.c.b16 %v466, %v464
        %vm483 = vcmask 523264
        %v485 = vsel %vm483, %v435, 0
        %v488 = vsel %vm483, %v436, 0
        %v491 = vsel %vm483, %v437, 0
        %v494 = vsel %vm483, %v438, 0
        %v497 = vsel %vm483, %v439, 0
        %v500 = vsel %vm483, %v440, 0
        %v503 = vsel %vm483, %v441, 0
        %v506 = vsel %vm483, %v442, 0
        %508 = vmatprep.subr.bf16.mxu0 %v468
        %509 = vmatpush1.bf16.msra.mxu0 %v467
        %510 = vmatprep.subr.bf16.mxu0 %v470
        %511 = vmatpush1.bf16.msra.mxu0 %v469
        %512 = vmatprep.subr.bf16.mxu0 %v472
        %513 = vmatpush1.bf16.msra.mxu0 %v471
        %514 = vmatprep.subr.bf16.mxu0 %v474
        %515 = vmatpush1.bf16.msra.mxu0 %v473
        %516 = vmatprep.subr.bf16.mxu0 0
        %517 = vmatpush1.bf16.msra.mxu0 0
        %518 = vmatprep.subr.bf16.mxu0 0
        %519 = vmatpush1.bf16.msra.mxu0 0
        %520 = vmatprep.subr.bf16.mxu0 0
        %521 = vmatpush1.bf16.msra.mxu0 0
        %522 = vmatprep.subr.bf16.mxu0 0
        %523 = vmatpush1.bf16.msra.mxu0 0
        %524 = vmatprep.subr.bf16.mxu0 0
        %525 = vmatpush1.bf16.msra.mxu0 0
        %526 = vmatprep.subr.bf16.mxu0 0
        %527 = vmatpush1.bf16.msra.mxu0 0
        %528 = vmatprep.subr.bf16.mxu0 0
        %529 = vmatpush1.bf16.msra.mxu0 0
        %530 = vmatprep.subr.bf16.mxu0 0
        %531 = vmatpush1.bf16.msra.mxu0 0
        %532 = vmatprep.subr.bf16.mxu0 0
        %533 = vmatpush1.bf16.msra.mxu0 0
        %534 = vmatprep.subr.bf16.mxu0 0
        %535 = vmatpush1.bf16.msra.mxu0 0
        %536 = vmatprep.subr.bf16.mxu0 0
        %537 = vmatpush1.bf16.msra.mxu0 0
        %538 = vmatprep.subr.bf16.mxu0 0
        %539 = vmatpush1.bf16.msra.mxu0 0
        %540 = vmatprep.mubr.bf16.mxu0 0
        %541 = vmatmul.mubr.bf16.gmra.mrb[0].mxu0 %v485
        %v542 = vpop.f32.mrb[0].mxu0
        %v543 = vadd.f32 0.0, %v542
        %v544 = vpop.f32.mrb[0].mxu0
        %v545 = vadd.f32 0.0, %v544
        %v546 = vpop.f32.mrb[0].mxu0
        %v547 = vadd.f32 0.0, %v546
        %v548 = vpop.f32.mrb[0].mxu0
        %v549 = vadd.f32 0.0, %v548
        %550 = vmatprep.mubr.bf16.mxu0 0
        %551 = vmatmul.mubr.bf16.gmra.mrb[0].mxu0 %v488
        %v552 = vpop.f32.mrb[0].mxu0
        %v553 = vadd.f32 0.0, %v552
        %v554 = vpop.f32.mrb[0].mxu0
        %v555 = vadd.f32 0.0, %v554
        %v556 = vpop.f32.mrb[0].mxu0
        %v557 = vadd.f32 0.0, %v556
        %v558 = vpop.f32.mrb[0].mxu0
        %v559 = vadd.f32 0.0, %v558
        %560 = vmatprep.mubr.bf16.mxu0 0
        %561 = vmatmul.mubr.bf16.gmra.mrb[0].mxu0 %v491
        %v562 = vpop.f32.mrb[0].mxu0
        %v563 = vadd.f32 0.0, %v562
        %v564 = vpop.f32.mrb[0].mxu0
        %v565 = vadd.f32 0.0, %v564
        %v566 = vpop.f32.mrb[0].mxu0
        %v567 = vadd.f32 0.0, %v566
        %v568 = vpop.f32.mrb[0].mxu0
        %v569 = vadd.f32 0.0, %v568
        %570 = vmatprep.mubr.bf16.mxu0 0
        %571 = vmatmul.mubr.bf16.gmra.mrb[0].mxu0 %v494
        %v572 = vpop.f32.mrb[0].mxu0
        %v573 = vadd.f32 0.0, %v572
        %v574 = vpop.f32.mrb[0].mxu0
        %v575 = vadd.f32 0.0, %v574
        %v576 = vpop.f32.mrb[0].mxu0
        %v577 = vadd.f32 0.0, %v576
        %v578 = vpop.f32.mrb[0].mxu0
        %v579 = vadd.f32 0.0, %v578
        %580 = vmatprep.mubr.bf16.mxu0 0
        %581 = vmatmul.mubr.bf16.gmra.mrb[0].mxu0 %v497
        %v582 = vpop.f32.mrb[0].mxu0
        %v583 = vadd.f32 0.0, %v582
        %v584 = vpop.f32.mrb[0].mxu0
        %v585 = vadd.f32 0.0, %v584
        %v586 = vpop.f32.mrb[0].mxu0
        %v587 = vadd.f32 0.0, %v586
        %v588 = vpop.f32.mrb[0].mxu0
        %v589 = vadd.f32 0.0, %v588
        %590 = vmatprep.mubr.bf16.mxu0 0
        %591 = vmatmul.mubr.bf16.gmra.mrb[0].mxu0 %v500
        %v592 = vpop.f32.mrb[0].mxu0
        %v593 = vadd.f32 0.0, %v592
        %v594 = vpop.f32.mrb[0].mxu0
        %v595 = vadd.f32 0.0, %v594
        %v596 = vpop.f32.mrb[0].mxu0
        %v597 = vadd.f32 0.0, %v596
        %v598 = vpop.f32.mrb[0].mxu0
        %v599 = vadd.f32 0.0, %v598
        %600 = vmatprep.mubr.bf16.mxu0 0
        %601 = vmatmul.mubr.bf16.gmra.mrb[0].mxu0 %v503
        %v602 = vpop.f32.mrb[0].mxu0
        %v603 = vadd.f32 0.0, %v602
        %v604 = vpop.f32.mrb[0].mxu0
        %v605 = vadd.f32 0.0, %v604
        %v606 = vpop.f32.mrb[0].mxu0
        %v607 = vadd.f32 0.0, %v606
        %v608 = vpop.f32.mrb[0].mxu0
        %v609 = vadd.f32 0.0, %v608
        %610 = vmatprep.mubr.bf16.mxu0 0
        %611 = vmatmul.mubr.bf16.gmra.mrb[0].mxu0 %v506
        %v612 = vpop.f32.mrb[0].mxu0
        %v613 = vadd.f32 0.0, %v612
        %v614 = vpop.f32.mrb[0].mxu0
        %v615 = vadd.f32 0.0, %v614
        %v616 = vpop.f32.mrb[0].mxu0
        %v617 = vadd.f32 0.0, %v616
        %v618 = vpop.f32.mrb[0].mxu0
        %v619 = vadd.f32 0.0, %v618
        %620 = vdwg.mxu0
        %v621 = vadd.f32 %v347, %v543
        %v622 = vadd.f32 %v348, %v545
        %v623 = vadd.f32 %v349, %v547
        %v624 = vadd.f32 %v350, %v549
        %v625 = vadd.f32 %v351, %v553
        %v626 = vadd.f32 %v352, %v555
        %v627 = vadd.f32 %v353, %v557
        %v628 = vadd.f32 %v354, %v559
        %v629 = vadd.f32 %v355, %v563
        %v630 = vadd.f32 %v356, %v565
        %v631 = vadd.f32 %v357, %v567
        %v632 = vadd.f32 %v358, %v569
        %v633 = vadd.f32 %v359, %v573
        %v634 = vadd.f32 %v360, %v575
        %v635 = vadd.f32 %v361, %v577
        %v636 = vadd.f32 %v362, %v579
        %v637 = vadd.f32 %v363, %v583
        %v638 = vadd.f32 %v364, %v585
        %v639 = vadd.f32 %v365, %v587
        %v640 = vadd.f32 %v366, %v589
        %v641 = vadd.f32 %v367, %v593
        %v642 = vadd.f32 %v368, %v595
        %v643 = vadd.f32 %v369, %v597
        %v644 = vadd.f32 %v370, %v599
        %v645 = vadd.f32 %v371, %v603
        %v646 = vadd.f32 %v372, %v605
        %v647 = vadd.f32 %v373, %v607
        %v648 = vadd.f32 %v374, %v609
        %v649 = vadd.f32 %v375, %v613
        %v650 = vadd.f32 %v376, %v615
        %v651 = vadd.f32 %v377, %v617
        %v652 = vadd.f32 %v378, %v619
        %653 = vst [vmem:[#allocation2] sm:$0xff] %v621
        %654 = vst [vmem:[#allocation2 + $0x8] sm:$0xff] %v622
        %655 = vst [vmem:[#allocation2 + $0x10] sm:$0xff] %v623
        %656 = vst [vmem:[#allocation2 + $0x18] sm:$0xff] %v624
        %657 = vst [vmem:[#allocation2 + $0x20] sm:$0xff] %v625
        %658 = vst [vmem:[#allocation2 + $0x28] sm:$0xff] %v626
        %659 = vst [vmem:[#allocation2 + $0x30] sm:$0xff] %v627
        %660 = vst [vmem:[#allocation2 + $0x38] sm:$0xff] %v628
        %661 = vst [vmem:[#allocation2 + $0x40] sm:$0xff] %v629
        %662 = vst [vmem:[#allocation2 + $0x48] sm:$0xff] %v630
        %663 = vst [vmem:[#allocation2 + $0x50] sm:$0xff] %v631
        %664 = vst [vmem:[#allocation2 + $0x58] sm:$0xff] %v632
        %665 = vst [vmem:[#allocation2 + $0x60] sm:$0xff] %v633
        %666 = vst [vmem:[#allocation2 + $0x68] sm:$0xff] %v634
        %667 = vst [vmem:[#allocation2 + $0x70] sm:$0xff] %v635
        %668 = vst [vmem:[#allocation2 + $0x78] sm:$0xff] %v636
        %669 = vst [vmem:[#allocation2 + $0x80] sm:$0xff] %v637
        %670 = vst [vmem:[#allocation2 + $0x88] sm:$0xff] %v638
        %671 = vst [vmem:[#allocation2 + $0x90] sm:$0xff] %v639
        %672 = vst [vmem:[#allocation2 + $0x98] sm:$0xff] %v640
        %673 = vst [vmem:[#allocation2 + $0xa0] sm:$0xff] %v641
        %674 = vst [vmem:[#allocation2 + $0xa8] sm:$0xff] %v642
        %675 = vst [vmem:[#allocation2 + $0xb0] sm:$0xff] %v643
        %676 = vst [vmem:[#allocation2 + $0xb8] sm:$0xff] %v644
        %677 = vst [vmem:[#allocation2 + $0xc0] sm:$0xff] %v645
        %678 = vst [vmem:[#allocation2 + $0xc8] sm:$0xff] %v646
        %679 = vst [vmem:[#allocation2 + $0xd0] sm:$0xff] %v647
        %680 = vst [vmem:[#allocation2 + $0xd8] sm:$0xff] %v648
        %681 = vst [vmem:[#allocation2 + $0xe0] sm:$0xff] %v649
        %682 = vst [vmem:[#allocation2 + $0xe8] sm:$0xff] %v650
        %683 = vst [vmem:[#allocation2 + $0xf0] sm:$0xff] %v651
        %684 = vst [vmem:[#allocation2 + $0xf8] sm:$0xff] %v652
        // Predicated region
        $region75: #{vae_forward.18} parent=65 // pred_check
          %p685 = pneg %p311
        $region76: #{vae_forward.18} parent=65 // pred_check_branch
          %687 = sbr.rel (%p685) target = $region78
        $region77: #{vae_forward.18} parent=65 // pred_region
          %v688 = vld [vmem:[#allocation2] sm:$0xff]
          %v689 = vld [vmem:[#allocation2 + $0x8] sm:$0xff]
          %v690 = vld [vmem:[#allocation2 + $0x10] sm:$0xff]
          %v691 = vld [vmem:[#allocation2 + $0x18] sm:$0xff]
          %v692 = vld [vmem:[#allocation2 + $0x20] sm:$0xff]
          %v693 = vld [vmem:[#allocation2 + $0x28] sm:$0xff]
          %v694 = vld [vmem:[#allocation2 + $0x30] sm:$0xff]
          %v695 = vld [vmem:[#allocation2 + $0x38] sm:$0xff]
          %v696 = vld [vmem:[#allocation2 + $0x40] sm:$0xff]
          %v697 = vld [vmem:[#allocation2 + $0x48] sm:$0xff]
          %v698 = vld [vmem:[#allocation2 + $0x50] sm:$0xff]
          %v699 = vld [vmem:[#allocation2 + $0x58] sm:$0xff]
          %v700 = vld [vmem:[#allocation2 + $0x60] sm:$0xff]
          %v701 = vld [vmem:[#allocation2 + $0x68] sm:$0xff]
          %v702 = vld [vmem:[#allocation2 + $0x70] sm:$0xff]
          %v703 = vld [vmem:[#allocation2 + $0x78] sm:$0xff]
          %v704 = vld [vmem:[#allocation2 + $0x80] sm:$0xff]
          %v705 = vld [vmem:[#allocation2 + $0x88] sm:$0xff]
          %v706 = vld [vmem:[#allocation2 + $0x90] sm:$0xff]
          %v707 = vld [vmem:[#allocation2 + $0x98] sm:$0xff]
          %v708 = vld [vmem:[#allocation2 + $0xa0] sm:$0xff]
          %v709 = vld [vmem:[#allocation2 + $0xa8] sm:$0xff]
          %v710 = vld [vmem:[#allocation2 + $0xb0] sm:$0xff]
          %v711 = vld [vmem:[#allocation2 + $0xb8] sm:$0xff]
          %v712 = vld [vmem:[#allocation2 + $0xc0] sm:$0xff]
          %v713 = vld [vmem:[#allocation2 + $0xc8] sm:$0xff]
          %v714 = vld [vmem:[#allocation2 + $0xd0] sm:$0xff]
          %v715 = vld [vmem:[#allocation2 + $0xd8] sm:$0xff]
          %v716 = vld [vmem:[#allocation2 + $0xe0] sm:$0xff]
          %v717 = vld [vmem:[#allocation2 + $0xe8] sm:$0xff]
          %v718 = vld [vmem:[#allocation2 + $0xf0] sm:$0xff]
          %v719 = vld [vmem:[#allocation2 + $0xf8] sm:$0xff]
          %v720 = vld [vmem:[%s306] sm:$0x3]
          %v722 = vlaneseq
          %v723 = vshrl.u32 %v722, 7
          %v724 = vsub.s32 0, %v723
          %v725 = vrot.slane %v720, %v724
          %v726 = vlaneseq
          %v727 = vshrl.u32 %v726, 7
          %v728 = vsub.s32 1, %v727
          %v729 = vrot.slane %v720, %v728
          %v732 = vadd.f32 %v688, %v725
          %v733 = vadd.f32 %v689, %v729
          %v734 = vadd.f32 %v690, %v725
          %v735 = vadd.f32 %v691, %v729
          %v736 = vadd.f32 %v692, %v725
          %v737 = vadd.f32 %v693, %v729
          %v738 = vadd.f32 %v694, %v725
          %v739 = vadd.f32 %v695, %v729
          %v740 = vadd.f32 %v696, %v725
          %v741 = vadd.f32 %v697, %v729
          %v742 = vadd.f32 %v698, %v725
          %v743 = vadd.f32 %v699, %v729
          %v744 = vadd.f32 %v700, %v725
          %v745 = vadd.f32 %v701, %v729
          %v746 = vadd.f32 %v702, %v725
          %v747 = vadd.f32 %v703, %v729
          %v748 = vadd.f32 %v704, %v725
          %v749 = vadd.f32 %v705, %v729
          %v750 = vadd.f32 %v706, %v725
          %v751 = vadd.f32 %v707, %v729
          %v752 = vadd.f32 %v708, %v725
          %v753 = vadd.f32 %v709, %v729
          %v754 = vadd.f32 %v710, %v725
          %v755 = vadd.f32 %v711, %v729
          %v756 = vadd.f32 %v712, %v725
          %v757 = vadd.f32 %v713, %v729
          %v758 = vadd.f32 %v714, %v725
          %v759 = vadd.f32 %v715, %v729
          %v760 = vadd.f32 %v716, %v725
          %v761 = vadd.f32 %v717, %v729
          %v762 = vadd.f32 %v718, %v725
          %v763 = vadd.f32 %v719, %v729
          %764 = vst [vmem:[%s291] sm:$0xff] %v732
          %765 = vst [vmem:[%s291 + $0x8] sm:$0xff] %v733
          %766 = vst [vmem:[%s291 + $0x10] sm:$0xff] %v734
          %767 = vst [vmem:[%s291 + $0x18] sm:$0xff] %v735
          %768 = vst [vmem:[%s291 + $0x20] sm:$0xff] %v736
          %769 = vst [vmem:[%s291 + $0x28] sm:$0xff] %v737
          %770 = vst [vmem:[%s291 + $0x30] sm:$0xff] %v738
          %771 = vst [vmem:[%s291 + $0x38] sm:$0xff] %v739
          %772 = vst [vmem:[%s291 + $0x40] sm:$0xff] %v740
          %773 = vst [vmem:[%s291 + $0x48] sm:$0xff] %v741
          %774 = vst [vmem:[%s291 + $0x50] sm:$0xff] %v742
          %775 = vst [vmem:[%s291 + $0x58] sm:$0xff] %v743
          %776 = vst [vmem:[%s291 + $0x60] sm:$0xff] %v744
          %777 = vst [vmem:[%s291 + $0x68] sm:$0xff] %v745
          %778 = vst [vmem:[%s291 + $0x70] sm:$0xff] %v746
          %779 = vst [vmem:[%s291 + $0x78] sm:$0xff] %v747
          %780 = vst [vmem:[%s291 + $0x80] sm:$0xff] %v748
          %781 = vst [vmem:[%s291 + $0x88] sm:$0xff] %v749
          %782 = vst [vmem:[%s291 + $0x90] sm:$0xff] %v750
          %783 = vst [vmem:[%s291 + $0x98] sm:$0xff] %v751
          %784 = vst [vmem:[%s291 + $0xa0] sm:$0xff] %v752
          %785 = vst [vmem:[%s291 + $0xa8] sm:$0xff] %v753
          %786 = vst [vmem:[%s291 + $0xb0] sm:$0xff] %v754
          %787 = vst [vmem:[%s291 + $0xb8] sm:$0xff] %v755
          %788 = vst [vmem:[%s291 + $0xc0] sm:$0xff] %v756
          %789 = vst [vmem:[%s291 + $0xc8] sm:$0xff] %v757
          %790 = vst [vmem:[%s291 + $0xd0] sm:$0xff] %v758
          %791 = vst [vmem:[%s291 + $0xd8] sm:$0xff] %v759
          %792 = vst [vmem:[%s291 + $0xe0] sm:$0xff] %v760
          %793 = vst [vmem:[%s291 + $0xe8] sm:$0xff] %v761
          %794 = vst [vmem:[%s291 + $0xf0] sm:$0xff] %v762
          %795 = vst [vmem:[%s291 + $0xf8] sm:$0xff] %v763
        $region78: #{vae_forward.18} parent=65 // pred_fallthru
          _
        %s796 = sand.u32 %s125, 1
        %s797 = sand.u32 %s125, 1
        %s798 = smul.addr %s797, 256
        %s799 = scalar_lea.vmem [#allocation4], %s798
        // Predicated region
        $region79: #{vae_forward.18} parent=65 // pred_check
          %p800 = pneg %p135
        $region80: #{vae_forward.18} parent=65 // pred_check_branch
          %802 = sbr.rel (%p800) target = $region82
        $region81: #{vae_forward.18} parent=65 // pred_region
          %s803 = smul.u32 16, %s19
          %s804 = smul.u32 2, %s20
          %s805 = smul.addr %s803, 4
          %s806 = sadd.s32 %s804, %s805
          %s807 = smul.addr %s806, 8
          %s808 = scalar_lea.vmem %s3, %s807
          // Predicated region
          $region83: #{vae_forward.18} parent=81 // pred_check
            _
          $region84: #{vae_forward.18} parent=81 // pred_check_branch
            %810 = sbr.rel (0) target = $region86
          $region85: #{vae_forward.18} parent=81 // pred_region
            // Predicated region
            $region87: #{vae_forward.18} parent=85 // pred_check
              _
            $region88: #{vae_forward.18} parent=85 // pred_check_branch
              %812 = sbr.rel (0) target = $region90
            $region89: #{vae_forward.18} parent=85 // pred_region
              loop: start=0, step=1, limit=1
              $region91: #{vae_forward.18} parent=89 // loop_pre_header
                _
              $region92: #{vae_forward.18} parent=89 // loop_header
                %s814 = sphi 0, %s818
                %p815 = scmp.ge.s32.totalorder %s814, 1
                %s819 = sphi %s799, %s799
                %s820 = sphi %s808, %s808
              $region93: #{vae_forward.18} parent=89 // loop_header_branch
                %817 = sbr.rel (%p815) target = $region97
              $region94: #{vae_forward.18} parent=89 // loop_body
                %v821 = vld [vmem:[%s819] sm:$0xff]
                %822 = vst [vmem:[%s820] sm:$0xff] %v821
                %v823 = vld [vmem:[%s819 + $0x8] sm:$0xff]
                %824 = vst [vmem:[%s820 + $0x8] sm:$0xff] %v823
                %v825 = vld [vmem:[%s819 + $0x10] sm:$0xff]
                %826 = vst [vmem:[%s820 + $0x20] sm:$0xff] %v825
                %v827 = vld [vmem:[%s819 + $0x18] sm:$0xff]
                %828 = vst [vmem:[%s820 + $0x28] sm:$0xff] %v827
                %v829 = vld [vmem:[%s819 + $0x20] sm:$0xff]
                %830 = vst [vmem:[%s820 + $0x40] sm:$0xff] %v829
                %v831 = vld [vmem:[%s819 + $0x28] sm:$0xff]
                %832 = vst [vmem:[%s820 + $0x48] sm:$0xff] %v831
                %v833 = vld [vmem:[%s819 + $0x30] sm:$0xff]
                %834 = vst [vmem:[%s820 + $0x60] sm:$0xff] %v833
                %v835 = vld [vmem:[%s819 + $0x38] sm:$0xff]
                %836 = vst [vmem:[%s820 + $0x68] sm:$0xff] %v835
                %v837 = vld [vmem:[%s819 + $0x40] sm:$0xff]
                %838 = vst [vmem:[%s820 + $0x80] sm:$0xff] %v837
                %v839 = vld [vmem:[%s819 + $0x48] sm:$0xff]
                %840 = vst [vmem:[%s820 + $0x88] sm:$0xff] %v839
                %v841 = vld [vmem:[%s819 + $0x50] sm:$0xff]
                %842 = vst [vmem:[%s820 + $0xa0] sm:$0xff] %v841
                %v843 = vld [vmem:[%s819 + $0x58] sm:$0xff]
                %844 = vst [vmem:[%s820 + $0xa8] sm:$0xff] %v843
                %v845 = vld [vmem:[%s819 + $0x60] sm:$0xff]
                %846 = vst [vmem:[%s820 + $0xc0] sm:$0xff] %v845
                %v847 = vld [vmem:[%s819 + $0x68] sm:$0xff]
                %848 = vst [vmem:[%s820 + $0xc8] sm:$0xff] %v847
                %v849 = vld [vmem:[%s819 + $0x70] sm:$0xff]
                %850 = vst [vmem:[%s820 + $0xe0] sm:$0xff] %v849
                %v851 = vld [vmem:[%s819 + $0x78] sm:$0xff]
                %852 = vst [vmem:[%s820 + $0xe8] sm:$0xff] %v851
                %v853 = vld [vmem:[%s819 + $0x80] sm:$0xff]
                %854 = vst [vmem:[%s820 + $0x100] sm:$0xff] %v853
                %v855 = vld [vmem:[%s819 + $0x88] sm:$0xff]
                %856 = vst [vmem:[%s820 + $0x108] sm:$0xff] %v855
                %v857 = vld [vmem:[%s819 + $0x90] sm:$0xff]
                %858 = vst [vmem:[%s820 + $0x120] sm:$0xff] %v857
                %v859 = vld [vmem:[%s819 + $0x98] sm:$0xff]
                %860 = vst [vmem:[%s820 + $0x128] sm:$0xff] %v859
                %v861 = vld [vmem:[%s819 + $0xa0] sm:$0xff]
                %862 = vst [vmem:[%s820 + $0x140] sm:$0xff] %v861
                %v863 = vld [vmem:[%s819 + $0xa8] sm:$0xff]
                %864 = vst [vmem:[%s820 + $0x148] sm:$0xff] %v863
                %v865 = vld [vmem:[%s819 + $0xb0] sm:$0xff]
                %866 = vst [vmem:[%s820 + $0x160] sm:$0xff] %v865
                %v867 = vld [vmem:[%s819 + $0xb8] sm:$0xff]
                %868 = vst [vmem:[%s820 + $0x168] sm:$0xff] %v867
                %v869 = vld [vmem:[%s819 + $0xc0] sm:$0xff]
                %870 = vst [vmem:[%s820 + $0x180] sm:$0xff] %v869
                %v871 = vld [vmem:[%s819 + $0xc8] sm:$0xff]
                %872 = vst [vmem:[%s820 + $0x188] sm:$0xff] %v871
                %v873 = vld [vmem:[%s819 + $0xd0] sm:$0xff]
                %874 = vst [vmem:[%s820 + $0x1a0] sm:$0xff] %v873
                %v875 = vld [vmem:[%s819 + $0xd8] sm:$0xff]
                %876 = vst [vmem:[%s820 + $0x1a8] sm:$0xff] %v875
                %v877 = vld [vmem:[%s819 + $0xe0] sm:$0xff]
                %878 = vst [vmem:[%s820 + $0x1c0] sm:$0xff] %v877
                %v879 = vld [vmem:[%s819 + $0xe8] sm:$0xff]
                %880 = vst [vmem:[%s820 + $0x1c8] sm:$0xff] %v879
                %v881 = vld [vmem:[%s819 + $0xf0] sm:$0xff]
                %882 = vst [vmem:[%s820 + $0x1e0] sm:$0xff] %v881
                %v883 = vld [vmem:[%s819 + $0xf8] sm:$0xff]
                %884 = vst [vmem:[%s820 + $0x1e8] sm:$0xff] %v883
              $region95: #{vae_forward.18} parent=89 // loop_footer
                %s818 = sadd.s32 1, %s814
              $region96: #{vae_forward.18} parent=89 // loop_footer_branch
                %813 = sbr.rel target = $region92
              $region97: #{vae_forward.18} parent=89 // loop_exit
                _
            $region90: #{vae_forward.18} parent=85 // pred_fallthru
              _
            // Predicated region
            $region98: #{vae_forward.18} parent=85 // pred_check
              _
            $region99: #{vae_forward.18} parent=85 // pred_check_branch
              %886 = sbr.rel target = $region101
            $region100: #{vae_forward.18} parent=85 // pred_region
              _
            $region101: #{vae_forward.18} parent=85 // pred_fallthru
              _
          $region86: #{vae_forward.18} parent=81 // pred_fallthru
            _
          %887 = vnop
        $region82: #{vae_forward.18} parent=65 // pred_fallthru
          _
      $region66: #{vae_forward.18} parent=5 // pred_fallthru
        _
      %p888 = scmp.le.s32.totalorder 2, %s9
      // Predicated region
      $region102: #{vae_forward.18} parent=5 // pred_check
        %p889 = pneg %p888
      $region103: #{vae_forward.18} parent=5 // pred_check_branch
        %891 = sbr.rel (%p889) target = $region105
      $region104: #{vae_forward.18} parent=5 // pred_region
        %s892 = ssub.s32 %s9, 2
        // Predicated region
        $region106: #{vae_forward.18} parent=104 // pred_check
          %p893 = pneg %p141
        $region107: #{vae_forward.18} parent=104 // pred_check_branch
          %895 = sbr.rel (%p893) target = $region109
        $region108: #{vae_forward.18} parent=104 // pred_region
          %s896 = sand.u32 %s126, 1
          %s897 = sand.u32 %s126, 1
          %s898 = smul.addr %s897, 256
          %s899 = scalar_lea.vmem [#allocation4], %s898
        $region109: #{vae_forward.18} parent=104 // pred_fallthru
          _
      $region105: #{vae_forward.18} parent=5 // pred_fallthru
        _
    $region6: #{vae_forward.18} parent=1 // loop_footer
      %s13 = sadd.s32 1, %s9
    $region7: #{vae_forward.18} parent=1 // loop_footer_branch
      %8 = sbr.rel target = $region3
    $region8: #{vae_forward.18} parent=1 // loop_exit
      _

// kernel: vae_forward.19
$region0: #{vae_forward.19}
  #allocation0 [shape = 'u32[]', space=smem, size = 0x4, offset = 0x4, fixed_abs, tag = 'smem constant byte address 0x4 - core index']
  #allocation1 [shape = 'u32[144,128]{1,0:T(1,128)}', space=vmem, size = 0x12000, scoped, tag = 'internal scratch']
  #allocation2 [shape = 'f32[256,128]{1,0:T(8,128)}', space=vmem, size = 0x20000, scoped, tag = 'scratch operand']
  %s0 = inlined_call_operand.vmem [shape: bf16[512,32], index: 0, kind: input, shape index: {}]
  %s1 = inlined_call_operand.vmem [shape: bf16[32,128], index: 1, kind: input, shape index: {}]
  %s2 = inlined_call_operand.vmem [shape: f32[1,128], index: 2, kind: input, shape index: {}]
  %s3 = inlined_call_operand.vmem [shape: f32[512,128], index: 3, kind: output, shape index: {}]
  %s4 = sld [smem:[#allocation0]]
  $region53: #{vae_forward.19} parent=0
    _
  %s6 = ssub.s32 1, %s4
  %s7 = scalar_select 0, %s6, %s4
  loop: start=0, step=1, limit=4
  $region2: #{vae_forward.19} parent=0 // loop_pre_header
    _
  $region3: #{vae_forward.19} parent=0 // loop_header
    %s9 = sphi 0, %s13
    %p10 = scmp.ge.s32.totalorder %s9, 4
    %s16 = sphi 0, %s35
    %s17 = sphi 0, %s31
    %s18 = sphi 0, %s27
    %s19 = sphi 0, %s16
    %s20 = sphi 0, %s17
    %s21 = sphi 0, %s18
    %s22 = sphi 0, %s19
    %s23 = sphi 0, %s20
    %s24 = sphi 0, %s21
    %s40 = sphi 0, %s42
    %s43 = sphi 0, %s40
    %s44 = sphi 0, %s43
    %s60 = sphi 0, %s44
    %s68 = sphi 0, %s70
    %s71 = sphi 0, %s68
    %s72 = sphi 0, %s71
    %s88 = sphi 0, %s72
    %s94 = sphi 0, %s96
    %s97 = sphi 0, %s94
    %s98 = sphi 0, %s97
    %s114 = sphi 0, %s98
    %s122 = sphi 0, %s124
    %s125 = sphi 0, %s122
    %s126 = sphi 0, %s125
    %s142 = sphi 0, %s126
  $region4: #{vae_forward.19} parent=0 // loop_header_branch
    %12 = sbr.rel (%p10) target = $region8
  $region5: #{vae_forward.19} parent=0 // loop_body
    %s14 = ssub.s32 %s9, 1
    %s15 = ssub.s32 %s9, 2
    %s25 = sadd.s32 1, %s18
    %p26 = scmp.ge.s32.totalorder %s25, 1
    %s27 = scalar_select %p26, 0, %s25
    %s28 = sadd.s32 1, %s17
    %s29 = scalar_select %p26, %s28, %s17
    %p30 = scmp.ge.s32.totalorder %s29, 1
    %s31 = scalar_select %p30, 0, %s29
    %s32 = sadd.s32 1, %s16
    %s33 = scalar_select %p30, %s32, %s16
    %p34 = scmp.ge.s32.totalorder %s33, 2
    %s35 = scalar_select %p34, 0, %s33
    %s36 = ssub.s32 %s16, %s35
    %s37 = ssub.s32 %s18, %s27
    %s38 = sor.u32 %s36, %s37
    %p39 = scmp.eq.s32.totalorder %s38, 0
    %s41 = sadd.s32 %s40, 1
    %s42 = scalar_select %p39, %s40, %s41
    %p45 = pneg %p39
    %p46 = scmp.eq.s32.totalorder %s9, 1
    %p47 = por %p45, %p46
    %p48 = scmp.ne.s32.totalorder %s40, %s43
    %p49 = scmp.eq.s32.totalorder %s9, 0
    %p50 = por %p48, %p49
    %p51 = scmp.ne.s32.totalorder %s40, %s43
    %p52 = scmp.eq.s32.totalorder %s14, 1
    %p53 = por %p51, %p52
    %p54 = scmp.ne.s32.totalorder %s43, %s44
    %p55 = scmp.eq.s32.totalorder %s14, 0
    %p56 = por %p54, %p55
    %p57 = scmp.ne.s32.totalorder %s43, %s44
    %p58 = scmp.eq.s32.totalorder %s15, 1
    %p59 = por %p57, %p58
    %p61 = scmp.ne.s32.totalorder %s44, %s60
    %p62 = scmp.eq.s32.totalorder %s15, 0
    %p63 = por %p61, %p62
    %s64 = ssub.s32 %s18, %s27
    %s65 = ssub.s32 %s17, %s31
    %s66 = sor.u32 %s64, %s65
    %p67 = scmp.eq.s32.totalorder %s66, 0
    %s69 = sadd.s32 %s68, 1
    %s70 = scalar_select %p67, %s68, %s69
    %p73 = pneg %p67
    %p74 = scmp.eq.s32.totalorder %s9, 1
    %p75 = por %p73, %p74
    %p76 = scmp.ne.s32.totalorder %s68, %s71
    %p77 = scmp.eq.s32.totalorder %s9, 0
    %p78 = por %p76, %p77
    %p79 = scmp.ne.s32.totalorder %s68, %s71
    %p80 = scmp.eq.s32.totalorder %s14, 1
    %p81 = por %p79, %p80
    %p82 = scmp.ne.s32.totalorder %s71, %s72
    %p83 = scmp.eq.s32.totalorder %s14, 0
    %p84 = por %p82, %p83
    %p85 = scmp.ne.s32.totalorder %s71, %s72
    %p86 = scmp.eq.s32.totalorder %s15, 1
    %p87 = por %p85, %p86
    %p89 = scmp.ne.s32.totalorder %s72, %s88
    %p90 = scmp.eq.s32.totalorder %s15, 0
    %p91 = por %p89, %p90
    %s92 = ssub.s32 %s17, %s31
    %p93 = scmp.eq.s32.totalorder %s92, 0
    %s95 = sadd.s32 %s94, 1
    %s96 = scalar_select %p93, %s94, %s95
    %p99 = pneg %p93
    %p100 = scmp.eq.s32.totalorder %s9, 1
    %p101 = por %p99, %p100
    %p102 = scmp.ne.s32.totalorder %s94, %s97
    %p103 = scmp.eq.s32.totalorder %s9, 0
    %p104 = por %p102, %p103
    %p105 = scmp.ne.s32.totalorder %s94, %s97
    %p106 = scmp.eq.s32.totalorder %s14, 1
    %p107 = por %p105, %p106
    %p108 = scmp.ne.s32.totalorder %s97, %s98
    %p109 = scmp.eq.s32.totalorder %s14, 0
    %p110 = por %p108, %p109
    %p111 = scmp.ne.s32.totalorder %s97, %s98
    %p112 = scmp.eq.s32.totalorder %s15, 1
    %p113 = por %p111, %p112
    %p115 = scmp.ne.s32.totalorder %s98, %s114
    %p116 = scmp.eq.s32.totalorder %s15, 0
    %p117 = por %p115, %p116
    %s118 = ssub.s32 %s16, %s35
    %s119 = ssub.s32 %s17, %s31
    %s120 = sor.u32 %s118, %s119
    %p121 = scmp.eq.s32.totalorder %s120, 0
    %s123 = sadd.s32 %s122, 1
    %s124 = scalar_select %p121, %s122, %s123
    %p127 = pneg %p121
    %p128 = scmp.eq.s32.totalorder %s9, 1
    %p129 = por %p127, %p128
    %p130 = scmp.ne.s32.totalorder %s122, %s125
    %p131 = scmp.eq.s32.totalorder %s9, 0
    %p132 = por %p130, %p131
    %p133 = scmp.ne.s32.totalorder %s122, %s125
    %p134 = scmp.eq.s32.totalorder %s14, 1
    %p135 = por %p133, %p134
    %p136 = scmp.ne.s32.totalorder %s125, %s126
    %p137 = scmp.eq.s32.totalorder %s14, 0
    %p138 = por %p136, %p137
    %p139 = scmp.ne.s32.totalorder %s125, %s126
    %p140 = scmp.eq.s32.totalorder %s15, 1
    %p141 = por %p139, %p140
    %p143 = scmp.ne.s32.totalorder %s126, %s142
    %p144 = scmp.eq.s32.totalorder %s15, 0
    %p145 = por %p143, %p144
    %p146 = scmp.le.s32.totalorder 1, %s9
    %p147 = scmp.lt.s32.totalorder %s9, 3
    %p148 = pnand %p146, %p147
    %p149 = pneg %p148
    // Predicated region
    $region9: #{vae_forward.19} parent=5 // pred_check
      _
    $region10: #{vae_forward.19} parent=5 // pred_check_branch
      %151 = sbr.rel (%p148) target = $region12
    $region11: #{vae_forward.19} parent=5 // pred_region
      %s152 = ssub.s32 %s9, 1
      // Predicated region
      $region13: #{vae_forward.19} parent=11 // pred_check
        %p153 = pneg %p84
      $region14: #{vae_forward.19} parent=11 // pred_check_branch
        %155 = sbr.rel (%p153) target = $region16
      $region15: #{vae_forward.19} parent=11 // pred_region
        %s156 = smul.u32 4, %s21
        %p157 = scmp.lt.s32.totalorder %s156, 3
        %s158 = scalar_select %p157, %s156, 3
        %p159 = scmp.lt.s32.totalorder %s20, 0
        %s160 = scalar_select %p159, %s20, 0
        %s161 = sadd.s32 %s160, %s158
        %s162 = smul.addr %s161, 4
        %s163 = scalar_lea.vmem %s1, %s162
        %s164 = smul.u32 4, %s21
      $region16: #{vae_forward.19} parent=11 // pred_fallthru
        _
      // Predicated region
      $region17: #{vae_forward.19} parent=11 // pred_check
        %p165 = pneg %p110
      $region18: #{vae_forward.19} parent=11 // pred_check_branch
        %167 = sbr.rel (%p165) target = $region20
      $region19: #{vae_forward.19} parent=11 // pred_region
        %p168 = scmp.lt.s32.totalorder %s20, 0
        %s169 = scalar_select %p168, %s20, 0
        %s170 = scalar_lea.vmem %s2, %s169
      $region20: #{vae_forward.19} parent=11 // pred_fallthru
        _
    $region12: #{vae_forward.19} parent=5 // pred_fallthru
      _
    %p171 = scmp.lt.s32.totalorder %s9, 2
    // Predicated region
    $region21: #{vae_forward.19} parent=5 // pred_check
      %p172 = pneg %p171
    $region22: #{vae_forward.19} parent=5 // pred_check_branch
      %174 = sbr.rel (%p172) target = $region24
    $region23: #{vae_forward.19} parent=5 // pred_region
      // Predicated region
      $region25: #{vae_forward.19} parent=23 // pred_check
        %p175 = pneg %p50
      $region26: #{vae_forward.19} parent=23 // pred_check_branch
        %177 = sbr.rel (%p175) target = $region28
      $region27: #{vae_forward.19} parent=23 // pred_region
        %s178 = smul.u32 32, %s16
        %p179 = scmp.lt.s32.totalorder %s178, 63
        %s180 = scalar_select %p179, %s178, 63
        %p181 = scmp.lt.s32.totalorder %s18, 0
        %s182 = scalar_select %p181, %s18, 0
        %s183 = sadd.s32 %s182, %s180
        %s184 = smul.addr %s183, 4
        %s185 = scalar_lea.vmem %s0, %s184
        %s186 = smul.u32 32, %s16
      $region28: #{vae_forward.19} parent=23 // pred_fallthru
        _
    $region24: #{vae_forward.19} parent=5 // pred_fallthru
      _
    %p187 = scmp.le.s32.totalorder 1, %s9
    %p188 = scmp.lt.s32.totalorder %s9, 3
    %p189 = pnand %p187, %p188
    %p190 = pneg %p189
    // Predicated region
    $region29: #{vae_forward.19} parent=5 // pred_check
      _
    $region30: #{vae_forward.19} parent=5 // pred_check_branch
      %192 = sbr.rel (%p189) target = $region32
    $region31: #{vae_forward.19} parent=5 // pred_region
      %s193 = ssub.s32 %s9, 1
      %s194 = smul.u32 32, %s19
      %p195 = scmp.lt.s32.totalorder %s194, 63
      %s196 = scalar_select %p195, %s194, 63
      %p197 = scmp.lt.s32.totalorder %s21, 0
      %s198 = scalar_select %p197, %s21, 0
      %s199 = sadd.s32 %s198, %s196
      %s200 = smul.addr %s199, 4
      %s201 = scalar_lea.vmem %s0, %s200
      %p202 = pneg %p56
      %p203 = pneg %p53
      %s204 = smul.u32 4, %s21
      %p205 = scmp.lt.s32.totalorder %s204, 3
      %s206 = scalar_select %p205, %s204, 3
      %p207 = scmp.lt.s32.totalorder %s20, 0
      %s208 = scalar_select %p207, %s20, 0
      %s209 = sadd.s32 %s208, %s206
      %s210 = smul.addr %s209, 4
      %s211 = scalar_lea.vmem %s1, %s210
      %p212 = pneg %p84
      %p213 = pneg %p81
      %p214 = scmp.lt.s32.totalorder %s20, 0
      %s215 = scalar_select %p214, %s20, 0
      %s216 = scalar_lea.vmem %s2, %s215
      %p217 = pneg %p110
      %p218 = pneg %p107
      %p219 = pneg %p138
      %p220 = pneg %p135
      %s221 = smul.u32 32, %s19
      %p222 = scmp.lt.s32.totalorder %s221, 63
      %s223 = scalar_select %p222, %s221, 63
      %p224 = scmp.lt.s32.totalorder %s20, 0
      %s225 = scalar_select %p224, %s20, 0
      %s226 = sadd.s32 %s225, %s223
      %s227 = smul.addr %s226, 8
      %s228 = scalar_lea.vmem %s3, %s227
      %s229 = smul.u32 32, %s19
      %p230 = scmp.lt.s32.totalorder %s229, 63
      %s231 = scalar_select %p230, %s229, 63
      %p232 = scmp.lt.s32.totalorder %s21, 0
      %s233 = scalar_select %p232, %s21, 0
      %s234 = sadd.s32 %s233, %s231
      %s235 = smul.addr %s234, 4
      %s236 = scalar_lea.vmem %s0, %s235
      %s237 = smul.u32 32, %s19
      %s238 = smul.u32 4, %s21
      %p239 = scmp.lt.s32.totalorder %s238, 3
      %s240 = scalar_select %p239, %s238, 3
      %p241 = scmp.lt.s32.totalorder %s20, 0
      %s242 = scalar_select %p241, %s20, 0
      %s243 = sadd.s32 %s242, %s240
      %s244 = smul.addr %s243, 4
      %s245 = scalar_lea.vmem %s1, %s244
      %s246 = smul.u32 4, %s21
      %p247 = scmp.lt.s32.totalorder %s20, 0
      %s248 = scalar_select %p247, %s20, 0
      %s249 = scalar_lea.vmem %s2, %s248
      %s250 = smul.u32 32, %s19
      %p251 = scmp.lt.s32.totalorder %s250, 63
      %s252 = scalar_select %p251, %s250, 63
      %p253 = scmp.lt.s32.totalorder %s20, 0
      %s254 = scalar_select %p253, %s20, 0
      %s255 = sadd.s32 %s254, %s252
      %s256 = smul.addr %s255, 8
      %s257 = scalar_lea.vmem %s3, %s256
      %s258 = smul.u32 32, %s19
      %p260 = scmp.eq.s32.totalorder %s21, 0
      // Predicated region
      $region33: #{vae_forward.19} parent=31 // pred_check
        %p261 = pneg %p260
      $region34: #{vae_forward.19} parent=31 // pred_check_branch
        %263 = sbr.rel (%p261) target = $region36
      $region35: #{vae_forward.19} parent=31 // pred_region
        %264 = vst [vmem:[#allocation2] sm:$0xff] 0.0
        %265 = vst [vmem:[#allocation2 + $0x8] sm:$0xff] 0.0
        %266 = vst [vmem:[#allocation2 + $0x10] sm:$0xff] 0.0
        %267 = vst [vmem:[#allocation2 + $0x18] sm:$0xff] 0.0
        %268 = vst [vmem:[#allocation2 + $0x20] sm:$0xff] 0.0
        %269 = vst [vmem:[#allocation2 + $0x28] sm:$0xff] 0.0
        %270 = vst [vmem:[#allocation2 + $0x30] sm:$0xff] 0.0
        %271 = vst [vmem:[#allocation2 + $0x38] sm:$0xff] 0.0
        %272 = vst [vmem:[#allocation2 + $0x40] sm:$0xff] 0.0
        %273 = vst [vmem:[#allocation2 + $0x48] sm:$0xff] 0.0
        %274 = vst [vmem:[#allocation2 + $0x50] sm:$0xff] 0.0
        %275 = vst [vmem:[#allocation2 + $0x58] sm:$0xff] 0.0
        %276 = vst [vmem:[#allocation2 + $0x60] sm:$0xff] 0.0
        %277 = vst [vmem:[#allocation2 + $0x68] sm:$0xff] 0.0
        %278 = vst [vmem:[#allocation2 + $0x70] sm:$0xff] 0.0
        %279 = vst [vmem:[#allocation2 + $0x78] sm:$0xff] 0.0
        %280 = vst [vmem:[#allocation2 + $0x80] sm:$0xff] 0.0
        %281 = vst [vmem:[#allocation2 + $0x88] sm:$0xff] 0.0
        %282 = vst [vmem:[#allocation2 + $0x90] sm:$0xff] 0.0
        %283 = vst [vmem:[#allocation2 + $0x98] sm:$0xff] 0.0
        %284 = vst [vmem:[#allocation2 + $0xa0] sm:$0xff] 0.0
        %285 = vst [vmem:[#allocation2 + $0xa8] sm:$0xff] 0.0
        %286 = vst [vmem:[#allocation2 + $0xb0] sm:$0xff] 0.0
        %287 = vst [vmem:[#allocation2 + $0xb8] sm:$0xff] 0.0
        %288 = vst [vmem:[#allocation2 + $0xc0] sm:$0xff] 0.0
        %289 = vst [vmem:[#allocation2 + $0xc8] sm:$0xff] 0.0
        %290 = vst [vmem:[#allocation2 + $0xd0] sm:$0xff] 0.0
        %291 = vst [vmem:[#allocation2 + $0xd8] sm:$0xff] 0.0
        %292 = vst [vmem:[#allocation2 + $0xe0] sm:$0xff] 0.0
        %293 = vst [vmem:[#allocation2 + $0xe8] sm:$0xff] 0.0
        %294 = vst [vmem:[#allocation2 + $0xf0] sm:$0xff] 0.0
        %295 = vst [vmem:[#allocation2 + $0xf8] sm:$0xff] 0.0
      $region36: #{vae_forward.19} parent=31 // pred_fallthru
        _
      %v296 = vld [vmem:[#allocation2] sm:$0xff]
      %v297 = vld [vmem:[#allocation2 + $0x8] sm:$0xff]
      %v298 = vld [vmem:[#allocation2 + $0x10] sm:$0xff]
      %v299 = vld [vmem:[#allocation2 + $0x18] sm:$0xff]
      %v300 = vld [vmem:[#allocation2 + $0x20] sm:$0xff]
      %v301 = vld [vmem:[#allocation2 + $0x28] sm:$0xff]
      %v302 = vld [vmem:[#allocation2 + $0x30] sm:$0xff]
      %v303 = vld [vmem:[#allocation2 + $0x38] sm:$0xff]
      %v304 = vld [vmem:[#allocation2 + $0x40] sm:$0xff]
      %v305 = vld [vmem:[#allocation2 + $0x48] sm:$0xff]
      %v306 = vld [vmem:[#allocation2 + $0x50] sm:$0xff]
      %v307 = vld [vmem:[#allocation2 + $0x58] sm:$0xff]
      %v308 = vld [vmem:[#allocation2 + $0x60] sm:$0xff]
      %v309 = vld [vmem:[#allocation2 + $0x68] sm:$0xff]
      %v310 = vld [vmem:[#allocation2 + $0x70] sm:$0xff]
      %v311 = vld [vmem:[#allocation2 + $0x78] sm:$0xff]
      %v312 = vld [vmem:[#allocation2 + $0x80] sm:$0xff]
      %v313 = vld [vmem:[#allocation2 + $0x88] sm:$0xff]
      %v314 = vld [vmem:[#allocation2 + $0x90] sm:$0xff]
      %v315 = vld [vmem:[#allocation2 + $0x98] sm:$0xff]
      %v316 = vld [vmem:[#allocation2 + $0xa0] sm:$0xff]
      %v317 = vld [vmem:[#allocation2 + $0xa8] sm:$0xff]
      %v318 = vld [vmem:[#allocation2 + $0xb0] sm:$0xff]
      %v319 = vld [vmem:[#allocation2 + $0xb8] sm:$0xff]
      %v320 = vld [vmem:[#allocation2 + $0xc0] sm:$0xff]
      %v321 = vld [vmem:[#allocation2 + $0xc8] sm:$0xff]
      %v322 = vld [vmem:[#allocation2 + $0xd0] sm:$0xff]
      %v323 = vld [vmem:[#allocation2 + $0xd8] sm:$0xff]
      %v324 = vld [vmem:[#allocation2 + $0xe0] sm:$0xff]
      %v325 = vld [vmem:[#allocation2 + $0xe8] sm:$0xff]
      %v326 = vld [vmem:[#allocation2 + $0xf0] sm:$0xff]
      %v327 = vld [vmem:[#allocation2 + $0xf8] sm:$0xff]
      %v328 = vld [vmem:[%s236] sm:$0xf]
      %v329 = vld [vmem:[%s236 + $0x4] sm:$0xf]
      %v330 = vld [vmem:[%s236 + $0x8] sm:$0xf]
      %v331 = vld [vmem:[%s236 + $0xc] sm:$0xf]
      %v332 = vld [vmem:[%s236 + $0x10] sm:$0xf]
      %v333 = vld [vmem:[%s236 + $0x14] sm:$0xf]
      %v334 = vld [vmem:[%s236 + $0x18] sm:$0xf]
      %v335 = vld [vmem:[%s236 + $0x1c] sm:$0xf]
      %v336 = vld [vmem:[%s236 + $0x20] sm:$0xf]
      %v337 = vld [vmem:[%s236 + $0x24] sm:$0xf]
      %v338 = vld [vmem:[%s236 + $0x28] sm:$0xf]
      %v339 = vld [vmem:[%s236 + $0x2c] sm:$0xf]
      %v340 = vld [vmem:[%s236 + $0x30] sm:$0xf]
      %v341 = vld [vmem:[%s236 + $0x34] sm:$0xf]
      %v342 = vld [vmem:[%s236 + $0x38] sm:$0xf]
      %v343 = vld [vmem:[%s236 + $0x3c] sm:$0xf]
      %v344 = vld [vmem:[%s236 + $0x40] sm:$0xf]
      %v345 = vld [vmem:[%s236 + $0x44] sm:$0xf]
      %v346 = vld [vmem:[%s236 + $0x48] sm:$0xf]
      %v347 = vld [vmem:[%s236 + $0x4c] sm:$0xf]
      %v348 = vld [vmem:[%s236 + $0x50] sm:$0xf]
      %v349 = vld [vmem:[%s236 + $0x54] sm:$0xf]
      %v350 = vld [vmem:[%s236 + $0x58] sm:$0xf]
      %v351 = vld [vmem:[%s236 + $0x5c] sm:$0xf]
      %v352 = vld [vmem:[%s236 + $0x60] sm:$0xf]
      %v353 = vld [vmem:[%s236 + $0x64] sm:$0xf]
      %v354 = vld [vmem:[%s236 + $0x68] sm:$0xf]
      %v355 = vld [vmem:[%s236 + $0x6c] sm:$0xf]
      %v356 = vld [vmem:[%s236 + $0x70] sm:$0xf]
      %v357 = vld [vmem:[%s236 + $0x74] sm:$0xf]
      %v358 = vld [vmem:[%s236 + $0x78] sm:$0xf]
      %v359 = vld [vmem:[%s236 + $0x7c] sm:$0xf]
      %v360 = vld [vmem:[%s245] sm:$0xf]
      %v361 = vld [vmem:[%s245 + $0x4] sm:$0xf]
      %v362 = vld [vmem:[%s245 + $0x8] sm:$0xf]
      %v363 = vld [vmem:[%s245 + $0xc] sm:$0xf]
      %v396 = vunpack.c.l.b16 %v328
      %v397 = vunpack.c.l.b16 %v329
      %v398 = vunpack.c.l.b16 %v330
      %v399 = vunpack.c.l.b16 %v331
      %v400 = vunpack.c.l.b16 %v332
      %v401 = vunpack.c.l.b16 %v333
      %v402 = vunpack.c.l.b16 %v334
      %v403 = vunpack.c.l.b16 %v335
      %v404 = vunpack.c.l.b16 %v336
      %v405 = vunpack.c.l.b16 %v337
      %v406 = vunpack.c.l.b16 %v338
      %v407 = vunpack.c.l.b16 %v339
      %v408 = vunpack.c.l.b16 %v340
      %v409 = vunpack.c.l.b16 %v341
      %v410 = vunpack.c.l.b16 %v342
      %v411 = vunpack.c.l.b16 %v343
      %v412 = vunpack.c.l.b16 %v344
      %v413 = vunpack.c.l.b16 %v345
      %v414 = vunpack.c.l.b16 %v346
      %v415 = vunpack.c.l.b16 %v347
      %v416 = vunpack.c.l.b16 %v348
      %v417 = vunpack.c.l.b16 %v349
      %v418 = vunpack.c.l.b16 %v350
      %v419 = vunpack.c.l.b16 %v351
      %v420 = vunpack.c.l.b16 %v352
      %v421 = vunpack.c.l.b16 %v353
      %v422 = vunpack.c.l.b16 %v354
      %v423 = vunpack.c.l.b16 %v355
      %v424 = vunpack.c.l.b16 %v356
      %v425 = vunpack.c.l.b16 %v357
      %v426 = vunpack.c.l.b16 %v358
      %v427 = vunpack.c.l.b16 %v359
      %v428 = vpack.c.b16 %v397, %v396
      %v429 = vpack.c.b16 %v399, %v398
      %v430 = vpack.c.b16 %v401, %v400
      %v431 = vpack.c.b16 %v403, %v402
      %v432 = vpack.c.b16 %v405, %v404
      %v433 = vpack.c.b16 %v407, %v406
      %v434 = vpack.c.b16 %v409, %v408
      %v435 = vpack.c.b16 %v411, %v410
      %v436 = vpack.c.b16 %v413, %v412
      %v437 = vpack.c.b16 %v415, %v414
      %v438 = vpack.c.b16 %v417, %v416
      %v439 = vpack.c.b16 %v419, %v418
      %v440 = vpack.c.b16 %v421, %v420
      %v441 = vpack.c.b16 %v423, %v422
      %v442 = vpack.c.b16 %v425, %v424
      %v443 = vpack.c.b16 %v427, %v426
      %v448 = vunpack.c.l.b16 %v360
      %v449 = vunpack.c.l.b16 %v361
      %v450 = vunpack.c.l.b16 %v362
      %v451 = vunpack.c.l.b16 %v363
      %v452 = vpack.c.b16 %v449, %v448
      %v453 = vpack.c.b16 %v451, %v450
      %vm456 = vcmask 261120
      %v458 = vsel %vm456, %v428, 0
      %v461 = vsel %vm456, %v429, 0
      %v464 = vsel %vm456, %v430, 0
      %v467 = vsel %vm456, %v431, 0
      %v470 = vsel %vm456, %v432, 0
      %v473 = vsel %vm456, %v433, 0
      %v476 = vsel %vm456, %v434, 0
      %v479 = vsel %vm456, %v435, 0
      %v482 = vsel %vm456, %v436, 0
      %v485 = vsel %vm456, %v437, 0
      %v488 = vsel %vm456, %v438, 0
      %v491 = vsel %vm456, %v439, 0
      %v494 = vsel %vm456, %v440, 0
      %v497 = vsel %vm456, %v441, 0
      %v500 = vsel %vm456, %v442, 0
      %v503 = vsel %vm456, %v443, 0
      %505 = vmatprep.subr.bf16.mxu0 0
      %506 = vmatpush1.bf16.msra.mxu0 %v452
      %507 = vmatprep.subr.bf16.mxu0 0
      %508 = vmatpush1.bf16.msra.mxu0 %v453
      %509 = vmatprep.subr.bf16.mxu0 0
      %510 = vmatpush1.bf16.msra.mxu0 0
      %511 = vmatprep.subr.bf16.mxu0 0
      %512 = vmatpush1.bf16.msra.mxu0 0
      %513 = vmatprep.subr.bf16.mxu0 0
      %514 = vmatpush1.bf16.msra.mxu0 0
      %515 = vmatprep.subr.bf16.mxu0 0
      %516 = vmatpush1.bf16.msra.mxu0 0
      %517 = vmatprep.subr.bf16.mxu0 0
      %518 = vmatpush1.bf16.msra.mxu0 0
      %519 = vmatprep.subr.bf16.mxu0 0
      %520 = vmatpush1.bf16.msra.mxu0 0
      %521 = vmatprep.subr.bf16.mxu0 0
      %522 = vmatpush1.bf16.msra.mxu0 0
      %523 = vmatprep.subr.bf16.mxu0 0
      %524 = vmatpush1.bf16.msra.mxu0 0
      %525 = vmatprep.subr.bf16.mxu0 0
      %526 = vmatpush1.bf16.msra.mxu0 0
      %527 = vmatprep.subr.bf16.mxu0 0
      %528 = vmatpush1.bf16.msra.mxu0 0
      %529 = vmatprep.subr.bf16.mxu0 0
      %530 = vmatpush1.bf16.msra.mxu0 0
      %531 = vmatprep.subr.bf16.mxu0 0
      %532 = vmatpush1.bf16.msra.mxu0 0
      %533 = vmatprep.subr.bf16.mxu0 0
      %534 = vmatpush1.bf16.msra.mxu0 0
      %535 = vmatprep.subr.bf16.mxu0 0
      %536 = vmatpush1.bf16.msra.mxu0 0
      %537 = vmatprep.mubr.bf16.mxu0 0
      %538 = vmatmul.mubr.bf16.gmra.mrb[0].mxu0 %v458
      %v539 = vpop.f32.mrb[0].mxu0
      %v540 = vadd.f32 0.0, %v539
      %v541 = vpop.f32.mrb[0].mxu0
      %v542 = vpop.f32.mrb[0].mxu0
      %v543 = vadd.f32 0.0, %v542
      %v544 = vpop.f32.mrb[0].mxu0
      %545 = vmatprep.mubr.bf16.mxu0 0
      %546 = vmatmul.mubr.bf16.gmra.mrb[0].mxu0 %v461
      %v547 = vpop.f32.mrb[0].mxu0
      %v548 = vadd.f32 0.0, %v547
      %v549 = vpop.f32.mrb[0].mxu0
      %v550 = vpop.f32.mrb[0].mxu0
      %v551 = vadd.f32 0.0, %v550
      %v552 = vpop.f32.mrb[0].mxu0
      %553 = vmatprep.mubr.bf16.mxu0 0
      %554 = vmatmul.mubr.bf16.gmra.mrb[0].mxu0 %v464
      %v555 = vpop.f32.mrb[0].mxu0
      %v556 = vadd.f32 0.0, %v555
      %v557 = vpop.f32.mrb[0].mxu0
      %v558 = vpop.f32.mrb[0].mxu0
      %v559 = vadd.f32 0.0, %v558
      %v560 = vpop.f32.mrb[0].mxu0
      %561 = vmatprep.mubr.bf16.mxu0 0
      %562 = vmatmul.mubr.bf16.gmra.mrb[0].mxu0 %v467
      %v563 = vpop.f32.mrb[0].mxu0
      %v564 = vadd.f32 0.0, %v563
      %v565 = vpop.f32.mrb[0].mxu0
      %v566 = vpop.f32.mrb[0].mxu0
      %v567 = vadd.f32 0.0, %v566
      %v568 = vpop.f32.mrb[0].mxu0
      %569 = vmatprep.mubr.bf16.mxu0 0
      %570 = vmatmul.mubr.bf16.gmra.mrb[0].mxu0 %v470
      %v571 = vpop.f32.mrb[0].mxu0
      %v572 = vadd.f32 0.0, %v571
      %v573 = vpop.f32.mrb[0].mxu0
      %v574 = vpop.f32.mrb[0].mxu0
      %v575 = vadd.f32 0.0, %v574
      %v576 = vpop.f32.mrb[0].mxu0
      %577 = vmatprep.mubr.bf16.mxu0 0
      %578 = vmatmul.mubr.bf16.gmra.mrb[0].mxu0 %v473
      %v579 = vpop.f32.mrb[0].mxu0
      %v580 = vadd.f32 0.0, %v579
      %v581 = vpop.f32.mrb[0].mxu0
      %v582 = vpop.f32.mrb[0].mxu0
      %v583 = vadd.f32 0.0, %v582
      %v584 = vpop.f32.mrb[0].mxu0
      %585 = vmatprep.mubr.bf16.mxu0 0
      %586 = vmatmul.mubr.bf16.gmra.mrb[0].mxu0 %v476
      %v587 = vpop.f32.mrb[0].mxu0
      %v588 = vadd.f32 0.0, %v587
      %v589 = vpop.f32.mrb[0].mxu0
      %v590 = vpop.f32.mrb[0].mxu0
      %v591 = vadd.f32 0.0, %v590
      %v592 = vpop.f32.mrb[0].mxu0
      %593 = vmatprep.mubr.bf16.mxu0 0
      %594 = vmatmul.mubr.bf16.gmra.mrb[0].mxu0 %v479
      %v595 = vpop.f32.mrb[0].mxu0
      %v596 = vadd.f32 0.0, %v595
      %v597 = vpop.f32.mrb[0].mxu0
      %v598 = vpop.f32.mrb[0].mxu0
      %v599 = vadd.f32 0.0, %v598
      %v600 = vpop.f32.mrb[0].mxu0
      %601 = vmatprep.mubr.bf16.mxu0 0
      %602 = vmatmul.mubr.bf16.gmra.mrb[0].mxu0 %v482
      %v603 = vpop.f32.mrb[0].mxu0
      %v604 = vadd.f32 0.0, %v603
      %v605 = vpop.f32.mrb[0].mxu0
      %v606 = vpop.f32.mrb[0].mxu0
      %v607 = vadd.f32 0.0, %v606
      %v608 = vpop.f32.mrb[0].mxu0
      %609 = vmatprep.mubr.bf16.mxu0 0
      %610 = vmatmul.mubr.bf16.gmra.mrb[0].mxu0 %v485
      %v611 = vpop.f32.mrb[0].mxu0
      %v612 = vadd.f32 0.0, %v611
      %v613 = vpop.f32.mrb[0].mxu0
      %v614 = vpop.f32.mrb[0].mxu0
      %v615 = vadd.f32 0.0, %v614
      %v616 = vpop.f32.mrb[0].mxu0
      %617 = vmatprep.mubr.bf16.mxu0 0
      %618 = vmatmul.mubr.bf16.gmra.mrb[0].mxu0 %v488
      %v619 = vpop.f32.mrb[0].mxu0
      %v620 = vadd.f32 0.0, %v619
      %v621 = vpop.f32.mrb[0].mxu0
      %v622 = vpop.f32.mrb[0].mxu0
      %v623 = vadd.f32 0.0, %v622
      %v624 = vpop.f32.mrb[0].mxu0
      %625 = vmatprep.mubr.bf16.mxu0 0
      %626 = vmatmul.mubr.bf16.gmra.mrb[0].mxu0 %v491
      %v627 = vpop.f32.mrb[0].mxu0
      %v628 = vadd.f32 0.0, %v627
      %v629 = vpop.f32.mrb[0].mxu0
      %v630 = vpop.f32.mrb[0].mxu0
      %v631 = vadd.f32 0.0, %v630
      %v632 = vpop.f32.mrb[0].mxu0
      %633 = vmatprep.mubr.bf16.mxu0 0
      %634 = vmatmul.mubr.bf16.gmra.mrb[0].mxu0 %v494
      %v635 = vpop.f32.mrb[0].mxu0
      %v636 = vadd.f32 0.0, %v635
      %v637 = vpop.f32.mrb[0].mxu0
      %v638 = vpop.f32.mrb[0].mxu0
      %v639 = vadd.f32 0.0, %v638
      %v640 = vpop.f32.mrb[0].mxu0
      %641 = vmatprep.mubr.bf16.mxu0 0
      %642 = vmatmul.mubr.bf16.gmra.mrb[0].mxu0 %v497
      %v643 = vpop.f32.mrb[0].mxu0
      %v644 = vadd.f32 0.0, %v643
      %v645 = vpop.f32.mrb[0].mxu0
      %v646 = vpop.f32.mrb[0].mxu0
      %v647 = vadd.f32 0.0, %v646
      %v648 = vpop.f32.mrb[0].mxu0
      %649 = vmatprep.mubr.bf16.mxu0 0
      %650 = vmatmul.mubr.bf16.gmra.mrb[0].mxu0 %v500
      %v651 = vpop.f32.mrb[0].mxu0
      %v652 = vadd.f32 0.0, %v651
      %v653 = vpop.f32.mrb[0].mxu0
      %v654 = vpop.f32.mrb[0].mxu0
      %v655 = vadd.f32 0.0, %v654
      %v656 = vpop.f32.mrb[0].mxu0
      %657 = vmatprep.mubr.bf16.mxu0 0
      %658 = vmatmul.mubr.bf16.gmra.mrb[0].mxu0 %v503
      %v659 = vpop.f32.mrb[0].mxu0
      %v660 = vadd.f32 0.0, %v659
      %v661 = vpop.f32.mrb[0].mxu0
      %v662 = vpop.f32.mrb[0].mxu0
      %v663 = vadd.f32 0.0, %v662
      %v664 = vpop.f32.mrb[0].mxu0
      %665 = vdwg.mxu0
      %v666 = vadd.f32 %v296, %v540
      %v667 = vadd.f32 %v297, %v543
      %v668 = vadd.f32 %v298, %v548
      %v669 = vadd.f32 %v299, %v551
      %v670 = vadd.f32 %v300, %v556
      %v671 = vadd.f32 %v301, %v559
      %v672 = vadd.f32 %v302, %v564
      %v673 = vadd.f32 %v303, %v567
      %v674 = vadd.f32 %v304, %v572
      %v675 = vadd.f32 %v305, %v575
      %v676 = vadd.f32 %v306, %v580
      %v677 = vadd.f32 %v307, %v583
      %v678 = vadd.f32 %v308, %v588
      %v679 = vadd.f32 %v309, %v591
      %v680 = vadd.f32 %v310, %v596
      %v681 = vadd.f32 %v311, %v599
      %v682 = vadd.f32 %v312, %v604
      %v683 = vadd.f32 %v313, %v607
      %v684 = vadd.f32 %v314, %v612
      %v685 = vadd.f32 %v315, %v615
      %v686 = vadd.f32 %v316, %v620
      %v687 = vadd.f32 %v317, %v623
      %v688 = vadd.f32 %v318, %v628
      %v689 = vadd.f32 %v319, %v631
      %v690 = vadd.f32 %v320, %v636
      %v691 = vadd.f32 %v321, %v639
      %v692 = vadd.f32 %v322, %v644
      %v693 = vadd.f32 %v323, %v647
      %v694 = vadd.f32 %v324, %v652
      %v695 = vadd.f32 %v325, %v655
      %v696 = vadd.f32 %v326, %v660
      %v697 = vadd.f32 %v327, %v663
      %698 = vst [vmem:[#allocation2] sm:$0xff] %v666
      %699 = vst [vmem:[#allocation2 + $0x8] sm:$0xff] %v667
      %700 = vst [vmem:[#allocation2 + $0x10] sm:$0xff] %v668
      %701 = vst [vmem:[#allocation2 + $0x18] sm:$0xff] %v669
      %702 = vst [vmem:[#allocation2 + $0x20] sm:$0xff] %v670
      %703 = vst [vmem:[#allocation2 + $0x28] sm:$0xff] %v671
      %704 = vst [vmem:[#allocation2 + $0x30] sm:$0xff] %v672
      %705 = vst [vmem:[#allocation2 + $0x38] sm:$0xff] %v673
      %706 = vst [vmem:[#allocation2 + $0x40] sm:$0xff] %v674
      %707 = vst [vmem:[#allocation2 + $0x48] sm:$0xff] %v675
      %708 = vst [vmem:[#allocation2 + $0x50] sm:$0xff] %v676
      %709 = vst [vmem:[#allocation2 + $0x58] sm:$0xff] %v677
      %710 = vst [vmem:[#allocation2 + $0x60] sm:$0xff] %v678
      %711 = vst [vmem:[#allocation2 + $0x68] sm:$0xff] %v679
      %712 = vst [vmem:[#allocation2 + $0x70] sm:$0xff] %v680
      %713 = vst [vmem:[#allocation2 + $0x78] sm:$0xff] %v681
      %714 = vst [vmem:[#allocation2 + $0x80] sm:$0xff] %v682
      %715 = vst [vmem:[#allocation2 + $0x88] sm:$0xff] %v683
      %716 = vst [vmem:[#allocation2 + $0x90] sm:$0xff] %v684
      %717 = vst [vmem:[#allocation2 + $0x98] sm:$0xff] %v685
      %718 = vst [vmem:[#allocation2 + $0xa0] sm:$0xff] %v686
      %719 = vst [vmem:[#allocation2 + $0xa8] sm:$0xff] %v687
      %720 = vst [vmem:[#allocation2 + $0xb0] sm:$0xff] %v688
      %721 = vst [vmem:[#allocation2 + $0xb8] sm:$0xff] %v689
      %722 = vst [vmem:[#allocation2 + $0xc0] sm:$0xff] %v690
      %723 = vst [vmem:[#allocation2 + $0xc8] sm:$0xff] %v691
      %724 = vst [vmem:[#allocation2 + $0xd0] sm:$0xff] %v692
      %725 = vst [vmem:[#allocation2 + $0xd8] sm:$0xff] %v693
      %726 = vst [vmem:[#allocation2 + $0xe0] sm:$0xff] %v694
      %727 = vst [vmem:[#allocation2 + $0xe8] sm:$0xff] %v695
      %728 = vst [vmem:[#allocation2 + $0xf0] sm:$0xff] %v696
      %729 = vst [vmem:[#allocation2 + $0xf8] sm:$0xff] %v697
      // Predicated region
      $region37: #{vae_forward.19} parent=31 // pred_check
        %p730 = pneg %p260
      $region38: #{vae_forward.19} parent=31 // pred_check_branch
        %732 = sbr.rel (%p730) target = $region40
      $region39: #{vae_forward.19} parent=31 // pred_region
        %v733 = vld [vmem:[#allocation2] sm:$0xff]
        %v734 = vld [vmem:[#allocation2 + $0x8] sm:$0xff]
        %v735 = vld [vmem:[#allocation2 + $0x10] sm:$0xff]
        %v736 = vld [vmem:[#allocation2 + $0x18] sm:$0xff]
        %v737 = vld [vmem:[#allocation2 + $0x20] sm:$0xff]
        %v738 = vld [vmem:[#allocation2 + $0x28] sm:$0xff]
        %v739 = vld [vmem:[#allocation2 + $0x30] sm:$0xff]
        %v740 = vld [vmem:[#allocation2 + $0x38] sm:$0xff]
        %v741 = vld [vmem:[#allocation2 + $0x40] sm:$0xff]
        %v742 = vld [vmem:[#allocation2 + $0x48] sm:$0xff]
        %v743 = vld [vmem:[#allocation2 + $0x50] sm:$0xff]
        %v744 = vld [vmem:[#allocation2 + $0x58] sm:$0xff]
        %v745 = vld [vmem:[#allocation2 + $0x60] sm:$0xff]
        %v746 = vld [vmem:[#allocation2 + $0x68] sm:$0xff]
        %v747 = vld [vmem:[#allocation2 + $0x70] sm:$0xff]
        %v748 = vld [vmem:[#allocation2 + $0x78] sm:$0xff]
        %v749 = vld [vmem:[#allocation2 + $0x80] sm:$0xff]
        %v750 = vld [vmem:[#allocation2 + $0x88] sm:$0xff]
        %v751 = vld [vmem:[#allocation2 + $0x90] sm:$0xff]
        %v752 = vld [vmem:[#allocation2 + $0x98] sm:$0xff]
        %v753 = vld [vmem:[#allocation2 + $0xa0] sm:$0xff]
        %v754 = vld [vmem:[#allocation2 + $0xa8] sm:$0xff]
        %v755 = vld [vmem:[#allocation2 + $0xb0] sm:$0xff]
        %v756 = vld [vmem:[#allocation2 + $0xb8] sm:$0xff]
        %v757 = vld [vmem:[#allocation2 + $0xc0] sm:$0xff]
        %v758 = vld [vmem:[#allocation2 + $0xc8] sm:$0xff]
        %v759 = vld [vmem:[#allocation2 + $0xd0] sm:$0xff]
        %v760 = vld [vmem:[#allocation2 + $0xd8] sm:$0xff]
        %v761 = vld [vmem:[#allocation2 + $0xe0] sm:$0xff]
        %v762 = vld [vmem:[#allocation2 + $0xe8] sm:$0xff]
        %v763 = vld [vmem:[#allocation2 + $0xf0] sm:$0xff]
        %v764 = vld [vmem:[#allocation2 + $0xf8] sm:$0xff]
        %v765 = vld [vmem:[%s249] sm:$0x1]
        %v767 = vlaneseq
        %v768 = vshrl.u32 %v767, 7
        %v769 = vsub.s32 0, %v768
        %v770 = vrot.slane %v765, %v769
        %v772 = vadd.f32 %v733, %v770
        %v773 = vadd.f32 %v734, %v770
        %v774 = vadd.f32 %v735, %v770
        %v775 = vadd.f32 %v736, %v770
        %v776 = vadd.f32 %v737, %v770
        %v777 = vadd.f32 %v738, %v770
        %v778 = vadd.f32 %v739, %v770
        %v779 = vadd.f32 %v740, %v770
        %v780 = vadd.f32 %v741, %v770
        %v781 = vadd.f32 %v742, %v770
        %v782 = vadd.f32 %v743, %v770
        %v783 = vadd.f32 %v744, %v770
        %v784 = vadd.f32 %v745, %v770
        %v785 = vadd.f32 %v746, %v770
        %v786 = vadd.f32 %v747, %v770
        %v787 = vadd.f32 %v748, %v770
        %v788 = vadd.f32 %v749, %v770
        %v789 = vadd.f32 %v750, %v770
        %v790 = vadd.f32 %v751, %v770
        %v791 = vadd.f32 %v752, %v770
        %v792 = vadd.f32 %v753, %v770
        %v793 = vadd.f32 %v754, %v770
        %v794 = vadd.f32 %v755, %v770
        %v795 = vadd.f32 %v756, %v770
        %v796 = vadd.f32 %v757, %v770
        %v797 = vadd.f32 %v758, %v770
        %v798 = vadd.f32 %v759, %v770
        %v799 = vadd.f32 %v760, %v770
        %v800 = vadd.f32 %v761, %v770
        %v801 = vadd.f32 %v762, %v770
        %v802 = vadd.f32 %v763, %v770
        %v803 = vadd.f32 %v764, %v770
        %804 = vst [vmem:[%s257] sm:$0xff] %v772
        %805 = vst [vmem:[%s257 + $0x8] sm:$0xff] %v773
        %806 = vst [vmem:[%s257 + $0x10] sm:$0xff] %v774
        %807 = vst [vmem:[%s257 + $0x18] sm:$0xff] %v775
        %808 = vst [vmem:[%s257 + $0x20] sm:$0xff] %v776
        %809 = vst [vmem:[%s257 + $0x28] sm:$0xff] %v777
        %810 = vst [vmem:[%s257 + $0x30] sm:$0xff] %v778
        %811 = vst [vmem:[%s257 + $0x38] sm:$0xff] %v779
        %812 = vst [vmem:[%s257 + $0x40] sm:$0xff] %v780
        %813 = vst [vmem:[%s257 + $0x48] sm:$0xff] %v781
        %814 = vst [vmem:[%s257 + $0x50] sm:$0xff] %v782
        %815 = vst [vmem:[%s257 + $0x58] sm:$0xff] %v783
        %816 = vst [vmem:[%s257 + $0x60] sm:$0xff] %v784
        %817 = vst [vmem:[%s257 + $0x68] sm:$0xff] %v785
        %818 = vst [vmem:[%s257 + $0x70] sm:$0xff] %v786
        %819 = vst [vmem:[%s257 + $0x78] sm:$0xff] %v787
        %820 = vst [vmem:[%s257 + $0x80] sm:$0xff] %v788
        %821 = vst [vmem:[%s257 + $0x88] sm:$0xff] %v789
        %822 = vst [vmem:[%s257 + $0x90] sm:$0xff] %v790
        %823 = vst [vmem:[%s257 + $0x98] sm:$0xff] %v791
        %824 = vst [vmem:[%s257 + $0xa0] sm:$0xff] %v792
        %825 = vst [vmem:[%s257 + $0xa8] sm:$0xff] %v793
        %826 = vst [vmem:[%s257 + $0xb0] sm:$0xff] %v794
        %827 = vst [vmem:[%s257 + $0xb8] sm:$0xff] %v795
        %828 = vst [vmem:[%s257 + $0xc0] sm:$0xff] %v796
        %829 = vst [vmem:[%s257 + $0xc8] sm:$0xff] %v797
        %830 = vst [vmem:[%s257 + $0xd0] sm:$0xff] %v798
        %831 = vst [vmem:[%s257 + $0xd8] sm:$0xff] %v799
        %832 = vst [vmem:[%s257 + $0xe0] sm:$0xff] %v800
        %833 = vst [vmem:[%s257 + $0xe8] sm:$0xff] %v801
        %834 = vst [vmem:[%s257 + $0xf0] sm:$0xff] %v802
        %835 = vst [vmem:[%s257 + $0xf8] sm:$0xff] %v803
      $region40: #{vae_forward.19} parent=31 // pred_fallthru
        _
      %s836 = smul.u32 32, %s19
      %p837 = scmp.lt.s32.totalorder %s836, 63
      %s838 = scalar_select %p837, %s836, 63
      %p839 = scmp.lt.s32.totalorder %s20, 0
      %s840 = scalar_select %p839, %s20, 0
      %s841 = sadd.s32 %s840, %s838
      %s842 = smul.addr %s841, 8
      %s843 = scalar_lea.vmem %s3, %s842
      // Predicated region
      $region41: #{vae_forward.19} parent=31 // pred_check
        %p844 = pneg %p135
      $region42: #{vae_forward.19} parent=31 // pred_check_branch
        %846 = sbr.rel (%p844) target = $region44
      $region43: #{vae_forward.19} parent=31 // pred_region
        %s847 = smul.u32 32, %s19
      $region44: #{vae_forward.19} parent=31 // pred_fallthru
        _
    $region32: #{vae_forward.19} parent=5 // pred_fallthru
      _
    %p848 = scmp.le.s32.totalorder 2, %s9
    // Predicated region
    $region45: #{vae_forward.19} parent=5 // pred_check
      %p849 = pneg %p848
    $region46: #{vae_forward.19} parent=5 // pred_check_branch
      %851 = sbr.rel (%p849) target = $region48
    $region47: #{vae_forward.19} parent=5 // pred_region
      %s852 = ssub.s32 %s9, 2
      // Predicated region
      $region49: #{vae_forward.19} parent=47 // pred_check
        %p853 = pneg %p141
      $region50: #{vae_forward.19} parent=47 // pred_check_branch
        %855 = sbr.rel (%p853) target = $region52
      $region51: #{vae_forward.19} parent=47 // pred_region
        %s856 = smul.u32 32, %s22
        %p857 = scmp.lt.s32.totalorder %s856, 63
        %s858 = scalar_select %p857, %s856, 63
        %p859 = scmp.lt.s32.totalorder %s23, 0
        %s860 = scalar_select %p859, %s23, 0
        %s861 = sadd.s32 %s860, %s858
        %s862 = smul.addr %s861, 8
        %s863 = scalar_lea.vmem %s3, %s862
      $region52: #{vae_forward.19} parent=47 // pred_fallthru
        _
    $region48: #{vae_forward.19} parent=5 // pred_fallthru
      _
  $region6: #{vae_forward.19} parent=0 // loop_footer
    %s13 = sadd.s32 1, %s9
  $region7: #{vae_forward.19} parent=0 // loop_footer_branch
    %8 = sbr.rel target = $region3
  $region8: #{vae_forward.19} parent=0 // loop_exit
    _

</llo_original>
